<compile_context>
chip_gen: v6e
topology: v6e:2x2x1
jax: 0.10.0
libtpu: 0.0.40
codegen_flags: <defaults>
</compile_context>

<pallas_src>
import functools

import jax
import jax.numpy as jnp
from jax.experimental import pallas as pl
from jax.experimental.pallas import tpu as pltpu


# ----------------------------------------------------------------------------
# Generation-aware knobs
# ----------------------------------------------------------------------------
@functools.lru_cache(maxsize=1)
def _tpu_kind():
    try:
        return jax.devices()[0].device_kind.lower()
    except Exception:
        return ""


def _vmem_limit_bytes():
    kind = _tpu_kind()
    if "v7" in kind:
        return 48 * 1024 * 1024       # 64 MiB physical -> leave headroom
    if "v5" in kind or "v6" in kind:
        return 96 * 1024 * 1024       # 128 MiB physical
    return 32 * 1024 * 1024           # conservative default


def _row_tile_cap():
    return 256 if "v7" in _tpu_kind() else 512


def _round_up(n, m):
    return -(-n // m) * m


# ----------------------------------------------------------------------------
# Kernel 1: encoder stand-in (1x1 conv C->F + ReLU + global average pool)
#   grid = (B, row-tiles); (8, F) per-sublane accumulator scratch; the conv is
#   C broadcast-FMAs on the VPU (K=C=3 would waste the MXU), chunked over F.
# ----------------------------------------------------------------------------
def encoder_kernel(x_ref, wc_ref, bc_ref, out_ref, acc_ref, *, inv_hw):
    # x_ref:   (1, tile_hw, C) f32   pixel tile of one image, channels last
    # wc_ref:  (C, F) f32            1x1-conv stand-in weight
    # bc_ref:  (1, F) f32
    # out_ref: (1, 1, F) f32         per-image pooled feature (last tile only)
    # acc_ref: (8, F) f32            per-sublane running sums (scratch)
    r = pl.program_id(1)
    n_r = pl.num_programs(1)

    @pl.when(r == 0)
    def _():
        acc_ref[...] = jnp.zeros_like(acc_ref)

    x = x_ref[0]                                  # (tile_hw, C)
    rows, C = x.shape
    F = wc_ref.shape[1]
    FC = min(F, 512)                              # keep live intermediate small

    for f0 in range(0, F, FC):                    # static F-chunk loop
        f1 = min(f0 + FC, F)
        conv = x[:, 0:1] * wc_ref[0:1, f0:f1] + bc_ref[:, f0:f1]
        for c in range(1, C):
            conv = conv + x[:, c:c + 1] * wc_ref[c:c + 1, f0:f1]
        conv = jnp.maximum(conv, 0.0)             # ReLU before pooling
        if rows % 8 == 0:
            # per-sublane partial sums: pure VPU adds, no XLU per tile
            acc_ref[:, f0:f1] += conv.reshape(rows // 8, 8, f1 - f0).sum(axis=0)
        else:
            acc_ref[0:1, f0:f1] += jnp.sum(conv, axis=0, keepdims=True)

    @pl.when(r == n_r - 1)
    def _():
        # single cross-sublane reduce per image, then global-average scale
        out_ref[0] = jnp.sum(acc_ref[...], axis=0, keepdims=True) * inv_hw


# ----------------------------------------------------------------------------
# Kernel 2: self.fc  — one batched (Bp, F) @ (F, E) MXU matmul
# ----------------------------------------------------------------------------
def fc_kernel(p_ref, w_ref, b_ref, o_ref):
    # p_ref: (Bp, F) f32 ; w_ref: (F, E) bf16 ; b_ref: (1, E) f32 ; o_ref: (Bp, E) f32
    o_ref[...] = (
        jnp.dot(p_ref[...].astype(jnp.bfloat16), w_ref[...],
                preferred_element_type=jnp.float32)
        + b_ref[...]
    )


# ----------------------------------------------------------------------------
# Kernel 3: single-layer LSTM (batch_first semantics, zero init state)
#   Gridded over batch tiles (bt is a multiple of 8).  Input projection hoisted
#   to one big matmul; only h @ Whh + gate nonlinearities stay in the loop.
# ----------------------------------------------------------------------------
def lstm_kernel(seq_ref, wih_ref, whh_ref, b_ref, hs_ref, gx_sc, h_sc, c_sc):
    # seq_ref: (T1, bt, E) f32   time-major input sequence (batch tile)
    # wih_ref: (E, 4H) bf16      gate order [i, f, g, o] (PyTorch convention)
    # whh_ref: (H, 4H) bf16
    # b_ref:   (1, 4H) f32       b_ih + b_hh
    # hs_ref:  (T1, bt, H) bf16  all hidden states (output)
    # gx_sc:   (T1, bt, 4H) f32  precomputed input-projection gates (scratch)
    # h_sc/c_sc: (bt, H) f32     recurrent state (scratch)
    T1, bt, E = seq_ref.shape
    H = whh_ref.shape[0]

    # Hoisted input projection: one (T1*bt, E) x (E, 4H) MXU matmul.
    # bt % 8 == 0 -> this reshape is layout-free (no VMEM relayout copy).
    seq2d = seq_ref[...].reshape(T1 * bt, E).astype(jnp.bfloat16)
    gx = (jnp.dot(seq2d, wih_ref[...], preferred_element_type=jnp.float32)
          + b_ref[...])
    gx_sc[...] = gx.reshape(T1, bt, 4 * H)

    h_sc[...] = jnp.zeros_like(h_sc)
    c_sc[...] = jnp.zeros_like(c_sc)

    def step(t, carry):
        gates = gx_sc[t] + jnp.dot(h_sc[...].astype(jnp.bfloat16), whh_ref[...],
                                   preferred_element_type=jnp.float32)  # (bt, 4H)
        i = jax.nn.sigmoid(gates[:, 0 * H:1 * H])
        f = jax.nn.sigmoid(gates[:, 1 * H:2 * H])
        g = jnp.tanh(gates[:, 2 * H:3 * H])
        o = jax.nn.sigmoid(gates[:, 3 * H:4 * H])

        c_new = f * c_sc[...] + i * g
        h_new = o * jnp.tanh(c_new)
        c_sc[...] = c_new
        h_sc[...] = h_new
        hs_ref[t] = h_new.astype(hs_ref.dtype)    # full-sublane bf16 store
        return carry

    # Unrolled so the LLO scheduler overlaps step t+1's Whh matmul with the
    # gate VPU/EUP work of step t.
    jax.lax.fori_loop(0, T1, step, 0, unroll=True)


# ----------------------------------------------------------------------------
# Kernel 4: fc_out (hoisted output projection), gridded over vocab tiles.
#   Lane-dense (Mp, tile_v) stores; the (Mp, H) activation block stays resident.
# ----------------------------------------------------------------------------
def fc_out_kernel(h_ref, w_ref, b_ref, o_ref):
    # h_ref: (Mp, H) bf16 ; w_ref: (H, tv) bf16 ; b_ref: (1, tv) f32 ; o_ref: (Mp, tv) f32
    o_ref[...] = (
        jnp.dot(h_ref[...], w_ref[...], preferred_element_type=jnp.float32)
        + b_ref[...]
    )


# ----------------------------------------------------------------------------
# Wrapper
# ----------------------------------------------------------------------------
def _vmem_specs(n):
    return [pl.BlockSpec(memory_space=pltpu.MemorySpace.VMEM) for _ in range(n)]


def _row_tile(hw, cap):
    if hw <= cap:
        return hw
    for t in range(cap, 7, -8):           # largest multiple-of-8 divisor <= cap
        if hw % t == 0:
            return t
    return hw


def _v_tile(vp):
    # vp is always a multiple of 128 (padded in the wrapper)
    for t in (2048, 1024, 512, 256, 128):
        if vp % t == 0:
            return t
    return vp


@jax.jit
def captioning_forward(images, captions, params):
    B, C, Himg, Wimg = images.shape
    HW = Himg * Wimg
    T = captions.shape[1]
    T1 = T + 1
    F = params["wc"].shape[1]
    E = params["wfc"].shape[1]
    H = params["whh"].shape[0]
    V = params["wout"].shape[1]

    vmem_limit = _vmem_limit_bytes()

    # --- encoder stand-in: 1x1 conv -> ReLU -> global average pool ---------
    x = jnp.transpose(images, (0, 2, 3, 1)).reshape(B, HW, C)   # NCHW -> (B, HW, C)
    tile_hw = _row_tile(HW, _row_tile_cap())
    n_r = HW // tile_hw

    pooled3 = pl.pallas_call(
        functools.partial(encoder_kernel, inv_hw=1.0 / HW),
        out_shape=jax.ShapeDtypeStruct((B, 1, F), jnp.float32),
        grid_spec=pltpu.PrefetchScalarGridSpec(
            num_scalar_prefetch=0,
            grid=(B, n_r),
            in_specs=[
                pl.BlockSpec((1, tile_hw, C), lambda b, r: (b, r, 0)),
                pl.BlockSpec((C, F), lambda b, r: (0, 0)),
                pl.BlockSpec((1, F), lambda b, r: (0, 0)),
            ],
            out_specs=pl.BlockSpec((1, 1, F), lambda b, r: (b, 0, 0)),
            scratch_shapes=[pltpu.VMEM((8, F), jnp.float32)],
        ),
        compiler_params=pltpu.CompilerParams(
            dimension_semantics=("parallel", "arbitrary"),
            vmem_limit_bytes=vmem_limit),
    )(x, params["wc"], params["bc"])
    pooled = pooled3.reshape(B, F)                               # (B, F)

    # pad the batch to a multiple of 8: full sublanes in fc / LSTM kernels
    Bp = _round_up(B, 8)
    pooled_p = jnp.pad(pooled, ((0, Bp - B), (0, 0)))            # (Bp, F)

    # --- self.fc: one (Bp, F) @ (F, E) matmul -------------------------------
    feat_p = pl.pallas_call(
        fc_kernel,
        out_shape=jax.ShapeDtypeStruct((Bp, E), jnp.float32),
        in_specs=_vmem_specs(3),
        out_specs=pl.BlockSpec(memory_space=pltpu.MemorySpace.VMEM),
        compiler_params=pltpu.CompilerParams(vmem_limit_bytes=vmem_limit),
    )(pooled_p, params["wfc"], params["bfc"])                    # (Bp, E)

    # --- embedding lookup + concat, time-major, padded batch ---------------
    # TODO(synk): gather could be folded into the LSTM kernel via scalar
    # prefetch; at these sizes it is left to XLA (fused under jit).
    cap_p = jnp.pad(captions, ((0, Bp - B), (0, 0)))             # (Bp, T)
    emb_t = jnp.take(params["embedding"], cap_p.T, axis=0)       # (T, Bp, E)
    seq_t = jnp.concatenate([feat_p[None, :, :], emb_t], axis=0) # (T1, Bp, E)

    # --- LSTM: grid over batch tiles ("parallel" -> 2-TC split on v7x) -----
    bt = 8
    hs = pl.pallas_call(
        lstm_kernel,
        out_shape=jax.ShapeDtypeStruct((T1, Bp, H), jnp.bfloat16),
        grid_spec=pltpu.PrefetchScalarGridSpec(
            num_scalar_prefetch=0,
            grid=(Bp // bt,),
            in_specs=[
                pl.BlockSpec((T1, bt, E), lambda b: (0, b, 0)),
                pl.BlockSpec((E, 4 * H), lambda b: (0, 0)),
                pl.BlockSpec((H, 4 * H), lambda b: (0, 0)),
                pl.BlockSpec((1, 4 * H), lambda b: (0, 0)),
            ],
            out_specs=pl.BlockSpec((T1, bt, H), lambda b: (0, b, 0)),
            scratch_shapes=[
                pltpu.VMEM((T1, bt, 4 * H), jnp.float32),
                pltpu.VMEM((bt, H), jnp.float32),
                pltpu.VMEM((bt, H), jnp.float32),
            ],
        ),
        compiler_params=pltpu.CompilerParams(
            dimension_semantics=("parallel",),
            vmem_limit_bytes=vmem_limit),
    )(seq_t, params["wih"], params["whh"], params["b_lstm"])     # (T1, Bp, H) bf16

    # --- fc_out: lane-dense matmul tiled over (padded) vocab ---------------
    h_bm = jnp.transpose(hs, (1, 0, 2))[:B].reshape(B * T1, H)   # (B*T1, H) bf16
    M = B * T1
    Mp = _round_up(M, 8)                                         # full sublanes
    h_bm = jnp.pad(h_bm, ((0, Mp - M), (0, 0)))

    Vp = _round_up(V, 128)                                       # lane-aligned vocab
    wout_p = jnp.pad(params["wout"], ((0, 0), (0, Vp - V)))
    bout_p = jnp.pad(params["bout"], ((0, 0), (0, Vp - V)))
    tile_v = _v_tile(Vp)

    logits2d = pl.pallas_call(
        fc_out_kernel,
        out_shape=jax.ShapeDtypeStruct((Mp, Vp), jnp.float32),
        grid_spec=pltpu.PrefetchScalarGridSpec(
            num_scalar_prefetch=0,
            grid=(Vp // tile_v,),
            in_specs=[
                pl.BlockSpec((Mp, H), lambda j: (0, 0)),
                pl.BlockSpec((H, tile_v), lambda j: (0, j)),
                pl.BlockSpec((1, tile_v), lambda j: (0, j)),
            ],
            out_specs=pl.BlockSpec((Mp, tile_v), lambda j: (0, j)),
        ),
        compiler_params=pltpu.CompilerParams(
            dimension_semantics=("parallel",),
            vmem_limit_bytes=vmem_limit),
    )(h_bm, wout_p, bout_p)                                      # (Mp, Vp)

    return logits2d[:M, :V].reshape(B, T1, V)                    # (B, T+1, V)


# ----------------------------------------------------------------------------
# Deterministic parameter construction
# ----------------------------------------------------------------------------
def init_params(key, in_channels, embed_size, hidden_size, vocab_size,
                feat_dim=2048):
    ks = jax.random.split(key, 10)
    s = 0.02
    f32 = jnp.float32
    bf16 = jnp.bfloat16
    return {
        # encoder stand-in (1x1 conv C -> 2048); kept f32 (VPU FMA path)
        "wc":  (jax.random.normal(ks[0], (in_channels, feat_dim)) * s).astype(f32),
        "bc":  (jax.random.normal(ks[1], (1, feat_dim)) * s).astype(f32),
        # self.fc : Linear(2048, embed_size)
        "wfc": (jax.random.normal(ks[2], (feat_dim, embed_size)) * s).astype(bf16),
        "bfc": (jax.random.normal(ks[3], (1, embed_size)) * s).astype(f32),
        # self.embedding : Embedding(vocab_size, embed_size)
        "embedding": (jax.random.normal(ks[4], (vocab_size, embed_size)) * s).astype(f32),
        # self.lstm : LSTM(embed_size, hidden_size), gate order [i, f, g, o]
        "wih": (jax.random.normal(ks[5], (embed_size, 4 * hidden_size)) * s).astype(bf16),
        "whh": (jax.random.normal(ks[6], (hidden_size, 4 * hidden_size)) * s).astype(bf16),
        "b_lstm": (jax.random.normal(ks[7], (1, 4 * hidden_size)) * s).astype(f32),
        # self.fc_out : Linear(hidden_size, vocab_size)
        "wout": (jax.random.normal(ks[8], (hidden_size, vocab_size)) * s).astype(bf16),
        "bout": (jax.random.normal(ks[9], (1, vocab_size)) * s).astype(f32),
    }


if __name__ == "__main__":
    B, C, S = 2, 3, 16                 # batch, image channels, spatial
    T = 8                              # caption length
    # lane-aligned toy model dims (H, V multiples of 128 -> dense gate slices / stores)
    embed_size, hidden_size, vocab_size = 128, 128, 256

    key = jax.random.PRNGKey(0)
    k_img, k_cap, k_par = jax.random.split(key, 3)

    images = jax.random.normal(k_img, (B, C, S, S), dtype=jnp.float32)
    captions = jax.random.randint(k_cap, (B, T), 0, vocab_size, dtype=jnp.int32)
    params = init_params(k_par, C, embed_size, hidden_size, vocab_size)

    out = captioning_forward(images, captions, params)
    out = jax.block_until_ready(out)

    assert out.shape == (B, T + 1, vocab_size), out.shape
    assert bool(jnp.all(jnp.isfinite(out)))
    print("KERNEL_OK")
</pallas_src>

<mosaic_0001>
module attributes {stable_mosaic.version = 11 : i64} {
  func.func @encoder_kernel(%arg0: i32, %arg1: i32, %arg2: memref<1x256x3xf32, #tpu.memory_space<vmem>>, %arg3: memref<3x2048xf32, #tpu.memory_space<vmem>>, %arg4: memref<1x2048xf32, #tpu.memory_space<vmem>>, %arg5: memref<1x1x2048xf32, #tpu.memory_space<vmem>>, %arg6: memref<8x2048xf32, #tpu.memory_space<vmem>>) attributes {dimension_semantics = [#tpu.dimension_semantics<parallel>, #tpu.dimension_semantics<arbitrary>], iteration_bounds = array<i64: 2, 1>, scalar_prefetch = 0 : i64, scratch_operands = 1 : i64, tpu.core_type = #tpu.core_type<tc>, window_params = [{transform_indices = @transform_0, window_bounds = array<i64: 1, 256, 3>}, {pipeline_mode = #tpu.pipeline_mode<synchronous>, transform_indices = @transform_1, window_bounds = array<i64: 3, 2048>}, {pipeline_mode = #tpu.pipeline_mode<synchronous>, transform_indices = @transform_2, window_bounds = array<i64: 1, 2048>}, {transform_indices = @transform_3, window_bounds = array<i64: 1, 1, 2048>}]} {
    %c0_i32 = arith.constant 0 : i32
    %0 = arith.cmpi eq, %arg1, %c0_i32 : i32
    %1 = arith.extui %0 : i1 to i32
    %c0_i32_0 = arith.constant 0 : i32
    %2 = arith.cmpi ne, %1, %c0_i32_0 : i32
    scf.if %2 {
      %cst_55 = arith.constant 0.000000e+00 : f32
      %116 = vector.broadcast %cst_55 : f32 to vector<8x2048xf32>
      %c0_56 = arith.constant 0 : index
      %c0_57 = arith.constant 0 : index
      %117 = vector.load %arg6[%c0_56, %c0_57] : memref<8x2048xf32, #tpu.memory_space<vmem>>, vector<8x2048xf32>
      tpu.vector_store %arg6[%c0_56, %c0_57], %116 {strides = array<i32>} : memref<8x2048xf32, #tpu.memory_space<vmem>>, vector<8x2048xf32>,
    } else {
    }
    %c0 = arith.constant 0 : index
    %c0_1 = arith.constant 0 : index
    %c0_2 = arith.constant 0 : index
    %3 = vector.load %arg2[%c0, %c0_1, %c0_2] : memref<1x256x3xf32, #tpu.memory_space<vmem>>, vector<1x256x3xf32>
    %4 = vector.shape_cast %3 : vector<1x256x3xf32> to vector<256x3xf32>
    %5 = vector.extract_strided_slice %4 {offsets = [0, 0], sizes = [256, 1], strides = [1, 1]} : vector<256x3xf32> to vector<256x1xf32>
    %c0_3 = arith.constant 0 : index
    %c0_4 = arith.constant 0 : index
    %6 = vector.load %arg3[%c0_3, %c0_4] : memref<3x2048xf32, #tpu.memory_space<vmem>>, vector<1x512xf32>
    %7 = vector.broadcast %5 : vector<256x1xf32> to vector<256x512xf32>
    %8 = vector.broadcast %6 : vector<1x512xf32> to vector<256x512xf32>
    %9 = arith.mulf %7, %8 : vector<256x512xf32>
    %c0_5 = arith.constant 0 : index
    %c0_6 = arith.constant 0 : index
    %10 = vector.load %arg4[%c0_5, %c0_6] : memref<1x2048xf32, #tpu.memory_space<vmem>>, vector<1x512xf32>
    %11 = vector.broadcast %10 : vector<1x512xf32> to vector<256x512xf32>
    %12 = arith.addf %9, %11 : vector<256x512xf32>
    %13 = vector.extract_strided_slice %4 {offsets = [0, 1], sizes = [256, 1], strides = [1, 1]} : vector<256x3xf32> to vector<256x1xf32>
    %c1 = arith.constant 1 : index
    %c0_7 = arith.constant 0 : index
    %14 = vector.load %arg3[%c1, %c0_7] : memref<3x2048xf32, #tpu.memory_space<vmem>>, vector<1x512xf32>
    %15 = vector.broadcast %13 : vector<256x1xf32> to vector<256x512xf32>
    %16 = vector.broadcast %14 : vector<1x512xf32> to vector<256x512xf32>
    %17 = arith.mulf %15, %16 : vector<256x512xf32>
    %18 = arith.addf %12, %17 : vector<256x512xf32>
    %19 = vector.extract_strided_slice %4 {offsets = [0, 2], sizes = [256, 1], strides = [1, 1]} : vector<256x3xf32> to vector<256x1xf32>
    %c2 = arith.constant 2 : index
    %c0_8 = arith.constant 0 : index
    %20 = vector.load %arg3[%c2, %c0_8] : memref<3x2048xf32, #tpu.memory_space<vmem>>, vector<1x512xf32>
    %21 = vector.broadcast %19 : vector<256x1xf32> to vector<256x512xf32>
    %22 = vector.broadcast %20 : vector<1x512xf32> to vector<256x512xf32>
    %23 = arith.mulf %21, %22 : vector<256x512xf32>
    %24 = arith.addf %18, %23 : vector<256x512xf32>
    %cst = arith.constant 0.000000e+00 : f32
    %25 = vector.broadcast %cst : f32 to vector<256x512xf32>
    %26 = arith.maximumf %24, %25 : vector<256x512xf32>
    %c0_9 = arith.constant 0 : index
    %c0_10 = arith.constant 0 : index
    %27 = vector.load %arg6[%c0_9, %c0_10] : memref<8x2048xf32, #tpu.memory_space<vmem>>, vector<8x512xf32>
    %28 = vector.shape_cast %26 : vector<256x512xf32> to vector<32x8x512xf32>
    %cst_11 = arith.constant dense<0.000000e+00> : vector<8x512xf32>
    %29 = vector.multi_reduction <add>, %28, %cst_11 [0] : vector<32x8x512xf32> to vector<8x512xf32>
    %30 = arith.addf %27, %29 : vector<8x512xf32>
    %c0_12 = arith.constant 0 : index
    %c0_13 = arith.constant 0 : index
    %31 = vector.load %arg6[%c0_12, %c0_13] : memref<8x2048xf32, #tpu.memory_space<vmem>>, vector<8x512xf32>
    tpu.vector_store %arg6[%c0_12, %c0_13], %30 {strides = array<i32>} : memref<8x2048xf32, #tpu.memory_space<vmem>>, vector<8x512xf32>,
    %32 = vector.extract_strided_slice %4 {offsets = [0, 0], sizes = [256, 1], strides = [1, 1]} : vector<256x3xf32> to vector<256x1xf32>
    %c0_14 = arith.constant 0 : index
    %c512 = arith.constant 512 : index
    %33 = vector.load %arg3[%c0_14, %c512] : memref<3x2048xf32, #tpu.memory_space<vmem>>, vector<1x512xf32>
    %34 = vector.broadcast %32 : vector<256x1xf32> to vector<256x512xf32>
    %35 = vector.broadcast %33 : vector<1x512xf32> to vector<256x512xf32>
    %36 = arith.mulf %34, %35 : vector<256x512xf32>
    %c0_15 = arith.constant 0 : index
    %c512_16 = arith.constant 512 : index
    %37 = vector.load %arg4[%c0_15, %c512_16] : memref<1x2048xf32, #tpu.memory_space<vmem>>, vector<1x512xf32>
    %38 = vector.broadcast %37 : vector<1x512xf32> to vector<256x512xf32>
    %39 = arith.addf %36, %38 : vector<256x512xf32>
    %40 = vector.extract_strided_slice %4 {offsets = [0, 1], sizes = [256, 1], strides = [1, 1]} : vector<256x3xf32> to vector<256x1xf32>
    %c1_17 = arith.constant 1 : index
    %c512_18 = arith.constant 512 : index
    %41 = vector.load %arg3[%c1_17, %c512_18] : memref<3x2048xf32, #tpu.memory_space<vmem>>, vector<1x512xf32>
    %42 = vector.broadcast %40 : vector<256x1xf32> to vector<256x512xf32>
    %43 = vector.broadcast %41 : vector<1x512xf32> to vector<256x512xf32>
    %44 = arith.mulf %42, %43 : vector<256x512xf32>
    %45 = arith.addf %39, %44 : vector<256x512xf32>
    %46 = vector.extract_strided_slice %4 {offsets = [0, 2], sizes = [256, 1], strides = [1, 1]} : vector<256x3xf32> to vector<256x1xf32>
    %c2_19 = arith.constant 2 : index
    %c512_20 = arith.constant 512 : index
    %47 = vector.load %arg3[%c2_19, %c512_20] : memref<3x2048xf32, #tpu.memory_space<vmem>>, vector<1x512xf32>
    %48 = vector.broadcast %46 : vector<256x1xf32> to vector<256x512xf32>
    %49 = vector.broadcast %47 : vector<1x512xf32> to vector<256x512xf32>
    %50 = arith.mulf %48, %49 : vector<256x512xf32>
    %51 = arith.addf %45, %50 : vector<256x512xf32>
    %cst_21 = arith.constant 0.000000e+00 : f32
    %52 = vector.broadcast %cst_21 : f32 to vector<256x512xf32>
    %53 = arith.maximumf %51, %52 : vector<256x512xf32>
    %c0_22 = arith.constant 0 : index
    %c512_23 = arith.constant 512 : index
    %54 = vector.load %arg6[%c0_22, %c512_23] : memref<8x2048xf32, #tpu.memory_space<vmem>>, vector<8x512xf32>
    %55 = vector.shape_cast %53 : vector<256x512xf32> to vector<32x8x512xf32>
    %cst_24 = arith.constant dense<0.000000e+00> : vector<8x512xf32>
    %56 = vector.multi_reduction <add>, %55, %cst_24 [0] : vector<32x8x512xf32> to vector<8x512xf32>
    %57 = arith.addf %54, %56 : vector<8x512xf32>
    %c0_25 = arith.constant 0 : index
    %c512_26 = arith.constant 512 : index
    %58 = vector.load %arg6[%c0_25, %c512_26] : memref<8x2048xf32, #tpu.memory_space<vmem>>, vector<8x512xf32>
    tpu.vector_store %arg6[%c0_25, %c512_26], %57 {strides = array<i32>} : memref<8x2048xf32, #tpu.memory_space<vmem>>, vector<8x512xf32>,
    %59 = vector.extract_strided_slice %4 {offsets = [0, 0], sizes = [256, 1], strides = [1, 1]} : vector<256x3xf32> to vector<256x1xf32>
    %c0_27 = arith.constant 0 : index
    %c1024 = arith.constant 1024 : index
    %60 = vector.load %arg3[%c0_27, %c1024] : memref<3x2048xf32, #tpu.memory_space<vmem>>, vector<1x512xf32>
    %61 = vector.broadcast %59 : vector<256x1xf32> to vector<256x512xf32>
    %62 = vector.broadcast %60 : vector<1x512xf32> to vector<256x512xf32>
    %63 = arith.mulf %61, %62 : vector<256x512xf32>
    %c0_28 = arith.constant 0 : index
    %c1024_29 = arith.constant 1024 : index
    %64 = vector.load %arg4[%c0_28, %c1024_29] : memref<1x2048xf32, #tpu.memory_space<vmem>>, vector<1x512xf32>
    %65 = vector.broadcast %64 : vector<1x512xf32> to vector<256x512xf32>
    %66 = arith.addf %63, %65 : vector<256x512xf32>
    %67 = vector.extract_strided_slice %4 {offsets = [0, 1], sizes = [256, 1], strides = [1, 1]} : vector<256x3xf32> to vector<256x1xf32>
    %c1_30 = arith.constant 1 : index
    %c1024_31 = arith.constant 1024 : index
    %68 = vector.load %arg3[%c1_30, %c1024_31] : memref<3x2048xf32, #tpu.memory_space<vmem>>, vector<1x512xf32>
    %69 = vector.broadcast %67 : vector<256x1xf32> to vector<256x512xf32>
    %70 = vector.broadcast %68 : vector<1x512xf32> to vector<256x512xf32>
    %71 = arith.mulf %69, %70 : vector<256x512xf32>
    %72 = arith.addf %66, %71 : vector<256x512xf32>
    %73 = vector.extract_strided_slice %4 {offsets = [0, 2], sizes = [256, 1], strides = [1, 1]} : vector<256x3xf32> to vector<256x1xf32>
    %c2_32 = arith.constant 2 : index
    %c1024_33 = arith.constant 1024 : index
    %74 = vector.load %arg3[%c2_32, %c1024_33] : memref<3x2048xf32, #tpu.memory_space<vmem>>, vector<1x512xf32>
    %75 = vector.broadcast %73 : vector<256x1xf32> to vector<256x512xf32>
    %76 = vector.broadcast %74 : vector<1x512xf32> to vector<256x512xf32>
    %77 = arith.mulf %75, %76 : vector<256x512xf32>
    %78 = arith.addf %72, %77 : vector<256x512xf32>
    %cst_34 = arith.constant 0.000000e+00 : f32
    %79 = vector.broadcast %cst_34 : f32 to vector<256x512xf32>
    %80 = arith.maximumf %78, %79 : vector<256x512xf32>
    %c0_35 = arith.constant 0 : index
    %c1024_36 = arith.constant 1024 : index
    %81 = vector.load %arg6[%c0_35, %c1024_36] : memref<8x2048xf32, #tpu.memory_space<vmem>>, vector<8x512xf32>
    %82 = vector.shape_cast %80 : vector<256x512xf32> to vector<32x8x512xf32>
    %cst_37 = arith.constant dense<0.000000e+00> : vector<8x512xf32>
    %83 = vector.multi_reduction <add>, %82, %cst_37 [0] : vector<32x8x512xf32> to vector<8x512xf32>
    %84 = arith.addf %81, %83 : vector<8x512xf32>
    %c0_38 = arith.constant 0 : index
    %c1024_39 = arith.constant 1024 : index
    %85 = vector.load %arg6[%c0_38, %c1024_39] : memref<8x2048xf32, #tpu.memory_space<vmem>>, vector<8x512xf32>
    tpu.vector_store %arg6[%c0_38, %c1024_39], %84 {strides = array<i32>} : memref<8x2048xf32, #tpu.memory_space<vmem>>, vector<8x512xf32>,
    %86 = vector.extract_strided_slice %4 {offsets = [0, 0], sizes = [256, 1], strides = [1, 1]} : vector<256x3xf32> to vector<256x1xf32>
    %c0_40 = arith.constant 0 : index
    %c1536 = arith.constant 1536 : index
    %87 = vector.load %arg3[%c0_40, %c1536] : memref<3x2048xf32, #tpu.memory_space<vmem>>, vector<1x512xf32>
    %88 = vector.broadcast %86 : vector<256x1xf32> to vector<256x512xf32>
    %89 = vector.broadcast %87 : vector<1x512xf32> to vector<256x512xf32>
    %90 = arith.mulf %88, %89 : vector<256x512xf32>
    %c0_41 = arith.constant 0 : index
    %c1536_42 = arith.constant 1536 : index
    %91 = vector.load %arg4[%c0_41, %c1536_42] : memref<1x2048xf32, #tpu.memory_space<vmem>>, vector<1x512xf32>
    %92 = vector.broadcast %91 : vector<1x512xf32> to vector<256x512xf32>
    %93 = arith.addf %90, %92 : vector<256x512xf32>
    %94 = vector.extract_strided_slice %4 {offsets = [0, 1], sizes = [256, 1], strides = [1, 1]} : vector<256x3xf32> to vector<256x1xf32>
    %c1_43 = arith.constant 1 : index
    %c1536_44 = arith.constant 1536 : index
    %95 = vector.load %arg3[%c1_43, %c1536_44] : memref<3x2048xf32, #tpu.memory_space<vmem>>, vector<1x512xf32>
    %96 = vector.broadcast %94 : vector<256x1xf32> to vector<256x512xf32>
    %97 = vector.broadcast %95 : vector<1x512xf32> to vector<256x512xf32>
    %98 = arith.mulf %96, %97 : vector<256x512xf32>
    %99 = arith.addf %93, %98 : vector<256x512xf32>
    %100 = vector.extract_strided_slice %4 {offsets = [0, 2], sizes = [256, 1], strides = [1, 1]} : vector<256x3xf32> to vector<256x1xf32>
    %c2_45 = arith.constant 2 : index
    %c1536_46 = arith.constant 1536 : index
    %101 = vector.load %arg3[%c2_45, %c1536_46] : memref<3x2048xf32, #tpu.memory_space<vmem>>, vector<1x512xf32>
    %102 = vector.broadcast %100 : vector<256x1xf32> to vector<256x512xf32>
    %103 = vector.broadcast %101 : vector<1x512xf32> to vector<256x512xf32>
    %104 = arith.mulf %102, %103 : vector<256x512xf32>
    %105 = arith.addf %99, %104 : vector<256x512xf32>
    %cst_47 = arith.constant 0.000000e+00 : f32
    %106 = vector.broadcast %cst_47 : f32 to vector<256x512xf32>
    %107 = arith.maximumf %105, %106 : vector<256x512xf32>
    %c0_48 = arith.constant 0 : index
    %c1536_49 = arith.constant 1536 : index
    %108 = vector.load %arg6[%c0_48, %c1536_49] : memref<8x2048xf32, #tpu.memory_space<vmem>>, vector<8x512xf32>
    %109 = vector.shape_cast %107 : vector<256x512xf32> to vector<32x8x512xf32>
    %cst_50 = arith.constant dense<0.000000e+00> : vector<8x512xf32>
    %110 = vector.multi_reduction <add>, %109, %cst_50 [0] : vector<32x8x512xf32> to vector<8x512xf32>
    %111 = arith.addf %108, %110 : vector<8x512xf32>
    %c0_51 = arith.constant 0 : index
    %c1536_52 = arith.constant 1536 : index
    %112 = vector.load %arg6[%c0_51, %c1536_52] : memref<8x2048xf32, #tpu.memory_space<vmem>>, vector<8x512xf32>
    tpu.vector_store %arg6[%c0_51, %c1536_52], %111 {strides = array<i32>} : memref<8x2048xf32, #tpu.memory_space<vmem>>, vector<8x512xf32>,
    %c0_i32_53 = arith.constant 0 : i32
    %113 = arith.cmpi eq, %arg1, %c0_i32_53 : i32
    %114 = arith.extui %113 : i1 to i32
    %c0_i32_54 = arith.constant 0 : i32
    %115 = arith.cmpi ne, %114, %c0_i32_54 : i32
    scf.if %115 {
      %c0_55 = arith.constant 0 : index
      %c0_56 = arith.constant 0 : index
      %116 = vector.load %arg6[%c0_55, %c0_56] : memref<8x2048xf32, #tpu.memory_space<vmem>>, vector<8x2048xf32>
      %cst_57 = arith.constant dense<0.000000e+00> : vector<2048xf32>
      %117 = vector.multi_reduction <add>, %116, %cst_57 [0] : vector<8x2048xf32> to vector<2048xf32>
      %118 = vector.shape_cast %117 : vector<2048xf32> to vector<1x2048xf32>
      %cst_58 = arith.constant 3.906250e-03 : f32
      %119 = vector.broadcast %cst_58 : f32 to vector<1x2048xf32>
      %120 = arith.mulf %118, %119 : vector<1x2048xf32>
      %c0_59 = arith.constant 0 : index
      %c0_60 = arith.constant 0 : index
      %c0_61 = arith.constant 0 : index
      %121 = vector.load %arg5[%c0_59, %c0_60, %c0_61] : memref<1x1x2048xf32, #tpu.memory_space<vmem>>, vector<1x1x2048xf32>
      %122 = vector.shape_cast %121 : vector<1x1x2048xf32> to vector<1x2048xf32>
      %123 = vector.shape_cast %120 : vector<1x2048xf32> to vector<1x1x2048xf32>
      tpu.vector_store %arg5[%c0_59, %c0_60, %c0_61], %123 {strides = array<i32>} : memref<1x1x2048xf32, #tpu.memory_space<vmem>>, vector<1x1x2048xf32>,
    } else {
    }
    return
  }
  func.func @transform_0(%arg0: i32, %arg1: i32) -> (i32, i32, i32) {
    %c0_i32 = arith.constant 0 : i32
    %c0_i32_0 = arith.constant 0 : i32
    return %arg0, %arg1, %c0_i32 : i32, i32, i32
  }
  func.func @transform_1(%arg0: i32, %arg1: i32) -> (i32, i32) {
    %c0_i32 = arith.constant 0 : i32
    %c0_i32_0 = arith.constant 0 : i32
    %c0_i32_1 = arith.constant 0 : i32
    return %c0_i32, %c0_i32_0 : i32, i32
  }
  func.func @transform_2(%arg0: i32, %arg1: i32) -> (i32, i32) {
    %c0_i32 = arith.constant 0 : i32
    %c0_i32_0 = arith.constant 0 : i32
    %c0_i32_1 = arith.constant 0 : i32
    return %c0_i32, %c0_i32_0 : i32, i32
  }
  func.func @transform_3(%arg0: i32, %arg1: i32) -> (i32, i32, i32) {
    %c0_i32 = arith.constant 0 : i32
    %c0_i32_0 = arith.constant 0 : i32
    %c0_i32_1 = arith.constant 0 : i32
    return %arg0, %c0_i32, %c0_i32_0 : i32, i32, i32
  }
}

module attributes {stable_mosaic.version = 11 : i64} {
  func.func @fc_kernel(%arg0: memref<8x2048xf32, #tpu.memory_space<vmem>>, %arg1: memref<2048x128xbf16, #tpu.memory_space<vmem>>, %arg2: memref<1x128xf32, #tpu.memory_space<vmem>>, %arg3: memref<8x128xf32, #tpu.memory_space<vmem>>) attributes {dimension_semantics = [], scalar_prefetch = 0 : i64, scratch_operands = 0 : i64, tpu.core_type = #tpu.core_type<tc>} {
    %c0 = arith.constant 0 : index
    %c0_0 = arith.constant 0 : index
    %0 = vector.load %arg0[%c0, %c0_0] : memref<8x2048xf32, #tpu.memory_space<vmem>>, vector<8x2048xf32>
    %1 = arith.truncf %0 : vector<8x2048xf32> to vector<8x2048xbf16>
    %c0_1 = arith.constant 0 : index
    %c0_2 = arith.constant 0 : index
    %2 = vector.load %arg1[%c0_1, %c0_2] : memref<2048x128xbf16, #tpu.memory_space<vmem>>, vector<2048x128xbf16>
    %cst = arith.constant dense<0.000000e+00> : vector<8x128xf32>
    %3 = tpu.matmul %1, %2, %cst {dimension_numbers = #tpu.dot_dimension_numbers<[1], [0], [0], [1], [0, 0, 1, 1], [], []>} : vector<8x2048xbf16>, vector<2048x128xbf16>, vector<8x128xf32> -> vector<8x128xf32>
    %c0_3 = arith.constant 0 : index
    %c0_4 = arith.constant 0 : index
    %4 = vector.load %arg2[%c0_3, %c0_4] : memref<1x128xf32, #tpu.memory_space<vmem>>, vector<1x128xf32>
    %5 = vector.broadcast %4 : vector<1x128xf32> to vector<8x128xf32>
    %6 = arith.addf %3, %5 : vector<8x128xf32>
    %c0_5 = arith.constant 0 : index
    %c0_6 = arith.constant 0 : index
    %7 = vector.load %arg3[%c0_5, %c0_6] : memref<8x128xf32, #tpu.memory_space<vmem>>, vector<8x128xf32>
    tpu.vector_store %arg3[%c0_5, %c0_6], %6 {strides = array<i32>} : memref<8x128xf32, #tpu.memory_space<vmem>>, vector<8x128xf32>,
    return
  }
}

module attributes {stable_mosaic.version = 11 : i64} {
  func.func @lstm_kernel(%arg0: i32, %arg1: memref<9x8x128xf32, #tpu.memory_space<vmem>>, %arg2: memref<128x512xbf16, #tpu.memory_space<vmem>>, %arg3: memref<128x512xbf16, #tpu.memory_space<vmem>>, %arg4: memref<1x512xf32, #tpu.memory_space<vmem>>, %arg5: memref<9x8x128xbf16, #tpu.memory_space<vmem>>, %arg6: memref<9x8x512xf32, #tpu.memory_space<vmem>>, %arg7: memref<8x128xf32, #tpu.memory_space<vmem>>, %arg8: memref<8x128xf32, #tpu.memory_space<vmem>>) attributes {dimension_semantics = [#tpu.dimension_semantics<parallel>], iteration_bounds = array<i64: 1>, scalar_prefetch = 0 : i64, scratch_operands = 3 : i64, tpu.core_type = #tpu.core_type<tc>, window_params = [{transform_indices = @transform_0, window_bounds = array<i64: 9, 8, 128>}, {pipeline_mode = #tpu.pipeline_mode<synchronous>, transform_indices = @transform_1, window_bounds = array<i64: 128, 512>}, {pipeline_mode = #tpu.pipeline_mode<synchronous>, transform_indices = @transform_2, window_bounds = array<i64: 128, 512>}, {pipeline_mode = #tpu.pipeline_mode<synchronous>, transform_indices = @transform_3, window_bounds = array<i64: 1, 512>}, {transform_indices = @transform_4, window_bounds = array<i64: 9, 8, 128>}]} {
    %c0 = arith.constant 0 : index
    %c0_0 = arith.constant 0 : index
    %c0_1 = arith.constant 0 : index
    %0 = vector.load %arg1[%c0, %c0_0, %c0_1] : memref<9x8x128xf32, #tpu.memory_space<vmem>>, vector<9x8x128xf32>
    %1 = vector.shape_cast %0 : vector<9x8x128xf32> to vector<72x128xf32>
    %2 = arith.truncf %1 : vector<72x128xf32> to vector<72x128xbf16>
    %c0_2 = arith.constant 0 : index
    %c0_3 = arith.constant 0 : index
    %3 = vector.load %arg2[%c0_2, %c0_3] : memref<128x512xbf16, #tpu.memory_space<vmem>>, vector<128x512xbf16>
    %cst = arith.constant dense<0.000000e+00> : vector<72x512xf32>
    %4 = tpu.matmul %2, %3, %cst {dimension_numbers = #tpu.dot_dimension_numbers<[1], [0], [0], [1], [0, 0, 1, 1], [], []>} : vector<72x128xbf16>, vector<128x512xbf16>, vector<72x512xf32> -> vector<72x512xf32>
    %c0_4 = arith.constant 0 : index
    %c0_5 = arith.constant 0 : index
    %5 = vector.load %arg4[%c0_4, %c0_5] : memref<1x512xf32, #tpu.memory_space<vmem>>, vector<1x512xf32>
    %6 = vector.broadcast %5 : vector<1x512xf32> to vector<72x512xf32>
    %7 = arith.addf %4, %6 : vector<72x512xf32>
    %8 = vector.shape_cast %7 : vector<72x512xf32> to vector<9x8x512xf32>
    %c0_6 = arith.constant 0 : index
    %c0_7 = arith.constant 0 : index
    %c0_8 = arith.constant 0 : index
    %9 = vector.load %arg6[%c0_6, %c0_7, %c0_8] : memref<9x8x512xf32, #tpu.memory_space<vmem>>, vector<9x8x512xf32>
    tpu.vector_store %arg6[%c0_6, %c0_7, %c0_8], %8 {strides = array<i32>} : memref<9x8x512xf32, #tpu.memory_space<vmem>>, vector<9x8x512xf32>,
    %cst_9 = arith.constant 0.000000e+00 : f32
    %10 = vector.broadcast %cst_9 : f32 to vector<8x128xf32>
    %c0_10 = arith.constant 0 : index
    %c0_11 = arith.constant 0 : index
    %11 = vector.load %arg7[%c0_10, %c0_11] : memref<8x128xf32, #tpu.memory_space<vmem>>, vector<8x128xf32>
    tpu.vector_store %arg7[%c0_10, %c0_11], %10 {strides = array<i32>} : memref<8x128xf32, #tpu.memory_space<vmem>>, vector<8x128xf32>,
    %cst_12 = arith.constant 0.000000e+00 : f32
    %12 = vector.broadcast %cst_12 : f32 to vector<8x128xf32>
    %c0_13 = arith.constant 0 : index
    %c0_14 = arith.constant 0 : index
    %13 = vector.load %arg8[%c0_13, %c0_14] : memref<8x128xf32, #tpu.memory_space<vmem>>, vector<8x128xf32>
    tpu.vector_store %arg8[%c0_13, %c0_14], %12 {strides = array<i32>} : memref<8x128xf32, #tpu.memory_space<vmem>>, vector<8x128xf32>,
    %c0_i32 = arith.constant 0 : i32
    %14 = arith.index_cast %c0_i32 : i32 to index
    %c0_15 = arith.constant 0 : index
    %c0_16 = arith.constant 0 : index
    %15 = vector.load %arg6[%14, %c0_15, %c0_16] : memref<9x8x512xf32, #tpu.memory_space<vmem>>, vector<1x8x512xf32>
    %16 = vector.shape_cast %15 : vector<1x8x512xf32> to vector<8x512xf32>
    %c0_17 = arith.constant 0 : index
    %c0_18 = arith.constant 0 : index
    %17 = vector.load %arg7[%c0_17, %c0_18] : memref<8x128xf32, #tpu.memory_space<vmem>>, vector<8x128xf32>
    %18 = arith.truncf %17 : vector<8x128xf32> to vector<8x128xbf16>
    %c0_19 = arith.constant 0 : index
    %c0_20 = arith.constant 0 : index
    %19 = vector.load %arg3[%c0_19, %c0_20] : memref<128x512xbf16, #tpu.memory_space<vmem>>, vector<128x512xbf16>
    %cst_21 = arith.constant dense<0.000000e+00> : vector<8x512xf32>
    %20 = tpu.matmul %18, %19, %cst_21 {dimension_numbers = #tpu.dot_dimension_numbers<[1], [0], [0], [1], [0, 0, 1, 1], [], []>} : vector<8x128xbf16>, vector<128x512xbf16>, vector<8x512xf32> -> vector<8x512xf32>
    %21 = arith.addf %16, %20 : vector<8x512xf32>
    %22 = vector.extract_strided_slice %21 {offsets = [0, 0], sizes = [8, 128], strides = [1, 1]} : vector<8x512xf32> to vector<8x128xf32>
    %23 = arith.negf %22 : vector<8x128xf32>
    %24 = math.exp %23 : vector<8x128xf32>
    %cst_22 = arith.constant 1.000000e+00 : f32
    %25 = vector.broadcast %cst_22 : f32 to vector<8x128xf32>
    %26 = arith.addf %25, %24 : vector<8x128xf32>
    %27 = arith.divf %25, %26 : vector<8x128xf32>
    %28 = vector.extract_strided_slice %21 {offsets = [0, 128], sizes = [8, 128], strides = [1, 1]} : vector<8x512xf32> to vector<8x128xf32>
    %29 = arith.negf %28 : vector<8x128xf32>
    %30 = math.exp %29 : vector<8x128xf32>
    %cst_23 = arith.constant 1.000000e+00 : f32
    %31 = vector.broadcast %cst_23 : f32 to vector<8x128xf32>
    %32 = arith.addf %31, %30 : vector<8x128xf32>
    %33 = arith.divf %31, %32 : vector<8x128xf32>
    %34 = vector.extract_strided_slice %21 {offsets = [0, 256], sizes = [8, 128], strides = [1, 1]} : vector<8x512xf32> to vector<8x128xf32>
    %35 = math.tanh %34 : vector<8x128xf32>
    %36 = vector.extract_strided_slice %21 {offsets = [0, 384], sizes = [8, 128], strides = [1, 1]} : vector<8x512xf32> to vector<8x128xf32>
    %37 = arith.negf %36 : vector<8x128xf32>
    %38 = math.exp %37 : vector<8x128xf32>
    %cst_24 = arith.constant 1.000000e+00 : f32
    %39 = vector.broadcast %cst_24 : f32 to vector<8x128xf32>
    %40 = arith.addf %39, %38 : vector<8x128xf32>
    %41 = arith.divf %39, %40 : vector<8x128xf32>
    %c0_25 = arith.constant 0 : index
    %c0_26 = arith.constant 0 : index
    %42 = vector.load %arg8[%c0_25, %c0_26] : memref<8x128xf32, #tpu.memory_space<vmem>>, vector<8x128xf32>
    %43 = arith.mulf %33, %42 : vector<8x128xf32>
    %44 = arith.mulf %27, %35 : vector<8x128xf32>
    %45 = arith.addf %43, %44 : vector<8x128xf32>
    %46 = math.tanh %45 : vector<8x128xf32>
    %47 = arith.mulf %41, %46 : vector<8x128xf32>
    %c0_27 = arith.constant 0 : index
    %c0_28 = arith.constant 0 : index
    %48 = vector.load %arg8[%c0_27, %c0_28] : memref<8x128xf32, #tpu.memory_space<vmem>>, vector<8x128xf32>
    tpu.vector_store %arg8[%c0_27, %c0_28], %45 {strides = array<i32>} : memref<8x128xf32, #tpu.memory_space<vmem>>, vector<8x128xf32>,
    %c0_29 = arith.constant 0 : index
    %c0_30 = arith.constant 0 : index
    %49 = vector.load %arg7[%c0_29, %c0_30] : memref<8x128xf32, #tpu.memory_space<vmem>>, vector<8x128xf32>
    tpu.vector_store %arg7[%c0_29, %c0_30], %47 {strides = array<i32>} : memref<8x128xf32, #tpu.memory_space<vmem>>, vector<8x128xf32>,
    %50 = arith.truncf %47 : vector<8x128xf32> to vector<8x128xbf16>
    %51 = arith.index_cast %c0_i32 : i32 to index
    %c0_31 = arith.constant 0 : index
    %c0_32 = arith.constant 0 : index
    %52 = vector.load %arg5[%51, %c0_31, %c0_32] : memref<9x8x128xbf16, #tpu.memory_space<vmem>>, vector<1x8x128xbf16>
    %53 = vector.shape_cast %52 : vector<1x8x128xbf16> to vector<8x128xbf16>
    %54 = vector.shape_cast %50 : vector<8x128xbf16> to vector<1x8x128xbf16>
    tpu.vector_store %arg5[%51, %c0_31, %c0_32], %54 {strides = array<i32>} : memref<9x8x128xbf16, #tpu.memory_space<vmem>>, vector<1x8x128xbf16>,
    %c1_i32 = arith.constant 1 : i32
    %55 = arith.index_cast %c1_i32 : i32 to index
    %c0_33 = arith.constant 0 : index
    %c0_34 = arith.constant 0 : index
    %56 = vector.load %arg6[%55, %c0_33, %c0_34] : memref<9x8x512xf32, #tpu.memory_space<vmem>>, vector<1x8x512xf32>
    %57 = vector.shape_cast %56 : vector<1x8x512xf32> to vector<8x512xf32>
    %c0_35 = arith.constant 0 : index
    %c0_36 = arith.constant 0 : index
    %58 = vector.load %arg7[%c0_35, %c0_36] : memref<8x128xf32, #tpu.memory_space<vmem>>, vector<8x128xf32>
    %59 = arith.truncf %58 : vector<8x128xf32> to vector<8x128xbf16>
    %c0_37 = arith.constant 0 : index
    %c0_38 = arith.constant 0 : index
    %60 = vector.load %arg3[%c0_37, %c0_38] : memref<128x512xbf16, #tpu.memory_space<vmem>>, vector<128x512xbf16>
    %cst_39 = arith.constant dense<0.000000e+00> : vector<8x512xf32>
    %61 = tpu.matmul %59, %60, %cst_39 {dimension_numbers = #tpu.dot_dimension_numbers<[1], [0], [0], [1], [0, 0, 1, 1], [], []>} : vector<8x128xbf16>, vector<128x512xbf16>, vector<8x512xf32> -> vector<8x512xf32>
    %62 = arith.addf %57, %61 : vector<8x512xf32>
    %63 = vector.extract_strided_slice %62 {offsets = [0, 0], sizes = [8, 128], strides = [1, 1]} : vector<8x512xf32> to vector<8x128xf32>
    %64 = arith.negf %63 : vector<8x128xf32>
    %65 = math.exp %64 : vector<8x128xf32>
    %cst_40 = arith.constant 1.000000e+00 : f32
    %66 = vector.broadcast %cst_40 : f32 to vector<8x128xf32>
    %67 = arith.addf %66, %65 : vector<8x128xf32>
    %68 = arith.divf %66, %67 : vector<8x128xf32>
    %69 = vector.extract_strided_slice %62 {offsets = [0, 128], sizes = [8, 128], strides = [1, 1]} : vector<8x512xf32> to vector<8x128xf32>
    %70 = arith.negf %69 : vector<8x128xf32>
    %71 = math.exp %70 : vector<8x128xf32>
    %cst_41 = arith.constant 1.000000e+00 : f32
    %72 = vector.broadcast %cst_41 : f32 to vector<8x128xf32>
    %73 = arith.addf %72, %71 : vector<8x128xf32>
    %74 = arith.divf %72, %73 : vector<8x128xf32>
    %75 = vector.extract_strided_slice %62 {offsets = [0, 256], sizes = [8, 128], strides = [1, 1]} : vector<8x512xf32> to vector<8x128xf32>
    %76 = math.tanh %75 : vector<8x128xf32>
    %77 = vector.extract_strided_slice %62 {offsets = [0, 384], sizes = [8, 128], strides = [1, 1]} : vector<8x512xf32> to vector<8x128xf32>
    %78 = arith.negf %77 : vector<8x128xf32>
    %79 = math.exp %78 : vector<8x128xf32>
    %cst_42 = arith.constant 1.000000e+00 : f32
    %80 = vector.broadcast %cst_42 : f32 to vector<8x128xf32>
    %81 = arith.addf %80, %79 : vector<8x128xf32>
    %82 = arith.divf %80, %81 : vector<8x128xf32>
    %c0_43 = arith.constant 0 : index
    %c0_44 = arith.constant 0 : index
    %83 = vector.load %arg8[%c0_43, %c0_44] : memref<8x128xf32, #tpu.memory_space<vmem>>, vector<8x128xf32>
    %84 = arith.mulf %74, %83 : vector<8x128xf32>
    %85 = arith.mulf %68, %76 : vector<8x128xf32>
    %86 = arith.addf %84, %85 : vector<8x128xf32>
    %87 = math.tanh %86 : vector<8x128xf32>
    %88 = arith.mulf %82, %87 : vector<8x128xf32>
    %c0_45 = arith.constant 0 : index
    %c0_46 = arith.constant 0 : index
    %89 = vector.load %arg8[%c0_45, %c0_46] : memref<8x128xf32, #tpu.memory_space<vmem>>, vector<8x128xf32>
    tpu.vector_store %arg8[%c0_45, %c0_46], %86 {strides = array<i32>} : memref<8x128xf32, #tpu.memory_space<vmem>>, vector<8x128xf32>,
    %c0_47 = arith.constant 0 : index
    %c0_48 = arith.constant 0 : index
    %90 = vector.load %arg7[%c0_47, %c0_48] : memref<8x128xf32, #tpu.memory_space<vmem>>, vector<8x128xf32>
    tpu.vector_store %arg7[%c0_47, %c0_48], %88 {strides = array<i32>} : memref<8x128xf32, #tpu.memory_space<vmem>>, vector<8x128xf32>,
    %91 = arith.truncf %88 : vector<8x128xf32> to vector<8x128xbf16>
    %92 = arith.index_cast %c1_i32 : i32 to index
    %c0_49 = arith.constant 0 : index
    %c0_50 = arith.constant 0 : index
    %93 = vector.load %arg5[%92, %c0_49, %c0_50] : memref<9x8x128xbf16, #tpu.memory_space<vmem>>, vector<1x8x128xbf16>
    %94 = vector.shape_cast %93 : vector<1x8x128xbf16> to vector<8x128xbf16>
    %95 = vector.shape_cast %91 : vector<8x128xbf16> to vector<1x8x128xbf16>
    tpu.vector_store %arg5[%92, %c0_49, %c0_50], %95 {strides = array<i32>} : memref<9x8x128xbf16, #tpu.memory_space<vmem>>, vector<1x8x128xbf16>,
    %c2_i32 = arith.constant 2 : i32
    %96 = arith.index_cast %c2_i32 : i32 to index
    %c0_51 = arith.constant 0 : index
    %c0_52 = arith.constant 0 : index
    %97 = vector.load %arg6[%96, %c0_51, %c0_52] : memref<9x8x512xf32, #tpu.memory_space<vmem>>, vector<1x8x512xf32>
    %98 = vector.shape_cast %97 : vector<1x8x512xf32> to vector<8x512xf32>
    %c0_53 = arith.constant 0 : index
    %c0_54 = arith.constant 0 : index
    %99 = vector.load %arg7[%c0_53, %c0_54] : memref<8x128xf32, #tpu.memory_space<vmem>>, vector<8x128xf32>
    %100 = arith.truncf %99 : vector<8x128xf32> to vector<8x128xbf16>
    %c0_55 = arith.constant 0 : index
    %c0_56 = arith.constant 0 : index
    %101 = vector.load %arg3[%c0_55, %c0_56] : memref<128x512xbf16, #tpu.memory_space<vmem>>, vector<128x512xbf16>
    %cst_57 = arith.constant dense<0.000000e+00> : vector<8x512xf32>
    %102 = tpu.matmul %100, %101, %cst_57 {dimension_numbers = #tpu.dot_dimension_numbers<[1], [0], [0], [1], [0, 0, 1, 1], [], []>} : vector<8x128xbf16>, vector<128x512xbf16>, vector<8x512xf32> -> vector<8x512xf32>
    %103 = arith.addf %98, %102 : vector<8x512xf32>
    %104 = vector.extract_strided_slice %103 {offsets = [0, 0], sizes = [8, 128], strides = [1, 1]} : vector<8x512xf32> to vector<8x128xf32>
    %105 = arith.negf %104 : vector<8x128xf32>
    %106 = math.exp %105 : vector<8x128xf32>
    %cst_58 = arith.constant 1.000000e+00 : f32
    %107 = vector.broadcast %cst_58 : f32 to vector<8x128xf32>
    %108 = arith.addf %107, %106 : vector<8x128xf32>
    %109 = arith.divf %107, %108 : vector<8x128xf32>
    %110 = vector.extract_strided_slice %103 {offsets = [0, 128], sizes = [8, 128], strides = [1, 1]} : vector<8x512xf32> to vector<8x128xf32>
    %111 = arith.negf %110 : vector<8x128xf32>
    %112 = math.exp %111 : vector<8x128xf32>
    %cst_59 = arith.constant 1.000000e+00 : f32
    %113 = vector.broadcast %cst_59 : f32 to vector<8x128xf32>
    %114 = arith.addf %113, %112 : vector<8x128xf32>
    %115 = arith.divf %113, %114 : vector<8x128xf32>
    %116 = vector.extract_strided_slice %103 {offsets = [0, 256], sizes = [8, 128], strides = [1, 1]} : vector<8x512xf32> to vector<8x128xf32>
    %117 = math.tanh %116 : vector<8x128xf32>
    %118 = vector.extract_strided_slice %103 {offsets = [0, 384], sizes = [8, 128], strides = [1, 1]} : vector<8x512xf32> to vector<8x128xf32>
    %119 = arith.negf %118 : vector<8x128xf32>
    %120 = math.exp %119 : vector<8x128xf32>
    %cst_60 = arith.constant 1.000000e+00 : f32
    %121 = vector.broadcast %cst_60 : f32 to vector<8x128xf32>
    %122 = arith.addf %121, %120 : vector<8x128xf32>
    %123 = arith.divf %121, %122 : vector<8x128xf32>
    %c0_61 = arith.constant 0 : index
    %c0_62 = arith.constant 0 : index
    %124 = vector.load %arg8[%c0_61, %c0_62] : memref<8x128xf32, #tpu.memory_space<vmem>>, vector<8x128xf32>
    %125 = arith.mulf %115, %124 : vector<8x128xf32>
    %126 = arith.mulf %109, %117 : vector<8x128xf32>
    %127 = arith.addf %125, %126 : vector<8x128xf32>
    %128 = math.tanh %127 : vector<8x128xf32>
    %129 = arith.mulf %123, %128 : vector<8x128xf32>
    %c0_63 = arith.constant 0 : index
    %c0_64 = arith.constant 0 : index
    %130 = vector.load %arg8[%c0_63, %c0_64] : memref<8x128xf32, #tpu.memory_space<vmem>>, vector<8x128xf32>
    tpu.vector_store %arg8[%c0_63, %c0_64], %127 {strides = array<i32>} : memref<8x128xf32, #tpu.memory_space<vmem>>, vector<8x128xf32>,
    %c0_65 = arith.constant 0 : index
    %c0_66 = arith.constant 0 : index
    %131 = vector.load %arg7[%c0_65, %c0_66] : memref<8x128xf32, #tpu.memory_space<vmem>>, vector<8x128xf32>
    tpu.vector_store %arg7[%c0_65, %c0_66], %129 {strides = array<i32>} : memref<8x128xf32, #tpu.memory_space<vmem>>, vector<8x128xf32>,
    %132 = arith.truncf %129 : vector<8x128xf32> to vector<8x128xbf16>
    %133 = arith.index_cast %c2_i32 : i32 to index
    %c0_67 = arith.constant 0 : index
    %c0_68 = arith.constant 0 : index
    %134 = vector.load %arg5[%133, %c0_67, %c0_68] : memref<9x8x128xbf16, #tpu.memory_space<vmem>>, vector<1x8x128xbf16>
    %135 = vector.shape_cast %134 : vector<1x8x128xbf16> to vector<8x128xbf16>
    %136 = vector.shape_cast %132 : vector<8x128xbf16> to vector<1x8x128xbf16>
    tpu.vector_store %arg5[%133, %c0_67, %c0_68], %136 {strides = array<i32>} : memref<9x8x128xbf16, #tpu.memory_space<vmem>>, vector<1x8x128xbf16>,
    %c3_i32 = arith.constant 3 : i32
    %137 = arith.index_cast %c3_i32 : i32 to index
    %c0_69 = arith.constant 0 : index
    %c0_70 = arith.constant 0 : index
    %138 = vector.load %arg6[%137, %c0_69, %c0_70] : memref<9x8x512xf32, #tpu.memory_space<vmem>>, vector<1x8x512xf32>
    %139 = vector.shape_cast %138 : vector<1x8x512xf32> to vector<8x512xf32>
    %c0_71 = arith.constant 0 : index
    %c0_72 = arith.constant 0 : index
    %140 = vector.load %arg7[%c0_71, %c0_72] : memref<8x128xf32, #tpu.memory_space<vmem>>, vector<8x128xf32>
    %141 = arith.truncf %140 : vector<8x128xf32> to vector<8x128xbf16>
    %c0_73 = arith.constant 0 : index
    %c0_74 = arith.constant 0 : index
    %142 = vector.load %arg3[%c0_73, %c0_74] : memref<128x512xbf16, #tpu.memory_space<vmem>>, vector<128x512xbf16>
    %cst_75 = arith.constant dense<0.000000e+00> : vector<8x512xf32>
    %143 = tpu.matmul %141, %142, %cst_75 {dimension_numbers = #tpu.dot_dimension_numbers<[1], [0], [0], [1], [0, 0, 1, 1], [], []>} : vector<8x128xbf16>, vector<128x512xbf16>, vector<8x512xf32> -> vector<8x512xf32>
    %144 = arith.addf %139, %143 : vector<8x512xf32>
    %145 = vector.extract_strided_slice %144 {offsets = [0, 0], sizes = [8, 128], strides = [1, 1]} : vector<8x512xf32> to vector<8x128xf32>
    %146 = arith.negf %145 : vector<8x128xf32>
    %147 = math.exp %146 : vector<8x128xf32>
    %cst_76 = arith.constant 1.000000e+00 : f32
    %148 = vector.broadcast %cst_76 : f32 to vector<8x128xf32>
    %149 = arith.addf %148, %147 : vector<8x128xf32>
    %150 = arith.divf %148, %149 : vector<8x128xf32>
    %151 = vector.extract_strided_slice %144 {offsets = [0, 128], sizes = [8, 128], strides = [1, 1]} : vector<8x512xf32> to vector<8x128xf32>
    %152 = arith.negf %151 : vector<8x128xf32>
    %153 = math.exp %152 : vector<8x128xf32>
    %cst_77 = arith.constant 1.000000e+00 : f32
    %154 = vector.broadcast %cst_77 : f32 to vector<8x128xf32>
    %155 = arith.addf %154, %153 : vector<8x128xf32>
    %156 = arith.divf %154, %155 : vector<8x128xf32>
    %157 = vector.extract_strided_slice %144 {offsets = [0, 256], sizes = [8, 128], strides = [1, 1]} : vector<8x512xf32> to vector<8x128xf32>
    %158 = math.tanh %157 : vector<8x128xf32>
    %159 = vector.extract_strided_slice %144 {offsets = [0, 384], sizes = [8, 128], strides = [1, 1]} : vector<8x512xf32> to vector<8x128xf32>
    %160 = arith.negf %159 : vector<8x128xf32>
    %161 = math.exp %160 : vector<8x128xf32>
    %cst_78 = arith.constant 1.000000e+00 : f32
    %162 = vector.broadcast %cst_78 : f32 to vector<8x128xf32>
    %163 = arith.addf %162, %161 : vector<8x128xf32>
    %164 = arith.divf %162, %163 : vector<8x128xf32>
    %c0_79 = arith.constant 0 : index
    %c0_80 = arith.constant 0 : index
    %165 = vector.load %arg8[%c0_79, %c0_80] : memref<8x128xf32, #tpu.memory_space<vmem>>, vector<8x128xf32>
    %166 = arith.mulf %156, %165 : vector<8x128xf32>
    %167 = arith.mulf %150, %158 : vector<8x128xf32>
    %168 = arith.addf %166, %167 : vector<8x128xf32>
    %169 = math.tanh %168 : vector<8x128xf32>
    %170 = arith.mulf %164, %169 : vector<8x128xf32>
    %c0_81 = arith.constant 0 : index
    %c0_82 = arith.constant 0 : index
    %171 = vector.load %arg8[%c0_81, %c0_82] : memref<8x128xf32, #tpu.memory_space<vmem>>, vector<8x128xf32>
    tpu.vector_store %arg8[%c0_81, %c0_82], %168 {strides = array<i32>} : memref<8x128xf32, #tpu.memory_space<vmem>>, vector<8x128xf32>,
    %c0_83 = arith.constant 0 : index
    %c0_84 = arith.constant 0 : index
    %172 = vector.load %arg7[%c0_83, %c0_84] : memref<8x128xf32, #tpu.memory_space<vmem>>, vector<8x128xf32>
    tpu.vector_store %arg7[%c0_83, %c0_84], %170 {strides = array<i32>} : memref<8x128xf32, #tpu.memory_space<vmem>>, vector<8x128xf32>,
    %173 = arith.truncf %170 : vector<8x128xf32> to vector<8x128xbf16>
    %174 = arith.index_cast %c3_i32 : i32 to index
    %c0_85 = arith.constant 0 : index
    %c0_86 = arith.constant 0 : index
    %175 = vector.load %arg5[%174, %c0_85, %c0_86] : memref<9x8x128xbf16, #tpu.memory_space<vmem>>, vector<1x8x128xbf16>
    %176 = vector.shape_cast %175 : vector<1x8x128xbf16> to vector<8x128xbf16>
    %177 = vector.shape_cast %173 : vector<8x128xbf16> to vector<1x8x128xbf16>
    tpu.vector_store %arg5[%174, %c0_85, %c0_86], %177 {strides = array<i32>} : memref<9x8x128xbf16, #tpu.memory_space<vmem>>, vector<1x8x128xbf16>,
    %c4_i32 = arith.constant 4 : i32
    %178 = arith.index_cast %c4_i32 : i32 to index
    %c0_87 = arith.constant 0 : index
    %c0_88 = arith.constant 0 : index
    %179 = vector.load %arg6[%178, %c0_87, %c0_88] : memref<9x8x512xf32, #tpu.memory_space<vmem>>, vector<1x8x512xf32>
    %180 = vector.shape_cast %179 : vector<1x8x512xf32> to vector<8x512xf32>
    %c0_89 = arith.constant 0 : index
    %c0_90 = arith.constant 0 : index
    %181 = vector.load %arg7[%c0_89, %c0_90] : memref<8x128xf32, #tpu.memory_space<vmem>>, vector<8x128xf32>
    %182 = arith.truncf %181 : vector<8x128xf32> to vector<8x128xbf16>
    %c0_91 = arith.constant 0 : index
    %c0_92 = arith.constant 0 : index
    %183 = vector.load %arg3[%c0_91, %c0_92] : memref<128x512xbf16, #tpu.memory_space<vmem>>, vector<128x512xbf16>
    %cst_93 = arith.constant dense<0.000000e+00> : vector<8x512xf32>
    %184 = tpu.matmul %182, %183, %cst_93 {dimension_numbers = #tpu.dot_dimension_numbers<[1], [0], [0], [1], [0, 0, 1, 1], [], []>} : vector<8x128xbf16>, vector<128x512xbf16>, vector<8x512xf32> -> vector<8x512xf32>
    %185 = arith.addf %180, %184 : vector<8x512xf32>
    %186 = vector.extract_strided_slice %185 {offsets = [0, 0], sizes = [8, 128], strides = [1, 1]} : vector<8x512xf32> to vector<8x128xf32>
    %187 = arith.negf %186 : vector<8x128xf32>
    %188 = math.exp %187 : vector<8x128xf32>
    %cst_94 = arith.constant 1.000000e+00 : f32
    %189 = vector.broadcast %cst_94 : f32 to vector<8x128xf32>
    %190 = arith.addf %189, %188 : vector<8x128xf32>
    %191 = arith.divf %189, %190 : vector<8x128xf32>
    %192 = vector.extract_strided_slice %185 {offsets = [0, 128], sizes = [8, 128], strides = [1, 1]} : vector<8x512xf32> to vector<8x128xf32>
    %193 = arith.negf %192 : vector<8x128xf32>
    %194 = math.exp %193 : vector<8x128xf32>
    %cst_95 = arith.constant 1.000000e+00 : f32
    %195 = vector.broadcast %cst_95 : f32 to vector<8x128xf32>
    %196 = arith.addf %195, %194 : vector<8x128xf32>
    %197 = arith.divf %195, %196 : vector<8x128xf32>
    %198 = vector.extract_strided_slice %185 {offsets = [0, 256], sizes = [8, 128], strides = [1, 1]} : vector<8x512xf32> to vector<8x128xf32>
    %199 = math.tanh %198 : vector<8x128xf32>
    %200 = vector.extract_strided_slice %185 {offsets = [0, 384], sizes = [8, 128], strides = [1, 1]} : vector<8x512xf32> to vector<8x128xf32>
    %201 = arith.negf %200 : vector<8x128xf32>
    %202 = math.exp %201 : vector<8x128xf32>
    %cst_96 = arith.constant 1.000000e+00 : f32
    %203 = vector.broadcast %cst_96 : f32 to vector<8x128xf32>
    %204 = arith.addf %203, %202 : vector<8x128xf32>
    %205 = arith.divf %203, %204 : vector<8x128xf32>
    %c0_97 = arith.constant 0 : index
    %c0_98 = arith.constant 0 : index
    %206 = vector.load %arg8[%c0_97, %c0_98] : memref<8x128xf32, #tpu.memory_space<vmem>>, vector<8x128xf32>
    %207 = arith.mulf %197, %206 : vector<8x128xf32>
    %208 = arith.mulf %191, %199 : vector<8x128xf32>
    %209 = arith.addf %207, %208 : vector<8x128xf32>
    %210 = math.tanh %209 : vector<8x128xf32>
    %211 = arith.mulf %205, %210 : vector<8x128xf32>
    %c0_99 = arith.constant 0 : index
    %c0_100 = arith.constant 0 : index
    %212 = vector.load %arg8[%c0_99, %c0_100] : memref<8x128xf32, #tpu.memory_space<vmem>>, vector<8x128xf32>
    tpu.vector_store %arg8[%c0_99, %c0_100], %209 {strides = array<i32>} : memref<8x128xf32, #tpu.memory_space<vmem>>, vector<8x128xf32>,
    %c0_101 = arith.constant 0 : index
    %c0_102 = arith.constant 0 : index
    %213 = vector.load %arg7[%c0_101, %c0_102] : memref<8x128xf32, #tpu.memory_space<vmem>>, vector<8x128xf32>
    tpu.vector_store %arg7[%c0_101, %c0_102], %211 {strides = array<i32>} : memref<8x128xf32, #tpu.memory_space<vmem>>, vector<8x128xf32>,
    %214 = arith.truncf %211 : vector<8x128xf32> to vector<8x128xbf16>
    %215 = arith.index_cast %c4_i32 : i32 to index
    %c0_103 = arith.constant 0 : index
    %c0_104 = arith.constant 0 : index
    %216 = vector.load %arg5[%215, %c0_103, %c0_104] : memref<9x8x128xbf16, #tpu.memory_space<vmem>>, vector<1x8x128xbf16>
    %217 = vector.shape_cast %216 : vector<1x8x128xbf16> to vector<8x128xbf16>
    %218 = vector.shape_cast %214 : vector<8x128xbf16> to vector<1x8x128xbf16>
    tpu.vector_store %arg5[%215, %c0_103, %c0_104], %218 {strides = array<i32>} : memref<9x8x128xbf16, #tpu.memory_space<vmem>>, vector<1x8x128xbf16>,
    %c5_i32 = arith.constant 5 : i32
    %219 = arith.index_cast %c5_i32 : i32 to index
    %c0_105 = arith.constant 0 : index
    %c0_106 = arith.constant 0 : index
    %220 = vector.load %arg6[%219, %c0_105, %c0_106] : memref<9x8x512xf32, #tpu.memory_space<vmem>>, vector<1x8x512xf32>
    %221 = vector.shape_cast %220 : vector<1x8x512xf32> to vector<8x512xf32>
    %c0_107 = arith.constant 0 : index
    %c0_108 = arith.constant 0 : index
    %222 = vector.load %arg7[%c0_107, %c0_108] : memref<8x128xf32, #tpu.memory_space<vmem>>, vector<8x128xf32>
    %223 = arith.truncf %222 : vector<8x128xf32> to vector<8x128xbf16>
    %c0_109 = arith.constant 0 : index
    %c0_110 = arith.constant 0 : index
    %224 = vector.load %arg3[%c0_109, %c0_110] : memref<128x512xbf16, #tpu.memory_space<vmem>>, vector<128x512xbf16>
    %cst_111 = arith.constant dense<0.000000e+00> : vector<8x512xf32>
    %225 = tpu.matmul %223, %224, %cst_111 {dimension_numbers = #tpu.dot_dimension_numbers<[1], [0], [0], [1], [0, 0, 1, 1], [], []>} : vector<8x128xbf16>, vector<128x512xbf16>, vector<8x512xf32> -> vector<8x512xf32>
    %226 = arith.addf %221, %225 : vector<8x512xf32>
    %227 = vector.extract_strided_slice %226 {offsets = [0, 0], sizes = [8, 128], strides = [1, 1]} : vector<8x512xf32> to vector<8x128xf32>
    %228 = arith.negf %227 : vector<8x128xf32>
    %229 = math.exp %228 : vector<8x128xf32>
    %cst_112 = arith.constant 1.000000e+00 : f32
    %230 = vector.broadcast %cst_112 : f32 to vector<8x128xf32>
    %231 = arith.addf %230, %229 : vector<8x128xf32>
    %232 = arith.divf %230, %231 : vector<8x128xf32>
    %233 = vector.extract_strided_slice %226 {offsets = [0, 128], sizes = [8, 128], strides = [1, 1]} : vector<8x512xf32> to vector<8x128xf32>
    %234 = arith.negf %233 : vector<8x128xf32>
    %235 = math.exp %234 : vector<8x128xf32>
    %cst_113 = arith.constant 1.000000e+00 : f32
    %236 = vector.broadcast %cst_113 : f32 to vector<8x128xf32>
    %237 = arith.addf %236, %235 : vector<8x128xf32>
    %238 = arith.divf %236, %237 : vector<8x128xf32>
    %239 = vector.extract_strided_slice %226 {offsets = [0, 256], sizes = [8, 128], strides = [1, 1]} : vector<8x512xf32> to vector<8x128xf32>
    %240 = math.tanh %239 : vector<8x128xf32>
    %241 = vector.extract_strided_slice %226 {offsets = [0, 384], sizes = [8, 128], strides = [1, 1]} : vector<8x512xf32> to vector<8x128xf32>
    %242 = arith.negf %241 : vector<8x128xf32>
    %243 = math.exp %242 : vector<8x128xf32>
    %cst_114 = arith.constant 1.000000e+00 : f32
    %244 = vector.broadcast %cst_114 : f32 to vector<8x128xf32>
    %245 = arith.addf %244, %243 : vector<8x128xf32>
    %246 = arith.divf %244, %245 : vector<8x128xf32>
    %c0_115 = arith.constant 0 : index
    %c0_116 = arith.constant 0 : index
    %247 = vector.load %arg8[%c0_115, %c0_116] : memref<8x128xf32, #tpu.memory_space<vmem>>, vector<8x128xf32>
    %248 = arith.mulf %238, %247 : vector<8x128xf32>
    %249 = arith.mulf %232, %240 : vector<8x128xf32>
    %250 = arith.addf %248, %249 : vector<8x128xf32>
    %251 = math.tanh %250 : vector<8x128xf32>
    %252 = arith.mulf %246, %251 : vector<8x128xf32>
    %c0_117 = arith.constant 0 : index
    %c0_118 = arith.constant 0 : index
    %253 = vector.load %arg8[%c0_117, %c0_118] : memref<8x128xf32, #tpu.memory_space<vmem>>, vector<8x128xf32>
    tpu.vector_store %arg8[%c0_117, %c0_118], %250 {strides = array<i32>} : memref<8x128xf32, #tpu.memory_space<vmem>>, vector<8x128xf32>,
    %c0_119 = arith.constant 0 : index
    %c0_120 = arith.constant 0 : index
    %254 = vector.load %arg7[%c0_119, %c0_120] : memref<8x128xf32, #tpu.memory_space<vmem>>, vector<8x128xf32>
    tpu.vector_store %arg7[%c0_119, %c0_120], %252 {strides = array<i32>} : memref<8x128xf32, #tpu.memory_space<vmem>>, vector<8x128xf32>,
    %255 = arith.truncf %252 : vector<8x128xf32> to vector<8x128xbf16>
    %256 = arith.index_cast %c5_i32 : i32 to index
    %c0_121 = arith.constant 0 : index
    %c0_122 = arith.constant 0 : index
    %257 = vector.load %arg5[%256, %c0_121, %c0_122] : memref<9x8x128xbf16, #tpu.memory_space<vmem>>, vector<1x8x128xbf16>
    %258 = vector.shape_cast %257 : vector<1x8x128xbf16> to vector<8x128xbf16>
    %259 = vector.shape_cast %255 : vector<8x128xbf16> to vector<1x8x128xbf16>
    tpu.vector_store %arg5[%256, %c0_121, %c0_122], %259 {strides = array<i32>} : memref<9x8x128xbf16, #tpu.memory_space<vmem>>, vector<1x8x128xbf16>,
    %c6_i32 = arith.constant 6 : i32
    %260 = arith.index_cast %c6_i32 : i32 to index
    %c0_123 = arith.constant 0 : index
    %c0_124 = arith.constant 0 : index
    %261 = vector.load %arg6[%260, %c0_123, %c0_124] : memref<9x8x512xf32, #tpu.memory_space<vmem>>, vector<1x8x512xf32>
    %262 = vector.shape_cast %261 : vector<1x8x512xf32> to vector<8x512xf32>
    %c0_125 = arith.constant 0 : index
    %c0_126 = arith.constant 0 : index
    %263 = vector.load %arg7[%c0_125, %c0_126] : memref<8x128xf32, #tpu.memory_space<vmem>>, vector<8x128xf32>
    %264 = arith.truncf %263 : vector<8x128xf32> to vector<8x128xbf16>
    %c0_127 = arith.constant 0 : index
    %c0_128 = arith.constant 0 : index
    %265 = vector.load %arg3[%c0_127, %c0_128] : memref<128x512xbf16, #tpu.memory_space<vmem>>, vector<128x512xbf16>
    %cst_129 = arith.constant dense<0.000000e+00> : vector<8x512xf32>
    %266 = tpu.matmul %264, %265, %cst_129 {dimension_numbers = #tpu.dot_dimension_numbers<[1], [0], [0], [1], [0, 0, 1, 1], [], []>} : vector<8x128xbf16>, vector<128x512xbf16>, vector<8x512xf32> -> vector<8x512xf32>
    %267 = arith.addf %262, %266 : vector<8x512xf32>
    %268 = vector.extract_strided_slice %267 {offsets = [0, 0], sizes = [8, 128], strides = [1, 1]} : vector<8x512xf32> to vector<8x128xf32>
    %269 = arith.negf %268 : vector<8x128xf32>
    %270 = math.exp %269 : vector<8x128xf32>
    %cst_130 = arith.constant 1.000000e+00 : f32
    %271 = vector.broadcast %cst_130 : f32 to vector<8x128xf32>
    %272 = arith.addf %271, %270 : vector<8x128xf32>
    %273 = arith.divf %271, %272 : vector<8x128xf32>
    %274 = vector.extract_strided_slice %267 {offsets = [0, 128], sizes = [8, 128], strides = [1, 1]} : vector<8x512xf32> to vector<8x128xf32>
    %275 = arith.negf %274 : vector<8x128xf32>
    %276 = math.exp %275 : vector<8x128xf32>
    %cst_131 = arith.constant 1.000000e+00 : f32
    %277 = vector.broadcast %cst_131 : f32 to vector<8x128xf32>
    %278 = arith.addf %277, %276 : vector<8x128xf32>
    %279 = arith.divf %277, %278 : vector<8x128xf32>
    %280 = vector.extract_strided_slice %267 {offsets = [0, 256], sizes = [8, 128], strides = [1, 1]} : vector<8x512xf32> to vector<8x128xf32>
    %281 = math.tanh %280 : vector<8x128xf32>
    %282 = vector.extract_strided_slice %267 {offsets = [0, 384], sizes = [8, 128], strides = [1, 1]} : vector<8x512xf32> to vector<8x128xf32>
    %283 = arith.negf %282 : vector<8x128xf32>
    %284 = math.exp %283 : vector<8x128xf32>
    %cst_132 = arith.constant 1.000000e+00 : f32
    %285 = vector.broadcast %cst_132 : f32 to vector<8x128xf32>
    %286 = arith.addf %285, %284 : vector<8x128xf32>
    %287 = arith.divf %285, %286 : vector<8x128xf32>
    %c0_133 = arith.constant 0 : index
    %c0_134 = arith.constant 0 : index
    %288 = vector.load %arg8[%c0_133, %c0_134] : memref<8x128xf32, #tpu.memory_space<vmem>>, vector<8x128xf32>
    %289 = arith.mulf %279, %288 : vector<8x128xf32>
    %290 = arith.mulf %273, %281 : vector<8x128xf32>
    %291 = arith.addf %289, %290 : vector<8x128xf32>
    %292 = math.tanh %291 : vector<8x128xf32>
    %293 = arith.mulf %287, %292 : vector<8x128xf32>
    %c0_135 = arith.constant 0 : index
    %c0_136 = arith.constant 0 : index
    %294 = vector.load %arg8[%c0_135, %c0_136] : memref<8x128xf32, #tpu.memory_space<vmem>>, vector<8x128xf32>
    tpu.vector_store %arg8[%c0_135, %c0_136], %291 {strides = array<i32>} : memref<8x128xf32, #tpu.memory_space<vmem>>, vector<8x128xf32>,
    %c0_137 = arith.constant 0 : index
    %c0_138 = arith.constant 0 : index
    %295 = vector.load %arg7[%c0_137, %c0_138] : memref<8x128xf32, #tpu.memory_space<vmem>>, vector<8x128xf32>
    tpu.vector_store %arg7[%c0_137, %c0_138], %293 {strides = array<i32>} : memref<8x128xf32, #tpu.memory_space<vmem>>, vector<8x128xf32>,
    %296 = arith.truncf %293 : vector<8x128xf32> to vector<8x128xbf16>
    %297 = arith.index_cast %c6_i32 : i32 to index
    %c0_139 = arith.constant 0 : index
    %c0_140 = arith.constant 0 : index
    %298 = vector.load %arg5[%297, %c0_139, %c0_140] : memref<9x8x128xbf16, #tpu.memory_space<vmem>>, vector<1x8x128xbf16>
    %299 = vector.shape_cast %298 : vector<1x8x128xbf16> to vector<8x128xbf16>
    %300 = vector.shape_cast %296 : vector<8x128xbf16> to vector<1x8x128xbf16>
    tpu.vector_store %arg5[%297, %c0_139, %c0_140], %300 {strides = array<i32>} : memref<9x8x128xbf16, #tpu.memory_space<vmem>>, vector<1x8x128xbf16>,
    %c7_i32 = arith.constant 7 : i32
    %301 = arith.index_cast %c7_i32 : i32 to index
    %c0_141 = arith.constant 0 : index
    %c0_142 = arith.constant 0 : index
    %302 = vector.load %arg6[%301, %c0_141, %c0_142] : memref<9x8x512xf32, #tpu.memory_space<vmem>>, vector<1x8x512xf32>
    %303 = vector.shape_cast %302 : vector<1x8x512xf32> to vector<8x512xf32>
    %c0_143 = arith.constant 0 : index
    %c0_144 = arith.constant 0 : index
    %304 = vector.load %arg7[%c0_143, %c0_144] : memref<8x128xf32, #tpu.memory_space<vmem>>, vector<8x128xf32>
    %305 = arith.truncf %304 : vector<8x128xf32> to vector<8x128xbf16>
    %c0_145 = arith.constant 0 : index
    %c0_146 = arith.constant 0 : index
    %306 = vector.load %arg3[%c0_145, %c0_146] : memref<128x512xbf16, #tpu.memory_space<vmem>>, vector<128x512xbf16>
    %cst_147 = arith.constant dense<0.000000e+00> : vector<8x512xf32>
    %307 = tpu.matmul %305, %306, %cst_147 {dimension_numbers = #tpu.dot_dimension_numbers<[1], [0], [0], [1], [0, 0, 1, 1], [], []>} : vector<8x128xbf16>, vector<128x512xbf16>, vector<8x512xf32> -> vector<8x512xf32>
    %308 = arith.addf %303, %307 : vector<8x512xf32>
    %309 = vector.extract_strided_slice %308 {offsets = [0, 0], sizes = [8, 128], strides = [1, 1]} : vector<8x512xf32> to vector<8x128xf32>
    %310 = arith.negf %309 : vector<8x128xf32>
    %311 = math.exp %310 : vector<8x128xf32>
    %cst_148 = arith.constant 1.000000e+00 : f32
    %312 = vector.broadcast %cst_148 : f32 to vector<8x128xf32>
    %313 = arith.addf %312, %311 : vector<8x128xf32>
    %314 = arith.divf %312, %313 : vector<8x128xf32>
    %315 = vector.extract_strided_slice %308 {offsets = [0, 128], sizes = [8, 128], strides = [1, 1]} : vector<8x512xf32> to vector<8x128xf32>
    %316 = arith.negf %315 : vector<8x128xf32>
    %317 = math.exp %316 : vector<8x128xf32>
    %cst_149 = arith.constant 1.000000e+00 : f32
    %318 = vector.broadcast %cst_149 : f32 to vector<8x128xf32>
    %319 = arith.addf %318, %317 : vector<8x128xf32>
    %320 = arith.divf %318, %319 : vector<8x128xf32>
    %321 = vector.extract_strided_slice %308 {offsets = [0, 256], sizes = [8, 128], strides = [1, 1]} : vector<8x512xf32> to vector<8x128xf32>
    %322 = math.tanh %321 : vector<8x128xf32>
    %323 = vector.extract_strided_slice %308 {offsets = [0, 384], sizes = [8, 128], strides = [1, 1]} : vector<8x512xf32> to vector<8x128xf32>
    %324 = arith.negf %323 : vector<8x128xf32>
    %325 = math.exp %324 : vector<8x128xf32>
    %cst_150 = arith.constant 1.000000e+00 : f32
    %326 = vector.broadcast %cst_150 : f32 to vector<8x128xf32>
    %327 = arith.addf %326, %325 : vector<8x128xf32>
    %328 = arith.divf %326, %327 : vector<8x128xf32>
    %c0_151 = arith.constant 0 : index
    %c0_152 = arith.constant 0 : index
    %329 = vector.load %arg8[%c0_151, %c0_152] : memref<8x128xf32, #tpu.memory_space<vmem>>, vector<8x128xf32>
    %330 = arith.mulf %320, %329 : vector<8x128xf32>
    %331 = arith.mulf %314, %322 : vector<8x128xf32>
    %332 = arith.addf %330, %331 : vector<8x128xf32>
    %333 = math.tanh %332 : vector<8x128xf32>
    %334 = arith.mulf %328, %333 : vector<8x128xf32>
    %c0_153 = arith.constant 0 : index
    %c0_154 = arith.constant 0 : index
    %335 = vector.load %arg8[%c0_153, %c0_154] : memref<8x128xf32, #tpu.memory_space<vmem>>, vector<8x128xf32>
    tpu.vector_store %arg8[%c0_153, %c0_154], %332 {strides = array<i32>} : memref<8x128xf32, #tpu.memory_space<vmem>>, vector<8x128xf32>,
    %c0_155 = arith.constant 0 : index
    %c0_156 = arith.constant 0 : index
    %336 = vector.load %arg7[%c0_155, %c0_156] : memref<8x128xf32, #tpu.memory_space<vmem>>, vector<8x128xf32>
    tpu.vector_store %arg7[%c0_155, %c0_156], %334 {strides = array<i32>} : memref<8x128xf32, #tpu.memory_space<vmem>>, vector<8x128xf32>,
    %337 = arith.truncf %334 : vector<8x128xf32> to vector<8x128xbf16>
    %338 = arith.index_cast %c7_i32 : i32 to index
    %c0_157 = arith.constant 0 : index
    %c0_158 = arith.constant 0 : index
    %339 = vector.load %arg5[%338, %c0_157, %c0_158] : memref<9x8x128xbf16, #tpu.memory_space<vmem>>, vector<1x8x128xbf16>
    %340 = vector.shape_cast %339 : vector<1x8x128xbf16> to vector<8x128xbf16>
    %341 = vector.shape_cast %337 : vector<8x128xbf16> to vector<1x8x128xbf16>
    tpu.vector_store %arg5[%338, %c0_157, %c0_158], %341 {strides = array<i32>} : memref<9x8x128xbf16, #tpu.memory_space<vmem>>, vector<1x8x128xbf16>,
    %c8_i32 = arith.constant 8 : i32
    %342 = arith.index_cast %c8_i32 : i32 to index
    %c0_159 = arith.constant 0 : index
    %c0_160 = arith.constant 0 : index
    %343 = vector.load %arg6[%342, %c0_159, %c0_160] : memref<9x8x512xf32, #tpu.memory_space<vmem>>, vector<1x8x512xf32>
    %344 = vector.shape_cast %343 : vector<1x8x512xf32> to vector<8x512xf32>
    %c0_161 = arith.constant 0 : index
    %c0_162 = arith.constant 0 : index
    %345 = vector.load %arg7[%c0_161, %c0_162] : memref<8x128xf32, #tpu.memory_space<vmem>>, vector<8x128xf32>
    %346 = arith.truncf %345 : vector<8x128xf32> to vector<8x128xbf16>
    %c0_163 = arith.constant 0 : index
    %c0_164 = arith.constant 0 : index
    %347 = vector.load %arg3[%c0_163, %c0_164] : memref<128x512xbf16, #tpu.memory_space<vmem>>, vector<128x512xbf16>
    %cst_165 = arith.constant dense<0.000000e+00> : vector<8x512xf32>
    %348 = tpu.matmul %346, %347, %cst_165 {dimension_numbers = #tpu.dot_dimension_numbers<[1], [0], [0], [1], [0, 0, 1, 1], [], []>} : vector<8x128xbf16>, vector<128x512xbf16>, vector<8x512xf32> -> vector<8x512xf32>
    %349 = arith.addf %344, %348 : vector<8x512xf32>
    %350 = vector.extract_strided_slice %349 {offsets = [0, 0], sizes = [8, 128], strides = [1, 1]} : vector<8x512xf32> to vector<8x128xf32>
    %351 = arith.negf %350 : vector<8x128xf32>
    %352 = math.exp %351 : vector<8x128xf32>
    %cst_166 = arith.constant 1.000000e+00 : f32
    %353 = vector.broadcast %cst_166 : f32 to vector<8x128xf32>
    %354 = arith.addf %353, %352 : vector<8x128xf32>
    %355 = arith.divf %353, %354 : vector<8x128xf32>
    %356 = vector.extract_strided_slice %349 {offsets = [0, 128], sizes = [8, 128], strides = [1, 1]} : vector<8x512xf32> to vector<8x128xf32>
    %357 = arith.negf %356 : vector<8x128xf32>
    %358 = math.exp %357 : vector<8x128xf32>
    %cst_167 = arith.constant 1.000000e+00 : f32
    %359 = vector.broadcast %cst_167 : f32 to vector<8x128xf32>
    %360 = arith.addf %359, %358 : vector<8x128xf32>
    %361 = arith.divf %359, %360 : vector<8x128xf32>
    %362 = vector.extract_strided_slice %349 {offsets = [0, 256], sizes = [8, 128], strides = [1, 1]} : vector<8x512xf32> to vector<8x128xf32>
    %363 = math.tanh %362 : vector<8x128xf32>
    %364 = vector.extract_strided_slice %349 {offsets = [0, 384], sizes = [8, 128], strides = [1, 1]} : vector<8x512xf32> to vector<8x128xf32>
    %365 = arith.negf %364 : vector<8x128xf32>
    %366 = math.exp %365 : vector<8x128xf32>
    %cst_168 = arith.constant 1.000000e+00 : f32
    %367 = vector.broadcast %cst_168 : f32 to vector<8x128xf32>
    %368 = arith.addf %367, %366 : vector<8x128xf32>
    %369 = arith.divf %367, %368 : vector<8x128xf32>
    %c0_169 = arith.constant 0 : index
    %c0_170 = arith.constant 0 : index
    %370 = vector.load %arg8[%c0_169, %c0_170] : memref<8x128xf32, #tpu.memory_space<vmem>>, vector<8x128xf32>
    %371 = arith.mulf %361, %370 : vector<8x128xf32>
    %372 = arith.mulf %355, %363 : vector<8x128xf32>
    %373 = arith.addf %371, %372 : vector<8x128xf32>
    %374 = math.tanh %373 : vector<8x128xf32>
    %375 = arith.mulf %369, %374 : vector<8x128xf32>
    %c0_171 = arith.constant 0 : index
    %c0_172 = arith.constant 0 : index
    %376 = vector.load %arg8[%c0_171, %c0_172] : memref<8x128xf32, #tpu.memory_space<vmem>>, vector<8x128xf32>
    tpu.vector_store %arg8[%c0_171, %c0_172], %373 {strides = array<i32>} : memref<8x128xf32, #tpu.memory_space<vmem>>, vector<8x128xf32>,
    %c0_173 = arith.constant 0 : index
    %c0_174 = arith.constant 0 : index
    %377 = vector.load %arg7[%c0_173, %c0_174] : memref<8x128xf32, #tpu.memory_space<vmem>>, vector<8x128xf32>
    tpu.vector_store %arg7[%c0_173, %c0_174], %375 {strides = array<i32>} : memref<8x128xf32, #tpu.memory_space<vmem>>, vector<8x128xf32>,
    %378 = arith.truncf %375 : vector<8x128xf32> to vector<8x128xbf16>
    %379 = arith.index_cast %c8_i32 : i32 to index
    %c0_175 = arith.constant 0 : index
    %c0_176 = arith.constant 0 : index
    %380 = vector.load %arg5[%379, %c0_175, %c0_176] : memref<9x8x128xbf16, #tpu.memory_space<vmem>>, vector<1x8x128xbf16>
    %381 = vector.shape_cast %380 : vector<1x8x128xbf16> to vector<8x128xbf16>
    %382 = vector.shape_cast %378 : vector<8x128xbf16> to vector<1x8x128xbf16>
    tpu.vector_store %arg5[%379, %c0_175, %c0_176], %382 {strides = array<i32>} : memref<9x8x128xbf16, #tpu.memory_space<vmem>>, vector<1x8x128xbf16>,
    %c9_i32 = arith.constant 9 : i32
    return
  }
  func.func @transform_0(%arg0: i32) -> (i32, i32, i32) {
    %c0_i32 = arith.constant 0 : i32
    %c0_i32_0 = arith.constant 0 : i32
    %c0_i32_1 = arith.constant 0 : i32
    return %c0_i32, %arg0, %c0_i32_0 : i32, i32, i32
  }
  func.func @transform_1(%arg0: i32) -> (i32, i32) {
    %c0_i32 = arith.constant 0 : i32
    %c0_i32_0 = arith.constant 0 : i32
    %c0_i32_1 = arith.constant 0 : i32
    return %c0_i32, %c0_i32_0 : i32, i32
  }
  func.func @transform_2(%arg0: i32) -> (i32, i32) {
    %c0_i32 = arith.constant 0 : i32
    %c0_i32_0 = arith.constant 0 : i32
    %c0_i32_1 = arith.constant 0 : i32
    return %c0_i32, %c0_i32_0 : i32, i32
  }
  func.func @transform_3(%arg0: i32) -> (i32, i32) {
    %c0_i32 = arith.constant 0 : i32
    %c0_i32_0 = arith.constant 0 : i32
    %c0_i32_1 = arith.constant 0 : i32
    return %c0_i32, %c0_i32_0 : i32, i32
  }
  func.func @transform_4(%arg0: i32) -> (i32, i32, i32) {
    %c0_i32 = arith.constant 0 : i32
    %c0_i32_0 = arith.constant 0 : i32
    %c0_i32_1 = arith.constant 0 : i32
    return %c0_i32, %arg0, %c0_i32_0 : i32, i32, i32
  }
}

module attributes {stable_mosaic.version = 11 : i64} {
  func.func @fc_out_kernel(%arg0: i32, %arg1: memref<24x128xbf16, #tpu.memory_space<vmem>>, %arg2: memref<128x256xbf16, #tpu.memory_space<vmem>>, %arg3: memref<1x256xf32, #tpu.memory_space<vmem>>, %arg4: memref<24x256xf32, #tpu.memory_space<vmem>>) attributes {dimension_semantics = [#tpu.dimension_semantics<parallel>], iteration_bounds = array<i64: 1>, scalar_prefetch = 0 : i64, scratch_operands = 0 : i64, tpu.core_type = #tpu.core_type<tc>, window_params = [{pipeline_mode = #tpu.pipeline_mode<synchronous>, transform_indices = @transform_0, window_bounds = array<i64: 24, 128>}, {transform_indices = @transform_1, window_bounds = array<i64: 128, 256>}, {transform_indices = @transform_2, window_bounds = array<i64: 1, 256>}, {transform_indices = @transform_3, window_bounds = array<i64: 24, 256>}]} {
    %c0 = arith.constant 0 : index
    %c0_0 = arith.constant 0 : index
    %0 = vector.load %arg1[%c0, %c0_0] : memref<24x128xbf16, #tpu.memory_space<vmem>>, vector<24x128xbf16>
    %c0_1 = arith.constant 0 : index
    %c0_2 = arith.constant 0 : index
    %1 = vector.load %arg2[%c0_1, %c0_2] : memref<128x256xbf16, #tpu.memory_space<vmem>>, vector<128x256xbf16>
    %cst = arith.constant dense<0.000000e+00> : vector<24x256xf32>
    %2 = tpu.matmul %0, %1, %cst {dimension_numbers = #tpu.dot_dimension_numbers<[1], [0], [0], [1], [0, 0, 1, 1], [], []>} : vector<24x128xbf16>, vector<128x256xbf16>, vector<24x256xf32> -> vector<24x256xf32>
    %c0_3 = arith.constant 0 : index
    %c0_4 = arith.constant 0 : index
    %3 = vector.load %arg3[%c0_3, %c0_4] : memref<1x256xf32, #tpu.memory_space<vmem>>, vector<1x256xf32>
    %4 = vector.broadcast %3 : vector<1x256xf32> to vector<24x256xf32>
    %5 = arith.addf %2, %4 : vector<24x256xf32>
    %c0_5 = arith.constant 0 : index
    %c0_6 = arith.constant 0 : index
    %6 = vector.load %arg4[%c0_5, %c0_6] : memref<24x256xf32, #tpu.memory_space<vmem>>, vector<24x256xf32>
    tpu.vector_store %arg4[%c0_5, %c0_6], %5 {strides = array<i32>} : memref<24x256xf32, #tpu.memory_space<vmem>>, vector<24x256xf32>,
    return
  }
  func.func @transform_0(%arg0: i32) -> (i32, i32) {
    %c0_i32 = arith.constant 0 : i32
    %c0_i32_0 = arith.constant 0 : i32
    %c0_i32_1 = arith.constant 0 : i32
    return %c0_i32, %c0_i32_0 : i32, i32
  }
  func.func @transform_1(%arg0: i32) -> (i32, i32) {
    %c0_i32 = arith.constant 0 : i32
    %c0_i32_0 = arith.constant 0 : i32
    return %c0_i32, %arg0 : i32, i32
  }
  func.func @transform_2(%arg0: i32) -> (i32, i32) {
    %c0_i32 = arith.constant 0 : i32
    %c0_i32_0 = arith.constant 0 : i32
    return %c0_i32, %arg0 : i32, i32
  }
  func.func @transform_3(%arg0: i32) -> (i32, i32) {
    %c0_i32 = arith.constant 0 : i32
    %c0_i32_0 = arith.constant 0 : i32
    return %c0_i32, %arg0 : i32, i32
  }
}

</mosaic_0001>

<llo_original>
// kernel: captioning_forward.7
$region0: #{captioning_forward.7}
  #allocation0 [shape = 'u32[]', space=smem, size = 0x4, offset = 0x4, fixed_abs, tag = 'smem constant byte address 0x4 - core index']
  #allocation1 [shape = 'u32[144,128]{1,0:T(1,128)}', space=vmem, size = 0x12000, scoped, tag = 'internal scratch']
  %s0 = inlined_call_operand.vmem [shape: bf16[24,128], index: 0, kind: input, shape index: {}]
  %s1 = inlined_call_operand.vmem [shape: bf16[128,256], index: 1, kind: input, shape index: {}]
  %s2 = inlined_call_operand.vmem [shape: f32[1,256], index: 2, kind: input, shape index: {}]
  %s3 = inlined_call_operand.vmem [shape: f32[24,256], index: 3, kind: output, shape index: {}]
  %s4 = sld [smem:[#allocation0]]
  $region22: #{captioning_forward.7} parent=0
    _
  %s6 = ssub.s32 1, %s4
  %s7 = scalar_select 0, %s6, %s4
  // Predicated region
  $region2: #{captioning_forward.7} parent=0 // pred_check
    _
  $region3: #{captioning_forward.7} parent=0 // pred_check_branch
    %9 = sbr.rel (0) target = $region5
  $region4: #{captioning_forward.7} parent=0 // pred_region
    _
  $region5: #{captioning_forward.7} parent=0 // pred_fallthru
    _
  // Predicated region
  $region6: #{captioning_forward.7} parent=0 // pred_check
    _
  $region7: #{captioning_forward.7} parent=0 // pred_check_branch
    %11 = sbr.rel (0) target = $region9
  $region8: #{captioning_forward.7} parent=0 // pred_region
    _
  $region9: #{captioning_forward.7} parent=0 // pred_fallthru
    _
  // Predicated region
  $region10: #{captioning_forward.7} parent=0 // pred_check
    _
  $region11: #{captioning_forward.7} parent=0 // pred_check_branch
    %13 = sbr.rel (0) target = $region13
  $region12: #{captioning_forward.7} parent=0 // pred_region
    _
  $region13: #{captioning_forward.7} parent=0 // pred_fallthru
    _
  %v15 = vld [vmem:[%s0] sm:$0xf]
  %v16 = vld [vmem:[%s0 + $0x4] sm:$0xf]
  %v17 = vld [vmem:[%s0 + $0x8] sm:$0xf]
  %v18 = vld [vmem:[%s1] sm:$0xff]
  %v19 = vld [vmem:[%s1 + $0x8] sm:$0xff]
  %v20 = vld [vmem:[%s1 + $0x10] sm:$0xff]
  %v21 = vld [vmem:[%s1 + $0x18] sm:$0xff]
  %v22 = vld [vmem:[%s1 + $0x20] sm:$0xff]
  %v23 = vld [vmem:[%s1 + $0x28] sm:$0xff]
  %v24 = vld [vmem:[%s1 + $0x30] sm:$0xff]
  %v25 = vld [vmem:[%s1 + $0x38] sm:$0xff]
  %v26 = vld [vmem:[%s1 + $0x40] sm:$0xff]
  %v27 = vld [vmem:[%s1 + $0x48] sm:$0xff]
  %v28 = vld [vmem:[%s1 + $0x50] sm:$0xff]
  %v29 = vld [vmem:[%s1 + $0x58] sm:$0xff]
  %v30 = vld [vmem:[%s1 + $0x60] sm:$0xff]
  %v31 = vld [vmem:[%s1 + $0x68] sm:$0xff]
  %v32 = vld [vmem:[%s1 + $0x70] sm:$0xff]
  %v33 = vld [vmem:[%s1 + $0x78] sm:$0xff]
  %v34 = vld [vmem:[%s2] sm:$0x3]
  %v36 = vlaneseq
  %v37 = vshrl.u32 %v36, 7
  %v38 = vsub.s32 0, %v37
  %v39 = vrot.slane %v34, %v38
  %v40 = vlaneseq
  %v41 = vshrl.u32 %v40, 7
  %v42 = vsub.s32 1, %v41
  %v43 = vrot.slane %v34, %v42
  %v49 = vunpack.c.l.b16 %v15
  %v50 = vunpack.c.l.b16 %v16
  %v51 = vunpack.c.l.b16 %v17
  %v52 = vpack.c.b16 %v50, %v49
  %v53 = vpack.c.b16 %v51, %v51
  %v72 = vunpack.c.l.b16 %v18
  %v73 = vunpack.c.h.b16 %v18
  %v74 = vunpack.c.l.b16 %v19
  %v75 = vunpack.c.h.b16 %v19
  %v76 = vunpack.c.l.b16 %v20
  %v77 = vunpack.c.h.b16 %v20
  %v78 = vunpack.c.l.b16 %v21
  %v79 = vunpack.c.h.b16 %v21
  %v80 = vunpack.c.l.b16 %v22
  %v81 = vunpack.c.h.b16 %v22
  %v82 = vunpack.c.l.b16 %v23
  %v83 = vunpack.c.h.b16 %v23
  %v84 = vunpack.c.l.b16 %v24
  %v85 = vunpack.c.h.b16 %v24
  %v86 = vunpack.c.l.b16 %v25
  %v87 = vunpack.c.h.b16 %v25
  %v88 = vunpack.c.l.b16 %v26
  %v89 = vunpack.c.h.b16 %v26
  %v90 = vunpack.c.l.b16 %v27
  %v91 = vunpack.c.h.b16 %v27
  %v92 = vunpack.c.l.b16 %v28
  %v93 = vunpack.c.h.b16 %v28
  %v94 = vunpack.c.l.b16 %v29
  %v95 = vunpack.c.h.b16 %v29
  %v96 = vunpack.c.l.b16 %v30
  %v97 = vunpack.c.h.b16 %v30
  %v98 = vunpack.c.l.b16 %v31
  %v99 = vunpack.c.h.b16 %v31
  %v100 = vunpack.c.l.b16 %v32
  %v101 = vunpack.c.h.b16 %v32
  %v102 = vunpack.c.l.b16 %v33
  %v103 = vunpack.c.h.b16 %v33
  %v104 = vpack.c.b16 %v74, %v72
  %v105 = vpack.c.b16 %v75, %v73
  %v106 = vpack.c.b16 %v78, %v76
  %v107 = vpack.c.b16 %v79, %v77
  %v108 = vpack.c.b16 %v82, %v80
  %v109 = vpack.c.b16 %v83, %v81
  %v110 = vpack.c.b16 %v86, %v84
  %v111 = vpack.c.b16 %v87, %v85
  %v112 = vpack.c.b16 %v90, %v88
  %v113 = vpack.c.b16 %v91, %v89
  %v114 = vpack.c.b16 %v94, %v92
  %v115 = vpack.c.b16 %v95, %v93
  %v116 = vpack.c.b16 %v98, %v96
  %v117 = vpack.c.b16 %v99, %v97
  %v118 = vpack.c.b16 %v102, %v100
  %v119 = vpack.c.b16 %v103, %v101
  %136 = vmatprep.subr.bf16.mxu0 %v119
  %137 = vmatpush1.bf16.msra.mxu0 %v118
  %138 = vmatprep.subr.bf16.mxu0 %v117
  %139 = vmatpush1.bf16.msra.mxu0 %v116
  %140 = vmatprep.subr.bf16.mxu0 %v115
  %141 = vmatpush1.bf16.msra.mxu0 %v114
  %142 = vmatprep.subr.bf16.mxu0 %v113
  %143 = vmatpush1.bf16.msra.mxu0 %v112
  %144 = vmatprep.subr.bf16.mxu0 %v111
  %145 = vmatpush1.bf16.msra.mxu0 %v110
  %146 = vmatprep.subr.bf16.mxu0 %v109
  %147 = vmatpush1.bf16.msra.mxu0 %v108
  %148 = vmatprep.subr.bf16.mxu0 %v107
  %149 = vmatpush1.bf16.msra.mxu0 %v106
  %150 = vmatprep.subr.bf16.mxu0 %v105
  %151 = vmatpush1.bf16.msra.mxu0 %v104
  %152 = vmatprep.subr.bf16.mxu0 0
  %153 = vmatpush2.bf16.msra.mxu0 0
  %154 = vmatprep.subr.bf16.mxu0 0
  %155 = vmatpush2.bf16.msra.mxu0 0
  %156 = vmatprep.subr.bf16.mxu0 0
  %157 = vmatpush2.bf16.msra.mxu0 0
  %158 = vmatprep.subr.bf16.mxu0 0
  %159 = vmatpush2.bf16.msra.mxu0 0
  %160 = vmatprep.subr.bf16.mxu0 0
  %161 = vmatpush2.bf16.msra.mxu0 0
  %162 = vmatprep.subr.bf16.mxu0 0
  %163 = vmatpush2.bf16.msra.mxu0 0
  %164 = vmatprep.subr.bf16.mxu0 0
  %165 = vmatpush2.bf16.msra.mxu0 0
  %166 = vmatprep.subr.bf16.mxu0 0
  %167 = vmatpush2.bf16.msra.mxu0 0
  %168 = vmatprep.mubr.bf16.mxu0 0
  %169 = vmatmul.mubr.bf16.gmra.mxu0 %v52
  %v170 = vpop.f32.mrf.mxu0
  %v171 = vadd.f32 %v39, %v170
  %v172 = vpop.f32.mrf.mxu0
  %v173 = vadd.f32 %v43, %v172
  %v174 = vpop.f32.mrf.mxu0
  %v175 = vadd.f32 %v39, %v174
  %v176 = vpop.f32.mrf.mxu0
  %v177 = vadd.f32 %v43, %v176
  %178 = vmatprep.mubr.bf16.mxu0 0
  %179 = vmatmul.mubr.bf16.gmra.mxu0 %v53
  %v180 = vpop.f32.mrf.mxu0
  %v181 = vadd.f32 %v39, %v180
  %v182 = vpop.f32.mrf.mxu0
  %v183 = vadd.f32 %v43, %v182
  %v184 = vpop.f32.mrf.mxu0
  %v185 = vpop.f32.mrf.mxu0
  %186 = vdwg.mxu0
  %187 = vst [vmem:[%s3] sm:$0xff] %v171
  %188 = vst [vmem:[%s3 + $0x8] sm:$0xff] %v173
  %189 = vst [vmem:[%s3 + $0x10] sm:$0xff] %v175
  %190 = vst [vmem:[%s3 + $0x18] sm:$0xff] %v177
  %191 = vst [vmem:[%s3 + $0x20] sm:$0xff] %v181
  %192 = vst [vmem:[%s3 + $0x28] sm:$0xff] %v183
  // Predicated region
  $region14: #{captioning_forward.7} parent=0 // pred_check
    _
  $region15: #{captioning_forward.7} parent=0 // pred_check_branch
    %194 = sbr.rel (0) target = $region17
  $region16: #{captioning_forward.7} parent=0 // pred_region
    _
  $region17: #{captioning_forward.7} parent=0 // pred_fallthru
    _
  // Predicated region
  $region18: #{captioning_forward.7} parent=0 // pred_check
    _
  $region19: #{captioning_forward.7} parent=0 // pred_check_branch
    %196 = sbr.rel (0) target = $region21
  $region20: #{captioning_forward.7} parent=0 // pred_region
    _
  $region21: #{captioning_forward.7} parent=0 // pred_fallthru
    _

// kernel: captioning_forward.5
$region0: #{captioning_forward.5}
  #allocation0 [shape = 'u32[]', space=smem, size = 0x4, offset = 0x4, fixed_abs, tag = 'smem constant byte address 0x4 - core index']
  #allocation1 [shape = 'u32[144,128]{1,0:T(1,128)}', space=vmem, size = 0x12000, scoped, tag = 'internal scratch']
  %s0 = inlined_call_operand.vmem [shape: f32[8,2048], index: 0, kind: input, shape index: {}]
  %s1 = inlined_call_operand.vmem [shape: bf16[2048,128], index: 1, kind: input, shape index: {}]
  %s2 = inlined_call_operand.vmem [shape: f32[1,128], index: 2, kind: input, shape index: {}]
  %s3 = inlined_call_operand.vmem [shape: f32[8,128], index: 3, kind: output, shape index: {}]
  %s4 = sld [smem:[#allocation0]]
  $region22: #{captioning_forward.5} parent=0
    _
  %s6 = ssub.s32 1, %s4
  %s7 = scalar_select 0, %s6, %s4
  // Predicated region
  $region2: #{captioning_forward.5} parent=0 // pred_check
    _
  $region3: #{captioning_forward.5} parent=0 // pred_check_branch
    %9 = sbr.rel (0) target = $region5
  $region4: #{captioning_forward.5} parent=0 // pred_region
    _
  $region5: #{captioning_forward.5} parent=0 // pred_fallthru
    _
  // Predicated region
  $region6: #{captioning_forward.5} parent=0 // pred_check
    _
  $region7: #{captioning_forward.5} parent=0 // pred_check_branch
    %11 = sbr.rel (0) target = $region9
  $region8: #{captioning_forward.5} parent=0 // pred_region
    _
  $region9: #{captioning_forward.5} parent=0 // pred_fallthru
    _
  // Predicated region
  $region10: #{captioning_forward.5} parent=0 // pred_check
    _
  $region11: #{captioning_forward.5} parent=0 // pred_check_branch
    %13 = sbr.rel (0) target = $region13
  $region12: #{captioning_forward.5} parent=0 // pred_region
    _
  $region13: #{captioning_forward.5} parent=0 // pred_fallthru
    _
  %v15 = vld [vmem:[%s0] sm:$0xff]
  %v16 = vld [vmem:[%s0 + $0x8] sm:$0xff]
  %v17 = vld [vmem:[%s0 + $0x10] sm:$0xff]
  %v18 = vld [vmem:[%s0 + $0x18] sm:$0xff]
  %v19 = vld [vmem:[%s0 + $0x20] sm:$0xff]
  %v20 = vld [vmem:[%s0 + $0x28] sm:$0xff]
  %v21 = vld [vmem:[%s0 + $0x30] sm:$0xff]
  %v22 = vld [vmem:[%s0 + $0x38] sm:$0xff]
  %v23 = vld [vmem:[%s0 + $0x40] sm:$0xff]
  %v24 = vld [vmem:[%s0 + $0x48] sm:$0xff]
  %v25 = vld [vmem:[%s0 + $0x50] sm:$0xff]
  %v26 = vld [vmem:[%s0 + $0x58] sm:$0xff]
  %v27 = vld [vmem:[%s0 + $0x60] sm:$0xff]
  %v28 = vld [vmem:[%s0 + $0x68] sm:$0xff]
  %v29 = vld [vmem:[%s0 + $0x70] sm:$0xff]
  %v30 = vld [vmem:[%s0 + $0x78] sm:$0xff]
  %v31 = vpack.c.bf16 %v15, %v15
  %v32 = vpack.c.bf16 %v16, %v16
  %v33 = vpack.c.bf16 %v17, %v17
  %v34 = vpack.c.bf16 %v18, %v18
  %v35 = vpack.c.bf16 %v19, %v19
  %v36 = vpack.c.bf16 %v20, %v20
  %v37 = vpack.c.bf16 %v21, %v21
  %v38 = vpack.c.bf16 %v22, %v22
  %v39 = vpack.c.bf16 %v23, %v23
  %v40 = vpack.c.bf16 %v24, %v24
  %v41 = vpack.c.bf16 %v25, %v25
  %v42 = vpack.c.bf16 %v26, %v26
  %v43 = vpack.c.bf16 %v27, %v27
  %v44 = vpack.c.bf16 %v28, %v28
  %v45 = vpack.c.bf16 %v29, %v29
  %v46 = vpack.c.bf16 %v30, %v30
  %v47 = vld [vmem:[%s1] sm:$0xf]
  %v48 = vld [vmem:[%s1 + $0x4] sm:$0xf]
  %v49 = vld [vmem:[%s1 + $0x8] sm:$0xf]
  %v50 = vld [vmem:[%s1 + $0xc] sm:$0xf]
  %v51 = vld [vmem:[%s1 + $0x10] sm:$0xf]
  %v52 = vld [vmem:[%s1 + $0x14] sm:$0xf]
  %v53 = vld [vmem:[%s1 + $0x18] sm:$0xf]
  %v54 = vld [vmem:[%s1 + $0x1c] sm:$0xf]
  %v55 = vld [vmem:[%s1 + $0x20] sm:$0xf]
  %v56 = vld [vmem:[%s1 + $0x24] sm:$0xf]
  %v57 = vld [vmem:[%s1 + $0x28] sm:$0xf]
  %v58 = vld [vmem:[%s1 + $0x2c] sm:$0xf]
  %v59 = vld [vmem:[%s1 + $0x30] sm:$0xf]
  %v60 = vld [vmem:[%s1 + $0x34] sm:$0xf]
  %v61 = vld [vmem:[%s1 + $0x38] sm:$0xf]
  %v62 = vld [vmem:[%s1 + $0x3c] sm:$0xf]
  %v63 = vld [vmem:[%s1 + $0x40] sm:$0xf]
  %v64 = vld [vmem:[%s1 + $0x44] sm:$0xf]
  %v65 = vld [vmem:[%s1 + $0x48] sm:$0xf]
  %v66 = vld [vmem:[%s1 + $0x4c] sm:$0xf]
  %v67 = vld [vmem:[%s1 + $0x50] sm:$0xf]
  %v68 = vld [vmem:[%s1 + $0x54] sm:$0xf]
  %v69 = vld [vmem:[%s1 + $0x58] sm:$0xf]
  %v70 = vld [vmem:[%s1 + $0x5c] sm:$0xf]
  %v71 = vld [vmem:[%s1 + $0x60] sm:$0xf]
  %v72 = vld [vmem:[%s1 + $0x64] sm:$0xf]
  %v73 = vld [vmem:[%s1 + $0x68] sm:$0xf]
  %v74 = vld [vmem:[%s1 + $0x6c] sm:$0xf]
  %v75 = vld [vmem:[%s1 + $0x70] sm:$0xf]
  %v76 = vld [vmem:[%s1 + $0x74] sm:$0xf]
  %v77 = vld [vmem:[%s1 + $0x78] sm:$0xf]
  %v78 = vld [vmem:[%s1 + $0x7c] sm:$0xf]
  %v79 = vld [vmem:[%s1 + $0x80] sm:$0xf]
  %v80 = vld [vmem:[%s1 + $0x84] sm:$0xf]
  %v81 = vld [vmem:[%s1 + $0x88] sm:$0xf]
  %v82 = vld [vmem:[%s1 + $0x8c] sm:$0xf]
  %v83 = vld [vmem:[%s1 + $0x90] sm:$0xf]
  %v84 = vld [vmem:[%s1 + $0x94] sm:$0xf]
  %v85 = vld [vmem:[%s1 + $0x98] sm:$0xf]
  %v86 = vld [vmem:[%s1 + $0x9c] sm:$0xf]
  %v87 = vld [vmem:[%s1 + $0xa0] sm:$0xf]
  %v88 = vld [vmem:[%s1 + $0xa4] sm:$0xf]
  %v89 = vld [vmem:[%s1 + $0xa8] sm:$0xf]
  %v90 = vld [vmem:[%s1 + $0xac] sm:$0xf]
  %v91 = vld [vmem:[%s1 + $0xb0] sm:$0xf]
  %v92 = vld [vmem:[%s1 + $0xb4] sm:$0xf]
  %v93 = vld [vmem:[%s1 + $0xb8] sm:$0xf]
  %v94 = vld [vmem:[%s1 + $0xbc] sm:$0xf]
  %v95 = vld [vmem:[%s1 + $0xc0] sm:$0xf]
  %v96 = vld [vmem:[%s1 + $0xc4] sm:$0xf]
  %v97 = vld [vmem:[%s1 + $0xc8] sm:$0xf]
  %v98 = vld [vmem:[%s1 + $0xcc] sm:$0xf]
  %v99 = vld [vmem:[%s1 + $0xd0] sm:$0xf]
  %v100 = vld [vmem:[%s1 + $0xd4] sm:$0xf]
  %v101 = vld [vmem:[%s1 + $0xd8] sm:$0xf]
  %v102 = vld [vmem:[%s1 + $0xdc] sm:$0xf]
  %v103 = vld [vmem:[%s1 + $0xe0] sm:$0xf]
  %v104 = vld [vmem:[%s1 + $0xe4] sm:$0xf]
  %v105 = vld [vmem:[%s1 + $0xe8] sm:$0xf]
  %v106 = vld [vmem:[%s1 + $0xec] sm:$0xf]
  %v107 = vld [vmem:[%s1 + $0xf0] sm:$0xf]
  %v108 = vld [vmem:[%s1 + $0xf4] sm:$0xf]
  %v109 = vld [vmem:[%s1 + $0xf8] sm:$0xf]
  %v110 = vld [vmem:[%s1 + $0xfc] sm:$0xf]
  %v111 = vld [vmem:[%s1 + $0x100] sm:$0xf]
  %v112 = vld [vmem:[%s1 + $0x104] sm:$0xf]
  %v113 = vld [vmem:[%s1 + $0x108] sm:$0xf]
  %v114 = vld [vmem:[%s1 + $0x10c] sm:$0xf]
  %v115 = vld [vmem:[%s1 + $0x110] sm:$0xf]
  %v116 = vld [vmem:[%s1 + $0x114] sm:$0xf]
  %v117 = vld [vmem:[%s1 + $0x118] sm:$0xf]
  %v118 = vld [vmem:[%s1 + $0x11c] sm:$0xf]
  %v119 = vld [vmem:[%s1 + $0x120] sm:$0xf]
  %v120 = vld [vmem:[%s1 + $0x124] sm:$0xf]
  %v121 = vld [vmem:[%s1 + $0x128] sm:$0xf]
  %v122 = vld [vmem:[%s1 + $0x12c] sm:$0xf]
  %v123 = vld [vmem:[%s1 + $0x130] sm:$0xf]
  %v124 = vld [vmem:[%s1 + $0x134] sm:$0xf]
  %v125 = vld [vmem:[%s1 + $0x138] sm:$0xf]
  %v126 = vld [vmem:[%s1 + $0x13c] sm:$0xf]
  %v127 = vld [vmem:[%s1 + $0x140] sm:$0xf]
  %v128 = vld [vmem:[%s1 + $0x144] sm:$0xf]
  %v129 = vld [vmem:[%s1 + $0x148] sm:$0xf]
  %v130 = vld [vmem:[%s1 + $0x14c] sm:$0xf]
  %v131 = vld [vmem:[%s1 + $0x150] sm:$0xf]
  %v132 = vld [vmem:[%s1 + $0x154] sm:$0xf]
  %v133 = vld [vmem:[%s1 + $0x158] sm:$0xf]
  %v134 = vld [vmem:[%s1 + $0x15c] sm:$0xf]
  %v135 = vld [vmem:[%s1 + $0x160] sm:$0xf]
  %v136 = vld [vmem:[%s1 + $0x164] sm:$0xf]
  %v137 = vld [vmem:[%s1 + $0x168] sm:$0xf]
  %v138 = vld [vmem:[%s1 + $0x16c] sm:$0xf]
  %v139 = vld [vmem:[%s1 + $0x170] sm:$0xf]
  %v140 = vld [vmem:[%s1 + $0x174] sm:$0xf]
  %v141 = vld [vmem:[%s1 + $0x178] sm:$0xf]
  %v142 = vld [vmem:[%s1 + $0x17c] sm:$0xf]
  %v143 = vld [vmem:[%s1 + $0x180] sm:$0xf]
  %v144 = vld [vmem:[%s1 + $0x184] sm:$0xf]
  %v145 = vld [vmem:[%s1 + $0x188] sm:$0xf]
  %v146 = vld [vmem:[%s1 + $0x18c] sm:$0xf]
  %v147 = vld [vmem:[%s1 + $0x190] sm:$0xf]
  %v148 = vld [vmem:[%s1 + $0x194] sm:$0xf]
  %v149 = vld [vmem:[%s1 + $0x198] sm:$0xf]
  %v150 = vld [vmem:[%s1 + $0x19c] sm:$0xf]
  %v151 = vld [vmem:[%s1 + $0x1a0] sm:$0xf]
  %v152 = vld [vmem:[%s1 + $0x1a4] sm:$0xf]
  %v153 = vld [vmem:[%s1 + $0x1a8] sm:$0xf]
  %v154 = vld [vmem:[%s1 + $0x1ac] sm:$0xf]
  %v155 = vld [vmem:[%s1 + $0x1b0] sm:$0xf]
  %v156 = vld [vmem:[%s1 + $0x1b4] sm:$0xf]
  %v157 = vld [vmem:[%s1 + $0x1b8] sm:$0xf]
  %v158 = vld [vmem:[%s1 + $0x1bc] sm:$0xf]
  %v159 = vld [vmem:[%s1 + $0x1c0] sm:$0xf]
  %v160 = vld [vmem:[%s1 + $0x1c4] sm:$0xf]
  %v161 = vld [vmem:[%s1 + $0x1c8] sm:$0xf]
  %v162 = vld [vmem:[%s1 + $0x1cc] sm:$0xf]
  %v163 = vld [vmem:[%s1 + $0x1d0] sm:$0xf]
  %v164 = vld [vmem:[%s1 + $0x1d4] sm:$0xf]
  %v165 = vld [vmem:[%s1 + $0x1d8] sm:$0xf]
  %v166 = vld [vmem:[%s1 + $0x1dc] sm:$0xf]
  %v167 = vld [vmem:[%s1 + $0x1e0] sm:$0xf]
  %v168 = vld [vmem:[%s1 + $0x1e4] sm:$0xf]
  %v169 = vld [vmem:[%s1 + $0x1e8] sm:$0xf]
  %v170 = vld [vmem:[%s1 + $0x1ec] sm:$0xf]
  %v171 = vld [vmem:[%s1 + $0x1f0] sm:$0xf]
  %v172 = vld [vmem:[%s1 + $0x1f4] sm:$0xf]
  %v173 = vld [vmem:[%s1 + $0x1f8] sm:$0xf]
  %v174 = vld [vmem:[%s1 + $0x1fc] sm:$0xf]
  %v175 = vld [vmem:[%s1 + $0x200] sm:$0xf]
  %v176 = vld [vmem:[%s1 + $0x204] sm:$0xf]
  %v177 = vld [vmem:[%s1 + $0x208] sm:$0xf]
  %v178 = vld [vmem:[%s1 + $0x20c] sm:$0xf]
  %v179 = vld [vmem:[%s1 + $0x210] sm:$0xf]
  %v180 = vld [vmem:[%s1 + $0x214] sm:$0xf]
  %v181 = vld [vmem:[%s1 + $0x218] sm:$0xf]
  %v182 = vld [vmem:[%s1 + $0x21c] sm:$0xf]
  %v183 = vld [vmem:[%s1 + $0x220] sm:$0xf]
  %v184 = vld [vmem:[%s1 + $0x224] sm:$0xf]
  %v185 = vld [vmem:[%s1 + $0x228] sm:$0xf]
  %v186 = vld [vmem:[%s1 + $0x22c] sm:$0xf]
  %v187 = vld [vmem:[%s1 + $0x230] sm:$0xf]
  %v188 = vld [vmem:[%s1 + $0x234] sm:$0xf]
  %v189 = vld [vmem:[%s1 + $0x238] sm:$0xf]
  %v190 = vld [vmem:[%s1 + $0x23c] sm:$0xf]
  %v191 = vld [vmem:[%s1 + $0x240] sm:$0xf]
  %v192 = vld [vmem:[%s1 + $0x244] sm:$0xf]
  %v193 = vld [vmem:[%s1 + $0x248] sm:$0xf]
  %v194 = vld [vmem:[%s1 + $0x24c] sm:$0xf]
  %v195 = vld [vmem:[%s1 + $0x250] sm:$0xf]
  %v196 = vld [vmem:[%s1 + $0x254] sm:$0xf]
  %v197 = vld [vmem:[%s1 + $0x258] sm:$0xf]
  %v198 = vld [vmem:[%s1 + $0x25c] sm:$0xf]
  %v199 = vld [vmem:[%s1 + $0x260] sm:$0xf]
  %v200 = vld [vmem:[%s1 + $0x264] sm:$0xf]
  %v201 = vld [vmem:[%s1 + $0x268] sm:$0xf]
  %v202 = vld [vmem:[%s1 + $0x26c] sm:$0xf]
  %v203 = vld [vmem:[%s1 + $0x270] sm:$0xf]
  %v204 = vld [vmem:[%s1 + $0x274] sm:$0xf]
  %v205 = vld [vmem:[%s1 + $0x278] sm:$0xf]
  %v206 = vld [vmem:[%s1 + $0x27c] sm:$0xf]
  %v207 = vld [vmem:[%s1 + $0x280] sm:$0xf]
  %v208 = vld [vmem:[%s1 + $0x284] sm:$0xf]
  %v209 = vld [vmem:[%s1 + $0x288] sm:$0xf]
  %v210 = vld [vmem:[%s1 + $0x28c] sm:$0xf]
  %v211 = vld [vmem:[%s1 + $0x290] sm:$0xf]
  %v212 = vld [vmem:[%s1 + $0x294] sm:$0xf]
  %v213 = vld [vmem:[%s1 + $0x298] sm:$0xf]
  %v214 = vld [vmem:[%s1 + $0x29c] sm:$0xf]
  %v215 = vld [vmem:[%s1 + $0x2a0] sm:$0xf]
  %v216 = vld [vmem:[%s1 + $0x2a4] sm:$0xf]
  %v217 = vld [vmem:[%s1 + $0x2a8] sm:$0xf]
  %v218 = vld [vmem:[%s1 + $0x2ac] sm:$0xf]
  %v219 = vld [vmem:[%s1 + $0x2b0] sm:$0xf]
  %v220 = vld [vmem:[%s1 + $0x2b4] sm:$0xf]
  %v221 = vld [vmem:[%s1 + $0x2b8] sm:$0xf]
  %v222 = vld [vmem:[%s1 + $0x2bc] sm:$0xf]
  %v223 = vld [vmem:[%s1 + $0x2c0] sm:$0xf]
  %v224 = vld [vmem:[%s1 + $0x2c4] sm:$0xf]
  %v225 = vld [vmem:[%s1 + $0x2c8] sm:$0xf]
  %v226 = vld [vmem:[%s1 + $0x2cc] sm:$0xf]
  %v227 = vld [vmem:[%s1 + $0x2d0] sm:$0xf]
  %v228 = vld [vmem:[%s1 + $0x2d4] sm:$0xf]
  %v229 = vld [vmem:[%s1 + $0x2d8] sm:$0xf]
  %v230 = vld [vmem:[%s1 + $0x2dc] sm:$0xf]
  %v231 = vld [vmem:[%s1 + $0x2e0] sm:$0xf]
  %v232 = vld [vmem:[%s1 + $0x2e4] sm:$0xf]
  %v233 = vld [vmem:[%s1 + $0x2e8] sm:$0xf]
  %v234 = vld [vmem:[%s1 + $0x2ec] sm:$0xf]
  %v235 = vld [vmem:[%s1 + $0x2f0] sm:$0xf]
  %v236 = vld [vmem:[%s1 + $0x2f4] sm:$0xf]
  %v237 = vld [vmem:[%s1 + $0x2f8] sm:$0xf]
  %v238 = vld [vmem:[%s1 + $0x2fc] sm:$0xf]
  %v239 = vld [vmem:[%s1 + $0x300] sm:$0xf]
  %v240 = vld [vmem:[%s1 + $0x304] sm:$0xf]
  %v241 = vld [vmem:[%s1 + $0x308] sm:$0xf]
  %v242 = vld [vmem:[%s1 + $0x30c] sm:$0xf]
  %v243 = vld [vmem:[%s1 + $0x310] sm:$0xf]
  %v244 = vld [vmem:[%s1 + $0x314] sm:$0xf]
  %v245 = vld [vmem:[%s1 + $0x318] sm:$0xf]
  %v246 = vld [vmem:[%s1 + $0x31c] sm:$0xf]
  %v247 = vld [vmem:[%s1 + $0x320] sm:$0xf]
  %v248 = vld [vmem:[%s1 + $0x324] sm:$0xf]
  %v249 = vld [vmem:[%s1 + $0x328] sm:$0xf]
  %v250 = vld [vmem:[%s1 + $0x32c] sm:$0xf]
  %v251 = vld [vmem:[%s1 + $0x330] sm:$0xf]
  %v252 = vld [vmem:[%s1 + $0x334] sm:$0xf]
  %v253 = vld [vmem:[%s1 + $0x338] sm:$0xf]
  %v254 = vld [vmem:[%s1 + $0x33c] sm:$0xf]
  %v255 = vld [vmem:[%s1 + $0x340] sm:$0xf]
  %v256 = vld [vmem:[%s1 + $0x344] sm:$0xf]
  %v257 = vld [vmem:[%s1 + $0x348] sm:$0xf]
  %v258 = vld [vmem:[%s1 + $0x34c] sm:$0xf]
  %v259 = vld [vmem:[%s1 + $0x350] sm:$0xf]
  %v260 = vld [vmem:[%s1 + $0x354] sm:$0xf]
  %v261 = vld [vmem:[%s1 + $0x358] sm:$0xf]
  %v262 = vld [vmem:[%s1 + $0x35c] sm:$0xf]
  %v263 = vld [vmem:[%s1 + $0x360] sm:$0xf]
  %v264 = vld [vmem:[%s1 + $0x364] sm:$0xf]
  %v265 = vld [vmem:[%s1 + $0x368] sm:$0xf]
  %v266 = vld [vmem:[%s1 + $0x36c] sm:$0xf]
  %v267 = vld [vmem:[%s1 + $0x370] sm:$0xf]
  %v268 = vld [vmem:[%s1 + $0x374] sm:$0xf]
  %v269 = vld [vmem:[%s1 + $0x378] sm:$0xf]
  %v270 = vld [vmem:[%s1 + $0x37c] sm:$0xf]
  %v271 = vld [vmem:[%s1 + $0x380] sm:$0xf]
  %v272 = vld [vmem:[%s1 + $0x384] sm:$0xf]
  %v273 = vld [vmem:[%s1 + $0x388] sm:$0xf]
  %v274 = vld [vmem:[%s1 + $0x38c] sm:$0xf]
  %v275 = vld [vmem:[%s1 + $0x390] sm:$0xf]
  %v276 = vld [vmem:[%s1 + $0x394] sm:$0xf]
  %v277 = vld [vmem:[%s1 + $0x398] sm:$0xf]
  %v278 = vld [vmem:[%s1 + $0x39c] sm:$0xf]
  %v279 = vld [vmem:[%s1 + $0x3a0] sm:$0xf]
  %v280 = vld [vmem:[%s1 + $0x3a4] sm:$0xf]
  %v281 = vld [vmem:[%s1 + $0x3a8] sm:$0xf]
  %v282 = vld [vmem:[%s1 + $0x3ac] sm:$0xf]
  %v283 = vld [vmem:[%s1 + $0x3b0] sm:$0xf]
  %v284 = vld [vmem:[%s1 + $0x3b4] sm:$0xf]
  %v285 = vld [vmem:[%s1 + $0x3b8] sm:$0xf]
  %v286 = vld [vmem:[%s1 + $0x3bc] sm:$0xf]
  %v287 = vld [vmem:[%s1 + $0x3c0] sm:$0xf]
  %v288 = vld [vmem:[%s1 + $0x3c4] sm:$0xf]
  %v289 = vld [vmem:[%s1 + $0x3c8] sm:$0xf]
  %v290 = vld [vmem:[%s1 + $0x3cc] sm:$0xf]
  %v291 = vld [vmem:[%s1 + $0x3d0] sm:$0xf]
  %v292 = vld [vmem:[%s1 + $0x3d4] sm:$0xf]
  %v293 = vld [vmem:[%s1 + $0x3d8] sm:$0xf]
  %v294 = vld [vmem:[%s1 + $0x3dc] sm:$0xf]
  %v295 = vld [vmem:[%s1 + $0x3e0] sm:$0xf]
  %v296 = vld [vmem:[%s1 + $0x3e4] sm:$0xf]
  %v297 = vld [vmem:[%s1 + $0x3e8] sm:$0xf]
  %v298 = vld [vmem:[%s1 + $0x3ec] sm:$0xf]
  %v299 = vld [vmem:[%s1 + $0x3f0] sm:$0xf]
  %v300 = vld [vmem:[%s1 + $0x3f4] sm:$0xf]
  %v301 = vld [vmem:[%s1 + $0x3f8] sm:$0xf]
  %v302 = vld [vmem:[%s1 + $0x3fc] sm:$0xf]
  %v303 = vld [vmem:[%s2] sm:$0x1]
  %v305 = vlaneseq
  %v306 = vshrl.u32 %v305, 7
  %v307 = vsub.s32 0, %v306
  %v308 = vrot.slane %v303, %v307
  %v566 = vunpack.c.l.b16 %v47
  %v567 = vunpack.c.l.b16 %v48
  %v568 = vunpack.c.l.b16 %v49
  %v569 = vunpack.c.l.b16 %v50
  %v570 = vunpack.c.l.b16 %v51
  %v571 = vunpack.c.l.b16 %v52
  %v572 = vunpack.c.l.b16 %v53
  %v573 = vunpack.c.l.b16 %v54
  %v574 = vunpack.c.l.b16 %v55
  %v575 = vunpack.c.l.b16 %v56
  %v576 = vunpack.c.l.b16 %v57
  %v577 = vunpack.c.l.b16 %v58
  %v578 = vunpack.c.l.b16 %v59
  %v579 = vunpack.c.l.b16 %v60
  %v580 = vunpack.c.l.b16 %v61
  %v581 = vunpack.c.l.b16 %v62
  %v582 = vunpack.c.l.b16 %v63
  %v583 = vunpack.c.l.b16 %v64
  %v584 = vunpack.c.l.b16 %v65
  %v585 = vunpack.c.l.b16 %v66
  %v586 = vunpack.c.l.b16 %v67
  %v587 = vunpack.c.l.b16 %v68
  %v588 = vunpack.c.l.b16 %v69
  %v589 = vunpack.c.l.b16 %v70
  %v590 = vunpack.c.l.b16 %v71
  %v591 = vunpack.c.l.b16 %v72
  %v592 = vunpack.c.l.b16 %v73
  %v593 = vunpack.c.l.b16 %v74
  %v594 = vunpack.c.l.b16 %v75
  %v595 = vunpack.c.l.b16 %v76
  %v596 = vunpack.c.l.b16 %v77
  %v597 = vunpack.c.l.b16 %v78
  %v598 = vunpack.c.l.b16 %v79
  %v599 = vunpack.c.l.b16 %v80
  %v600 = vunpack.c.l.b16 %v81
  %v601 = vunpack.c.l.b16 %v82
  %v602 = vunpack.c.l.b16 %v83
  %v603 = vunpack.c.l.b16 %v84
  %v604 = vunpack.c.l.b16 %v85
  %v605 = vunpack.c.l.b16 %v86
  %v606 = vunpack.c.l.b16 %v87
  %v607 = vunpack.c.l.b16 %v88
  %v608 = vunpack.c.l.b16 %v89
  %v609 = vunpack.c.l.b16 %v90
  %v610 = vunpack.c.l.b16 %v91
  %v611 = vunpack.c.l.b16 %v92
  %v612 = vunpack.c.l.b16 %v93
  %v613 = vunpack.c.l.b16 %v94
  %v614 = vunpack.c.l.b16 %v95
  %v615 = vunpack.c.l.b16 %v96
  %v616 = vunpack.c.l.b16 %v97
  %v617 = vunpack.c.l.b16 %v98
  %v618 = vunpack.c.l.b16 %v99
  %v619 = vunpack.c.l.b16 %v100
  %v620 = vunpack.c.l.b16 %v101
  %v621 = vunpack.c.l.b16 %v102
  %v622 = vunpack.c.l.b16 %v103
  %v623 = vunpack.c.l.b16 %v104
  %v624 = vunpack.c.l.b16 %v105
  %v625 = vunpack.c.l.b16 %v106
  %v626 = vunpack.c.l.b16 %v107
  %v627 = vunpack.c.l.b16 %v108
  %v628 = vunpack.c.l.b16 %v109
  %v629 = vunpack.c.l.b16 %v110
  %v630 = vunpack.c.l.b16 %v111
  %v631 = vunpack.c.l.b16 %v112
  %v632 = vunpack.c.l.b16 %v113
  %v633 = vunpack.c.l.b16 %v114
  %v634 = vunpack.c.l.b16 %v115
  %v635 = vunpack.c.l.b16 %v116
  %v636 = vunpack.c.l.b16 %v117
  %v637 = vunpack.c.l.b16 %v118
  %v638 = vunpack.c.l.b16 %v119
  %v639 = vunpack.c.l.b16 %v120
  %v640 = vunpack.c.l.b16 %v121
  %v641 = vunpack.c.l.b16 %v122
  %v642 = vunpack.c.l.b16 %v123
  %v643 = vunpack.c.l.b16 %v124
  %v644 = vunpack.c.l.b16 %v125
  %v645 = vunpack.c.l.b16 %v126
  %v646 = vunpack.c.l.b16 %v127
  %v647 = vunpack.c.l.b16 %v128
  %v648 = vunpack.c.l.b16 %v129
  %v649 = vunpack.c.l.b16 %v130
  %v650 = vunpack.c.l.b16 %v131
  %v651 = vunpack.c.l.b16 %v132
  %v652 = vunpack.c.l.b16 %v133
  %v653 = vunpack.c.l.b16 %v134
  %v654 = vunpack.c.l.b16 %v135
  %v655 = vunpack.c.l.b16 %v136
  %v656 = vunpack.c.l.b16 %v137
  %v657 = vunpack.c.l.b16 %v138
  %v658 = vunpack.c.l.b16 %v139
  %v659 = vunpack.c.l.b16 %v140
  %v660 = vunpack.c.l.b16 %v141
  %v661 = vunpack.c.l.b16 %v142
  %v662 = vunpack.c.l.b16 %v143
  %v663 = vunpack.c.l.b16 %v144
  %v664 = vunpack.c.l.b16 %v145
  %v665 = vunpack.c.l.b16 %v146
  %v666 = vunpack.c.l.b16 %v147
  %v667 = vunpack.c.l.b16 %v148
  %v668 = vunpack.c.l.b16 %v149
  %v669 = vunpack.c.l.b16 %v150
  %v670 = vunpack.c.l.b16 %v151
  %v671 = vunpack.c.l.b16 %v152
  %v672 = vunpack.c.l.b16 %v153
  %v673 = vunpack.c.l.b16 %v154
  %v674 = vunpack.c.l.b16 %v155
  %v675 = vunpack.c.l.b16 %v156
  %v676 = vunpack.c.l.b16 %v157
  %v677 = vunpack.c.l.b16 %v158
  %v678 = vunpack.c.l.b16 %v159
  %v679 = vunpack.c.l.b16 %v160
  %v680 = vunpack.c.l.b16 %v161
  %v681 = vunpack.c.l.b16 %v162
  %v682 = vunpack.c.l.b16 %v163
  %v683 = vunpack.c.l.b16 %v164
  %v684 = vunpack.c.l.b16 %v165
  %v685 = vunpack.c.l.b16 %v166
  %v686 = vunpack.c.l.b16 %v167
  %v687 = vunpack.c.l.b16 %v168
  %v688 = vunpack.c.l.b16 %v169
  %v689 = vunpack.c.l.b16 %v170
  %v690 = vunpack.c.l.b16 %v171
  %v691 = vunpack.c.l.b16 %v172
  %v692 = vunpack.c.l.b16 %v173
  %v693 = vunpack.c.l.b16 %v174
  %v694 = vunpack.c.l.b16 %v175
  %v695 = vunpack.c.l.b16 %v176
  %v696 = vunpack.c.l.b16 %v177
  %v697 = vunpack.c.l.b16 %v178
  %v698 = vunpack.c.l.b16 %v179
  %v699 = vunpack.c.l.b16 %v180
  %v700 = vunpack.c.l.b16 %v181
  %v701 = vunpack.c.l.b16 %v182
  %v702 = vunpack.c.l.b16 %v183
  %v703 = vunpack.c.l.b16 %v184
  %v704 = vunpack.c.l.b16 %v185
  %v705 = vunpack.c.l.b16 %v186
  %v706 = vunpack.c.l.b16 %v187
  %v707 = vunpack.c.l.b16 %v188
  %v708 = vunpack.c.l.b16 %v189
  %v709 = vunpack.c.l.b16 %v190
  %v710 = vunpack.c.l.b16 %v191
  %v711 = vunpack.c.l.b16 %v192
  %v712 = vunpack.c.l.b16 %v193
  %v713 = vunpack.c.l.b16 %v194
  %v714 = vunpack.c.l.b16 %v195
  %v715 = vunpack.c.l.b16 %v196
  %v716 = vunpack.c.l.b16 %v197
  %v717 = vunpack.c.l.b16 %v198
  %v718 = vunpack.c.l.b16 %v199
  %v719 = vunpack.c.l.b16 %v200
  %v720 = vunpack.c.l.b16 %v201
  %v721 = vunpack.c.l.b16 %v202
  %v722 = vunpack.c.l.b16 %v203
  %v723 = vunpack.c.l.b16 %v204
  %v724 = vunpack.c.l.b16 %v205
  %v725 = vunpack.c.l.b16 %v206
  %v726 = vunpack.c.l.b16 %v207
  %v727 = vunpack.c.l.b16 %v208
  %v728 = vunpack.c.l.b16 %v209
  %v729 = vunpack.c.l.b16 %v210
  %v730 = vunpack.c.l.b16 %v211
  %v731 = vunpack.c.l.b16 %v212
  %v732 = vunpack.c.l.b16 %v213
  %v733 = vunpack.c.l.b16 %v214
  %v734 = vunpack.c.l.b16 %v215
  %v735 = vunpack.c.l.b16 %v216
  %v736 = vunpack.c.l.b16 %v217
  %v737 = vunpack.c.l.b16 %v218
  %v738 = vunpack.c.l.b16 %v219
  %v739 = vunpack.c.l.b16 %v220
  %v740 = vunpack.c.l.b16 %v221
  %v741 = vunpack.c.l.b16 %v222
  %v742 = vunpack.c.l.b16 %v223
  %v743 = vunpack.c.l.b16 %v224
  %v744 = vunpack.c.l.b16 %v225
  %v745 = vunpack.c.l.b16 %v226
  %v746 = vunpack.c.l.b16 %v227
  %v747 = vunpack.c.l.b16 %v228
  %v748 = vunpack.c.l.b16 %v229
  %v749 = vunpack.c.l.b16 %v230
  %v750 = vunpack.c.l.b16 %v231
  %v751 = vunpack.c.l.b16 %v232
  %v752 = vunpack.c.l.b16 %v233
  %v753 = vunpack.c.l.b16 %v234
  %v754 = vunpack.c.l.b16 %v235
  %v755 = vunpack.c.l.b16 %v236
  %v756 = vunpack.c.l.b16 %v237
  %v757 = vunpack.c.l.b16 %v238
  %v758 = vunpack.c.l.b16 %v239
  %v759 = vunpack.c.l.b16 %v240
  %v760 = vunpack.c.l.b16 %v241
  %v761 = vunpack.c.l.b16 %v242
  %v762 = vunpack.c.l.b16 %v243
  %v763 = vunpack.c.l.b16 %v244
  %v764 = vunpack.c.l.b16 %v245
  %v765 = vunpack.c.l.b16 %v246
  %v766 = vunpack.c.l.b16 %v247
  %v767 = vunpack.c.l.b16 %v248
  %v768 = vunpack.c.l.b16 %v249
  %v769 = vunpack.c.l.b16 %v250
  %v770 = vunpack.c.l.b16 %v251
  %v771 = vunpack.c.l.b16 %v252
  %v772 = vunpack.c.l.b16 %v253
  %v773 = vunpack.c.l.b16 %v254
  %v774 = vunpack.c.l.b16 %v255
  %v775 = vunpack.c.l.b16 %v256
  %v776 = vunpack.c.l.b16 %v257
  %v777 = vunpack.c.l.b16 %v258
  %v778 = vunpack.c.l.b16 %v259
  %v779 = vunpack.c.l.b16 %v260
  %v780 = vunpack.c.l.b16 %v261
  %v781 = vunpack.c.l.b16 %v262
  %v782 = vunpack.c.l.b16 %v263
  %v783 = vunpack.c.l.b16 %v264
  %v784 = vunpack.c.l.b16 %v265
  %v785 = vunpack.c.l.b16 %v266
  %v786 = vunpack.c.l.b16 %v267
  %v787 = vunpack.c.l.b16 %v268
  %v788 = vunpack.c.l.b16 %v269
  %v789 = vunpack.c.l.b16 %v270
  %v790 = vunpack.c.l.b16 %v271
  %v791 = vunpack.c.l.b16 %v272
  %v792 = vunpack.c.l.b16 %v273
  %v793 = vunpack.c.l.b16 %v274
  %v794 = vunpack.c.l.b16 %v275
  %v795 = vunpack.c.l.b16 %v276
  %v796 = vunpack.c.l.b16 %v277
  %v797 = vunpack.c.l.b16 %v278
  %v798 = vunpack.c.l.b16 %v279
  %v799 = vunpack.c.l.b16 %v280
  %v800 = vunpack.c.l.b16 %v281
  %v801 = vunpack.c.l.b16 %v282
  %v802 = vunpack.c.l.b16 %v283
  %v803 = vunpack.c.l.b16 %v284
  %v804 = vunpack.c.l.b16 %v285
  %v805 = vunpack.c.l.b16 %v286
  %v806 = vunpack.c.l.b16 %v287
  %v807 = vunpack.c.l.b16 %v288
  %v808 = vunpack.c.l.b16 %v289
  %v809 = vunpack.c.l.b16 %v290
  %v810 = vunpack.c.l.b16 %v291
  %v811 = vunpack.c.l.b16 %v292
  %v812 = vunpack.c.l.b16 %v293
  %v813 = vunpack.c.l.b16 %v294
  %v814 = vunpack.c.l.b16 %v295
  %v815 = vunpack.c.l.b16 %v296
  %v816 = vunpack.c.l.b16 %v297
  %v817 = vunpack.c.l.b16 %v298
  %v818 = vunpack.c.l.b16 %v299
  %v819 = vunpack.c.l.b16 %v300
  %v820 = vunpack.c.l.b16 %v301
  %v821 = vunpack.c.l.b16 %v302
  %v822 = vpack.c.b16 %v567, %v566
  %v823 = vpack.c.b16 %v569, %v568
  %v824 = vpack.c.b16 %v571, %v570
  %v825 = vpack.c.b16 %v573, %v572
  %v826 = vpack.c.b16 %v575, %v574
  %v827 = vpack.c.b16 %v577, %v576
  %v828 = vpack.c.b16 %v579, %v578
  %v829 = vpack.c.b16 %v581, %v580
  %v830 = vpack.c.b16 %v583, %v582
  %v831 = vpack.c.b16 %v585, %v584
  %v832 = vpack.c.b16 %v587, %v586
  %v833 = vpack.c.b16 %v589, %v588
  %v834 = vpack.c.b16 %v591, %v590
  %v835 = vpack.c.b16 %v593, %v592
  %v836 = vpack.c.b16 %v595, %v594
  %v837 = vpack.c.b16 %v597, %v596
  %v838 = vpack.c.b16 %v599, %v598
  %v839 = vpack.c.b16 %v601, %v600
  %v840 = vpack.c.b16 %v603, %v602
  %v841 = vpack.c.b16 %v605, %v604
  %v842 = vpack.c.b16 %v607, %v606
  %v843 = vpack.c.b16 %v609, %v608
  %v844 = vpack.c.b16 %v611, %v610
  %v845 = vpack.c.b16 %v613, %v612
  %v846 = vpack.c.b16 %v615, %v614
  %v847 = vpack.c.b16 %v617, %v616
  %v848 = vpack.c.b16 %v619, %v618
  %v849 = vpack.c.b16 %v621, %v620
  %v850 = vpack.c.b16 %v623, %v622
  %v851 = vpack.c.b16 %v625, %v624
  %v852 = vpack.c.b16 %v627, %v626
  %v853 = vpack.c.b16 %v629, %v628
  %v854 = vpack.c.b16 %v631, %v630
  %v855 = vpack.c.b16 %v633, %v632
  %v856 = vpack.c.b16 %v635, %v634
  %v857 = vpack.c.b16 %v637, %v636
  %v858 = vpack.c.b16 %v639, %v638
  %v859 = vpack.c.b16 %v641, %v640
  %v860 = vpack.c.b16 %v643, %v642
  %v861 = vpack.c.b16 %v645, %v644
  %v862 = vpack.c.b16 %v647, %v646
  %v863 = vpack.c.b16 %v649, %v648
  %v864 = vpack.c.b16 %v651, %v650
  %v865 = vpack.c.b16 %v653, %v652
  %v866 = vpack.c.b16 %v655, %v654
  %v867 = vpack.c.b16 %v657, %v656
  %v868 = vpack.c.b16 %v659, %v658
  %v869 = vpack.c.b16 %v661, %v660
  %v870 = vpack.c.b16 %v663, %v662
  %v871 = vpack.c.b16 %v665, %v664
  %v872 = vpack.c.b16 %v667, %v666
  %v873 = vpack.c.b16 %v669, %v668
  %v874 = vpack.c.b16 %v671, %v670
  %v875 = vpack.c.b16 %v673, %v672
  %v876 = vpack.c.b16 %v675, %v674
  %v877 = vpack.c.b16 %v677, %v676
  %v878 = vpack.c.b16 %v679, %v678
  %v879 = vpack.c.b16 %v681, %v680
  %v880 = vpack.c.b16 %v683, %v682
  %v881 = vpack.c.b16 %v685, %v684
  %v882 = vpack.c.b16 %v687, %v686
  %v883 = vpack.c.b16 %v689, %v688
  %v884 = vpack.c.b16 %v691, %v690
  %v885 = vpack.c.b16 %v693, %v692
  %v886 = vpack.c.b16 %v695, %v694
  %v887 = vpack.c.b16 %v697, %v696
  %v888 = vpack.c.b16 %v699, %v698
  %v889 = vpack.c.b16 %v701, %v700
  %v890 = vpack.c.b16 %v703, %v702
  %v891 = vpack.c.b16 %v705, %v704
  %v892 = vpack.c.b16 %v707, %v706
  %v893 = vpack.c.b16 %v709, %v708
  %v894 = vpack.c.b16 %v711, %v710
  %v895 = vpack.c.b16 %v713, %v712
  %v896 = vpack.c.b16 %v715, %v714
  %v897 = vpack.c.b16 %v717, %v716
  %v898 = vpack.c.b16 %v719, %v718
  %v899 = vpack.c.b16 %v721, %v720
  %v900 = vpack.c.b16 %v723, %v722
  %v901 = vpack.c.b16 %v725, %v724
  %v902 = vpack.c.b16 %v727, %v726
  %v903 = vpack.c.b16 %v729, %v728
  %v904 = vpack.c.b16 %v731, %v730
  %v905 = vpack.c.b16 %v733, %v732
  %v906 = vpack.c.b16 %v735, %v734
  %v907 = vpack.c.b16 %v737, %v736
  %v908 = vpack.c.b16 %v739, %v738
  %v909 = vpack.c.b16 %v741, %v740
  %v910 = vpack.c.b16 %v743, %v742
  %v911 = vpack.c.b16 %v745, %v744
  %v912 = vpack.c.b16 %v747, %v746
  %v913 = vpack.c.b16 %v749, %v748
  %v914 = vpack.c.b16 %v751, %v750
  %v915 = vpack.c.b16 %v753, %v752
  %v916 = vpack.c.b16 %v755, %v754
  %v917 = vpack.c.b16 %v757, %v756
  %v918 = vpack.c.b16 %v759, %v758
  %v919 = vpack.c.b16 %v761, %v760
  %v920 = vpack.c.b16 %v763, %v762
  %v921 = vpack.c.b16 %v765, %v764
  %v922 = vpack.c.b16 %v767, %v766
  %v923 = vpack.c.b16 %v769, %v768
  %v924 = vpack.c.b16 %v771, %v770
  %v925 = vpack.c.b16 %v773, %v772
  %v926 = vpack.c.b16 %v775, %v774
  %v927 = vpack.c.b16 %v777, %v776
  %v928 = vpack.c.b16 %v779, %v778
  %v929 = vpack.c.b16 %v781, %v780
  %v930 = vpack.c.b16 %v783, %v782
  %v931 = vpack.c.b16 %v785, %v784
  %v932 = vpack.c.b16 %v787, %v786
  %v933 = vpack.c.b16 %v789, %v788
  %v934 = vpack.c.b16 %v791, %v790
  %v935 = vpack.c.b16 %v793, %v792
  %v936 = vpack.c.b16 %v795, %v794
  %v937 = vpack.c.b16 %v797, %v796
  %v938 = vpack.c.b16 %v799, %v798
  %v939 = vpack.c.b16 %v801, %v800
  %v940 = vpack.c.b16 %v803, %v802
  %v941 = vpack.c.b16 %v805, %v804
  %v942 = vpack.c.b16 %v807, %v806
  %v943 = vpack.c.b16 %v809, %v808
  %v944 = vpack.c.b16 %v811, %v810
  %v945 = vpack.c.b16 %v813, %v812
  %v946 = vpack.c.b16 %v815, %v814
  %v947 = vpack.c.b16 %v817, %v816
  %v948 = vpack.c.b16 %v819, %v818
  %v949 = vpack.c.b16 %v821, %v820
  %1078 = vmatprep.subr.bf16.mxu0 0
  %1079 = vmatpush1.bf16.msra.mxu0 %v829
  %1080 = vmatprep.subr.bf16.mxu0 0
  %1081 = vmatpush1.bf16.msra.mxu0 %v828
  %1082 = vmatprep.subr.bf16.mxu0 0
  %1083 = vmatpush1.bf16.msra.mxu0 %v827
  %1084 = vmatprep.subr.bf16.mxu0 0
  %1085 = vmatpush1.bf16.msra.mxu0 %v826
  %1086 = vmatprep.subr.bf16.mxu0 0
  %1087 = vmatpush1.bf16.msra.mxu0 %v825
  %1088 = vmatprep.subr.bf16.mxu0 0
  %1089 = vmatpush1.bf16.msra.mxu0 %v824
  %1090 = vmatprep.subr.bf16.mxu0 0
  %1091 = vmatpush1.bf16.msra.mxu0 %v823
  %1092 = vmatprep.subr.bf16.mxu0 0
  %1093 = vmatpush1.bf16.msra.mxu0 %v822
  %1094 = vmatprep.subr.bf16.mxu0 0
  %1095 = vmatpush2.bf16.msra.mxu0 %v837
  %1096 = vmatprep.subr.bf16.mxu0 0
  %1097 = vmatpush2.bf16.msra.mxu0 %v836
  %1098 = vmatprep.subr.bf16.mxu0 0
  %1099 = vmatpush2.bf16.msra.mxu0 %v835
  %1100 = vmatprep.subr.bf16.mxu0 0
  %1101 = vmatpush2.bf16.msra.mxu0 %v834
  %1102 = vmatprep.subr.bf16.mxu0 0
  %1103 = vmatpush2.bf16.msra.mxu0 %v833
  %1104 = vmatprep.subr.bf16.mxu0 0
  %1105 = vmatpush2.bf16.msra.mxu0 %v832
  %1106 = vmatprep.subr.bf16.mxu0 0
  %1107 = vmatpush2.bf16.msra.mxu0 %v831
  %1108 = vmatprep.subr.bf16.mxu0 0
  %1109 = vmatpush2.bf16.msra.mxu0 %v830
  %1110 = vmatprep.mubr.bf16.mxu0 %v32
  %1111 = vmatmul.mubr.bf16.gmra.mxu0 %v31
  %v1112 = vpop.f32.mrf.mxu0
  %v1113 = vadd.f32 %v308, %v1112
  %v1114 = vpop.f32.mrf.mxu0
  %v1115 = vpop.f32.mrf.mxu0
  %v1116 = vpop.f32.mrf.mxu0
  %1117 = vdwg.mxu0
  %1118 = vmatprep.subr.bf16.mxu0 0
  %1119 = vmatpush1.bf16.msra.mxu0 %v845
  %1120 = vmatprep.subr.bf16.mxu0 0
  %1121 = vmatpush1.bf16.msra.mxu0 %v844
  %1122 = vmatprep.subr.bf16.mxu0 0
  %1123 = vmatpush1.bf16.msra.mxu0 %v843
  %1124 = vmatprep.subr.bf16.mxu0 0
  %1125 = vmatpush1.bf16.msra.mxu0 %v842
  %1126 = vmatprep.subr.bf16.mxu0 0
  %1127 = vmatpush1.bf16.msra.mxu0 %v841
  %1128 = vmatprep.subr.bf16.mxu0 0
  %1129 = vmatpush1.bf16.msra.mxu0 %v840
  %1130 = vmatprep.subr.bf16.mxu0 0
  %1131 = vmatpush1.bf16.msra.mxu0 %v839
  %1132 = vmatprep.subr.bf16.mxu0 0
  %1133 = vmatpush1.bf16.msra.mxu0 %v838
  %1134 = vmatprep.subr.bf16.mxu0 0
  %1135 = vmatpush2.bf16.msra.mxu0 %v853
  %1136 = vmatprep.subr.bf16.mxu0 0
  %1137 = vmatpush2.bf16.msra.mxu0 %v852
  %1138 = vmatprep.subr.bf16.mxu0 0
  %1139 = vmatpush2.bf16.msra.mxu0 %v851
  %1140 = vmatprep.subr.bf16.mxu0 0
  %1141 = vmatpush2.bf16.msra.mxu0 %v850
  %1142 = vmatprep.subr.bf16.mxu0 0
  %1143 = vmatpush2.bf16.msra.mxu0 %v849
  %1144 = vmatprep.subr.bf16.mxu0 0
  %1145 = vmatpush2.bf16.msra.mxu0 %v848
  %1146 = vmatprep.subr.bf16.mxu0 0
  %1147 = vmatpush2.bf16.msra.mxu0 %v847
  %1148 = vmatprep.subr.bf16.mxu0 0
  %1149 = vmatpush2.bf16.msra.mxu0 %v846
  %1150 = vmatprep.mubr.bf16.mxu0 %v34
  %1151 = vmatmul.mubr.bf16.gmra.mxu0 %v33
  %v1152 = vpop.f32.mrf.mxu0
  %v1153 = vadd.f32 %v1113, %v1152
  %v1154 = vpop.f32.mrf.mxu0
  %v1155 = vpop.f32.mrf.mxu0
  %v1156 = vpop.f32.mrf.mxu0
  %1157 = vdwg.mxu0
  %1158 = vmatprep.subr.bf16.mxu0 0
  %1159 = vmatpush1.bf16.msra.mxu0 %v861
  %1160 = vmatprep.subr.bf16.mxu0 0
  %1161 = vmatpush1.bf16.msra.mxu0 %v860
  %1162 = vmatprep.subr.bf16.mxu0 0
  %1163 = vmatpush1.bf16.msra.mxu0 %v859
  %1164 = vmatprep.subr.bf16.mxu0 0
  %1165 = vmatpush1.bf16.msra.mxu0 %v858
  %1166 = vmatprep.subr.bf16.mxu0 0
  %1167 = vmatpush1.bf16.msra.mxu0 %v857
  %1168 = vmatprep.subr.bf16.mxu0 0
  %1169 = vmatpush1.bf16.msra.mxu0 %v856
  %1170 = vmatprep.subr.bf16.mxu0 0
  %1171 = vmatpush1.bf16.msra.mxu0 %v855
  %1172 = vmatprep.subr.bf16.mxu0 0
  %1173 = vmatpush1.bf16.msra.mxu0 %v854
  %1174 = vmatprep.subr.bf16.mxu0 0
  %1175 = vmatpush2.bf16.msra.mxu0 %v869
  %1176 = vmatprep.subr.bf16.mxu0 0
  %1177 = vmatpush2.bf16.msra.mxu0 %v868
  %1178 = vmatprep.subr.bf16.mxu0 0
  %1179 = vmatpush2.bf16.msra.mxu0 %v867
  %1180 = vmatprep.subr.bf16.mxu0 0
  %1181 = vmatpush2.bf16.msra.mxu0 %v866
  %1182 = vmatprep.subr.bf16.mxu0 0
  %1183 = vmatpush2.bf16.msra.mxu0 %v865
  %1184 = vmatprep.subr.bf16.mxu0 0
  %1185 = vmatpush2.bf16.msra.mxu0 %v864
  %1186 = vmatprep.subr.bf16.mxu0 0
  %1187 = vmatpush2.bf16.msra.mxu0 %v863
  %1188 = vmatprep.subr.bf16.mxu0 0
  %1189 = vmatpush2.bf16.msra.mxu0 %v862
  %1190 = vmatprep.mubr.bf16.mxu0 %v36
  %1191 = vmatmul.mubr.bf16.gmra.mxu0 %v35
  %v1192 = vpop.f32.mrf.mxu0
  %v1193 = vadd.f32 %v1153, %v1192
  %v1194 = vpop.f32.mrf.mxu0
  %v1195 = vpop.f32.mrf.mxu0
  %v1196 = vpop.f32.mrf.mxu0
  %1197 = vdwg.mxu0
  %1198 = vmatprep.subr.bf16.mxu0 0
  %1199 = vmatpush1.bf16.msra.mxu0 %v877
  %1200 = vmatprep.subr.bf16.mxu0 0
  %1201 = vmatpush1.bf16.msra.mxu0 %v876
  %1202 = vmatprep.subr.bf16.mxu0 0
  %1203 = vmatpush1.bf16.msra.mxu0 %v875
  %1204 = vmatprep.subr.bf16.mxu0 0
  %1205 = vmatpush1.bf16.msra.mxu0 %v874
  %1206 = vmatprep.subr.bf16.mxu0 0
  %1207 = vmatpush1.bf16.msra.mxu0 %v873
  %1208 = vmatprep.subr.bf16.mxu0 0
  %1209 = vmatpush1.bf16.msra.mxu0 %v872
  %1210 = vmatprep.subr.bf16.mxu0 0
  %1211 = vmatpush1.bf16.msra.mxu0 %v871
  %1212 = vmatprep.subr.bf16.mxu0 0
  %1213 = vmatpush1.bf16.msra.mxu0 %v870
  %1214 = vmatprep.subr.bf16.mxu0 0
  %1215 = vmatpush2.bf16.msra.mxu0 %v885
  %1216 = vmatprep.subr.bf16.mxu0 0
  %1217 = vmatpush2.bf16.msra.mxu0 %v884
  %1218 = vmatprep.subr.bf16.mxu0 0
  %1219 = vmatpush2.bf16.msra.mxu0 %v883
  %1220 = vmatprep.subr.bf16.mxu0 0
  %1221 = vmatpush2.bf16.msra.mxu0 %v882
  %1222 = vmatprep.subr.bf16.mxu0 0
  %1223 = vmatpush2.bf16.msra.mxu0 %v881
  %1224 = vmatprep.subr.bf16.mxu0 0
  %1225 = vmatpush2.bf16.msra.mxu0 %v880
  %1226 = vmatprep.subr.bf16.mxu0 0
  %1227 = vmatpush2.bf16.msra.mxu0 %v879
  %1228 = vmatprep.subr.bf16.mxu0 0
  %1229 = vmatpush2.bf16.msra.mxu0 %v878
  %1230 = vmatprep.mubr.bf16.mxu0 %v38
  %1231 = vmatmul.mubr.bf16.gmra.mxu0 %v37
  %v1232 = vpop.f32.mrf.mxu0
  %v1233 = vadd.f32 %v1193, %v1232
  %v1234 = vpop.f32.mrf.mxu0
  %v1235 = vpop.f32.mrf.mxu0
  %v1236 = vpop.f32.mrf.mxu0
  %1237 = vdwg.mxu0
  %1238 = vmatprep.subr.bf16.mxu0 0
  %1239 = vmatpush1.bf16.msra.mxu0 %v893
  %1240 = vmatprep.subr.bf16.mxu0 0
  %1241 = vmatpush1.bf16.msra.mxu0 %v892
  %1242 = vmatprep.subr.bf16.mxu0 0
  %1243 = vmatpush1.bf16.msra.mxu0 %v891
  %1244 = vmatprep.subr.bf16.mxu0 0
  %1245 = vmatpush1.bf16.msra.mxu0 %v890
  %1246 = vmatprep.subr.bf16.mxu0 0
  %1247 = vmatpush1.bf16.msra.mxu0 %v889
  %1248 = vmatprep.subr.bf16.mxu0 0
  %1249 = vmatpush1.bf16.msra.mxu0 %v888
  %1250 = vmatprep.subr.bf16.mxu0 0
  %1251 = vmatpush1.bf16.msra.mxu0 %v887
  %1252 = vmatprep.subr.bf16.mxu0 0
  %1253 = vmatpush1.bf16.msra.mxu0 %v886
  %1254 = vmatprep.subr.bf16.mxu0 0
  %1255 = vmatpush2.bf16.msra.mxu0 %v901
  %1256 = vmatprep.subr.bf16.mxu0 0
  %1257 = vmatpush2.bf16.msra.mxu0 %v900
  %1258 = vmatprep.subr.bf16.mxu0 0
  %1259 = vmatpush2.bf16.msra.mxu0 %v899
  %1260 = vmatprep.subr.bf16.mxu0 0
  %1261 = vmatpush2.bf16.msra.mxu0 %v898
  %1262 = vmatprep.subr.bf16.mxu0 0
  %1263 = vmatpush2.bf16.msra.mxu0 %v897
  %1264 = vmatprep.subr.bf16.mxu0 0
  %1265 = vmatpush2.bf16.msra.mxu0 %v896
  %1266 = vmatprep.subr.bf16.mxu0 0
  %1267 = vmatpush2.bf16.msra.mxu0 %v895
  %1268 = vmatprep.subr.bf16.mxu0 0
  %1269 = vmatpush2.bf16.msra.mxu0 %v894
  %1270 = vmatprep.mubr.bf16.mxu0 %v40
  %1271 = vmatmul.mubr.bf16.gmra.mxu0 %v39
  %v1272 = vpop.f32.mrf.mxu0
  %v1273 = vadd.f32 %v1233, %v1272
  %v1274 = vpop.f32.mrf.mxu0
  %v1275 = vpop.f32.mrf.mxu0
  %v1276 = vpop.f32.mrf.mxu0
  %1277 = vdwg.mxu0
  %1278 = vmatprep.subr.bf16.mxu0 0
  %1279 = vmatpush1.bf16.msra.mxu0 %v909
  %1280 = vmatprep.subr.bf16.mxu0 0
  %1281 = vmatpush1.bf16.msra.mxu0 %v908
  %1282 = vmatprep.subr.bf16.mxu0 0
  %1283 = vmatpush1.bf16.msra.mxu0 %v907
  %1284 = vmatprep.subr.bf16.mxu0 0
  %1285 = vmatpush1.bf16.msra.mxu0 %v906
  %1286 = vmatprep.subr.bf16.mxu0 0
  %1287 = vmatpush1.bf16.msra.mxu0 %v905
  %1288 = vmatprep.subr.bf16.mxu0 0
  %1289 = vmatpush1.bf16.msra.mxu0 %v904
  %1290 = vmatprep.subr.bf16.mxu0 0
  %1291 = vmatpush1.bf16.msra.mxu0 %v903
  %1292 = vmatprep.subr.bf16.mxu0 0
  %1293 = vmatpush1.bf16.msra.mxu0 %v902
  %1294 = vmatprep.subr.bf16.mxu0 0
  %1295 = vmatpush2.bf16.msra.mxu0 %v917
  %1296 = vmatprep.subr.bf16.mxu0 0
  %1297 = vmatpush2.bf16.msra.mxu0 %v916
  %1298 = vmatprep.subr.bf16.mxu0 0
  %1299 = vmatpush2.bf16.msra.mxu0 %v915
  %1300 = vmatprep.subr.bf16.mxu0 0
  %1301 = vmatpush2.bf16.msra.mxu0 %v914
  %1302 = vmatprep.subr.bf16.mxu0 0
  %1303 = vmatpush2.bf16.msra.mxu0 %v913
  %1304 = vmatprep.subr.bf16.mxu0 0
  %1305 = vmatpush2.bf16.msra.mxu0 %v912
  %1306 = vmatprep.subr.bf16.mxu0 0
  %1307 = vmatpush2.bf16.msra.mxu0 %v911
  %1308 = vmatprep.subr.bf16.mxu0 0
  %1309 = vmatpush2.bf16.msra.mxu0 %v910
  %1310 = vmatprep.mubr.bf16.mxu0 %v42
  %1311 = vmatmul.mubr.bf16.gmra.mxu0 %v41
  %v1312 = vpop.f32.mrf.mxu0
  %v1313 = vadd.f32 %v1273, %v1312
  %v1314 = vpop.f32.mrf.mxu0
  %v1315 = vpop.f32.mrf.mxu0
  %v1316 = vpop.f32.mrf.mxu0
  %1317 = vdwg.mxu0
  %1318 = vmatprep.subr.bf16.mxu0 0
  %1319 = vmatpush1.bf16.msra.mxu0 %v925
  %1320 = vmatprep.subr.bf16.mxu0 0
  %1321 = vmatpush1.bf16.msra.mxu0 %v924
  %1322 = vmatprep.subr.bf16.mxu0 0
  %1323 = vmatpush1.bf16.msra.mxu0 %v923
  %1324 = vmatprep.subr.bf16.mxu0 0
  %1325 = vmatpush1.bf16.msra.mxu0 %v922
  %1326 = vmatprep.subr.bf16.mxu0 0
  %1327 = vmatpush1.bf16.msra.mxu0 %v921
  %1328 = vmatprep.subr.bf16.mxu0 0
  %1329 = vmatpush1.bf16.msra.mxu0 %v920
  %1330 = vmatprep.subr.bf16.mxu0 0
  %1331 = vmatpush1.bf16.msra.mxu0 %v919
  %1332 = vmatprep.subr.bf16.mxu0 0
  %1333 = vmatpush1.bf16.msra.mxu0 %v918
  %1334 = vmatprep.subr.bf16.mxu0 0
  %1335 = vmatpush2.bf16.msra.mxu0 %v933
  %1336 = vmatprep.subr.bf16.mxu0 0
  %1337 = vmatpush2.bf16.msra.mxu0 %v932
  %1338 = vmatprep.subr.bf16.mxu0 0
  %1339 = vmatpush2.bf16.msra.mxu0 %v931
  %1340 = vmatprep.subr.bf16.mxu0 0
  %1341 = vmatpush2.bf16.msra.mxu0 %v930
  %1342 = vmatprep.subr.bf16.mxu0 0
  %1343 = vmatpush2.bf16.msra.mxu0 %v929
  %1344 = vmatprep.subr.bf16.mxu0 0
  %1345 = vmatpush2.bf16.msra.mxu0 %v928
  %1346 = vmatprep.subr.bf16.mxu0 0
  %1347 = vmatpush2.bf16.msra.mxu0 %v927
  %1348 = vmatprep.subr.bf16.mxu0 0
  %1349 = vmatpush2.bf16.msra.mxu0 %v926
  %1350 = vmatprep.mubr.bf16.mxu0 %v44
  %1351 = vmatmul.mubr.bf16.gmra.mxu0 %v43
  %v1352 = vpop.f32.mrf.mxu0
  %v1353 = vadd.f32 %v1313, %v1352
  %v1354 = vpop.f32.mrf.mxu0
  %v1355 = vpop.f32.mrf.mxu0
  %v1356 = vpop.f32.mrf.mxu0
  %1357 = vdwg.mxu0
  %1358 = vmatprep.subr.bf16.mxu0 0
  %1359 = vmatpush1.bf16.msra.mxu0 %v941
  %1360 = vmatprep.subr.bf16.mxu0 0
  %1361 = vmatpush1.bf16.msra.mxu0 %v940
  %1362 = vmatprep.subr.bf16.mxu0 0
  %1363 = vmatpush1.bf16.msra.mxu0 %v939
  %1364 = vmatprep.subr.bf16.mxu0 0
  %1365 = vmatpush1.bf16.msra.mxu0 %v938
  %1366 = vmatprep.subr.bf16.mxu0 0
  %1367 = vmatpush1.bf16.msra.mxu0 %v937
  %1368 = vmatprep.subr.bf16.mxu0 0
  %1369 = vmatpush1.bf16.msra.mxu0 %v936
  %1370 = vmatprep.subr.bf16.mxu0 0
  %1371 = vmatpush1.bf16.msra.mxu0 %v935
  %1372 = vmatprep.subr.bf16.mxu0 0
  %1373 = vmatpush1.bf16.msra.mxu0 %v934
  %1374 = vmatprep.subr.bf16.mxu0 0
  %1375 = vmatpush2.bf16.msra.mxu0 %v949
  %1376 = vmatprep.subr.bf16.mxu0 0
  %1377 = vmatpush2.bf16.msra.mxu0 %v948
  %1378 = vmatprep.subr.bf16.mxu0 0
  %1379 = vmatpush2.bf16.msra.mxu0 %v947
  %1380 = vmatprep.subr.bf16.mxu0 0
  %1381 = vmatpush2.bf16.msra.mxu0 %v946
  %1382 = vmatprep.subr.bf16.mxu0 0
  %1383 = vmatpush2.bf16.msra.mxu0 %v945
  %1384 = vmatprep.subr.bf16.mxu0 0
  %1385 = vmatpush2.bf16.msra.mxu0 %v944
  %1386 = vmatprep.subr.bf16.mxu0 0
  %1387 = vmatpush2.bf16.msra.mxu0 %v943
  %1388 = vmatprep.subr.bf16.mxu0 0
  %1389 = vmatpush2.bf16.msra.mxu0 %v942
  %1390 = vmatprep.mubr.bf16.mxu0 %v46
  %1391 = vmatmul.mubr.bf16.gmra.mxu0 %v45
  %v1392 = vpop.f32.mrf.mxu0
  %v1393 = vadd.f32 %v1353, %v1392
  %v1394 = vpop.f32.mrf.mxu0
  %v1395 = vpop.f32.mrf.mxu0
  %v1396 = vpop.f32.mrf.mxu0
  %1397 = vdwg.mxu0
  %1398 = vst [vmem:[%s3] sm:$0xff] %v1393
  // Predicated region
  $region14: #{captioning_forward.5} parent=0 // pred_check
    _
  $region15: #{captioning_forward.5} parent=0 // pred_check_branch
    %1400 = sbr.rel (0) target = $region17
  $region16: #{captioning_forward.5} parent=0 // pred_region
    _
  $region17: #{captioning_forward.5} parent=0 // pred_fallthru
    _
  // Predicated region
  $region18: #{captioning_forward.5} parent=0 // pred_check
    _
  $region19: #{captioning_forward.5} parent=0 // pred_check_branch
    %1402 = sbr.rel (0) target = $region21
  $region20: #{captioning_forward.5} parent=0 // pred_region
    _
  $region21: #{captioning_forward.5} parent=0 // pred_fallthru
    _

// kernel: captioning_forward.4
$region0: #{captioning_forward.4}
  #allocation0 [shape = 'u32[]', space=smem, size = 0x4, offset = 0x4, fixed_abs, tag = 'smem constant byte address 0x4 - core index']
  #allocation1 [shape = 'u32[144,128]{1,0:T(1,128)}', space=vmem, size = 0x12000, scoped, tag = 'internal scratch']
  #allocation2 [shape = 'f32[8,2048]{1,0:T(8,128)}', space=vmem, size = 0x10000, scoped, tag = 'scratch operand']
  %s0 = inlined_call_operand.vmem [shape: f32[2,256,3], index: 0, kind: input, shape index: {}]
  %s1 = inlined_call_operand.hbm [shape: f32[3,2048], index: 1, kind: input, shape index: {}]
  %s2 = inlined_call_operand.hbm [shape: f32[1,2048], index: 2, kind: input, shape index: {}]
  %s3 = inlined_call_operand.vmem [shape: f32[2,1,2048], index: 3, kind: output, shape index: {}]
  %s4 = sld [smem:[#allocation0]]
  $region61: #{captioning_forward.4} parent=0
    _
  %s6 = ssub.s32 1, %s4
  %s7 = scalar_select 0, %s6, %s4
  $region1: #{captioning_forward.4} parent=0
    #allocation3 [shape = 'u8[32768]{0}', space=vmem, size = 0x8000, scoped, tag = 'input window, operand 1, single buffered']
    #allocation4 [shape = 's32[2]{0}', space=sflag, size = 0x8, scoped, tag = 'scoped memory for captioning_forward.4']
    #allocation5 [shape = 'u8[8192]{0}', space=vmem, size = 0x2000, scoped, tag = 'input window, operand 2, single buffered']
    #allocation6 [shape = 's32[1]{0}', space=sflag, size = 0x4, scoped, tag = 'scoped memory for captioning_forward.4']
    %8 = vsyncpa [#allocation4], 0
    %9 = vsyncpa [#allocation6], 0
    loop: start=0, step=1, limit=4
    $region2: #{captioning_forward.4} parent=1 // loop_pre_header
      _
    $region3: #{captioning_forward.4} parent=1 // loop_header
      %s11 = sphi 0, %s15
      %p12 = scmp.ge.s32.totalorder %s11, 4
      %s18 = sphi 0, %s30
      %s19 = sphi 0, %s26
      %s20 = sphi 0, %s18
      %s21 = sphi 0, %s19
      %s22 = sphi 0, %s20
      %s23 = sphi 0, %s21
      %s35 = sphi 0, %s37
      %s38 = sphi 0, %s35
      %s39 = sphi 0, %s38
      %s55 = sphi 0, %s39
      %s59 = sphi 0, %s59
      %s61 = sphi 0, %s59
      %s62 = sphi 0, %s61
      %s76 = sphi 0, %s62
      %s80 = sphi 0, %s80
      %s82 = sphi 0, %s80
      %s83 = sphi 0, %s82
      %s97 = sphi 0, %s83
      %s103 = sphi 0, %s105
      %s106 = sphi 0, %s103
      %s107 = sphi 0, %s106
      %s123 = sphi 0, %s107
    $region4: #{captioning_forward.4} parent=1 // loop_header_branch
      %14 = sbr.rel (%p12) target = $region8
    $region5: #{captioning_forward.4} parent=1 // loop_body
      %s16 = ssub.s32 %s11, 1
      %s17 = ssub.s32 %s11, 2
      %s24 = sadd.s32 1, %s19
      %p25 = scmp.ge.s32.totalorder %s24, 1
      %s26 = scalar_select %p25, 0, %s24
      %s27 = sadd.s32 1, %s18
      %s28 = scalar_select %p25, %s27, %s18
      %p29 = scmp.ge.s32.totalorder %s28, 2
      %s30 = scalar_select %p29, 0, %s28
      %s31 = ssub.s32 %s18, %s30
      %s32 = ssub.s32 %s19, %s26
      %s33 = sor.u32 %s31, %s32
      %p34 = scmp.eq.s32.totalorder %s33, 0
      %s36 = sadd.s32 %s35, 1
      %s37 = scalar_select %p34, %s35, %s36
      %p40 = pneg %p34
      %p41 = scmp.eq.s32.totalorder %s11, 1
      %p42 = por %p40, %p41
      %p43 = scmp.ne.s32.totalorder %s35, %s38
      %p44 = scmp.eq.s32.totalorder %s11, 0
      %p45 = por %p43, %p44
      %p46 = scmp.ne.s32.totalorder %s35, %s38
      %p47 = scmp.eq.s32.totalorder %s16, 1
      %p48 = por %p46, %p47
      %p49 = scmp.ne.s32.totalorder %s38, %s39
      %p50 = scmp.eq.s32.totalorder %s16, 0
      %p51 = por %p49, %p50
      %p52 = scmp.ne.s32.totalorder %s38, %s39
      %p53 = scmp.eq.s32.totalorder %s17, 1
      %p54 = por %p52, %p53
      %p56 = scmp.ne.s32.totalorder %s39, %s55
      %p57 = scmp.eq.s32.totalorder %s17, 0
      %p58 = por %p56, %p57
      %s60 = sadd.s32 %s59, 1
      %p63 = scmp.eq.s32.totalorder %s11, 1
      %p64 = scmp.ne.s32.totalorder %s59, %s61
      %p65 = scmp.eq.s32.totalorder %s11, 0
      %p66 = por %p64, %p65
      %p67 = scmp.ne.s32.totalorder %s59, %s61
      %p68 = scmp.eq.s32.totalorder %s16, 1
      %p69 = por %p67, %p68
      %p70 = scmp.ne.s32.totalorder %s61, %s62
      %p71 = scmp.eq.s32.totalorder %s16, 0
      %p72 = por %p70, %p71
      %p73 = scmp.ne.s32.totalorder %s61, %s62
      %p74 = scmp.eq.s32.totalorder %s17, 1
      %p75 = por %p73, %p74
      %p77 = scmp.ne.s32.totalorder %s62, %s76
      %p78 = scmp.eq.s32.totalorder %s17, 0
      %p79 = por %p77, %p78
      %s81 = sadd.s32 %s80, 1
      %p84 = scmp.eq.s32.totalorder %s11, 1
      %p85 = scmp.ne.s32.totalorder %s80, %s82
      %p86 = scmp.eq.s32.totalorder %s11, 0
      %p87 = por %p85, %p86
      %p88 = scmp.ne.s32.totalorder %s80, %s82
      %p89 = scmp.eq.s32.totalorder %s16, 1
      %p90 = por %p88, %p89
      %p91 = scmp.ne.s32.totalorder %s82, %s83
      %p92 = scmp.eq.s32.totalorder %s16, 0
      %p93 = por %p91, %p92
      %p94 = scmp.ne.s32.totalorder %s82, %s83
      %p95 = scmp.eq.s32.totalorder %s17, 1
      %p96 = por %p94, %p95
      %p98 = scmp.ne.s32.totalorder %s83, %s97
      %p99 = scmp.eq.s32.totalorder %s17, 0
      %p100 = por %p98, %p99
      %s101 = ssub.s32 %s18, %s30
      %p102 = scmp.eq.s32.totalorder %s101, 0
      %s104 = sadd.s32 %s103, 1
      %s105 = scalar_select %p102, %s103, %s104
      %p108 = pneg %p102
      %p109 = scmp.eq.s32.totalorder %s11, 1
      %p110 = por %p108, %p109
      %p111 = scmp.ne.s32.totalorder %s103, %s106
      %p112 = scmp.eq.s32.totalorder %s11, 0
      %p113 = por %p111, %p112
      %p114 = scmp.ne.s32.totalorder %s103, %s106
      %p115 = scmp.eq.s32.totalorder %s16, 1
      %p116 = por %p114, %p115
      %p117 = scmp.ne.s32.totalorder %s106, %s107
      %p118 = scmp.eq.s32.totalorder %s16, 0
      %p119 = por %p117, %p118
      %p120 = scmp.ne.s32.totalorder %s106, %s107
      %p121 = scmp.eq.s32.totalorder %s17, 1
      %p122 = por %p120, %p121
      %p124 = scmp.ne.s32.totalorder %s107, %s123
      %p125 = scmp.eq.s32.totalorder %s17, 0
      %p126 = por %p124, %p125
      %p127 = scmp.le.s32.totalorder 1, %s11
      %p128 = scmp.lt.s32.totalorder %s11, 3
      %p129 = pnand %p127, %p128
      %p130 = pneg %p129
      // Predicated region
      $region9: #{captioning_forward.4} parent=5 // pred_check
        _
      $region10: #{captioning_forward.4} parent=5 // pred_check_branch
        %132 = sbr.rel (%p129) target = $region12
      $region11: #{captioning_forward.4} parent=5 // pred_region
        %s133 = ssub.s32 %s11, 1
        // Predicated region
        $region13: #{captioning_forward.4} parent=11 // pred_check
          %p134 = pneg %p72
        $region14: #{captioning_forward.4} parent=11 // pred_check_branch
          %136 = sbr.rel (%p134) target = $region16
        $region15: #{captioning_forward.4} parent=11 // pred_region
          %s138 = ssub.s32 1024, 1024
          %139 = vsyncadd [#allocation4], %s138
          %s141 = sshll.u32 [#allocation3], 4
          %s142 = int_to_ptr.vmem [resolvable:$true] %s141
          %144 = dma.hbm_to_vmem [thread:$0]  %s1, 1024, %s142, [#allocation4]
        $region16: #{captioning_forward.4} parent=11 // pred_fallthru
          _
        // Predicated region
        $region17: #{captioning_forward.4} parent=11 // pred_check
          %p145 = pneg %p93
        $region18: #{captioning_forward.4} parent=11 // pred_check_branch
          %147 = sbr.rel (%p145) target = $region20
        $region19: #{captioning_forward.4} parent=11 // pred_region
          %s149 = ssub.s32 256, 256
          %150 = vsyncadd [#allocation6], %s149
          %s152 = sshll.u32 [#allocation5], 4
          %s153 = int_to_ptr.vmem [resolvable:$true] %s152
          %155 = dma.hbm_to_vmem [thread:$0]  %s2, 256, %s153, [#allocation6]
        $region20: #{captioning_forward.4} parent=11 // pred_fallthru
          _
      $region12: #{captioning_forward.4} parent=5 // pred_fallthru
        _
      %p156 = scmp.lt.s32.totalorder %s11, 2
      // Predicated region
      $region21: #{captioning_forward.4} parent=5 // pred_check
        %p157 = pneg %p156
      $region22: #{captioning_forward.4} parent=5 // pred_check_branch
        %159 = sbr.rel (%p157) target = $region24
      $region23: #{captioning_forward.4} parent=5 // pred_region
        // Predicated region
        $region25: #{captioning_forward.4} parent=23 // pred_check
          %p160 = pneg %p45
        $region26: #{captioning_forward.4} parent=23 // pred_check_branch
          %162 = sbr.rel (%p160) target = $region28
        $region27: #{captioning_forward.4} parent=23 // pred_region
          %s163 = smul.u32 32, %s19
          %p164 = scmp.lt.s32.totalorder %s18, 1
          %s165 = scalar_select %p164, %s18, 1
          %p166 = scmp.lt.s32.totalorder %s163, 31
          %s167 = scalar_select %p166, %s163, 31
          %s168 = smul.addr %s165, 32
          %s169 = sadd.s32 %s167, %s168
          %s170 = smul.addr %s169, 8
          %s171 = scalar_lea.vmem %s0, %s170
          %s172 = smul.u32 32, %s19
        $region28: #{captioning_forward.4} parent=23 // pred_fallthru
          _
      $region24: #{captioning_forward.4} parent=5 // pred_fallthru
        _
      %p173 = scmp.le.s32.totalorder 1, %s11
      %p174 = scmp.lt.s32.totalorder %s11, 3
      %p175 = pnand %p173, %p174
      %p176 = pneg %p175
      // Predicated region
      $region29: #{captioning_forward.4} parent=5 // pred_check
        _
      $region30: #{captioning_forward.4} parent=5 // pred_check_branch
        %178 = sbr.rel (%p175) target = $region32
      $region31: #{captioning_forward.4} parent=5 // pred_region
        %s179 = ssub.s32 %s11, 1
        // Predicated region
        $region33: #{captioning_forward.4} parent=31 // pred_check
          %p180 = pneg %p72
        $region34: #{captioning_forward.4} parent=31 // pred_check_branch
          %182 = sbr.rel (%p180) target = $region36
        $region35: #{captioning_forward.4} parent=31 // pred_region
          %183 = dma.done [#allocation4], 1024
        $region36: #{captioning_forward.4} parent=31 // pred_fallthru
          _
        // Predicated region
        $region37: #{captioning_forward.4} parent=31 // pred_check
          %p184 = pneg %p93
        $region38: #{captioning_forward.4} parent=31 // pred_check_branch
          %186 = sbr.rel (%p184) target = $region40
        $region39: #{captioning_forward.4} parent=31 // pred_region
          %187 = dma.done [#allocation6], 256
        $region40: #{captioning_forward.4} parent=31 // pred_fallthru
          _
        %s188 = smul.u32 32, %s21
        %p189 = scmp.lt.s32.totalorder %s20, 1
        %s190 = scalar_select %p189, %s20, 1
        %p191 = scmp.lt.s32.totalorder %s188, 31
        %s192 = scalar_select %p191, %s188, 31
        %s193 = smul.addr %s190, 32
        %s194 = sadd.s32 %s192, %s193
        %s195 = smul.addr %s194, 8
        %s196 = scalar_lea.vmem %s0, %s195
        %p197 = pneg %p51
        %p198 = pneg %p48
        %p199 = pneg %p72
        %p200 = pneg %p69
        %p201 = pneg %p93
        %p202 = pneg %p90
        %p203 = pneg %p119
        %p204 = pneg %p116
        %p205 = scmp.lt.s32.totalorder %s20, 1
        %s206 = scalar_select %p205, %s20, 1
        %s207 = smul.addr %s206, 16
        %s208 = scalar_lea.vmem %s3, %s207
        %s209 = smul.u32 32, %s21
        %p210 = scmp.lt.s32.totalorder %s20, 1
        %s211 = scalar_select %p210, %s20, 1
        %p212 = scmp.lt.s32.totalorder %s209, 31
        %s213 = scalar_select %p212, %s209, 31
        %s214 = smul.addr %s211, 32
        %s215 = sadd.s32 %s213, %s214
        %s216 = smul.addr %s215, 8
        %s217 = scalar_lea.vmem %s0, %s216
        %s218 = smul.u32 32, %s21
        %p219 = scmp.lt.s32.totalorder %s20, 1
        %s220 = scalar_select %p219, %s20, 1
        %s221 = smul.addr %s220, 16
        %s222 = scalar_lea.vmem %s3, %s221
        %p223 = scmp.eq.s32.totalorder %s21, 0
        // Predicated region
        $region41: #{captioning_forward.4} parent=31 // pred_check
          %p224 = pneg %p223
        $region42: #{captioning_forward.4} parent=31 // pred_check_branch
          %226 = sbr.rel (%p224) target = $region44
        $region43: #{captioning_forward.4} parent=31 // pred_region
          %227 = vst [vmem:[#allocation2] sm:$0xff] 0.0
          %228 = vst [vmem:[#allocation2 + $0x8] sm:$0xff] 0.0
          %229 = vst [vmem:[#allocation2 + $0x10] sm:$0xff] 0.0
          %230 = vst [vmem:[#allocation2 + $0x18] sm:$0xff] 0.0
          %231 = vst [vmem:[#allocation2 + $0x20] sm:$0xff] 0.0
          %232 = vst [vmem:[#allocation2 + $0x28] sm:$0xff] 0.0
          %233 = vst [vmem:[#allocation2 + $0x30] sm:$0xff] 0.0
          %234 = vst [vmem:[#allocation2 + $0x38] sm:$0xff] 0.0
          %235 = vst [vmem:[#allocation2 + $0x40] sm:$0xff] 0.0
          %236 = vst [vmem:[#allocation2 + $0x48] sm:$0xff] 0.0
          %237 = vst [vmem:[#allocation2 + $0x50] sm:$0xff] 0.0
          %238 = vst [vmem:[#allocation2 + $0x58] sm:$0xff] 0.0
          %239 = vst [vmem:[#allocation2 + $0x60] sm:$0xff] 0.0
          %240 = vst [vmem:[#allocation2 + $0x68] sm:$0xff] 0.0
          %241 = vst [vmem:[#allocation2 + $0x70] sm:$0xff] 0.0
          %242 = vst [vmem:[#allocation2 + $0x78] sm:$0xff] 0.0
        $region44: #{captioning_forward.4} parent=31 // pred_fallthru
          _
        %v243 = vld [vmem:[%s217] sm:$0xff]
        %v244 = vld [vmem:[%s217 + $0x8] sm:$0xff]
        %v245 = vld [vmem:[%s217 + $0x10] sm:$0xff]
        %v246 = vld [vmem:[%s217 + $0x18] sm:$0xff]
        %v247 = vld [vmem:[%s217 + $0x20] sm:$0xff]
        %v248 = vld [vmem:[%s217 + $0x28] sm:$0xff]
        %v249 = vld [vmem:[%s217 + $0x30] sm:$0xff]
        %v250 = vld [vmem:[%s217 + $0x38] sm:$0xff]
        %v251 = vld [vmem:[%s217 + $0x40] sm:$0xff]
        %v252 = vld [vmem:[%s217 + $0x48] sm:$0xff]
        %v253 = vld [vmem:[%s217 + $0x50] sm:$0xff]
        %v254 = vld [vmem:[%s217 + $0x58] sm:$0xff]
        %v255 = vld [vmem:[%s217 + $0x60] sm:$0xff]
        %v256 = vld [vmem:[%s217 + $0x68] sm:$0xff]
        %v257 = vld [vmem:[%s217 + $0x70] sm:$0xff]
        %v258 = vld [vmem:[%s217 + $0x78] sm:$0xff]
        %v259 = vld [vmem:[%s217 + $0x80] sm:$0xff]
        %v260 = vld [vmem:[%s217 + $0x88] sm:$0xff]
        %v261 = vld [vmem:[%s217 + $0x90] sm:$0xff]
        %v262 = vld [vmem:[%s217 + $0x98] sm:$0xff]
        %v263 = vld [vmem:[%s217 + $0xa0] sm:$0xff]
        %v264 = vld [vmem:[%s217 + $0xa8] sm:$0xff]
        %v265 = vld [vmem:[%s217 + $0xb0] sm:$0xff]
        %v266 = vld [vmem:[%s217 + $0xb8] sm:$0xff]
        %v267 = vld [vmem:[%s217 + $0xc0] sm:$0xff]
        %v268 = vld [vmem:[%s217 + $0xc8] sm:$0xff]
        %v269 = vld [vmem:[%s217 + $0xd0] sm:$0xff]
        %v270 = vld [vmem:[%s217 + $0xd8] sm:$0xff]
        %v271 = vld [vmem:[%s217 + $0xe0] sm:$0xff]
        %v272 = vld [vmem:[%s217 + $0xe8] sm:$0xff]
        %v273 = vld [vmem:[%s217 + $0xf0] sm:$0xff]
        %v274 = vld [vmem:[%s217 + $0xf8] sm:$0xff]
        %v275 = vld [vmem:[#allocation3] ss:$4 sm:$0xf]
        %277 = vset.pattern.permute.xlu0 0
        %278 = vperm.xlu0 %277, %v243
        %v279 = vpop.permute.xlu0 %278
        %282 = vset.pattern.permute.xlu0 0
        %283 = vperm.xlu0 %282, %v244
        %v284 = vpop.permute.xlu0 %283
        %287 = vset.pattern.permute.xlu0 0
        %288 = vperm.xlu0 %287, %v245
        %v289 = vpop.permute.xlu0 %288
        %292 = vset.pattern.permute.xlu0 0
        %293 = vperm.xlu0 %292, %v246
        %v294 = vpop.permute.xlu0 %293
        %297 = vset.pattern.permute.xlu0 0
        %298 = vperm.xlu0 %297, %v247
        %v299 = vpop.permute.xlu0 %298
        %302 = vset.pattern.permute.xlu0 0
        %303 = vperm.xlu0 %302, %v248
        %v304 = vpop.permute.xlu0 %303
        %307 = vset.pattern.permute.xlu0 0
        %308 = vperm.xlu0 %307, %v249
        %v309 = vpop.permute.xlu0 %308
        %312 = vset.pattern.permute.xlu0 0
        %313 = vperm.xlu0 %312, %v250
        %v314 = vpop.permute.xlu0 %313
        %317 = vset.pattern.permute.xlu0 0
        %318 = vperm.xlu0 %317, %v251
        %v319 = vpop.permute.xlu0 %318
        %322 = vset.pattern.permute.xlu0 0
        %323 = vperm.xlu0 %322, %v252
        %v324 = vpop.permute.xlu0 %323
        %327 = vset.pattern.permute.xlu0 0
        %328 = vperm.xlu0 %327, %v253
        %v329 = vpop.permute.xlu0 %328
        %332 = vset.pattern.permute.xlu0 0
        %333 = vperm.xlu0 %332, %v254
        %v334 = vpop.permute.xlu0 %333
        %337 = vset.pattern.permute.xlu0 0
        %338 = vperm.xlu0 %337, %v255
        %v339 = vpop.permute.xlu0 %338
        %342 = vset.pattern.permute.xlu0 0
        %343 = vperm.xlu0 %342, %v256
        %v344 = vpop.permute.xlu0 %343
        %347 = vset.pattern.permute.xlu0 0
        %348 = vperm.xlu0 %347, %v257
        %v349 = vpop.permute.xlu0 %348
        %352 = vset.pattern.permute.xlu0 0
        %353 = vperm.xlu0 %352, %v258
        %v354 = vpop.permute.xlu0 %353
        %357 = vset.pattern.permute.xlu0 0
        %358 = vperm.xlu0 %357, %v259
        %v359 = vpop.permute.xlu0 %358
        %362 = vset.pattern.permute.xlu0 0
        %363 = vperm.xlu0 %362, %v260
        %v364 = vpop.permute.xlu0 %363
        %367 = vset.pattern.permute.xlu0 0
        %368 = vperm.xlu0 %367, %v261
        %v369 = vpop.permute.xlu0 %368
        %372 = vset.pattern.permute.xlu0 0
        %373 = vperm.xlu0 %372, %v262
        %v374 = vpop.permute.xlu0 %373
        %377 = vset.pattern.permute.xlu0 0
        %378 = vperm.xlu0 %377, %v263
        %v379 = vpop.permute.xlu0 %378
        %382 = vset.pattern.permute.xlu0 0
        %383 = vperm.xlu0 %382, %v264
        %v384 = vpop.permute.xlu0 %383
        %387 = vset.pattern.permute.xlu0 0
        %388 = vperm.xlu0 %387, %v265
        %v389 = vpop.permute.xlu0 %388
        %392 = vset.pattern.permute.xlu0 0
        %393 = vperm.xlu0 %392, %v266
        %v394 = vpop.permute.xlu0 %393
        %397 = vset.pattern.permute.xlu0 0
        %398 = vperm.xlu0 %397, %v267
        %v399 = vpop.permute.xlu0 %398
        %402 = vset.pattern.permute.xlu0 0
        %403 = vperm.xlu0 %402, %v268
        %v404 = vpop.permute.xlu0 %403
        %407 = vset.pattern.permute.xlu0 0
        %408 = vperm.xlu0 %407, %v269
        %v409 = vpop.permute.xlu0 %408
        %412 = vset.pattern.permute.xlu0 0
        %413 = vperm.xlu0 %412, %v270
        %v414 = vpop.permute.xlu0 %413
        %417 = vset.pattern.permute.xlu0 0
        %418 = vperm.xlu0 %417, %v271
        %v419 = vpop.permute.xlu0 %418
        %422 = vset.pattern.permute.xlu0 0
        %423 = vperm.xlu0 %422, %v272
        %v424 = vpop.permute.xlu0 %423
        %427 = vset.pattern.permute.xlu0 0
        %428 = vperm.xlu0 %427, %v273
        %v429 = vpop.permute.xlu0 %428
        %432 = vset.pattern.permute.xlu0 0
        %433 = vperm.xlu0 %432, %v274
        %v434 = vpop.permute.xlu0 %433
        %v437 = vlaneseq
        %v438 = vshrl.u32 %v437, 7
        %v439 = vsub.s32 0, %v438
        %v440 = vrot.slane %v275, %v439
        %v441 = vlaneseq
        %v442 = vshrl.u32 %v441, 7
        %v443 = vsub.s32 1, %v442
        %v444 = vrot.slane %v275, %v443
        %v445 = vlaneseq
        %v446 = vshrl.u32 %v445, 7
        %v447 = vsub.s32 2, %v446
        %v448 = vrot.slane %v275, %v447
        %v449 = vlaneseq
        %v450 = vshrl.u32 %v449, 7
        %v451 = vsub.s32 3, %v450
        %v452 = vrot.slane %v275, %v451
        %v457 = vmul.f32 %v279, %v440
        %v458 = vmul.f32 %v279, %v444
        %v459 = vmul.f32 %v279, %v448
        %v460 = vmul.f32 %v279, %v452
        %v461 = vmul.f32 %v284, %v440
        %v462 = vmul.f32 %v284, %v444
        %v463 = vmul.f32 %v284, %v448
        %v464 = vmul.f32 %v284, %v452
        %v465 = vmul.f32 %v289, %v440
        %v466 = vmul.f32 %v289, %v444
        %v467 = vmul.f32 %v289, %v448
        %v468 = vmul.f32 %v289, %v452
        %v469 = vmul.f32 %v294, %v440
        %v470 = vmul.f32 %v294, %v444
        %v471 = vmul.f32 %v294, %v448
        %v472 = vmul.f32 %v294, %v452
        %v473 = vmul.f32 %v299, %v440
        %v474 = vmul.f32 %v299, %v444
        %v475 = vmul.f32 %v299, %v448
        %v476 = vmul.f32 %v299, %v452
        %v477 = vmul.f32 %v304, %v440
        %v478 = vmul.f32 %v304, %v444
        %v479 = vmul.f32 %v304, %v448
        %v480 = vmul.f32 %v304, %v452
        %v481 = vmul.f32 %v309, %v440
        %v482 = vmul.f32 %v309, %v444
        %v483 = vmul.f32 %v309, %v448
        %v484 = vmul.f32 %v309, %v452
        %v485 = vmul.f32 %v314, %v440
        %v486 = vmul.f32 %v314, %v444
        %v487 = vmul.f32 %v314, %v448
        %v488 = vmul.f32 %v314, %v452
        %v489 = vmul.f32 %v319, %v440
        %v490 = vmul.f32 %v319, %v444
        %v491 = vmul.f32 %v319, %v448
        %v492 = vmul.f32 %v319, %v452
        %v493 = vmul.f32 %v324, %v440
        %v494 = vmul.f32 %v324, %v444
        %v495 = vmul.f32 %v324, %v448
        %v496 = vmul.f32 %v324, %v452
        %v497 = vmul.f32 %v329, %v440
        %v498 = vmul.f32 %v329, %v444
        %v499 = vmul.f32 %v329, %v448
        %v500 = vmul.f32 %v329, %v452
        %v501 = vmul.f32 %v334, %v440
        %v502 = vmul.f32 %v334, %v444
        %v503 = vmul.f32 %v334, %v448
        %v504 = vmul.f32 %v334, %v452
        %v505 = vmul.f32 %v339, %v440
        %v506 = vmul.f32 %v339, %v444
        %v507 = vmul.f32 %v339, %v448
        %v508 = vmul.f32 %v339, %v452
        %v509 = vmul.f32 %v344, %v440
        %v510 = vmul.f32 %v344, %v444
        %v511 = vmul.f32 %v344, %v448
        %v512 = vmul.f32 %v344, %v452
        %v513 = vmul.f32 %v349, %v440
        %v514 = vmul.f32 %v349, %v444
        %v515 = vmul.f32 %v349, %v448
        %v516 = vmul.f32 %v349, %v452
        %v517 = vmul.f32 %v354, %v440
        %v518 = vmul.f32 %v354, %v444
        %v519 = vmul.f32 %v354, %v448
        %v520 = vmul.f32 %v354, %v452
        %v521 = vmul.f32 %v359, %v440
        %v522 = vmul.f32 %v359, %v444
        %v523 = vmul.f32 %v359, %v448
        %v524 = vmul.f32 %v359, %v452
        %v525 = vmul.f32 %v364, %v440
        %v526 = vmul.f32 %v364, %v444
        %v527 = vmul.f32 %v364, %v448
        %v528 = vmul.f32 %v364, %v452
        %v529 = vmul.f32 %v369, %v440
        %v530 = vmul.f32 %v369, %v444
        %v531 = vmul.f32 %v369, %v448
        %v532 = vmul.f32 %v369, %v452
        %v533 = vmul.f32 %v374, %v440
        %v534 = vmul.f32 %v374, %v444
        %v535 = vmul.f32 %v374, %v448
        %v536 = vmul.f32 %v374, %v452
        %v537 = vmul.f32 %v379, %v440
        %v538 = vmul.f32 %v379, %v444
        %v539 = vmul.f32 %v379, %v448
        %v540 = vmul.f32 %v379, %v452
        %v541 = vmul.f32 %v384, %v440
        %v542 = vmul.f32 %v384, %v444
        %v543 = vmul.f32 %v384, %v448
        %v544 = vmul.f32 %v384, %v452
        %v545 = vmul.f32 %v389, %v440
        %v546 = vmul.f32 %v389, %v444
        %v547 = vmul.f32 %v389, %v448
        %v548 = vmul.f32 %v389, %v452
        %v549 = vmul.f32 %v394, %v440
        %v550 = vmul.f32 %v394, %v444
        %v551 = vmul.f32 %v394, %v448
        %v552 = vmul.f32 %v394, %v452
        %v553 = vmul.f32 %v399, %v440
        %v554 = vmul.f32 %v399, %v444
        %v555 = vmul.f32 %v399, %v448
        %v556 = vmul.f32 %v399, %v452
        %v557 = vmul.f32 %v404, %v440
        %v558 = vmul.f32 %v404, %v444
        %v559 = vmul.f32 %v404, %v448
        %v560 = vmul.f32 %v404, %v452
        %v561 = vmul.f32 %v409, %v440
        %v562 = vmul.f32 %v409, %v444
        %v563 = vmul.f32 %v409, %v448
        %v564 = vmul.f32 %v409, %v452
        %v565 = vmul.f32 %v414, %v440
        %v566 = vmul.f32 %v414, %v444
        %v567 = vmul.f32 %v414, %v448
        %v568 = vmul.f32 %v414, %v452
        %v569 = vmul.f32 %v419, %v440
        %v570 = vmul.f32 %v419, %v444
        %v571 = vmul.f32 %v419, %v448
        %v572 = vmul.f32 %v419, %v452
        %v573 = vmul.f32 %v424, %v440
        %v574 = vmul.f32 %v424, %v444
        %v575 = vmul.f32 %v424, %v448
        %v576 = vmul.f32 %v424, %v452
        %v577 = vmul.f32 %v429, %v440
        %v578 = vmul.f32 %v429, %v444
        %v579 = vmul.f32 %v429, %v448
        %v580 = vmul.f32 %v429, %v452
        %v581 = vmul.f32 %v434, %v440
        %v582 = vmul.f32 %v434, %v444
        %v583 = vmul.f32 %v434, %v448
        %v584 = vmul.f32 %v434, %v452
        %v585 = vld [vmem:[#allocation5] sm:$0xf]
        %v587 = vlaneseq
        %v588 = vshrl.u32 %v587, 7
        %v589 = vsub.s32 0, %v588
        %v590 = vrot.slane %v585, %v589
        %v591 = vlaneseq
        %v592 = vshrl.u32 %v591, 7
        %v593 = vsub.s32 1, %v592
        %v594 = vrot.slane %v585, %v593
        %v595 = vlaneseq
        %v596 = vshrl.u32 %v595, 7
        %v597 = vsub.s32 2, %v596
        %v598 = vrot.slane %v585, %v597
        %v599 = vlaneseq
        %v600 = vshrl.u32 %v599, 7
        %v601 = vsub.s32 3, %v600
        %v602 = vrot.slane %v585, %v601
        %v607 = vadd.f32 %v457, %v590
        %v608 = vadd.f32 %v458, %v594
        %v609 = vadd.f32 %v459, %v598
        %v610 = vadd.f32 %v460, %v602
        %v611 = vadd.f32 %v461, %v590
        %v612 = vadd.f32 %v462, %v594
        %v613 = vadd.f32 %v463, %v598
        %v614 = vadd.f32 %v464, %v602
        %v615 = vadd.f32 %v465, %v590
        %v616 = vadd.f32 %v466, %v594
        %v617 = vadd.f32 %v467, %v598
        %v618 = vadd.f32 %v468, %v602
        %v619 = vadd.f32 %v469, %v590
        %v620 = vadd.f32 %v470, %v594
        %v621 = vadd.f32 %v471, %v598
        %v622 = vadd.f32 %v472, %v602
        %v623 = vadd.f32 %v473, %v590
        %v624 = vadd.f32 %v474, %v594
        %v625 = vadd.f32 %v475, %v598
        %v626 = vadd.f32 %v476, %v602
        %v627 = vadd.f32 %v477, %v590
        %v628 = vadd.f32 %v478, %v594
        %v629 = vadd.f32 %v479, %v598
        %v630 = vadd.f32 %v480, %v602
        %v631 = vadd.f32 %v481, %v590
        %v632 = vadd.f32 %v482, %v594
        %v633 = vadd.f32 %v483, %v598
        %v634 = vadd.f32 %v484, %v602
        %v635 = vadd.f32 %v485, %v590
        %v636 = vadd.f32 %v486, %v594
        %v637 = vadd.f32 %v487, %v598
        %v638 = vadd.f32 %v488, %v602
        %v639 = vadd.f32 %v489, %v590
        %v640 = vadd.f32 %v490, %v594
        %v641 = vadd.f32 %v491, %v598
        %v642 = vadd.f32 %v492, %v602
        %v643 = vadd.f32 %v493, %v590
        %v644 = vadd.f32 %v494, %v594
        %v645 = vadd.f32 %v495, %v598
        %v646 = vadd.f32 %v496, %v602
        %v647 = vadd.f32 %v497, %v590
        %v648 = vadd.f32 %v498, %v594
        %v649 = vadd.f32 %v499, %v598
        %v650 = vadd.f32 %v500, %v602
        %v651 = vadd.f32 %v501, %v590
        %v652 = vadd.f32 %v502, %v594
        %v653 = vadd.f32 %v503, %v598
        %v654 = vadd.f32 %v504, %v602
        %v655 = vadd.f32 %v505, %v590
        %v656 = vadd.f32 %v506, %v594
        %v657 = vadd.f32 %v507, %v598
        %v658 = vadd.f32 %v508, %v602
        %v659 = vadd.f32 %v509, %v590
        %v660 = vadd.f32 %v510, %v594
        %v661 = vadd.f32 %v511, %v598
        %v662 = vadd.f32 %v512, %v602
        %v663 = vadd.f32 %v513, %v590
        %v664 = vadd.f32 %v514, %v594
        %v665 = vadd.f32 %v515, %v598
        %v666 = vadd.f32 %v516, %v602
        %v667 = vadd.f32 %v517, %v590
        %v668 = vadd.f32 %v518, %v594
        %v669 = vadd.f32 %v519, %v598
        %v670 = vadd.f32 %v520, %v602
        %v671 = vadd.f32 %v521, %v590
        %v672 = vadd.f32 %v522, %v594
        %v673 = vadd.f32 %v523, %v598
        %v674 = vadd.f32 %v524, %v602
        %v675 = vadd.f32 %v525, %v590
        %v676 = vadd.f32 %v526, %v594
        %v677 = vadd.f32 %v527, %v598
        %v678 = vadd.f32 %v528, %v602
        %v679 = vadd.f32 %v529, %v590
        %v680 = vadd.f32 %v530, %v594
        %v681 = vadd.f32 %v531, %v598
        %v682 = vadd.f32 %v532, %v602
        %v683 = vadd.f32 %v533, %v590
        %v684 = vadd.f32 %v534, %v594
        %v685 = vadd.f32 %v535, %v598
        %v686 = vadd.f32 %v536, %v602
        %v687 = vadd.f32 %v537, %v590
        %v688 = vadd.f32 %v538, %v594
        %v689 = vadd.f32 %v539, %v598
        %v690 = vadd.f32 %v540, %v602
        %v691 = vadd.f32 %v541, %v590
        %v692 = vadd.f32 %v542, %v594
        %v693 = vadd.f32 %v543, %v598
        %v694 = vadd.f32 %v544, %v602
        %v695 = vadd.f32 %v545, %v590
        %v696 = vadd.f32 %v546, %v594
        %v697 = vadd.f32 %v547, %v598
        %v698 = vadd.f32 %v548, %v602
        %v699 = vadd.f32 %v549, %v590
        %v700 = vadd.f32 %v550, %v594
        %v701 = vadd.f32 %v551, %v598
        %v702 = vadd.f32 %v552, %v602
        %v703 = vadd.f32 %v553, %v590
        %v704 = vadd.f32 %v554, %v594
        %v705 = vadd.f32 %v555, %v598
        %v706 = vadd.f32 %v556, %v602
        %v707 = vadd.f32 %v557, %v590
        %v708 = vadd.f32 %v558, %v594
        %v709 = vadd.f32 %v559, %v598
        %v710 = vadd.f32 %v560, %v602
        %v711 = vadd.f32 %v561, %v590
        %v712 = vadd.f32 %v562, %v594
        %v713 = vadd.f32 %v563, %v598
        %v714 = vadd.f32 %v564, %v602
        %v715 = vadd.f32 %v565, %v590
        %v716 = vadd.f32 %v566, %v594
        %v717 = vadd.f32 %v567, %v598
        %v718 = vadd.f32 %v568, %v602
        %v719 = vadd.f32 %v569, %v590
        %v720 = vadd.f32 %v570, %v594
        %v721 = vadd.f32 %v571, %v598
        %v722 = vadd.f32 %v572, %v602
        %v723 = vadd.f32 %v573, %v590
        %v724 = vadd.f32 %v574, %v594
        %v725 = vadd.f32 %v575, %v598
        %v726 = vadd.f32 %v576, %v602
        %v727 = vadd.f32 %v577, %v590
        %v728 = vadd.f32 %v578, %v594
        %v729 = vadd.f32 %v579, %v598
        %v730 = vadd.f32 %v580, %v602
        %v731 = vadd.f32 %v581, %v590
        %v732 = vadd.f32 %v582, %v594
        %v733 = vadd.f32 %v583, %v598
        %v734 = vadd.f32 %v584, %v602
        %s735 = scalar_lea.vmem [#allocation3], 1
        %v736 = vld [vmem:[%s735] ss:$4 sm:$0xf]
        %737 = vset.pattern.permute.xlu0 1
        %738 = vperm.xlu0 %737, %v243
        %v739 = vpop.permute.xlu0 %738
        %741 = vset.pattern.permute.xlu0 1
        %742 = vperm.xlu0 %741, %v244
        %v743 = vpop.permute.xlu0 %742
        %745 = vset.pattern.permute.xlu0 1
        %746 = vperm.xlu0 %745, %v245
        %v747 = vpop.permute.xlu0 %746
        %749 = vset.pattern.permute.xlu0 1
        %750 = vperm.xlu0 %749, %v246
        %v751 = vpop.permute.xlu0 %750
        %753 = vset.pattern.permute.xlu0 1
        %754 = vperm.xlu0 %753, %v247
        %v755 = vpop.permute.xlu0 %754
        %757 = vset.pattern.permute.xlu0 1
        %758 = vperm.xlu0 %757, %v248
        %v759 = vpop.permute.xlu0 %758
        %761 = vset.pattern.permute.xlu0 1
        %762 = vperm.xlu0 %761, %v249
        %v763 = vpop.permute.xlu0 %762
        %765 = vset.pattern.permute.xlu0 1
        %766 = vperm.xlu0 %765, %v250
        %v767 = vpop.permute.xlu0 %766
        %769 = vset.pattern.permute.xlu0 1
        %770 = vperm.xlu0 %769, %v251
        %v771 = vpop.permute.xlu0 %770
        %773 = vset.pattern.permute.xlu0 1
        %774 = vperm.xlu0 %773, %v252
        %v775 = vpop.permute.xlu0 %774
        %777 = vset.pattern.permute.xlu0 1
        %778 = vperm.xlu0 %777, %v253
        %v779 = vpop.permute.xlu0 %778
        %781 = vset.pattern.permute.xlu0 1
        %782 = vperm.xlu0 %781, %v254
        %v783 = vpop.permute.xlu0 %782
        %785 = vset.pattern.permute.xlu0 1
        %786 = vperm.xlu0 %785, %v255
        %v787 = vpop.permute.xlu0 %786
        %789 = vset.pattern.permute.xlu0 1
        %790 = vperm.xlu0 %789, %v256
        %v791 = vpop.permute.xlu0 %790
        %793 = vset.pattern.permute.xlu0 1
        %794 = vperm.xlu0 %793, %v257
        %v795 = vpop.permute.xlu0 %794
        %797 = vset.pattern.permute.xlu0 1
        %798 = vperm.xlu0 %797, %v258
        %v799 = vpop.permute.xlu0 %798
        %801 = vset.pattern.permute.xlu0 1
        %802 = vperm.xlu0 %801, %v259
        %v803 = vpop.permute.xlu0 %802
        %805 = vset.pattern.permute.xlu0 1
        %806 = vperm.xlu0 %805, %v260
        %v807 = vpop.permute.xlu0 %806
        %809 = vset.pattern.permute.xlu0 1
        %810 = vperm.xlu0 %809, %v261
        %v811 = vpop.permute.xlu0 %810
        %813 = vset.pattern.permute.xlu0 1
        %814 = vperm.xlu0 %813, %v262
        %v815 = vpop.permute.xlu0 %814
        %817 = vset.pattern.permute.xlu0 1
        %818 = vperm.xlu0 %817, %v263
        %v819 = vpop.permute.xlu0 %818
        %821 = vset.pattern.permute.xlu0 1
        %822 = vperm.xlu0 %821, %v264
        %v823 = vpop.permute.xlu0 %822
        %825 = vset.pattern.permute.xlu0 1
        %826 = vperm.xlu0 %825, %v265
        %v827 = vpop.permute.xlu0 %826
        %829 = vset.pattern.permute.xlu0 1
        %830 = vperm.xlu0 %829, %v266
        %v831 = vpop.permute.xlu0 %830
        %833 = vset.pattern.permute.xlu0 1
        %834 = vperm.xlu0 %833, %v267
        %v835 = vpop.permute.xlu0 %834
        %837 = vset.pattern.permute.xlu0 1
        %838 = vperm.xlu0 %837, %v268
        %v839 = vpop.permute.xlu0 %838
        %841 = vset.pattern.permute.xlu0 1
        %842 = vperm.xlu0 %841, %v269
        %v843 = vpop.permute.xlu0 %842
        %845 = vset.pattern.permute.xlu0 1
        %846 = vperm.xlu0 %845, %v270
        %v847 = vpop.permute.xlu0 %846
        %849 = vset.pattern.permute.xlu0 1
        %850 = vperm.xlu0 %849, %v271
        %v851 = vpop.permute.xlu0 %850
        %853 = vset.pattern.permute.xlu0 1
        %854 = vperm.xlu0 %853, %v272
        %v855 = vpop.permute.xlu0 %854
        %857 = vset.pattern.permute.xlu0 1
        %858 = vperm.xlu0 %857, %v273
        %v859 = vpop.permute.xlu0 %858
        %861 = vset.pattern.permute.xlu0 1
        %862 = vperm.xlu0 %861, %v274
        %v863 = vpop.permute.xlu0 %862
        %v866 = vlaneseq
        %v867 = vshrl.u32 %v866, 7
        %v868 = vsub.s32 0, %v867
        %v869 = vrot.slane %v736, %v868
        %v870 = vlaneseq
        %v871 = vshrl.u32 %v870, 7
        %v872 = vsub.s32 1, %v871
        %v873 = vrot.slane %v736, %v872
        %v874 = vlaneseq
        %v875 = vshrl.u32 %v874, 7
        %v876 = vsub.s32 2, %v875
        %v877 = vrot.slane %v736, %v876
        %v878 = vlaneseq
        %v879 = vshrl.u32 %v878, 7
        %v880 = vsub.s32 3, %v879
        %v881 = vrot.slane %v736, %v880
        %v886 = vmul.f32 %v739, %v869
        %v887 = vmul.f32 %v739, %v873
        %v888 = vmul.f32 %v739, %v877
        %v889 = vmul.f32 %v739, %v881
        %v890 = vmul.f32 %v743, %v869
        %v891 = vmul.f32 %v743, %v873
        %v892 = vmul.f32 %v743, %v877
        %v893 = vmul.f32 %v743, %v881
        %v894 = vmul.f32 %v747, %v869
        %v895 = vmul.f32 %v747, %v873
        %v896 = vmul.f32 %v747, %v877
        %v897 = vmul.f32 %v747, %v881
        %v898 = vmul.f32 %v751, %v869
        %v899 = vmul.f32 %v751, %v873
        %v900 = vmul.f32 %v751, %v877
        %v901 = vmul.f32 %v751, %v881
        %v902 = vmul.f32 %v755, %v869
        %v903 = vmul.f32 %v755, %v873
        %v904 = vmul.f32 %v755, %v877
        %v905 = vmul.f32 %v755, %v881
        %v906 = vmul.f32 %v759, %v869
        %v907 = vmul.f32 %v759, %v873
        %v908 = vmul.f32 %v759, %v877
        %v909 = vmul.f32 %v759, %v881
        %v910 = vmul.f32 %v763, %v869
        %v911 = vmul.f32 %v763, %v873
        %v912 = vmul.f32 %v763, %v877
        %v913 = vmul.f32 %v763, %v881
        %v914 = vmul.f32 %v767, %v869
        %v915 = vmul.f32 %v767, %v873
        %v916 = vmul.f32 %v767, %v877
        %v917 = vmul.f32 %v767, %v881
        %v918 = vmul.f32 %v771, %v869
        %v919 = vmul.f32 %v771, %v873
        %v920 = vmul.f32 %v771, %v877
        %v921 = vmul.f32 %v771, %v881
        %v922 = vmul.f32 %v775, %v869
        %v923 = vmul.f32 %v775, %v873
        %v924 = vmul.f32 %v775, %v877
        %v925 = vmul.f32 %v775, %v881
        %v926 = vmul.f32 %v779, %v869
        %v927 = vmul.f32 %v779, %v873
        %v928 = vmul.f32 %v779, %v877
        %v929 = vmul.f32 %v779, %v881
        %v930 = vmul.f32 %v783, %v869
        %v931 = vmul.f32 %v783, %v873
        %v932 = vmul.f32 %v783, %v877
        %v933 = vmul.f32 %v783, %v881
        %v934 = vmul.f32 %v787, %v869
        %v935 = vmul.f32 %v787, %v873
        %v936 = vmul.f32 %v787, %v877
        %v937 = vmul.f32 %v787, %v881
        %v938 = vmul.f32 %v791, %v869
        %v939 = vmul.f32 %v791, %v873
        %v940 = vmul.f32 %v791, %v877
        %v941 = vmul.f32 %v791, %v881
        %v942 = vmul.f32 %v795, %v869
        %v943 = vmul.f32 %v795, %v873
        %v944 = vmul.f32 %v795, %v877
        %v945 = vmul.f32 %v795, %v881
        %v946 = vmul.f32 %v799, %v869
        %v947 = vmul.f32 %v799, %v873
        %v948 = vmul.f32 %v799, %v877
        %v949 = vmul.f32 %v799, %v881
        %v950 = vmul.f32 %v803, %v869
        %v951 = vmul.f32 %v803, %v873
        %v952 = vmul.f32 %v803, %v877
        %v953 = vmul.f32 %v803, %v881
        %v954 = vmul.f32 %v807, %v869
        %v955 = vmul.f32 %v807, %v873
        %v956 = vmul.f32 %v807, %v877
        %v957 = vmul.f32 %v807, %v881
        %v958 = vmul.f32 %v811, %v869
        %v959 = vmul.f32 %v811, %v873
        %v960 = vmul.f32 %v811, %v877
        %v961 = vmul.f32 %v811, %v881
        %v962 = vmul.f32 %v815, %v869
        %v963 = vmul.f32 %v815, %v873
        %v964 = vmul.f32 %v815, %v877
        %v965 = vmul.f32 %v815, %v881
        %v966 = vmul.f32 %v819, %v869
        %v967 = vmul.f32 %v819, %v873
        %v968 = vmul.f32 %v819, %v877
        %v969 = vmul.f32 %v819, %v881
        %v970 = vmul.f32 %v823, %v869
        %v971 = vmul.f32 %v823, %v873
        %v972 = vmul.f32 %v823, %v877
        %v973 = vmul.f32 %v823, %v881
        %v974 = vmul.f32 %v827, %v869
        %v975 = vmul.f32 %v827, %v873
        %v976 = vmul.f32 %v827, %v877
        %v977 = vmul.f32 %v827, %v881
        %v978 = vmul.f32 %v831, %v869
        %v979 = vmul.f32 %v831, %v873
        %v980 = vmul.f32 %v831, %v877
        %v981 = vmul.f32 %v831, %v881
        %v982 = vmul.f32 %v835, %v869
        %v983 = vmul.f32 %v835, %v873
        %v984 = vmul.f32 %v835, %v877
        %v985 = vmul.f32 %v835, %v881
        %v986 = vmul.f32 %v839, %v869
        %v987 = vmul.f32 %v839, %v873
        %v988 = vmul.f32 %v839, %v877
        %v989 = vmul.f32 %v839, %v881
        %v990 = vmul.f32 %v843, %v869
        %v991 = vmul.f32 %v843, %v873
        %v992 = vmul.f32 %v843, %v877
        %v993 = vmul.f32 %v843, %v881
        %v994 = vmul.f32 %v847, %v869
        %v995 = vmul.f32 %v847, %v873
        %v996 = vmul.f32 %v847, %v877
        %v997 = vmul.f32 %v847, %v881
        %v998 = vmul.f32 %v851, %v869
        %v999 = vmul.f32 %v851, %v873
        %v1000 = vmul.f32 %v851, %v877
        %v1001 = vmul.f32 %v851, %v881
        %v1002 = vmul.f32 %v855, %v869
        %v1003 = vmul.f32 %v855, %v873
        %v1004 = vmul.f32 %v855, %v877
        %v1005 = vmul.f32 %v855, %v881
        %v1006 = vmul.f32 %v859, %v869
        %v1007 = vmul.f32 %v859, %v873
        %v1008 = vmul.f32 %v859, %v877
        %v1009 = vmul.f32 %v859, %v881
        %v1010 = vmul.f32 %v863, %v869
        %v1011 = vmul.f32 %v863, %v873
        %v1012 = vmul.f32 %v863, %v877
        %v1013 = vmul.f32 %v863, %v881
        %v1014 = vadd.f32 %v607, %v886
        %v1015 = vadd.f32 %v608, %v887
        %v1016 = vadd.f32 %v609, %v888
        %v1017 = vadd.f32 %v610, %v889
        %v1018 = vadd.f32 %v611, %v890
        %v1019 = vadd.f32 %v612, %v891
        %v1020 = vadd.f32 %v613, %v892
        %v1021 = vadd.f32 %v614, %v893
        %v1022 = vadd.f32 %v615, %v894
        %v1023 = vadd.f32 %v616, %v895
        %v1024 = vadd.f32 %v617, %v896
        %v1025 = vadd.f32 %v618, %v897
        %v1026 = vadd.f32 %v619, %v898
        %v1027 = vadd.f32 %v620, %v899
        %v1028 = vadd.f32 %v621, %v900
        %v1029 = vadd.f32 %v622, %v901
        %v1030 = vadd.f32 %v623, %v902
        %v1031 = vadd.f32 %v624, %v903
        %v1032 = vadd.f32 %v625, %v904
        %v1033 = vadd.f32 %v626, %v905
        %v1034 = vadd.f32 %v627, %v906
        %v1035 = vadd.f32 %v628, %v907
        %v1036 = vadd.f32 %v629, %v908
        %v1037 = vadd.f32 %v630, %v909
        %v1038 = vadd.f32 %v631, %v910
        %v1039 = vadd.f32 %v632, %v911
        %v1040 = vadd.f32 %v633, %v912
        %v1041 = vadd.f32 %v634, %v913
        %v1042 = vadd.f32 %v635, %v914
        %v1043 = vadd.f32 %v636, %v915
        %v1044 = vadd.f32 %v637, %v916
        %v1045 = vadd.f32 %v638, %v917
        %v1046 = vadd.f32 %v639, %v918
        %v1047 = vadd.f32 %v640, %v919
        %v1048 = vadd.f32 %v641, %v920
        %v1049 = vadd.f32 %v642, %v921
        %v1050 = vadd.f32 %v643, %v922
        %v1051 = vadd.f32 %v644, %v923
        %v1052 = vadd.f32 %v645, %v924
        %v1053 = vadd.f32 %v646, %v925
        %v1054 = vadd.f32 %v647, %v926
        %v1055 = vadd.f32 %v648, %v927
        %v1056 = vadd.f32 %v649, %v928
        %v1057 = vadd.f32 %v650, %v929
        %v1058 = vadd.f32 %v651, %v930
        %v1059 = vadd.f32 %v652, %v931
        %v1060 = vadd.f32 %v653, %v932
        %v1061 = vadd.f32 %v654, %v933
        %v1062 = vadd.f32 %v655, %v934
        %v1063 = vadd.f32 %v656, %v935
        %v1064 = vadd.f32 %v657, %v936
        %v1065 = vadd.f32 %v658, %v937
        %v1066 = vadd.f32 %v659, %v938
        %v1067 = vadd.f32 %v660, %v939
        %v1068 = vadd.f32 %v661, %v940
        %v1069 = vadd.f32 %v662, %v941
        %v1070 = vadd.f32 %v663, %v942
        %v1071 = vadd.f32 %v664, %v943
        %v1072 = vadd.f32 %v665, %v944
        %v1073 = vadd.f32 %v666, %v945
        %v1074 = vadd.f32 %v667, %v946
        %v1075 = vadd.f32 %v668, %v947
        %v1076 = vadd.f32 %v669, %v948
        %v1077 = vadd.f32 %v670, %v949
        %v1078 = vadd.f32 %v671, %v950
        %v1079 = vadd.f32 %v672, %v951
        %v1080 = vadd.f32 %v673, %v952
        %v1081 = vadd.f32 %v674, %v953
        %v1082 = vadd.f32 %v675, %v954
        %v1083 = vadd.f32 %v676, %v955
        %v1084 = vadd.f32 %v677, %v956
        %v1085 = vadd.f32 %v678, %v957
        %v1086 = vadd.f32 %v679, %v958
        %v1087 = vadd.f32 %v680, %v959
        %v1088 = vadd.f32 %v681, %v960
        %v1089 = vadd.f32 %v682, %v961
        %v1090 = vadd.f32 %v683, %v962
        %v1091 = vadd.f32 %v684, %v963
        %v1092 = vadd.f32 %v685, %v964
        %v1093 = vadd.f32 %v686, %v965
        %v1094 = vadd.f32 %v687, %v966
        %v1095 = vadd.f32 %v688, %v967
        %v1096 = vadd.f32 %v689, %v968
        %v1097 = vadd.f32 %v690, %v969
        %v1098 = vadd.f32 %v691, %v970
        %v1099 = vadd.f32 %v692, %v971
        %v1100 = vadd.f32 %v693, %v972
        %v1101 = vadd.f32 %v694, %v973
        %v1102 = vadd.f32 %v695, %v974
        %v1103 = vadd.f32 %v696, %v975
        %v1104 = vadd.f32 %v697, %v976
        %v1105 = vadd.f32 %v698, %v977
        %v1106 = vadd.f32 %v699, %v978
        %v1107 = vadd.f32 %v700, %v979
        %v1108 = vadd.f32 %v701, %v980
        %v1109 = vadd.f32 %v702, %v981
        %v1110 = vadd.f32 %v703, %v982
        %v1111 = vadd.f32 %v704, %v983
        %v1112 = vadd.f32 %v705, %v984
        %v1113 = vadd.f32 %v706, %v985
        %v1114 = vadd.f32 %v707, %v986
        %v1115 = vadd.f32 %v708, %v987
        %v1116 = vadd.f32 %v709, %v988
        %v1117 = vadd.f32 %v710, %v989
        %v1118 = vadd.f32 %v711, %v990
        %v1119 = vadd.f32 %v712, %v991
        %v1120 = vadd.f32 %v713, %v992
        %v1121 = vadd.f32 %v714, %v993
        %v1122 = vadd.f32 %v715, %v994
        %v1123 = vadd.f32 %v716, %v995
        %v1124 = vadd.f32 %v717, %v996
        %v1125 = vadd.f32 %v718, %v997
        %v1126 = vadd.f32 %v719, %v998
        %v1127 = vadd.f32 %v720, %v999
        %v1128 = vadd.f32 %v721, %v1000
        %v1129 = vadd.f32 %v722, %v1001
        %v1130 = vadd.f32 %v723, %v1002
        %v1131 = vadd.f32 %v724, %v1003
        %v1132 = vadd.f32 %v725, %v1004
        %v1133 = vadd.f32 %v726, %v1005
        %v1134 = vadd.f32 %v727, %v1006
        %v1135 = vadd.f32 %v728, %v1007
        %v1136 = vadd.f32 %v729, %v1008
        %v1137 = vadd.f32 %v730, %v1009
        %v1138 = vadd.f32 %v731, %v1010
        %v1139 = vadd.f32 %v732, %v1011
        %v1140 = vadd.f32 %v733, %v1012
        %v1141 = vadd.f32 %v734, %v1013
        %s1142 = scalar_lea.vmem [#allocation3], 2
        %v1143 = vld [vmem:[%s1142] ss:$4 sm:$0xf]
        %1144 = vset.pattern.permute.xlu0 2
        %1145 = vperm.xlu0 %1144, %v243
        %v1146 = vpop.permute.xlu0 %1145
        %1148 = vset.pattern.permute.xlu0 2
        %1149 = vperm.xlu0 %1148, %v244
        %v1150 = vpop.permute.xlu0 %1149
        %1152 = vset.pattern.permute.xlu0 2
        %1153 = vperm.xlu0 %1152, %v245
        %v1154 = vpop.permute.xlu0 %1153
        %1156 = vset.pattern.permute.xlu0 2
        %1157 = vperm.xlu0 %1156, %v246
        %v1158 = vpop.permute.xlu0 %1157
        %1160 = vset.pattern.permute.xlu0 2
        %1161 = vperm.xlu0 %1160, %v247
        %v1162 = vpop.permute.xlu0 %1161
        %1164 = vset.pattern.permute.xlu0 2
        %1165 = vperm.xlu0 %1164, %v248
        %v1166 = vpop.permute.xlu0 %1165
        %1168 = vset.pattern.permute.xlu0 2
        %1169 = vperm.xlu0 %1168, %v249
        %v1170 = vpop.permute.xlu0 %1169
        %1172 = vset.pattern.permute.xlu0 2
        %1173 = vperm.xlu0 %1172, %v250
        %v1174 = vpop.permute.xlu0 %1173
        %1176 = vset.pattern.permute.xlu0 2
        %1177 = vperm.xlu0 %1176, %v251
        %v1178 = vpop.permute.xlu0 %1177
        %1180 = vset.pattern.permute.xlu0 2
        %1181 = vperm.xlu0 %1180, %v252
        %v1182 = vpop.permute.xlu0 %1181
        %1184 = vset.pattern.permute.xlu0 2
        %1185 = vperm.xlu0 %1184, %v253
        %v1186 = vpop.permute.xlu0 %1185
        %1188 = vset.pattern.permute.xlu0 2
        %1189 = vperm.xlu0 %1188, %v254
        %v1190 = vpop.permute.xlu0 %1189
        %1192 = vset.pattern.permute.xlu0 2
        %1193 = vperm.xlu0 %1192, %v255
        %v1194 = vpop.permute.xlu0 %1193
        %1196 = vset.pattern.permute.xlu0 2
        %1197 = vperm.xlu0 %1196, %v256
        %v1198 = vpop.permute.xlu0 %1197
        %1200 = vset.pattern.permute.xlu0 2
        %1201 = vperm.xlu0 %1200, %v257
        %v1202 = vpop.permute.xlu0 %1201
        %1204 = vset.pattern.permute.xlu0 2
        %1205 = vperm.xlu0 %1204, %v258
        %v1206 = vpop.permute.xlu0 %1205
        %1208 = vset.pattern.permute.xlu0 2
        %1209 = vperm.xlu0 %1208, %v259
        %v1210 = vpop.permute.xlu0 %1209
        %1212 = vset.pattern.permute.xlu0 2
        %1213 = vperm.xlu0 %1212, %v260
        %v1214 = vpop.permute.xlu0 %1213
        %1216 = vset.pattern.permute.xlu0 2
        %1217 = vperm.xlu0 %1216, %v261
        %v1218 = vpop.permute.xlu0 %1217
        %1220 = vset.pattern.permute.xlu0 2
        %1221 = vperm.xlu0 %1220, %v262
        %v1222 = vpop.permute.xlu0 %1221
        %1224 = vset.pattern.permute.xlu0 2
        %1225 = vperm.xlu0 %1224, %v263
        %v1226 = vpop.permute.xlu0 %1225
        %1228 = vset.pattern.permute.xlu0 2
        %1229 = vperm.xlu0 %1228, %v264
        %v1230 = vpop.permute.xlu0 %1229
        %1232 = vset.pattern.permute.xlu0 2
        %1233 = vperm.xlu0 %1232, %v265
        %v1234 = vpop.permute.xlu0 %1233
        %1236 = vset.pattern.permute.xlu0 2
        %1237 = vperm.xlu0 %1236, %v266
        %v1238 = vpop.permute.xlu0 %1237
        %1240 = vset.pattern.permute.xlu0 2
        %1241 = vperm.xlu0 %1240, %v267
        %v1242 = vpop.permute.xlu0 %1241
        %1244 = vset.pattern.permute.xlu0 2
        %1245 = vperm.xlu0 %1244, %v268
        %v1246 = vpop.permute.xlu0 %1245
        %1248 = vset.pattern.permute.xlu0 2
        %1249 = vperm.xlu0 %1248, %v269
        %v1250 = vpop.permute.xlu0 %1249
        %1252 = vset.pattern.permute.xlu0 2
        %1253 = vperm.xlu0 %1252, %v270
        %v1254 = vpop.permute.xlu0 %1253
        %1256 = vset.pattern.permute.xlu0 2
        %1257 = vperm.xlu0 %1256, %v271
        %v1258 = vpop.permute.xlu0 %1257
        %1260 = vset.pattern.permute.xlu0 2
        %1261 = vperm.xlu0 %1260, %v272
        %v1262 = vpop.permute.xlu0 %1261
        %1264 = vset.pattern.permute.xlu0 2
        %1265 = vperm.xlu0 %1264, %v273
        %v1266 = vpop.permute.xlu0 %1265
        %1268 = vset.pattern.permute.xlu0 2
        %1269 = vperm.xlu0 %1268, %v274
        %v1270 = vpop.permute.xlu0 %1269
        %v1273 = vlaneseq
        %v1274 = vshrl.u32 %v1273, 7
        %v1275 = vsub.s32 0, %v1274
        %v1276 = vrot.slane %v1143, %v1275
        %v1277 = vlaneseq
        %v1278 = vshrl.u32 %v1277, 7
        %v1279 = vsub.s32 1, %v1278
        %v1280 = vrot.slane %v1143, %v1279
        %v1281 = vlaneseq
        %v1282 = vshrl.u32 %v1281, 7
        %v1283 = vsub.s32 2, %v1282
        %v1284 = vrot.slane %v1143, %v1283
        %v1285 = vlaneseq
        %v1286 = vshrl.u32 %v1285, 7
        %v1287 = vsub.s32 3, %v1286
        %v1288 = vrot.slane %v1143, %v1287
        %v1293 = vmul.f32 %v1146, %v1276
        %v1294 = vmul.f32 %v1146, %v1280
        %v1295 = vmul.f32 %v1146, %v1284
        %v1296 = vmul.f32 %v1146, %v1288
        %v1297 = vmul.f32 %v1150, %v1276
        %v1298 = vmul.f32 %v1150, %v1280
        %v1299 = vmul.f32 %v1150, %v1284
        %v1300 = vmul.f32 %v1150, %v1288
        %v1301 = vmul.f32 %v1154, %v1276
        %v1302 = vmul.f32 %v1154, %v1280
        %v1303 = vmul.f32 %v1154, %v1284
        %v1304 = vmul.f32 %v1154, %v1288
        %v1305 = vmul.f32 %v1158, %v1276
        %v1306 = vmul.f32 %v1158, %v1280
        %v1307 = vmul.f32 %v1158, %v1284
        %v1308 = vmul.f32 %v1158, %v1288
        %v1309 = vmul.f32 %v1162, %v1276
        %v1310 = vmul.f32 %v1162, %v1280
        %v1311 = vmul.f32 %v1162, %v1284
        %v1312 = vmul.f32 %v1162, %v1288
        %v1313 = vmul.f32 %v1166, %v1276
        %v1314 = vmul.f32 %v1166, %v1280
        %v1315 = vmul.f32 %v1166, %v1284
        %v1316 = vmul.f32 %v1166, %v1288
        %v1317 = vmul.f32 %v1170, %v1276
        %v1318 = vmul.f32 %v1170, %v1280
        %v1319 = vmul.f32 %v1170, %v1284
        %v1320 = vmul.f32 %v1170, %v1288
        %v1321 = vmul.f32 %v1174, %v1276
        %v1322 = vmul.f32 %v1174, %v1280
        %v1323 = vmul.f32 %v1174, %v1284
        %v1324 = vmul.f32 %v1174, %v1288
        %v1325 = vmul.f32 %v1178, %v1276
        %v1326 = vmul.f32 %v1178, %v1280
        %v1327 = vmul.f32 %v1178, %v1284
        %v1328 = vmul.f32 %v1178, %v1288
        %v1329 = vmul.f32 %v1182, %v1276
        %v1330 = vmul.f32 %v1182, %v1280
        %v1331 = vmul.f32 %v1182, %v1284
        %v1332 = vmul.f32 %v1182, %v1288
        %v1333 = vmul.f32 %v1186, %v1276
        %v1334 = vmul.f32 %v1186, %v1280
        %v1335 = vmul.f32 %v1186, %v1284
        %v1336 = vmul.f32 %v1186, %v1288
        %v1337 = vmul.f32 %v1190, %v1276
        %v1338 = vmul.f32 %v1190, %v1280
        %v1339 = vmul.f32 %v1190, %v1284
        %v1340 = vmul.f32 %v1190, %v1288
        %v1341 = vmul.f32 %v1194, %v1276
        %v1342 = vmul.f32 %v1194, %v1280
        %v1343 = vmul.f32 %v1194, %v1284
        %v1344 = vmul.f32 %v1194, %v1288
        %v1345 = vmul.f32 %v1198, %v1276
        %v1346 = vmul.f32 %v1198, %v1280
        %v1347 = vmul.f32 %v1198, %v1284
        %v1348 = vmul.f32 %v1198, %v1288
        %v1349 = vmul.f32 %v1202, %v1276
        %v1350 = vmul.f32 %v1202, %v1280
        %v1351 = vmul.f32 %v1202, %v1284
        %v1352 = vmul.f32 %v1202, %v1288
        %v1353 = vmul.f32 %v1206, %v1276
        %v1354 = vmul.f32 %v1206, %v1280
        %v1355 = vmul.f32 %v1206, %v1284
        %v1356 = vmul.f32 %v1206, %v1288
        %v1357 = vmul.f32 %v1210, %v1276
        %v1358 = vmul.f32 %v1210, %v1280
        %v1359 = vmul.f32 %v1210, %v1284
        %v1360 = vmul.f32 %v1210, %v1288
        %v1361 = vmul.f32 %v1214, %v1276
        %v1362 = vmul.f32 %v1214, %v1280
        %v1363 = vmul.f32 %v1214, %v1284
        %v1364 = vmul.f32 %v1214, %v1288
        %v1365 = vmul.f32 %v1218, %v1276
        %v1366 = vmul.f32 %v1218, %v1280
        %v1367 = vmul.f32 %v1218, %v1284
        %v1368 = vmul.f32 %v1218, %v1288
        %v1369 = vmul.f32 %v1222, %v1276
        %v1370 = vmul.f32 %v1222, %v1280
        %v1371 = vmul.f32 %v1222, %v1284
        %v1372 = vmul.f32 %v1222, %v1288
        %v1373 = vmul.f32 %v1226, %v1276
        %v1374 = vmul.f32 %v1226, %v1280
        %v1375 = vmul.f32 %v1226, %v1284
        %v1376 = vmul.f32 %v1226, %v1288
        %v1377 = vmul.f32 %v1230, %v1276
        %v1378 = vmul.f32 %v1230, %v1280
        %v1379 = vmul.f32 %v1230, %v1284
        %v1380 = vmul.f32 %v1230, %v1288
        %v1381 = vmul.f32 %v1234, %v1276
        %v1382 = vmul.f32 %v1234, %v1280
        %v1383 = vmul.f32 %v1234, %v1284
        %v1384 = vmul.f32 %v1234, %v1288
        %v1385 = vmul.f32 %v1238, %v1276
        %v1386 = vmul.f32 %v1238, %v1280
        %v1387 = vmul.f32 %v1238, %v1284
        %v1388 = vmul.f32 %v1238, %v1288
        %v1389 = vmul.f32 %v1242, %v1276
        %v1390 = vmul.f32 %v1242, %v1280
        %v1391 = vmul.f32 %v1242, %v1284
        %v1392 = vmul.f32 %v1242, %v1288
        %v1393 = vmul.f32 %v1246, %v1276
        %v1394 = vmul.f32 %v1246, %v1280
        %v1395 = vmul.f32 %v1246, %v1284
        %v1396 = vmul.f32 %v1246, %v1288
        %v1397 = vmul.f32 %v1250, %v1276
        %v1398 = vmul.f32 %v1250, %v1280
        %v1399 = vmul.f32 %v1250, %v1284
        %v1400 = vmul.f32 %v1250, %v1288
        %v1401 = vmul.f32 %v1254, %v1276
        %v1402 = vmul.f32 %v1254, %v1280
        %v1403 = vmul.f32 %v1254, %v1284
        %v1404 = vmul.f32 %v1254, %v1288
        %v1405 = vmul.f32 %v1258, %v1276
        %v1406 = vmul.f32 %v1258, %v1280
        %v1407 = vmul.f32 %v1258, %v1284
        %v1408 = vmul.f32 %v1258, %v1288
        %v1409 = vmul.f32 %v1262, %v1276
        %v1410 = vmul.f32 %v1262, %v1280
        %v1411 = vmul.f32 %v1262, %v1284
        %v1412 = vmul.f32 %v1262, %v1288
        %v1413 = vmul.f32 %v1266, %v1276
        %v1414 = vmul.f32 %v1266, %v1280
        %v1415 = vmul.f32 %v1266, %v1284
        %v1416 = vmul.f32 %v1266, %v1288
        %v1417 = vmul.f32 %v1270, %v1276
        %v1418 = vmul.f32 %v1270, %v1280
        %v1419 = vmul.f32 %v1270, %v1284
        %v1420 = vmul.f32 %v1270, %v1288
        %v1421 = vadd.f32 %v1014, %v1293
        %v1422 = vadd.f32 %v1015, %v1294
        %v1423 = vadd.f32 %v1016, %v1295
        %v1424 = vadd.f32 %v1017, %v1296
        %v1425 = vadd.f32 %v1018, %v1297
        %v1426 = vadd.f32 %v1019, %v1298
        %v1427 = vadd.f32 %v1020, %v1299
        %v1428 = vadd.f32 %v1021, %v1300
        %v1429 = vadd.f32 %v1022, %v1301
        %v1430 = vadd.f32 %v1023, %v1302
        %v1431 = vadd.f32 %v1024, %v1303
        %v1432 = vadd.f32 %v1025, %v1304
        %v1433 = vadd.f32 %v1026, %v1305
        %v1434 = vadd.f32 %v1027, %v1306
        %v1435 = vadd.f32 %v1028, %v1307
        %v1436 = vadd.f32 %v1029, %v1308
        %v1437 = vadd.f32 %v1030, %v1309
        %v1438 = vadd.f32 %v1031, %v1310
        %v1439 = vadd.f32 %v1032, %v1311
        %v1440 = vadd.f32 %v1033, %v1312
        %v1441 = vadd.f32 %v1034, %v1313
        %v1442 = vadd.f32 %v1035, %v1314
        %v1443 = vadd.f32 %v1036, %v1315
        %v1444 = vadd.f32 %v1037, %v1316
        %v1445 = vadd.f32 %v1038, %v1317
        %v1446 = vadd.f32 %v1039, %v1318
        %v1447 = vadd.f32 %v1040, %v1319
        %v1448 = vadd.f32 %v1041, %v1320
        %v1449 = vadd.f32 %v1042, %v1321
        %v1450 = vadd.f32 %v1043, %v1322
        %v1451 = vadd.f32 %v1044, %v1323
        %v1452 = vadd.f32 %v1045, %v1324
        %v1453 = vadd.f32 %v1046, %v1325
        %v1454 = vadd.f32 %v1047, %v1326
        %v1455 = vadd.f32 %v1048, %v1327
        %v1456 = vadd.f32 %v1049, %v1328
        %v1457 = vadd.f32 %v1050, %v1329
        %v1458 = vadd.f32 %v1051, %v1330
        %v1459 = vadd.f32 %v1052, %v1331
        %v1460 = vadd.f32 %v1053, %v1332
        %v1461 = vadd.f32 %v1054, %v1333
        %v1462 = vadd.f32 %v1055, %v1334
        %v1463 = vadd.f32 %v1056, %v1335
        %v1464 = vadd.f32 %v1057, %v1336
        %v1465 = vadd.f32 %v1058, %v1337
        %v1466 = vadd.f32 %v1059, %v1338
        %v1467 = vadd.f32 %v1060, %v1339
        %v1468 = vadd.f32 %v1061, %v1340
        %v1469 = vadd.f32 %v1062, %v1341
        %v1470 = vadd.f32 %v1063, %v1342
        %v1471 = vadd.f32 %v1064, %v1343
        %v1472 = vadd.f32 %v1065, %v1344
        %v1473 = vadd.f32 %v1066, %v1345
        %v1474 = vadd.f32 %v1067, %v1346
        %v1475 = vadd.f32 %v1068, %v1347
        %v1476 = vadd.f32 %v1069, %v1348
        %v1477 = vadd.f32 %v1070, %v1349
        %v1478 = vadd.f32 %v1071, %v1350
        %v1479 = vadd.f32 %v1072, %v1351
        %v1480 = vadd.f32 %v1073, %v1352
        %v1481 = vadd.f32 %v1074, %v1353
        %v1482 = vadd.f32 %v1075, %v1354
        %v1483 = vadd.f32 %v1076, %v1355
        %v1484 = vadd.f32 %v1077, %v1356
        %v1485 = vadd.f32 %v1078, %v1357
        %v1486 = vadd.f32 %v1079, %v1358
        %v1487 = vadd.f32 %v1080, %v1359
        %v1488 = vadd.f32 %v1081, %v1360
        %v1489 = vadd.f32 %v1082, %v1361
        %v1490 = vadd.f32 %v1083, %v1362
        %v1491 = vadd.f32 %v1084, %v1363
        %v1492 = vadd.f32 %v1085, %v1364
        %v1493 = vadd.f32 %v1086, %v1365
        %v1494 = vadd.f32 %v1087, %v1366
        %v1495 = vadd.f32 %v1088, %v1367
        %v1496 = vadd.f32 %v1089, %v1368
        %v1497 = vadd.f32 %v1090, %v1369
        %v1498 = vadd.f32 %v1091, %v1370
        %v1499 = vadd.f32 %v1092, %v1371
        %v1500 = vadd.f32 %v1093, %v1372
        %v1501 = vadd.f32 %v1094, %v1373
        %v1502 = vadd.f32 %v1095, %v1374
        %v1503 = vadd.f32 %v1096, %v1375
        %v1504 = vadd.f32 %v1097, %v1376
        %v1505 = vadd.f32 %v1098, %v1377
        %v1506 = vadd.f32 %v1099, %v1378
        %v1507 = vadd.f32 %v1100, %v1379
        %v1508 = vadd.f32 %v1101, %v1380
        %v1509 = vadd.f32 %v1102, %v1381
        %v1510 = vadd.f32 %v1103, %v1382
        %v1511 = vadd.f32 %v1104, %v1383
        %v1512 = vadd.f32 %v1105, %v1384
        %v1513 = vadd.f32 %v1106, %v1385
        %v1514 = vadd.f32 %v1107, %v1386
        %v1515 = vadd.f32 %v1108, %v1387
        %v1516 = vadd.f32 %v1109, %v1388
        %v1517 = vadd.f32 %v1110, %v1389
        %v1518 = vadd.f32 %v1111, %v1390
        %v1519 = vadd.f32 %v1112, %v1391
        %v1520 = vadd.f32 %v1113, %v1392
        %v1521 = vadd.f32 %v1114, %v1393
        %v1522 = vadd.f32 %v1115, %v1394
        %v1523 = vadd.f32 %v1116, %v1395
        %v1524 = vadd.f32 %v1117, %v1396
        %v1525 = vadd.f32 %v1118, %v1397
        %v1526 = vadd.f32 %v1119, %v1398
        %v1527 = vadd.f32 %v1120, %v1399
        %v1528 = vadd.f32 %v1121, %v1400
        %v1529 = vadd.f32 %v1122, %v1401
        %v1530 = vadd.f32 %v1123, %v1402
        %v1531 = vadd.f32 %v1124, %v1403
        %v1532 = vadd.f32 %v1125, %v1404
        %v1533 = vadd.f32 %v1126, %v1405
        %v1534 = vadd.f32 %v1127, %v1406
        %v1535 = vadd.f32 %v1128, %v1407
        %v1536 = vadd.f32 %v1129, %v1408
        %v1537 = vadd.f32 %v1130, %v1409
        %v1538 = vadd.f32 %v1131, %v1410
        %v1539 = vadd.f32 %v1132, %v1411
        %v1540 = vadd.f32 %v1133, %v1412
        %v1541 = vadd.f32 %v1134, %v1413
        %v1542 = vadd.f32 %v1135, %v1414
        %v1543 = vadd.f32 %v1136, %v1415
        %v1544 = vadd.f32 %v1137, %v1416
        %v1545 = vadd.f32 %v1138, %v1417
        %v1546 = vadd.f32 %v1139, %v1418
        %v1547 = vadd.f32 %v1140, %v1419
        %v1548 = vadd.f32 %v1141, %v1420
        %v1549 = vmax.f32 %v1421, 0.0
        %v1550 = vmax.f32 %v1422, 0.0
        %v1551 = vmax.f32 %v1423, 0.0
        %v1552 = vmax.f32 %v1424, 0.0
        %v1553 = vmax.f32 %v1425, 0.0
        %v1554 = vmax.f32 %v1426, 0.0
        %v1555 = vmax.f32 %v1427, 0.0
        %v1556 = vmax.f32 %v1428, 0.0
        %v1557 = vmax.f32 %v1429, 0.0
        %v1558 = vmax.f32 %v1430, 0.0
        %v1559 = vmax.f32 %v1431, 0.0
        %v1560 = vmax.f32 %v1432, 0.0
        %v1561 = vmax.f32 %v1433, 0.0
        %v1562 = vmax.f32 %v1434, 0.0
        %v1563 = vmax.f32 %v1435, 0.0
        %v1564 = vmax.f32 %v1436, 0.0
        %v1565 = vmax.f32 %v1437, 0.0
        %v1566 = vmax.f32 %v1438, 0.0
        %v1567 = vmax.f32 %v1439, 0.0
        %v1568 = vmax.f32 %v1440, 0.0
        %v1569 = vmax.f32 %v1441, 0.0
        %v1570 = vmax.f32 %v1442, 0.0
        %v1571 = vmax.f32 %v1443, 0.0
        %v1572 = vmax.f32 %v1444, 0.0
        %v1573 = vmax.f32 %v1445, 0.0
        %v1574 = vmax.f32 %v1446, 0.0
        %v1575 = vmax.f32 %v1447, 0.0
        %v1576 = vmax.f32 %v1448, 0.0
        %v1577 = vmax.f32 %v1449, 0.0
        %v1578 = vmax.f32 %v1450, 0.0
        %v1579 = vmax.f32 %v1451, 0.0
        %v1580 = vmax.f32 %v1452, 0.0
        %v1581 = vmax.f32 %v1453, 0.0
        %v1582 = vmax.f32 %v1454, 0.0
        %v1583 = vmax.f32 %v1455, 0.0
        %v1584 = vmax.f32 %v1456, 0.0
        %v1585 = vmax.f32 %v1457, 0.0
        %v1586 = vmax.f32 %v1458, 0.0
        %v1587 = vmax.f32 %v1459, 0.0
        %v1588 = vmax.f32 %v1460, 0.0
        %v1589 = vmax.f32 %v1461, 0.0
        %v1590 = vmax.f32 %v1462, 0.0
        %v1591 = vmax.f32 %v1463, 0.0
        %v1592 = vmax.f32 %v1464, 0.0
        %v1593 = vmax.f32 %v1465, 0.0
        %v1594 = vmax.f32 %v1466, 0.0
        %v1595 = vmax.f32 %v1467, 0.0
        %v1596 = vmax.f32 %v1468, 0.0
        %v1597 = vmax.f32 %v1469, 0.0
        %v1598 = vmax.f32 %v1470, 0.0
        %v1599 = vmax.f32 %v1471, 0.0
        %v1600 = vmax.f32 %v1472, 0.0
        %v1601 = vmax.f32 %v1473, 0.0
        %v1602 = vmax.f32 %v1474, 0.0
        %v1603 = vmax.f32 %v1475, 0.0
        %v1604 = vmax.f32 %v1476, 0.0
        %v1605 = vmax.f32 %v1477, 0.0
        %v1606 = vmax.f32 %v1478, 0.0
        %v1607 = vmax.f32 %v1479, 0.0
        %v1608 = vmax.f32 %v1480, 0.0
        %v1609 = vmax.f32 %v1481, 0.0
        %v1610 = vmax.f32 %v1482, 0.0
        %v1611 = vmax.f32 %v1483, 0.0
        %v1612 = vmax.f32 %v1484, 0.0
        %v1613 = vmax.f32 %v1485, 0.0
        %v1614 = vmax.f32 %v1486, 0.0
        %v1615 = vmax.f32 %v1487, 0.0
        %v1616 = vmax.f32 %v1488, 0.0
        %v1617 = vmax.f32 %v1489, 0.0
        %v1618 = vmax.f32 %v1490, 0.0
        %v1619 = vmax.f32 %v1491, 0.0
        %v1620 = vmax.f32 %v1492, 0.0
        %v1621 = vmax.f32 %v1493, 0.0
        %v1622 = vmax.f32 %v1494, 0.0
        %v1623 = vmax.f32 %v1495, 0.0
        %v1624 = vmax.f32 %v1496, 0.0
        %v1625 = vmax.f32 %v1497, 0.0
        %v1626 = vmax.f32 %v1498, 0.0
        %v1627 = vmax.f32 %v1499, 0.0
        %v1628 = vmax.f32 %v1500, 0.0
        %v1629 = vmax.f32 %v1501, 0.0
        %v1630 = vmax.f32 %v1502, 0.0
        %v1631 = vmax.f32 %v1503, 0.0
        %v1632 = vmax.f32 %v1504, 0.0
        %v1633 = vmax.f32 %v1505, 0.0
        %v1634 = vmax.f32 %v1506, 0.0
        %v1635 = vmax.f32 %v1507, 0.0
        %v1636 = vmax.f32 %v1508, 0.0
        %v1637 = vmax.f32 %v1509, 0.0
        %v1638 = vmax.f32 %v1510, 0.0
        %v1639 = vmax.f32 %v1511, 0.0
        %v1640 = vmax.f32 %v1512, 0.0
        %v1641 = vmax.f32 %v1513, 0.0
        %v1642 = vmax.f32 %v1514, 0.0
        %v1643 = vmax.f32 %v1515, 0.0
        %v1644 = vmax.f32 %v1516, 0.0
        %v1645 = vmax.f32 %v1517, 0.0
        %v1646 = vmax.f32 %v1518, 0.0
        %v1647 = vmax.f32 %v1519, 0.0
        %v1648 = vmax.f32 %v1520, 0.0
        %v1649 = vmax.f32 %v1521, 0.0
        %v1650 = vmax.f32 %v1522, 0.0
        %v1651 = vmax.f32 %v1523, 0.0
        %v1652 = vmax.f32 %v1524, 0.0
        %v1653 = vmax.f32 %v1525, 0.0
        %v1654 = vmax.f32 %v1526, 0.0
        %v1655 = vmax.f32 %v1527, 0.0
        %v1656 = vmax.f32 %v1528, 0.0
        %v1657 = vmax.f32 %v1529, 0.0
        %v1658 = vmax.f32 %v1530, 0.0
        %v1659 = vmax.f32 %v1531, 0.0
        %v1660 = vmax.f32 %v1532, 0.0
        %v1661 = vmax.f32 %v1533, 0.0
        %v1662 = vmax.f32 %v1534, 0.0
        %v1663 = vmax.f32 %v1535, 0.0
        %v1664 = vmax.f32 %v1536, 0.0
        %v1665 = vmax.f32 %v1537, 0.0
        %v1666 = vmax.f32 %v1538, 0.0
        %v1667 = vmax.f32 %v1539, 0.0
        %v1668 = vmax.f32 %v1540, 0.0
        %v1669 = vmax.f32 %v1541, 0.0
        %v1670 = vmax.f32 %v1542, 0.0
        %v1671 = vmax.f32 %v1543, 0.0
        %v1672 = vmax.f32 %v1544, 0.0
        %v1673 = vmax.f32 %v1545, 0.0
        %v1674 = vmax.f32 %v1546, 0.0
        %v1675 = vmax.f32 %v1547, 0.0
        %v1676 = vmax.f32 %v1548, 0.0
        %v1677 = vld [vmem:[#allocation2] sm:$0xff]
        %v1678 = vld [vmem:[#allocation2 + $0x8] sm:$0xff]
        %v1679 = vld [vmem:[#allocation2 + $0x10] sm:$0xff]
        %v1680 = vld [vmem:[#allocation2 + $0x18] sm:$0xff]
        %v1681 = vadd.f32 %v1549, %v1553
        %v1682 = vadd.f32 %v1681, %v1557
        %v1683 = vadd.f32 %v1682, %v1561
        %v1684 = vadd.f32 %v1683, %v1565
        %v1685 = vadd.f32 %v1684, %v1569
        %v1686 = vadd.f32 %v1685, %v1573
        %v1687 = vadd.f32 %v1686, %v1577
        %v1688 = vadd.f32 %v1687, %v1581
        %v1689 = vadd.f32 %v1688, %v1585
        %v1690 = vadd.f32 %v1689, %v1589
        %v1691 = vadd.f32 %v1690, %v1593
        %v1692 = vadd.f32 %v1691, %v1597
        %v1693 = vadd.f32 %v1692, %v1601
        %v1694 = vadd.f32 %v1693, %v1605
        %v1695 = vadd.f32 %v1694, %v1609
        %v1696 = vadd.f32 %v1695, %v1613
        %v1697 = vadd.f32 %v1696, %v1617
        %v1698 = vadd.f32 %v1697, %v1621
        %v1699 = vadd.f32 %v1698, %v1625
        %v1700 = vadd.f32 %v1699, %v1629
        %v1701 = vadd.f32 %v1700, %v1633
        %v1702 = vadd.f32 %v1701, %v1637
        %v1703 = vadd.f32 %v1702, %v1641
        %v1704 = vadd.f32 %v1703, %v1645
        %v1705 = vadd.f32 %v1704, %v1649
        %v1706 = vadd.f32 %v1705, %v1653
        %v1707 = vadd.f32 %v1706, %v1657
        %v1708 = vadd.f32 %v1707, %v1661
        %v1709 = vadd.f32 %v1708, %v1665
        %v1710 = vadd.f32 %v1709, %v1669
        %v1711 = vadd.f32 %v1710, %v1673
        %v1712 = vadd.f32 %v1550, %v1554
        %v1713 = vadd.f32 %v1712, %v1558
        %v1714 = vadd.f32 %v1713, %v1562
        %v1715 = vadd.f32 %v1714, %v1566
        %v1716 = vadd.f32 %v1715, %v1570
        %v1717 = vadd.f32 %v1716, %v1574
        %v1718 = vadd.f32 %v1717, %v1578
        %v1719 = vadd.f32 %v1718, %v1582
        %v1720 = vadd.f32 %v1719, %v1586
        %v1721 = vadd.f32 %v1720, %v1590
        %v1722 = vadd.f32 %v1721, %v1594
        %v1723 = vadd.f32 %v1722, %v1598
        %v1724 = vadd.f32 %v1723, %v1602
        %v1725 = vadd.f32 %v1724, %v1606
        %v1726 = vadd.f32 %v1725, %v1610
        %v1727 = vadd.f32 %v1726, %v1614
        %v1728 = vadd.f32 %v1727, %v1618
        %v1729 = vadd.f32 %v1728, %v1622
        %v1730 = vadd.f32 %v1729, %v1626
        %v1731 = vadd.f32 %v1730, %v1630
        %v1732 = vadd.f32 %v1731, %v1634
        %v1733 = vadd.f32 %v1732, %v1638
        %v1734 = vadd.f32 %v1733, %v1642
        %v1735 = vadd.f32 %v1734, %v1646
        %v1736 = vadd.f32 %v1735, %v1650
        %v1737 = vadd.f32 %v1736, %v1654
        %v1738 = vadd.f32 %v1737, %v1658
        %v1739 = vadd.f32 %v1738, %v1662
        %v1740 = vadd.f32 %v1739, %v1666
        %v1741 = vadd.f32 %v1740, %v1670
        %v1742 = vadd.f32 %v1741, %v1674
        %v1743 = vadd.f32 %v1551, %v1555
        %v1744 = vadd.f32 %v1743, %v1559
        %v1745 = vadd.f32 %v1744, %v1563
        %v1746 = vadd.f32 %v1745, %v1567
        %v1747 = vadd.f32 %v1746, %v1571
        %v1748 = vadd.f32 %v1747, %v1575
        %v1749 = vadd.f32 %v1748, %v1579
        %v1750 = vadd.f32 %v1749, %v1583
        %v1751 = vadd.f32 %v1750, %v1587
        %v1752 = vadd.f32 %v1751, %v1591
        %v1753 = vadd.f32 %v1752, %v1595
        %v1754 = vadd.f32 %v1753, %v1599
        %v1755 = vadd.f32 %v1754, %v1603
        %v1756 = vadd.f32 %v1755, %v1607
        %v1757 = vadd.f32 %v1756, %v1611
        %v1758 = vadd.f32 %v1757, %v1615
        %v1759 = vadd.f32 %v1758, %v1619
        %v1760 = vadd.f32 %v1759, %v1623
        %v1761 = vadd.f32 %v1760, %v1627
        %v1762 = vadd.f32 %v1761, %v1631
        %v1763 = vadd.f32 %v1762, %v1635
        %v1764 = vadd.f32 %v1763, %v1639
        %v1765 = vadd.f32 %v1764, %v1643
        %v1766 = vadd.f32 %v1765, %v1647
        %v1767 = vadd.f32 %v1766, %v1651
        %v1768 = vadd.f32 %v1767, %v1655
        %v1769 = vadd.f32 %v1768, %v1659
        %v1770 = vadd.f32 %v1769, %v1663
        %v1771 = vadd.f32 %v1770, %v1667
        %v1772 = vadd.f32 %v1771, %v1671
        %v1773 = vadd.f32 %v1772, %v1675
        %v1774 = vadd.f32 %v1552, %v1556
        %v1775 = vadd.f32 %v1774, %v1560
        %v1776 = vadd.f32 %v1775, %v1564
        %v1777 = vadd.f32 %v1776, %v1568
        %v1778 = vadd.f32 %v1777, %v1572
        %v1779 = vadd.f32 %v1778, %v1576
        %v1780 = vadd.f32 %v1779, %v1580
        %v1781 = vadd.f32 %v1780, %v1584
        %v1782 = vadd.f32 %v1781, %v1588
        %v1783 = vadd.f32 %v1782, %v1592
        %v1784 = vadd.f32 %v1783, %v1596
        %v1785 = vadd.f32 %v1784, %v1600
        %v1786 = vadd.f32 %v1785, %v1604
        %v1787 = vadd.f32 %v1786, %v1608
        %v1788 = vadd.f32 %v1787, %v1612
        %v1789 = vadd.f32 %v1788, %v1616
        %v1790 = vadd.f32 %v1789, %v1620
        %v1791 = vadd.f32 %v1790, %v1624
        %v1792 = vadd.f32 %v1791, %v1628
        %v1793 = vadd.f32 %v1792, %v1632
        %v1794 = vadd.f32 %v1793, %v1636
        %v1795 = vadd.f32 %v1794, %v1640
        %v1796 = vadd.f32 %v1795, %v1644
        %v1797 = vadd.f32 %v1796, %v1648
        %v1798 = vadd.f32 %v1797, %v1652
        %v1799 = vadd.f32 %v1798, %v1656
        %v1800 = vadd.f32 %v1799, %v1660
        %v1801 = vadd.f32 %v1800, %v1664
        %v1802 = vadd.f32 %v1801, %v1668
        %v1803 = vadd.f32 %v1802, %v1672
        %v1804 = vadd.f32 %v1803, %v1676
        %v1805 = vadd.f32 %v1677, %v1711
        %v1806 = vadd.f32 %v1678, %v1742
        %v1807 = vadd.f32 %v1679, %v1773
        %v1808 = vadd.f32 %v1680, %v1804
        %1809 = vst [vmem:[#allocation2] sm:$0xff] %v1805
        %1810 = vst [vmem:[#allocation2 + $0x8] sm:$0xff] %v1806
        %1811 = vst [vmem:[#allocation2 + $0x10] sm:$0xff] %v1807
        %1812 = vst [vmem:[#allocation2 + $0x18] sm:$0xff] %v1808
        %s1813 = scalar_lea.vmem [#allocation3], 16
        %v1814 = vld [vmem:[%s1813] ss:$4 sm:$0xf]
        %v1816 = vlaneseq
        %v1817 = vshrl.u32 %v1816, 7
        %v1818 = vsub.s32 0, %v1817
        %v1819 = vrot.slane %v1814, %v1818
        %v1820 = vlaneseq
        %v1821 = vshrl.u32 %v1820, 7
        %v1822 = vsub.s32 1, %v1821
        %v1823 = vrot.slane %v1814, %v1822
        %v1824 = vlaneseq
        %v1825 = vshrl.u32 %v1824, 7
        %v1826 = vsub.s32 2, %v1825
        %v1827 = vrot.slane %v1814, %v1826
        %v1828 = vlaneseq
        %v1829 = vshrl.u32 %v1828, 7
        %v1830 = vsub.s32 3, %v1829
        %v1831 = vrot.slane %v1814, %v1830
        %v1836 = vmul.f32 %v279, %v1819
        %v1837 = vmul.f32 %v279, %v1823
        %v1838 = vmul.f32 %v279, %v1827
        %v1839 = vmul.f32 %v279, %v1831
        %v1840 = vmul.f32 %v284, %v1819
        %v1841 = vmul.f32 %v284, %v1823
        %v1842 = vmul.f32 %v284, %v1827
        %v1843 = vmul.f32 %v284, %v1831
        %v1844 = vmul.f32 %v289, %v1819
        %v1845 = vmul.f32 %v289, %v1823
        %v1846 = vmul.f32 %v289, %v1827
        %v1847 = vmul.f32 %v289, %v1831
        %v1848 = vmul.f32 %v294, %v1819
        %v1849 = vmul.f32 %v294, %v1823
        %v1850 = vmul.f32 %v294, %v1827
        %v1851 = vmul.f32 %v294, %v1831
        %v1852 = vmul.f32 %v299, %v1819
        %v1853 = vmul.f32 %v299, %v1823
        %v1854 = vmul.f32 %v299, %v1827
        %v1855 = vmul.f32 %v299, %v1831
        %v1856 = vmul.f32 %v304, %v1819
        %v1857 = vmul.f32 %v304, %v1823
        %v1858 = vmul.f32 %v304, %v1827
        %v1859 = vmul.f32 %v304, %v1831
        %v1860 = vmul.f32 %v309, %v1819
        %v1861 = vmul.f32 %v309, %v1823
        %v1862 = vmul.f32 %v309, %v1827
        %v1863 = vmul.f32 %v309, %v1831
        %v1864 = vmul.f32 %v314, %v1819
        %v1865 = vmul.f32 %v314, %v1823
        %v1866 = vmul.f32 %v314, %v1827
        %v1867 = vmul.f32 %v314, %v1831
        %v1868 = vmul.f32 %v319, %v1819
        %v1869 = vmul.f32 %v319, %v1823
        %v1870 = vmul.f32 %v319, %v1827
        %v1871 = vmul.f32 %v319, %v1831
        %v1872 = vmul.f32 %v324, %v1819
        %v1873 = vmul.f32 %v324, %v1823
        %v1874 = vmul.f32 %v324, %v1827
        %v1875 = vmul.f32 %v324, %v1831
        %v1876 = vmul.f32 %v329, %v1819
        %v1877 = vmul.f32 %v329, %v1823
        %v1878 = vmul.f32 %v329, %v1827
        %v1879 = vmul.f32 %v329, %v1831
        %v1880 = vmul.f32 %v334, %v1819
        %v1881 = vmul.f32 %v334, %v1823
        %v1882 = vmul.f32 %v334, %v1827
        %v1883 = vmul.f32 %v334, %v1831
        %v1884 = vmul.f32 %v339, %v1819
        %v1885 = vmul.f32 %v339, %v1823
        %v1886 = vmul.f32 %v339, %v1827
        %v1887 = vmul.f32 %v339, %v1831
        %v1888 = vmul.f32 %v344, %v1819
        %v1889 = vmul.f32 %v344, %v1823
        %v1890 = vmul.f32 %v344, %v1827
        %v1891 = vmul.f32 %v344, %v1831
        %v1892 = vmul.f32 %v349, %v1819
        %v1893 = vmul.f32 %v349, %v1823
        %v1894 = vmul.f32 %v349, %v1827
        %v1895 = vmul.f32 %v349, %v1831
        %v1896 = vmul.f32 %v354, %v1819
        %v1897 = vmul.f32 %v354, %v1823
        %v1898 = vmul.f32 %v354, %v1827
        %v1899 = vmul.f32 %v354, %v1831
        %v1900 = vmul.f32 %v359, %v1819
        %v1901 = vmul.f32 %v359, %v1823
        %v1902 = vmul.f32 %v359, %v1827
        %v1903 = vmul.f32 %v359, %v1831
        %v1904 = vmul.f32 %v364, %v1819
        %v1905 = vmul.f32 %v364, %v1823
        %v1906 = vmul.f32 %v364, %v1827
        %v1907 = vmul.f32 %v364, %v1831
        %v1908 = vmul.f32 %v369, %v1819
        %v1909 = vmul.f32 %v369, %v1823
        %v1910 = vmul.f32 %v369, %v1827
        %v1911 = vmul.f32 %v369, %v1831
        %v1912 = vmul.f32 %v374, %v1819
        %v1913 = vmul.f32 %v374, %v1823
        %v1914 = vmul.f32 %v374, %v1827
        %v1915 = vmul.f32 %v374, %v1831
        %v1916 = vmul.f32 %v379, %v1819
        %v1917 = vmul.f32 %v379, %v1823
        %v1918 = vmul.f32 %v379, %v1827
        %v1919 = vmul.f32 %v379, %v1831
        %v1920 = vmul.f32 %v384, %v1819
        %v1921 = vmul.f32 %v384, %v1823
        %v1922 = vmul.f32 %v384, %v1827
        %v1923 = vmul.f32 %v384, %v1831
        %v1924 = vmul.f32 %v389, %v1819
        %v1925 = vmul.f32 %v389, %v1823
        %v1926 = vmul.f32 %v389, %v1827
        %v1927 = vmul.f32 %v389, %v1831
        %v1928 = vmul.f32 %v394, %v1819
        %v1929 = vmul.f32 %v394, %v1823
        %v1930 = vmul.f32 %v394, %v1827
        %v1931 = vmul.f32 %v394, %v1831
        %v1932 = vmul.f32 %v399, %v1819
        %v1933 = vmul.f32 %v399, %v1823
        %v1934 = vmul.f32 %v399, %v1827
        %v1935 = vmul.f32 %v399, %v1831
        %v1936 = vmul.f32 %v404, %v1819
        %v1937 = vmul.f32 %v404, %v1823
        %v1938 = vmul.f32 %v404, %v1827
        %v1939 = vmul.f32 %v404, %v1831
        %v1940 = vmul.f32 %v409, %v1819
        %v1941 = vmul.f32 %v409, %v1823
        %v1942 = vmul.f32 %v409, %v1827
        %v1943 = vmul.f32 %v409, %v1831
        %v1944 = vmul.f32 %v414, %v1819
        %v1945 = vmul.f32 %v414, %v1823
        %v1946 = vmul.f32 %v414, %v1827
        %v1947 = vmul.f32 %v414, %v1831
        %v1948 = vmul.f32 %v419, %v1819
        %v1949 = vmul.f32 %v419, %v1823
        %v1950 = vmul.f32 %v419, %v1827
        %v1951 = vmul.f32 %v419, %v1831
        %v1952 = vmul.f32 %v424, %v1819
        %v1953 = vmul.f32 %v424, %v1823
        %v1954 = vmul.f32 %v424, %v1827
        %v1955 = vmul.f32 %v424, %v1831
        %v1956 = vmul.f32 %v429, %v1819
        %v1957 = vmul.f32 %v429, %v1823
        %v1958 = vmul.f32 %v429, %v1827
        %v1959 = vmul.f32 %v429, %v1831
        %v1960 = vmul.f32 %v434, %v1819
        %v1961 = vmul.f32 %v434, %v1823
        %v1962 = vmul.f32 %v434, %v1827
        %v1963 = vmul.f32 %v434, %v1831
        %v1964 = vld [vmem:[#allocation5 + $0x4] sm:$0xf]
        %v1966 = vlaneseq
        %v1967 = vshrl.u32 %v1966, 7
        %v1968 = vsub.s32 0, %v1967
        %v1969 = vrot.slane %v1964, %v1968
        %v1970 = vlaneseq
        %v1971 = vshrl.u32 %v1970, 7
        %v1972 = vsub.s32 1, %v1971
        %v1973 = vrot.slane %v1964, %v1972
        %v1974 = vlaneseq
        %v1975 = vshrl.u32 %v1974, 7
        %v1976 = vsub.s32 2, %v1975
        %v1977 = vrot.slane %v1964, %v1976
        %v1978 = vlaneseq
        %v1979 = vshrl.u32 %v1978, 7
        %v1980 = vsub.s32 3, %v1979
        %v1981 = vrot.slane %v1964, %v1980
        %v1986 = vadd.f32 %v1836, %v1969
        %v1987 = vadd.f32 %v1837, %v1973
        %v1988 = vadd.f32 %v1838, %v1977
        %v1989 = vadd.f32 %v1839, %v1981
        %v1990 = vadd.f32 %v1840, %v1969
        %v1991 = vadd.f32 %v1841, %v1973
        %v1992 = vadd.f32 %v1842, %v1977
        %v1993 = vadd.f32 %v1843, %v1981
        %v1994 = vadd.f32 %v1844, %v1969
        %v1995 = vadd.f32 %v1845, %v1973
        %v1996 = vadd.f32 %v1846, %v1977
        %v1997 = vadd.f32 %v1847, %v1981
        %v1998 = vadd.f32 %v1848, %v1969
        %v1999 = vadd.f32 %v1849, %v1973
        %v2000 = vadd.f32 %v1850, %v1977
        %v2001 = vadd.f32 %v1851, %v1981
        %v2002 = vadd.f32 %v1852, %v1969
        %v2003 = vadd.f32 %v1853, %v1973
        %v2004 = vadd.f32 %v1854, %v1977
        %v2005 = vadd.f32 %v1855, %v1981
        %v2006 = vadd.f32 %v1856, %v1969
        %v2007 = vadd.f32 %v1857, %v1973
        %v2008 = vadd.f32 %v1858, %v1977
        %v2009 = vadd.f32 %v1859, %v1981
        %v2010 = vadd.f32 %v1860, %v1969
        %v2011 = vadd.f32 %v1861, %v1973
        %v2012 = vadd.f32 %v1862, %v1977
        %v2013 = vadd.f32 %v1863, %v1981
        %v2014 = vadd.f32 %v1864, %v1969
        %v2015 = vadd.f32 %v1865, %v1973
        %v2016 = vadd.f32 %v1866, %v1977
        %v2017 = vadd.f32 %v1867, %v1981
        %v2018 = vadd.f32 %v1868, %v1969
        %v2019 = vadd.f32 %v1869, %v1973
        %v2020 = vadd.f32 %v1870, %v1977
        %v2021 = vadd.f32 %v1871, %v1981
        %v2022 = vadd.f32 %v1872, %v1969
        %v2023 = vadd.f32 %v1873, %v1973
        %v2024 = vadd.f32 %v1874, %v1977
        %v2025 = vadd.f32 %v1875, %v1981
        %v2026 = vadd.f32 %v1876, %v1969
        %v2027 = vadd.f32 %v1877, %v1973
        %v2028 = vadd.f32 %v1878, %v1977
        %v2029 = vadd.f32 %v1879, %v1981
        %v2030 = vadd.f32 %v1880, %v1969
        %v2031 = vadd.f32 %v1881, %v1973
        %v2032 = vadd.f32 %v1882, %v1977
        %v2033 = vadd.f32 %v1883, %v1981
        %v2034 = vadd.f32 %v1884, %v1969
        %v2035 = vadd.f32 %v1885, %v1973
        %v2036 = vadd.f32 %v1886, %v1977
        %v2037 = vadd.f32 %v1887, %v1981
        %v2038 = vadd.f32 %v1888, %v1969
        %v2039 = vadd.f32 %v1889, %v1973
        %v2040 = vadd.f32 %v1890, %v1977
        %v2041 = vadd.f32 %v1891, %v1981
        %v2042 = vadd.f32 %v1892, %v1969
        %v2043 = vadd.f32 %v1893, %v1973
        %v2044 = vadd.f32 %v1894, %v1977
        %v2045 = vadd.f32 %v1895, %v1981
        %v2046 = vadd.f32 %v1896, %v1969
        %v2047 = vadd.f32 %v1897, %v1973
        %v2048 = vadd.f32 %v1898, %v1977
        %v2049 = vadd.f32 %v1899, %v1981
        %v2050 = vadd.f32 %v1900, %v1969
        %v2051 = vadd.f32 %v1901, %v1973
        %v2052 = vadd.f32 %v1902, %v1977
        %v2053 = vadd.f32 %v1903, %v1981
        %v2054 = vadd.f32 %v1904, %v1969
        %v2055 = vadd.f32 %v1905, %v1973
        %v2056 = vadd.f32 %v1906, %v1977
        %v2057 = vadd.f32 %v1907, %v1981
        %v2058 = vadd.f32 %v1908, %v1969
        %v2059 = vadd.f32 %v1909, %v1973
        %v2060 = vadd.f32 %v1910, %v1977
        %v2061 = vadd.f32 %v1911, %v1981
        %v2062 = vadd.f32 %v1912, %v1969
        %v2063 = vadd.f32 %v1913, %v1973
        %v2064 = vadd.f32 %v1914, %v1977
        %v2065 = vadd.f32 %v1915, %v1981
        %v2066 = vadd.f32 %v1916, %v1969
        %v2067 = vadd.f32 %v1917, %v1973
        %v2068 = vadd.f32 %v1918, %v1977
        %v2069 = vadd.f32 %v1919, %v1981
        %v2070 = vadd.f32 %v1920, %v1969
        %v2071 = vadd.f32 %v1921, %v1973
        %v2072 = vadd.f32 %v1922, %v1977
        %v2073 = vadd.f32 %v1923, %v1981
        %v2074 = vadd.f32 %v1924, %v1969
        %v2075 = vadd.f32 %v1925, %v1973
        %v2076 = vadd.f32 %v1926, %v1977
        %v2077 = vadd.f32 %v1927, %v1981
        %v2078 = vadd.f32 %v1928, %v1969
        %v2079 = vadd.f32 %v1929, %v1973
        %v2080 = vadd.f32 %v1930, %v1977
        %v2081 = vadd.f32 %v1931, %v1981
        %v2082 = vadd.f32 %v1932, %v1969
        %v2083 = vadd.f32 %v1933, %v1973
        %v2084 = vadd.f32 %v1934, %v1977
        %v2085 = vadd.f32 %v1935, %v1981
        %v2086 = vadd.f32 %v1936, %v1969
        %v2087 = vadd.f32 %v1937, %v1973
        %v2088 = vadd.f32 %v1938, %v1977
        %v2089 = vadd.f32 %v1939, %v1981
        %v2090 = vadd.f32 %v1940, %v1969
        %v2091 = vadd.f32 %v1941, %v1973
        %v2092 = vadd.f32 %v1942, %v1977
        %v2093 = vadd.f32 %v1943, %v1981
        %v2094 = vadd.f32 %v1944, %v1969
        %v2095 = vadd.f32 %v1945, %v1973
        %v2096 = vadd.f32 %v1946, %v1977
        %v2097 = vadd.f32 %v1947, %v1981
        %v2098 = vadd.f32 %v1948, %v1969
        %v2099 = vadd.f32 %v1949, %v1973
        %v2100 = vadd.f32 %v1950, %v1977
        %v2101 = vadd.f32 %v1951, %v1981
        %v2102 = vadd.f32 %v1952, %v1969
        %v2103 = vadd.f32 %v1953, %v1973
        %v2104 = vadd.f32 %v1954, %v1977
        %v2105 = vadd.f32 %v1955, %v1981
        %v2106 = vadd.f32 %v1956, %v1969
        %v2107 = vadd.f32 %v1957, %v1973
        %v2108 = vadd.f32 %v1958, %v1977
        %v2109 = vadd.f32 %v1959, %v1981
        %v2110 = vadd.f32 %v1960, %v1969
        %v2111 = vadd.f32 %v1961, %v1973
        %v2112 = vadd.f32 %v1962, %v1977
        %v2113 = vadd.f32 %v1963, %v1981
        %s2114 = scalar_lea.vmem [#allocation3], 17
        %v2115 = vld [vmem:[%s2114] ss:$4 sm:$0xf]
        %v2117 = vlaneseq
        %v2118 = vshrl.u32 %v2117, 7
        %v2119 = vsub.s32 0, %v2118
        %v2120 = vrot.slane %v2115, %v2119
        %v2121 = vlaneseq
        %v2122 = vshrl.u32 %v2121, 7
        %v2123 = vsub.s32 1, %v2122
        %v2124 = vrot.slane %v2115, %v2123
        %v2125 = vlaneseq
        %v2126 = vshrl.u32 %v2125, 7
        %v2127 = vsub.s32 2, %v2126
        %v2128 = vrot.slane %v2115, %v2127
        %v2129 = vlaneseq
        %v2130 = vshrl.u32 %v2129, 7
        %v2131 = vsub.s32 3, %v2130
        %v2132 = vrot.slane %v2115, %v2131
        %v2137 = vmul.f32 %v739, %v2120
        %v2138 = vmul.f32 %v739, %v2124
        %v2139 = vmul.f32 %v739, %v2128
        %v2140 = vmul.f32 %v739, %v2132
        %v2141 = vmul.f32 %v743, %v2120
        %v2142 = vmul.f32 %v743, %v2124
        %v2143 = vmul.f32 %v743, %v2128
        %v2144 = vmul.f32 %v743, %v2132
        %v2145 = vmul.f32 %v747, %v2120
        %v2146 = vmul.f32 %v747, %v2124
        %v2147 = vmul.f32 %v747, %v2128
        %v2148 = vmul.f32 %v747, %v2132
        %v2149 = vmul.f32 %v751, %v2120
        %v2150 = vmul.f32 %v751, %v2124
        %v2151 = vmul.f32 %v751, %v2128
        %v2152 = vmul.f32 %v751, %v2132
        %v2153 = vmul.f32 %v755, %v2120
        %v2154 = vmul.f32 %v755, %v2124
        %v2155 = vmul.f32 %v755, %v2128
        %v2156 = vmul.f32 %v755, %v2132
        %v2157 = vmul.f32 %v759, %v2120
        %v2158 = vmul.f32 %v759, %v2124
        %v2159 = vmul.f32 %v759, %v2128
        %v2160 = vmul.f32 %v759, %v2132
        %v2161 = vmul.f32 %v763, %v2120
        %v2162 = vmul.f32 %v763, %v2124
        %v2163 = vmul.f32 %v763, %v2128
        %v2164 = vmul.f32 %v763, %v2132
        %v2165 = vmul.f32 %v767, %v2120
        %v2166 = vmul.f32 %v767, %v2124
        %v2167 = vmul.f32 %v767, %v2128
        %v2168 = vmul.f32 %v767, %v2132
        %v2169 = vmul.f32 %v771, %v2120
        %v2170 = vmul.f32 %v771, %v2124
        %v2171 = vmul.f32 %v771, %v2128
        %v2172 = vmul.f32 %v771, %v2132
        %v2173 = vmul.f32 %v775, %v2120
        %v2174 = vmul.f32 %v775, %v2124
        %v2175 = vmul.f32 %v775, %v2128
        %v2176 = vmul.f32 %v775, %v2132
        %v2177 = vmul.f32 %v779, %v2120
        %v2178 = vmul.f32 %v779, %v2124
        %v2179 = vmul.f32 %v779, %v2128
        %v2180 = vmul.f32 %v779, %v2132
        %v2181 = vmul.f32 %v783, %v2120
        %v2182 = vmul.f32 %v783, %v2124
        %v2183 = vmul.f32 %v783, %v2128
        %v2184 = vmul.f32 %v783, %v2132
        %v2185 = vmul.f32 %v787, %v2120
        %v2186 = vmul.f32 %v787, %v2124
        %v2187 = vmul.f32 %v787, %v2128
        %v2188 = vmul.f32 %v787, %v2132
        %v2189 = vmul.f32 %v791, %v2120
        %v2190 = vmul.f32 %v791, %v2124
        %v2191 = vmul.f32 %v791, %v2128
        %v2192 = vmul.f32 %v791, %v2132
        %v2193 = vmul.f32 %v795, %v2120
        %v2194 = vmul.f32 %v795, %v2124
        %v2195 = vmul.f32 %v795, %v2128
        %v2196 = vmul.f32 %v795, %v2132
        %v2197 = vmul.f32 %v799, %v2120
        %v2198 = vmul.f32 %v799, %v2124
        %v2199 = vmul.f32 %v799, %v2128
        %v2200 = vmul.f32 %v799, %v2132
        %v2201 = vmul.f32 %v803, %v2120
        %v2202 = vmul.f32 %v803, %v2124
        %v2203 = vmul.f32 %v803, %v2128
        %v2204 = vmul.f32 %v803, %v2132
        %v2205 = vmul.f32 %v807, %v2120
        %v2206 = vmul.f32 %v807, %v2124
        %v2207 = vmul.f32 %v807, %v2128
        %v2208 = vmul.f32 %v807, %v2132
        %v2209 = vmul.f32 %v811, %v2120
        %v2210 = vmul.f32 %v811, %v2124
        %v2211 = vmul.f32 %v811, %v2128
        %v2212 = vmul.f32 %v811, %v2132
        %v2213 = vmul.f32 %v815, %v2120
        %v2214 = vmul.f32 %v815, %v2124
        %v2215 = vmul.f32 %v815, %v2128
        %v2216 = vmul.f32 %v815, %v2132
        %v2217 = vmul.f32 %v819, %v2120
        %v2218 = vmul.f32 %v819, %v2124
        %v2219 = vmul.f32 %v819, %v2128
        %v2220 = vmul.f32 %v819, %v2132
        %v2221 = vmul.f32 %v823, %v2120
        %v2222 = vmul.f32 %v823, %v2124
        %v2223 = vmul.f32 %v823, %v2128
        %v2224 = vmul.f32 %v823, %v2132
        %v2225 = vmul.f32 %v827, %v2120
        %v2226 = vmul.f32 %v827, %v2124
        %v2227 = vmul.f32 %v827, %v2128
        %v2228 = vmul.f32 %v827, %v2132
        %v2229 = vmul.f32 %v831, %v2120
        %v2230 = vmul.f32 %v831, %v2124
        %v2231 = vmul.f32 %v831, %v2128
        %v2232 = vmul.f32 %v831, %v2132
        %v2233 = vmul.f32 %v835, %v2120
        %v2234 = vmul.f32 %v835, %v2124
        %v2235 = vmul.f32 %v835, %v2128
        %v2236 = vmul.f32 %v835, %v2132
        %v2237 = vmul.f32 %v839, %v2120
        %v2238 = vmul.f32 %v839, %v2124
        %v2239 = vmul.f32 %v839, %v2128
        %v2240 = vmul.f32 %v839, %v2132
        %v2241 = vmul.f32 %v843, %v2120
        %v2242 = vmul.f32 %v843, %v2124
        %v2243 = vmul.f32 %v843, %v2128
        %v2244 = vmul.f32 %v843, %v2132
        %v2245 = vmul.f32 %v847, %v2120
        %v2246 = vmul.f32 %v847, %v2124
        %v2247 = vmul.f32 %v847, %v2128
        %v2248 = vmul.f32 %v847, %v2132
        %v2249 = vmul.f32 %v851, %v2120
        %v2250 = vmul.f32 %v851, %v2124
        %v2251 = vmul.f32 %v851, %v2128
        %v2252 = vmul.f32 %v851, %v2132
        %v2253 = vmul.f32 %v855, %v2120
        %v2254 = vmul.f32 %v855, %v2124
        %v2255 = vmul.f32 %v855, %v2128
        %v2256 = vmul.f32 %v855, %v2132
        %v2257 = vmul.f32 %v859, %v2120
        %v2258 = vmul.f32 %v859, %v2124
        %v2259 = vmul.f32 %v859, %v2128
        %v2260 = vmul.f32 %v859, %v2132
        %v2261 = vmul.f32 %v863, %v2120
        %v2262 = vmul.f32 %v863, %v2124
        %v2263 = vmul.f32 %v863, %v2128
        %v2264 = vmul.f32 %v863, %v2132
        %v2265 = vadd.f32 %v1986, %v2137
        %v2266 = vadd.f32 %v1987, %v2138
        %v2267 = vadd.f32 %v1988, %v2139
        %v2268 = vadd.f32 %v1989, %v2140
        %v2269 = vadd.f32 %v1990, %v2141
        %v2270 = vadd.f32 %v1991, %v2142
        %v2271 = vadd.f32 %v1992, %v2143
        %v2272 = vadd.f32 %v1993, %v2144
        %v2273 = vadd.f32 %v1994, %v2145
        %v2274 = vadd.f32 %v1995, %v2146
        %v2275 = vadd.f32 %v1996, %v2147
        %v2276 = vadd.f32 %v1997, %v2148
        %v2277 = vadd.f32 %v1998, %v2149
        %v2278 = vadd.f32 %v1999, %v2150
        %v2279 = vadd.f32 %v2000, %v2151
        %v2280 = vadd.f32 %v2001, %v2152
        %v2281 = vadd.f32 %v2002, %v2153
        %v2282 = vadd.f32 %v2003, %v2154
        %v2283 = vadd.f32 %v2004, %v2155
        %v2284 = vadd.f32 %v2005, %v2156
        %v2285 = vadd.f32 %v2006, %v2157
        %v2286 = vadd.f32 %v2007, %v2158
        %v2287 = vadd.f32 %v2008, %v2159
        %v2288 = vadd.f32 %v2009, %v2160
        %v2289 = vadd.f32 %v2010, %v2161
        %v2290 = vadd.f32 %v2011, %v2162
        %v2291 = vadd.f32 %v2012, %v2163
        %v2292 = vadd.f32 %v2013, %v2164
        %v2293 = vadd.f32 %v2014, %v2165
        %v2294 = vadd.f32 %v2015, %v2166
        %v2295 = vadd.f32 %v2016, %v2167
        %v2296 = vadd.f32 %v2017, %v2168
        %v2297 = vadd.f32 %v2018, %v2169
        %v2298 = vadd.f32 %v2019, %v2170
        %v2299 = vadd.f32 %v2020, %v2171
        %v2300 = vadd.f32 %v2021, %v2172
        %v2301 = vadd.f32 %v2022, %v2173
        %v2302 = vadd.f32 %v2023, %v2174
        %v2303 = vadd.f32 %v2024, %v2175
        %v2304 = vadd.f32 %v2025, %v2176
        %v2305 = vadd.f32 %v2026, %v2177
        %v2306 = vadd.f32 %v2027, %v2178
        %v2307 = vadd.f32 %v2028, %v2179
        %v2308 = vadd.f32 %v2029, %v2180
        %v2309 = vadd.f32 %v2030, %v2181
        %v2310 = vadd.f32 %v2031, %v2182
        %v2311 = vadd.f32 %v2032, %v2183
        %v2312 = vadd.f32 %v2033, %v2184
        %v2313 = vadd.f32 %v2034, %v2185
        %v2314 = vadd.f32 %v2035, %v2186
        %v2315 = vadd.f32 %v2036, %v2187
        %v2316 = vadd.f32 %v2037, %v2188
        %v2317 = vadd.f32 %v2038, %v2189
        %v2318 = vadd.f32 %v2039, %v2190
        %v2319 = vadd.f32 %v2040, %v2191
        %v2320 = vadd.f32 %v2041, %v2192
        %v2321 = vadd.f32 %v2042, %v2193
        %v2322 = vadd.f32 %v2043, %v2194
        %v2323 = vadd.f32 %v2044, %v2195
        %v2324 = vadd.f32 %v2045, %v2196
        %v2325 = vadd.f32 %v2046, %v2197
        %v2326 = vadd.f32 %v2047, %v2198
        %v2327 = vadd.f32 %v2048, %v2199
        %v2328 = vadd.f32 %v2049, %v2200
        %v2329 = vadd.f32 %v2050, %v2201
        %v2330 = vadd.f32 %v2051, %v2202
        %v2331 = vadd.f32 %v2052, %v2203
        %v2332 = vadd.f32 %v2053, %v2204
        %v2333 = vadd.f32 %v2054, %v2205
        %v2334 = vadd.f32 %v2055, %v2206
        %v2335 = vadd.f32 %v2056, %v2207
        %v2336 = vadd.f32 %v2057, %v2208
        %v2337 = vadd.f32 %v2058, %v2209
        %v2338 = vadd.f32 %v2059, %v2210
        %v2339 = vadd.f32 %v2060, %v2211
        %v2340 = vadd.f32 %v2061, %v2212
        %v2341 = vadd.f32 %v2062, %v2213
        %v2342 = vadd.f32 %v2063, %v2214
        %v2343 = vadd.f32 %v2064, %v2215
        %v2344 = vadd.f32 %v2065, %v2216
        %v2345 = vadd.f32 %v2066, %v2217
        %v2346 = vadd.f32 %v2067, %v2218
        %v2347 = vadd.f32 %v2068, %v2219
        %v2348 = vadd.f32 %v2069, %v2220
        %v2349 = vadd.f32 %v2070, %v2221
        %v2350 = vadd.f32 %v2071, %v2222
        %v2351 = vadd.f32 %v2072, %v2223
        %v2352 = vadd.f32 %v2073, %v2224
        %v2353 = vadd.f32 %v2074, %v2225
        %v2354 = vadd.f32 %v2075, %v2226
        %v2355 = vadd.f32 %v2076, %v2227
        %v2356 = vadd.f32 %v2077, %v2228
        %v2357 = vadd.f32 %v2078, %v2229
        %v2358 = vadd.f32 %v2079, %v2230
        %v2359 = vadd.f32 %v2080, %v2231
        %v2360 = vadd.f32 %v2081, %v2232
        %v2361 = vadd.f32 %v2082, %v2233
        %v2362 = vadd.f32 %v2083, %v2234
        %v2363 = vadd.f32 %v2084, %v2235
        %v2364 = vadd.f32 %v2085, %v2236
        %v2365 = vadd.f32 %v2086, %v2237
        %v2366 = vadd.f32 %v2087, %v2238
        %v2367 = vadd.f32 %v2088, %v2239
        %v2368 = vadd.f32 %v2089, %v2240
        %v2369 = vadd.f32 %v2090, %v2241
        %v2370 = vadd.f32 %v2091, %v2242
        %v2371 = vadd.f32 %v2092, %v2243
        %v2372 = vadd.f32 %v2093, %v2244
        %v2373 = vadd.f32 %v2094, %v2245
        %v2374 = vadd.f32 %v2095, %v2246
        %v2375 = vadd.f32 %v2096, %v2247
        %v2376 = vadd.f32 %v2097, %v2248
        %v2377 = vadd.f32 %v2098, %v2249
        %v2378 = vadd.f32 %v2099, %v2250
        %v2379 = vadd.f32 %v2100, %v2251
        %v2380 = vadd.f32 %v2101, %v2252
        %v2381 = vadd.f32 %v2102, %v2253
        %v2382 = vadd.f32 %v2103, %v2254
        %v2383 = vadd.f32 %v2104, %v2255
        %v2384 = vadd.f32 %v2105, %v2256
        %v2385 = vadd.f32 %v2106, %v2257
        %v2386 = vadd.f32 %v2107, %v2258
        %v2387 = vadd.f32 %v2108, %v2259
        %v2388 = vadd.f32 %v2109, %v2260
        %v2389 = vadd.f32 %v2110, %v2261
        %v2390 = vadd.f32 %v2111, %v2262
        %v2391 = vadd.f32 %v2112, %v2263
        %v2392 = vadd.f32 %v2113, %v2264
        %s2393 = scalar_lea.vmem [#allocation3], 18
        %v2394 = vld [vmem:[%s2393] ss:$4 sm:$0xf]
        %v2396 = vlaneseq
        %v2397 = vshrl.u32 %v2396, 7
        %v2398 = vsub.s32 0, %v2397
        %v2399 = vrot.slane %v2394, %v2398
        %v2400 = vlaneseq
        %v2401 = vshrl.u32 %v2400, 7
        %v2402 = vsub.s32 1, %v2401
        %v2403 = vrot.slane %v2394, %v2402
        %v2404 = vlaneseq
        %v2405 = vshrl.u32 %v2404, 7
        %v2406 = vsub.s32 2, %v2405
        %v2407 = vrot.slane %v2394, %v2406
        %v2408 = vlaneseq
        %v2409 = vshrl.u32 %v2408, 7
        %v2410 = vsub.s32 3, %v2409
        %v2411 = vrot.slane %v2394, %v2410
        %v2416 = vmul.f32 %v1146, %v2399
        %v2417 = vmul.f32 %v1146, %v2403
        %v2418 = vmul.f32 %v1146, %v2407
        %v2419 = vmul.f32 %v1146, %v2411
        %v2420 = vmul.f32 %v1150, %v2399
        %v2421 = vmul.f32 %v1150, %v2403
        %v2422 = vmul.f32 %v1150, %v2407
        %v2423 = vmul.f32 %v1150, %v2411
        %v2424 = vmul.f32 %v1154, %v2399
        %v2425 = vmul.f32 %v1154, %v2403
        %v2426 = vmul.f32 %v1154, %v2407
        %v2427 = vmul.f32 %v1154, %v2411
        %v2428 = vmul.f32 %v1158, %v2399
        %v2429 = vmul.f32 %v1158, %v2403
        %v2430 = vmul.f32 %v1158, %v2407
        %v2431 = vmul.f32 %v1158, %v2411
        %v2432 = vmul.f32 %v1162, %v2399
        %v2433 = vmul.f32 %v1162, %v2403
        %v2434 = vmul.f32 %v1162, %v2407
        %v2435 = vmul.f32 %v1162, %v2411
        %v2436 = vmul.f32 %v1166, %v2399
        %v2437 = vmul.f32 %v1166, %v2403
        %v2438 = vmul.f32 %v1166, %v2407
        %v2439 = vmul.f32 %v1166, %v2411
        %v2440 = vmul.f32 %v1170, %v2399
        %v2441 = vmul.f32 %v1170, %v2403
        %v2442 = vmul.f32 %v1170, %v2407
        %v2443 = vmul.f32 %v1170, %v2411
        %v2444 = vmul.f32 %v1174, %v2399
        %v2445 = vmul.f32 %v1174, %v2403
        %v2446 = vmul.f32 %v1174, %v2407
        %v2447 = vmul.f32 %v1174, %v2411
        %v2448 = vmul.f32 %v1178, %v2399
        %v2449 = vmul.f32 %v1178, %v2403
        %v2450 = vmul.f32 %v1178, %v2407
        %v2451 = vmul.f32 %v1178, %v2411
        %v2452 = vmul.f32 %v1182, %v2399
        %v2453 = vmul.f32 %v1182, %v2403
        %v2454 = vmul.f32 %v1182, %v2407
        %v2455 = vmul.f32 %v1182, %v2411
        %v2456 = vmul.f32 %v1186, %v2399
        %v2457 = vmul.f32 %v1186, %v2403
        %v2458 = vmul.f32 %v1186, %v2407
        %v2459 = vmul.f32 %v1186, %v2411
        %v2460 = vmul.f32 %v1190, %v2399
        %v2461 = vmul.f32 %v1190, %v2403
        %v2462 = vmul.f32 %v1190, %v2407
        %v2463 = vmul.f32 %v1190, %v2411
        %v2464 = vmul.f32 %v1194, %v2399
        %v2465 = vmul.f32 %v1194, %v2403
        %v2466 = vmul.f32 %v1194, %v2407
        %v2467 = vmul.f32 %v1194, %v2411
        %v2468 = vmul.f32 %v1198, %v2399
        %v2469 = vmul.f32 %v1198, %v2403
        %v2470 = vmul.f32 %v1198, %v2407
        %v2471 = vmul.f32 %v1198, %v2411
        %v2472 = vmul.f32 %v1202, %v2399
        %v2473 = vmul.f32 %v1202, %v2403
        %v2474 = vmul.f32 %v1202, %v2407
        %v2475 = vmul.f32 %v1202, %v2411
        %v2476 = vmul.f32 %v1206, %v2399
        %v2477 = vmul.f32 %v1206, %v2403
        %v2478 = vmul.f32 %v1206, %v2407
        %v2479 = vmul.f32 %v1206, %v2411
        %v2480 = vmul.f32 %v1210, %v2399
        %v2481 = vmul.f32 %v1210, %v2403
        %v2482 = vmul.f32 %v1210, %v2407
        %v2483 = vmul.f32 %v1210, %v2411
        %v2484 = vmul.f32 %v1214, %v2399
        %v2485 = vmul.f32 %v1214, %v2403
        %v2486 = vmul.f32 %v1214, %v2407
        %v2487 = vmul.f32 %v1214, %v2411
        %v2488 = vmul.f32 %v1218, %v2399
        %v2489 = vmul.f32 %v1218, %v2403
        %v2490 = vmul.f32 %v1218, %v2407
        %v2491 = vmul.f32 %v1218, %v2411
        %v2492 = vmul.f32 %v1222, %v2399
        %v2493 = vmul.f32 %v1222, %v2403
        %v2494 = vmul.f32 %v1222, %v2407
        %v2495 = vmul.f32 %v1222, %v2411
        %v2496 = vmul.f32 %v1226, %v2399
        %v2497 = vmul.f32 %v1226, %v2403
        %v2498 = vmul.f32 %v1226, %v2407
        %v2499 = vmul.f32 %v1226, %v2411
        %v2500 = vmul.f32 %v1230, %v2399
        %v2501 = vmul.f32 %v1230, %v2403
        %v2502 = vmul.f32 %v1230, %v2407
        %v2503 = vmul.f32 %v1230, %v2411
        %v2504 = vmul.f32 %v1234, %v2399
        %v2505 = vmul.f32 %v1234, %v2403
        %v2506 = vmul.f32 %v1234, %v2407
        %v2507 = vmul.f32 %v1234, %v2411
        %v2508 = vmul.f32 %v1238, %v2399
        %v2509 = vmul.f32 %v1238, %v2403
        %v2510 = vmul.f32 %v1238, %v2407
        %v2511 = vmul.f32 %v1238, %v2411
        %v2512 = vmul.f32 %v1242, %v2399
        %v2513 = vmul.f32 %v1242, %v2403
        %v2514 = vmul.f32 %v1242, %v2407
        %v2515 = vmul.f32 %v1242, %v2411
        %v2516 = vmul.f32 %v1246, %v2399
        %v2517 = vmul.f32 %v1246, %v2403
        %v2518 = vmul.f32 %v1246, %v2407
        %v2519 = vmul.f32 %v1246, %v2411
        %v2520 = vmul.f32 %v1250, %v2399
        %v2521 = vmul.f32 %v1250, %v2403
        %v2522 = vmul.f32 %v1250, %v2407
        %v2523 = vmul.f32 %v1250, %v2411
        %v2524 = vmul.f32 %v1254, %v2399
        %v2525 = vmul.f32 %v1254, %v2403
        %v2526 = vmul.f32 %v1254, %v2407
        %v2527 = vmul.f32 %v1254, %v2411
        %v2528 = vmul.f32 %v1258, %v2399
        %v2529 = vmul.f32 %v1258, %v2403
        %v2530 = vmul.f32 %v1258, %v2407
        %v2531 = vmul.f32 %v1258, %v2411
        %v2532 = vmul.f32 %v1262, %v2399
        %v2533 = vmul.f32 %v1262, %v2403
        %v2534 = vmul.f32 %v1262, %v2407
        %v2535 = vmul.f32 %v1262, %v2411
        %v2536 = vmul.f32 %v1266, %v2399
        %v2537 = vmul.f32 %v1266, %v2403
        %v2538 = vmul.f32 %v1266, %v2407
        %v2539 = vmul.f32 %v1266, %v2411
        %v2540 = vmul.f32 %v1270, %v2399
        %v2541 = vmul.f32 %v1270, %v2403
        %v2542 = vmul.f32 %v1270, %v2407
        %v2543 = vmul.f32 %v1270, %v2411
        %v2544 = vadd.f32 %v2265, %v2416
        %v2545 = vadd.f32 %v2266, %v2417
        %v2546 = vadd.f32 %v2267, %v2418
        %v2547 = vadd.f32 %v2268, %v2419
        %v2548 = vadd.f32 %v2269, %v2420
        %v2549 = vadd.f32 %v2270, %v2421
        %v2550 = vadd.f32 %v2271, %v2422
        %v2551 = vadd.f32 %v2272, %v2423
        %v2552 = vadd.f32 %v2273, %v2424
        %v2553 = vadd.f32 %v2274, %v2425
        %v2554 = vadd.f32 %v2275, %v2426
        %v2555 = vadd.f32 %v2276, %v2427
        %v2556 = vadd.f32 %v2277, %v2428
        %v2557 = vadd.f32 %v2278, %v2429
        %v2558 = vadd.f32 %v2279, %v2430
        %v2559 = vadd.f32 %v2280, %v2431
        %v2560 = vadd.f32 %v2281, %v2432
        %v2561 = vadd.f32 %v2282, %v2433
        %v2562 = vadd.f32 %v2283, %v2434
        %v2563 = vadd.f32 %v2284, %v2435
        %v2564 = vadd.f32 %v2285, %v2436
        %v2565 = vadd.f32 %v2286, %v2437
        %v2566 = vadd.f32 %v2287, %v2438
        %v2567 = vadd.f32 %v2288, %v2439
        %v2568 = vadd.f32 %v2289, %v2440
        %v2569 = vadd.f32 %v2290, %v2441
        %v2570 = vadd.f32 %v2291, %v2442
        %v2571 = vadd.f32 %v2292, %v2443
        %v2572 = vadd.f32 %v2293, %v2444
        %v2573 = vadd.f32 %v2294, %v2445
        %v2574 = vadd.f32 %v2295, %v2446
        %v2575 = vadd.f32 %v2296, %v2447
        %v2576 = vadd.f32 %v2297, %v2448
        %v2577 = vadd.f32 %v2298, %v2449
        %v2578 = vadd.f32 %v2299, %v2450
        %v2579 = vadd.f32 %v2300, %v2451
        %v2580 = vadd.f32 %v2301, %v2452
        %v2581 = vadd.f32 %v2302, %v2453
        %v2582 = vadd.f32 %v2303, %v2454
        %v2583 = vadd.f32 %v2304, %v2455
        %v2584 = vadd.f32 %v2305, %v2456
        %v2585 = vadd.f32 %v2306, %v2457
        %v2586 = vadd.f32 %v2307, %v2458
        %v2587 = vadd.f32 %v2308, %v2459
        %v2588 = vadd.f32 %v2309, %v2460
        %v2589 = vadd.f32 %v2310, %v2461
        %v2590 = vadd.f32 %v2311, %v2462
        %v2591 = vadd.f32 %v2312, %v2463
        %v2592 = vadd.f32 %v2313, %v2464
        %v2593 = vadd.f32 %v2314, %v2465
        %v2594 = vadd.f32 %v2315, %v2466
        %v2595 = vadd.f32 %v2316, %v2467
        %v2596 = vadd.f32 %v2317, %v2468
        %v2597 = vadd.f32 %v2318, %v2469
        %v2598 = vadd.f32 %v2319, %v2470
        %v2599 = vadd.f32 %v2320, %v2471
        %v2600 = vadd.f32 %v2321, %v2472
        %v2601 = vadd.f32 %v2322, %v2473
        %v2602 = vadd.f32 %v2323, %v2474
        %v2603 = vadd.f32 %v2324, %v2475
        %v2604 = vadd.f32 %v2325, %v2476
        %v2605 = vadd.f32 %v2326, %v2477
        %v2606 = vadd.f32 %v2327, %v2478
        %v2607 = vadd.f32 %v2328, %v2479
        %v2608 = vadd.f32 %v2329, %v2480
        %v2609 = vadd.f32 %v2330, %v2481
        %v2610 = vadd.f32 %v2331, %v2482
        %v2611 = vadd.f32 %v2332, %v2483
        %v2612 = vadd.f32 %v2333, %v2484
        %v2613 = vadd.f32 %v2334, %v2485
        %v2614 = vadd.f32 %v2335, %v2486
        %v2615 = vadd.f32 %v2336, %v2487
        %v2616 = vadd.f32 %v2337, %v2488
        %v2617 = vadd.f32 %v2338, %v2489
        %v2618 = vadd.f32 %v2339, %v2490
        %v2619 = vadd.f32 %v2340, %v2491
        %v2620 = vadd.f32 %v2341, %v2492
        %v2621 = vadd.f32 %v2342, %v2493
        %v2622 = vadd.f32 %v2343, %v2494
        %v2623 = vadd.f32 %v2344, %v2495
        %v2624 = vadd.f32 %v2345, %v2496
        %v2625 = vadd.f32 %v2346, %v2497
        %v2626 = vadd.f32 %v2347, %v2498
        %v2627 = vadd.f32 %v2348, %v2499
        %v2628 = vadd.f32 %v2349, %v2500
        %v2629 = vadd.f32 %v2350, %v2501
        %v2630 = vadd.f32 %v2351, %v2502
        %v2631 = vadd.f32 %v2352, %v2503
        %v2632 = vadd.f32 %v2353, %v2504
        %v2633 = vadd.f32 %v2354, %v2505
        %v2634 = vadd.f32 %v2355, %v2506
        %v2635 = vadd.f32 %v2356, %v2507
        %v2636 = vadd.f32 %v2357, %v2508
        %v2637 = vadd.f32 %v2358, %v2509
        %v2638 = vadd.f32 %v2359, %v2510
        %v2639 = vadd.f32 %v2360, %v2511
        %v2640 = vadd.f32 %v2361, %v2512
        %v2641 = vadd.f32 %v2362, %v2513
        %v2642 = vadd.f32 %v2363, %v2514
        %v2643 = vadd.f32 %v2364, %v2515
        %v2644 = vadd.f32 %v2365, %v2516
        %v2645 = vadd.f32 %v2366, %v2517
        %v2646 = vadd.f32 %v2367, %v2518
        %v2647 = vadd.f32 %v2368, %v2519
        %v2648 = vadd.f32 %v2369, %v2520
        %v2649 = vadd.f32 %v2370, %v2521
        %v2650 = vadd.f32 %v2371, %v2522
        %v2651 = vadd.f32 %v2372, %v2523
        %v2652 = vadd.f32 %v2373, %v2524
        %v2653 = vadd.f32 %v2374, %v2525
        %v2654 = vadd.f32 %v2375, %v2526
        %v2655 = vadd.f32 %v2376, %v2527
        %v2656 = vadd.f32 %v2377, %v2528
        %v2657 = vadd.f32 %v2378, %v2529
        %v2658 = vadd.f32 %v2379, %v2530
        %v2659 = vadd.f32 %v2380, %v2531
        %v2660 = vadd.f32 %v2381, %v2532
        %v2661 = vadd.f32 %v2382, %v2533
        %v2662 = vadd.f32 %v2383, %v2534
        %v2663 = vadd.f32 %v2384, %v2535
        %v2664 = vadd.f32 %v2385, %v2536
        %v2665 = vadd.f32 %v2386, %v2537
        %v2666 = vadd.f32 %v2387, %v2538
        %v2667 = vadd.f32 %v2388, %v2539
        %v2668 = vadd.f32 %v2389, %v2540
        %v2669 = vadd.f32 %v2390, %v2541
        %v2670 = vadd.f32 %v2391, %v2542
        %v2671 = vadd.f32 %v2392, %v2543
        %v2672 = vmax.f32 %v2544, 0.0
        %v2673 = vmax.f32 %v2545, 0.0
        %v2674 = vmax.f32 %v2546, 0.0
        %v2675 = vmax.f32 %v2547, 0.0
        %v2676 = vmax.f32 %v2548, 0.0
        %v2677 = vmax.f32 %v2549, 0.0
        %v2678 = vmax.f32 %v2550, 0.0
        %v2679 = vmax.f32 %v2551, 0.0
        %v2680 = vmax.f32 %v2552, 0.0
        %v2681 = vmax.f32 %v2553, 0.0
        %v2682 = vmax.f32 %v2554, 0.0
        %v2683 = vmax.f32 %v2555, 0.0
        %v2684 = vmax.f32 %v2556, 0.0
        %v2685 = vmax.f32 %v2557, 0.0
        %v2686 = vmax.f32 %v2558, 0.0
        %v2687 = vmax.f32 %v2559, 0.0
        %v2688 = vmax.f32 %v2560, 0.0
        %v2689 = vmax.f32 %v2561, 0.0
        %v2690 = vmax.f32 %v2562, 0.0
        %v2691 = vmax.f32 %v2563, 0.0
        %v2692 = vmax.f32 %v2564, 0.0
        %v2693 = vmax.f32 %v2565, 0.0
        %v2694 = vmax.f32 %v2566, 0.0
        %v2695 = vmax.f32 %v2567, 0.0
        %v2696 = vmax.f32 %v2568, 0.0
        %v2697 = vmax.f32 %v2569, 0.0
        %v2698 = vmax.f32 %v2570, 0.0
        %v2699 = vmax.f32 %v2571, 0.0
        %v2700 = vmax.f32 %v2572, 0.0
        %v2701 = vmax.f32 %v2573, 0.0
        %v2702 = vmax.f32 %v2574, 0.0
        %v2703 = vmax.f32 %v2575, 0.0
        %v2704 = vmax.f32 %v2576, 0.0
        %v2705 = vmax.f32 %v2577, 0.0
        %v2706 = vmax.f32 %v2578, 0.0
        %v2707 = vmax.f32 %v2579, 0.0
        %v2708 = vmax.f32 %v2580, 0.0
        %v2709 = vmax.f32 %v2581, 0.0
        %v2710 = vmax.f32 %v2582, 0.0
        %v2711 = vmax.f32 %v2583, 0.0
        %v2712 = vmax.f32 %v2584, 0.0
        %v2713 = vmax.f32 %v2585, 0.0
        %v2714 = vmax.f32 %v2586, 0.0
        %v2715 = vmax.f32 %v2587, 0.0
        %v2716 = vmax.f32 %v2588, 0.0
        %v2717 = vmax.f32 %v2589, 0.0
        %v2718 = vmax.f32 %v2590, 0.0
        %v2719 = vmax.f32 %v2591, 0.0
        %v2720 = vmax.f32 %v2592, 0.0
        %v2721 = vmax.f32 %v2593, 0.0
        %v2722 = vmax.f32 %v2594, 0.0
        %v2723 = vmax.f32 %v2595, 0.0
        %v2724 = vmax.f32 %v2596, 0.0
        %v2725 = vmax.f32 %v2597, 0.0
        %v2726 = vmax.f32 %v2598, 0.0
        %v2727 = vmax.f32 %v2599, 0.0
        %v2728 = vmax.f32 %v2600, 0.0
        %v2729 = vmax.f32 %v2601, 0.0
        %v2730 = vmax.f32 %v2602, 0.0
        %v2731 = vmax.f32 %v2603, 0.0
        %v2732 = vmax.f32 %v2604, 0.0
        %v2733 = vmax.f32 %v2605, 0.0
        %v2734 = vmax.f32 %v2606, 0.0
        %v2735 = vmax.f32 %v2607, 0.0
        %v2736 = vmax.f32 %v2608, 0.0
        %v2737 = vmax.f32 %v2609, 0.0
        %v2738 = vmax.f32 %v2610, 0.0
        %v2739 = vmax.f32 %v2611, 0.0
        %v2740 = vmax.f32 %v2612, 0.0
        %v2741 = vmax.f32 %v2613, 0.0
        %v2742 = vmax.f32 %v2614, 0.0
        %v2743 = vmax.f32 %v2615, 0.0
        %v2744 = vmax.f32 %v2616, 0.0
        %v2745 = vmax.f32 %v2617, 0.0
        %v2746 = vmax.f32 %v2618, 0.0
        %v2747 = vmax.f32 %v2619, 0.0
        %v2748 = vmax.f32 %v2620, 0.0
        %v2749 = vmax.f32 %v2621, 0.0
        %v2750 = vmax.f32 %v2622, 0.0
        %v2751 = vmax.f32 %v2623, 0.0
        %v2752 = vmax.f32 %v2624, 0.0
        %v2753 = vmax.f32 %v2625, 0.0
        %v2754 = vmax.f32 %v2626, 0.0
        %v2755 = vmax.f32 %v2627, 0.0
        %v2756 = vmax.f32 %v2628, 0.0
        %v2757 = vmax.f32 %v2629, 0.0
        %v2758 = vmax.f32 %v2630, 0.0
        %v2759 = vmax.f32 %v2631, 0.0
        %v2760 = vmax.f32 %v2632, 0.0
        %v2761 = vmax.f32 %v2633, 0.0
        %v2762 = vmax.f32 %v2634, 0.0
        %v2763 = vmax.f32 %v2635, 0.0
        %v2764 = vmax.f32 %v2636, 0.0
        %v2765 = vmax.f32 %v2637, 0.0
        %v2766 = vmax.f32 %v2638, 0.0
        %v2767 = vmax.f32 %v2639, 0.0
        %v2768 = vmax.f32 %v2640, 0.0
        %v2769 = vmax.f32 %v2641, 0.0
        %v2770 = vmax.f32 %v2642, 0.0
        %v2771 = vmax.f32 %v2643, 0.0
        %v2772 = vmax.f32 %v2644, 0.0
        %v2773 = vmax.f32 %v2645, 0.0
        %v2774 = vmax.f32 %v2646, 0.0
        %v2775 = vmax.f32 %v2647, 0.0
        %v2776 = vmax.f32 %v2648, 0.0
        %v2777 = vmax.f32 %v2649, 0.0
        %v2778 = vmax.f32 %v2650, 0.0
        %v2779 = vmax.f32 %v2651, 0.0
        %v2780 = vmax.f32 %v2652, 0.0
        %v2781 = vmax.f32 %v2653, 0.0
        %v2782 = vmax.f32 %v2654, 0.0
        %v2783 = vmax.f32 %v2655, 0.0
        %v2784 = vmax.f32 %v2656, 0.0
        %v2785 = vmax.f32 %v2657, 0.0
        %v2786 = vmax.f32 %v2658, 0.0
        %v2787 = vmax.f32 %v2659, 0.0
        %v2788 = vmax.f32 %v2660, 0.0
        %v2789 = vmax.f32 %v2661, 0.0
        %v2790 = vmax.f32 %v2662, 0.0
        %v2791 = vmax.f32 %v2663, 0.0
        %v2792 = vmax.f32 %v2664, 0.0
        %v2793 = vmax.f32 %v2665, 0.0
        %v2794 = vmax.f32 %v2666, 0.0
        %v2795 = vmax.f32 %v2667, 0.0
        %v2796 = vmax.f32 %v2668, 0.0
        %v2797 = vmax.f32 %v2669, 0.0
        %v2798 = vmax.f32 %v2670, 0.0
        %v2799 = vmax.f32 %v2671, 0.0
        %v2800 = vld [vmem:[#allocation2 + $0x20] sm:$0xff]
        %v2801 = vld [vmem:[#allocation2 + $0x28] sm:$0xff]
        %v2802 = vld [vmem:[#allocation2 + $0x30] sm:$0xff]
        %v2803 = vld [vmem:[#allocation2 + $0x38] sm:$0xff]
        %v2804 = vadd.f32 %v2672, %v2676
        %v2805 = vadd.f32 %v2804, %v2680
        %v2806 = vadd.f32 %v2805, %v2684
        %v2807 = vadd.f32 %v2806, %v2688
        %v2808 = vadd.f32 %v2807, %v2692
        %v2809 = vadd.f32 %v2808, %v2696
        %v2810 = vadd.f32 %v2809, %v2700
        %v2811 = vadd.f32 %v2810, %v2704
        %v2812 = vadd.f32 %v2811, %v2708
        %v2813 = vadd.f32 %v2812, %v2712
        %v2814 = vadd.f32 %v2813, %v2716
        %v2815 = vadd.f32 %v2814, %v2720
        %v2816 = vadd.f32 %v2815, %v2724
        %v2817 = vadd.f32 %v2816, %v2728
        %v2818 = vadd.f32 %v2817, %v2732
        %v2819 = vadd.f32 %v2818, %v2736
        %v2820 = vadd.f32 %v2819, %v2740
        %v2821 = vadd.f32 %v2820, %v2744
        %v2822 = vadd.f32 %v2821, %v2748
        %v2823 = vadd.f32 %v2822, %v2752
        %v2824 = vadd.f32 %v2823, %v2756
        %v2825 = vadd.f32 %v2824, %v2760
        %v2826 = vadd.f32 %v2825, %v2764
        %v2827 = vadd.f32 %v2826, %v2768
        %v2828 = vadd.f32 %v2827, %v2772
        %v2829 = vadd.f32 %v2828, %v2776
        %v2830 = vadd.f32 %v2829, %v2780
        %v2831 = vadd.f32 %v2830, %v2784
        %v2832 = vadd.f32 %v2831, %v2788
        %v2833 = vadd.f32 %v2832, %v2792
        %v2834 = vadd.f32 %v2833, %v2796
        %v2835 = vadd.f32 %v2673, %v2677
        %v2836 = vadd.f32 %v2835, %v2681
        %v2837 = vadd.f32 %v2836, %v2685
        %v2838 = vadd.f32 %v2837, %v2689
        %v2839 = vadd.f32 %v2838, %v2693
        %v2840 = vadd.f32 %v2839, %v2697
        %v2841 = vadd.f32 %v2840, %v2701
        %v2842 = vadd.f32 %v2841, %v2705
        %v2843 = vadd.f32 %v2842, %v2709
        %v2844 = vadd.f32 %v2843, %v2713
        %v2845 = vadd.f32 %v2844, %v2717
        %v2846 = vadd.f32 %v2845, %v2721
        %v2847 = vadd.f32 %v2846, %v2725
        %v2848 = vadd.f32 %v2847, %v2729
        %v2849 = vadd.f32 %v2848, %v2733
        %v2850 = vadd.f32 %v2849, %v2737
        %v2851 = vadd.f32 %v2850, %v2741
        %v2852 = vadd.f32 %v2851, %v2745
        %v2853 = vadd.f32 %v2852, %v2749
        %v2854 = vadd.f32 %v2853, %v2753
        %v2855 = vadd.f32 %v2854, %v2757
        %v2856 = vadd.f32 %v2855, %v2761
        %v2857 = vadd.f32 %v2856, %v2765
        %v2858 = vadd.f32 %v2857, %v2769
        %v2859 = vadd.f32 %v2858, %v2773
        %v2860 = vadd.f32 %v2859, %v2777
        %v2861 = vadd.f32 %v2860, %v2781
        %v2862 = vadd.f32 %v2861, %v2785
        %v2863 = vadd.f32 %v2862, %v2789
        %v2864 = vadd.f32 %v2863, %v2793
        %v2865 = vadd.f32 %v2864, %v2797
        %v2866 = vadd.f32 %v2674, %v2678
        %v2867 = vadd.f32 %v2866, %v2682
        %v2868 = vadd.f32 %v2867, %v2686
        %v2869 = vadd.f32 %v2868, %v2690
        %v2870 = vadd.f32 %v2869, %v2694
        %v2871 = vadd.f32 %v2870, %v2698
        %v2872 = vadd.f32 %v2871, %v2702
        %v2873 = vadd.f32 %v2872, %v2706
        %v2874 = vadd.f32 %v2873, %v2710
        %v2875 = vadd.f32 %v2874, %v2714
        %v2876 = vadd.f32 %v2875, %v2718
        %v2877 = vadd.f32 %v2876, %v2722
        %v2878 = vadd.f32 %v2877, %v2726
        %v2879 = vadd.f32 %v2878, %v2730
        %v2880 = vadd.f32 %v2879, %v2734
        %v2881 = vadd.f32 %v2880, %v2738
        %v2882 = vadd.f32 %v2881, %v2742
        %v2883 = vadd.f32 %v2882, %v2746
        %v2884 = vadd.f32 %v2883, %v2750
        %v2885 = vadd.f32 %v2884, %v2754
        %v2886 = vadd.f32 %v2885, %v2758
        %v2887 = vadd.f32 %v2886, %v2762
        %v2888 = vadd.f32 %v2887, %v2766
        %v2889 = vadd.f32 %v2888, %v2770
        %v2890 = vadd.f32 %v2889, %v2774
        %v2891 = vadd.f32 %v2890, %v2778
        %v2892 = vadd.f32 %v2891, %v2782
        %v2893 = vadd.f32 %v2892, %v2786
        %v2894 = vadd.f32 %v2893, %v2790
        %v2895 = vadd.f32 %v2894, %v2794
        %v2896 = vadd.f32 %v2895, %v2798
        %v2897 = vadd.f32 %v2675, %v2679
        %v2898 = vadd.f32 %v2897, %v2683
        %v2899 = vadd.f32 %v2898, %v2687
        %v2900 = vadd.f32 %v2899, %v2691
        %v2901 = vadd.f32 %v2900, %v2695
        %v2902 = vadd.f32 %v2901, %v2699
        %v2903 = vadd.f32 %v2902, %v2703
        %v2904 = vadd.f32 %v2903, %v2707
        %v2905 = vadd.f32 %v2904, %v2711
        %v2906 = vadd.f32 %v2905, %v2715
        %v2907 = vadd.f32 %v2906, %v2719
        %v2908 = vadd.f32 %v2907, %v2723
        %v2909 = vadd.f32 %v2908, %v2727
        %v2910 = vadd.f32 %v2909, %v2731
        %v2911 = vadd.f32 %v2910, %v2735
        %v2912 = vadd.f32 %v2911, %v2739
        %v2913 = vadd.f32 %v2912, %v2743
        %v2914 = vadd.f32 %v2913, %v2747
        %v2915 = vadd.f32 %v2914, %v2751
        %v2916 = vadd.f32 %v2915, %v2755
        %v2917 = vadd.f32 %v2916, %v2759
        %v2918 = vadd.f32 %v2917, %v2763
        %v2919 = vadd.f32 %v2918, %v2767
        %v2920 = vadd.f32 %v2919, %v2771
        %v2921 = vadd.f32 %v2920, %v2775
        %v2922 = vadd.f32 %v2921, %v2779
        %v2923 = vadd.f32 %v2922, %v2783
        %v2924 = vadd.f32 %v2923, %v2787
        %v2925 = vadd.f32 %v2924, %v2791
        %v2926 = vadd.f32 %v2925, %v2795
        %v2927 = vadd.f32 %v2926, %v2799
        %v2928 = vadd.f32 %v2800, %v2834
        %v2929 = vadd.f32 %v2801, %v2865
        %v2930 = vadd.f32 %v2802, %v2896
        %v2931 = vadd.f32 %v2803, %v2927
        %2932 = vst [vmem:[#allocation2 + $0x20] sm:$0xff] %v2928
        %2933 = vst [vmem:[#allocation2 + $0x28] sm:$0xff] %v2929
        %2934 = vst [vmem:[#allocation2 + $0x30] sm:$0xff] %v2930
        %2935 = vst [vmem:[#allocation2 + $0x38] sm:$0xff] %v2931
        %s2936 = scalar_lea.vmem [#allocation3], 32
        %v2937 = vld [vmem:[%s2936] ss:$4 sm:$0xf]
        %v2939 = vlaneseq
        %v2940 = vshrl.u32 %v2939, 7
        %v2941 = vsub.s32 0, %v2940
        %v2942 = vrot.slane %v2937, %v2941
        %v2943 = vlaneseq
        %v2944 = vshrl.u32 %v2943, 7
        %v2945 = vsub.s32 1, %v2944
        %v2946 = vrot.slane %v2937, %v2945
        %v2947 = vlaneseq
        %v2948 = vshrl.u32 %v2947, 7
        %v2949 = vsub.s32 2, %v2948
        %v2950 = vrot.slane %v2937, %v2949
        %v2951 = vlaneseq
        %v2952 = vshrl.u32 %v2951, 7
        %v2953 = vsub.s32 3, %v2952
        %v2954 = vrot.slane %v2937, %v2953
        %v2959 = vmul.f32 %v279, %v2942
        %v2960 = vmul.f32 %v279, %v2946
        %v2961 = vmul.f32 %v279, %v2950
        %v2962 = vmul.f32 %v279, %v2954
        %v2963 = vmul.f32 %v284, %v2942
        %v2964 = vmul.f32 %v284, %v2946
        %v2965 = vmul.f32 %v284, %v2950
        %v2966 = vmul.f32 %v284, %v2954
        %v2967 = vmul.f32 %v289, %v2942
        %v2968 = vmul.f32 %v289, %v2946
        %v2969 = vmul.f32 %v289, %v2950
        %v2970 = vmul.f32 %v289, %v2954
        %v2971 = vmul.f32 %v294, %v2942
        %v2972 = vmul.f32 %v294, %v2946
        %v2973 = vmul.f32 %v294, %v2950
        %v2974 = vmul.f32 %v294, %v2954
        %v2975 = vmul.f32 %v299, %v2942
        %v2976 = vmul.f32 %v299, %v2946
        %v2977 = vmul.f32 %v299, %v2950
        %v2978 = vmul.f32 %v299, %v2954
        %v2979 = vmul.f32 %v304, %v2942
        %v2980 = vmul.f32 %v304, %v2946
        %v2981 = vmul.f32 %v304, %v2950
        %v2982 = vmul.f32 %v304, %v2954
        %v2983 = vmul.f32 %v309, %v2942
        %v2984 = vmul.f32 %v309, %v2946
        %v2985 = vmul.f32 %v309, %v2950
        %v2986 = vmul.f32 %v309, %v2954
        %v2987 = vmul.f32 %v314, %v2942
        %v2988 = vmul.f32 %v314, %v2946
        %v2989 = vmul.f32 %v314, %v2950
        %v2990 = vmul.f32 %v314, %v2954
        %v2991 = vmul.f32 %v319, %v2942
        %v2992 = vmul.f32 %v319, %v2946
        %v2993 = vmul.f32 %v319, %v2950
        %v2994 = vmul.f32 %v319, %v2954
        %v2995 = vmul.f32 %v324, %v2942
        %v2996 = vmul.f32 %v324, %v2946
        %v2997 = vmul.f32 %v324, %v2950
        %v2998 = vmul.f32 %v324, %v2954
        %v2999 = vmul.f32 %v329, %v2942
        %v3000 = vmul.f32 %v329, %v2946
        %v3001 = vmul.f32 %v329, %v2950
        %v3002 = vmul.f32 %v329, %v2954
        %v3003 = vmul.f32 %v334, %v2942
        %v3004 = vmul.f32 %v334, %v2946
        %v3005 = vmul.f32 %v334, %v2950
        %v3006 = vmul.f32 %v334, %v2954
        %v3007 = vmul.f32 %v339, %v2942
        %v3008 = vmul.f32 %v339, %v2946
        %v3009 = vmul.f32 %v339, %v2950
        %v3010 = vmul.f32 %v339, %v2954
        %v3011 = vmul.f32 %v344, %v2942
        %v3012 = vmul.f32 %v344, %v2946
        %v3013 = vmul.f32 %v344, %v2950
        %v3014 = vmul.f32 %v344, %v2954
        %v3015 = vmul.f32 %v349, %v2942
        %v3016 = vmul.f32 %v349, %v2946
        %v3017 = vmul.f32 %v349, %v2950
        %v3018 = vmul.f32 %v349, %v2954
        %v3019 = vmul.f32 %v354, %v2942
        %v3020 = vmul.f32 %v354, %v2946
        %v3021 = vmul.f32 %v354, %v2950
        %v3022 = vmul.f32 %v354, %v2954
        %v3023 = vmul.f32 %v359, %v2942
        %v3024 = vmul.f32 %v359, %v2946
        %v3025 = vmul.f32 %v359, %v2950
        %v3026 = vmul.f32 %v359, %v2954
        %v3027 = vmul.f32 %v364, %v2942
        %v3028 = vmul.f32 %v364, %v2946
        %v3029 = vmul.f32 %v364, %v2950
        %v3030 = vmul.f32 %v364, %v2954
        %v3031 = vmul.f32 %v369, %v2942
        %v3032 = vmul.f32 %v369, %v2946
        %v3033 = vmul.f32 %v369, %v2950
        %v3034 = vmul.f32 %v369, %v2954
        %v3035 = vmul.f32 %v374, %v2942
        %v3036 = vmul.f32 %v374, %v2946
        %v3037 = vmul.f32 %v374, %v2950
        %v3038 = vmul.f32 %v374, %v2954
        %v3039 = vmul.f32 %v379, %v2942
        %v3040 = vmul.f32 %v379, %v2946
        %v3041 = vmul.f32 %v379, %v2950
        %v3042 = vmul.f32 %v379, %v2954
        %v3043 = vmul.f32 %v384, %v2942
        %v3044 = vmul.f32 %v384, %v2946
        %v3045 = vmul.f32 %v384, %v2950
        %v3046 = vmul.f32 %v384, %v2954
        %v3047 = vmul.f32 %v389, %v2942
        %v3048 = vmul.f32 %v389, %v2946
        %v3049 = vmul.f32 %v389, %v2950
        %v3050 = vmul.f32 %v389, %v2954
        %v3051 = vmul.f32 %v394, %v2942
        %v3052 = vmul.f32 %v394, %v2946
        %v3053 = vmul.f32 %v394, %v2950
        %v3054 = vmul.f32 %v394, %v2954
        %v3055 = vmul.f32 %v399, %v2942
        %v3056 = vmul.f32 %v399, %v2946
        %v3057 = vmul.f32 %v399, %v2950
        %v3058 = vmul.f32 %v399, %v2954
        %v3059 = vmul.f32 %v404, %v2942
        %v3060 = vmul.f32 %v404, %v2946
        %v3061 = vmul.f32 %v404, %v2950
        %v3062 = vmul.f32 %v404, %v2954
        %v3063 = vmul.f32 %v409, %v2942
        %v3064 = vmul.f32 %v409, %v2946
        %v3065 = vmul.f32 %v409, %v2950
        %v3066 = vmul.f32 %v409, %v2954
        %v3067 = vmul.f32 %v414, %v2942
        %v3068 = vmul.f32 %v414, %v2946
        %v3069 = vmul.f32 %v414, %v2950
        %v3070 = vmul.f32 %v414, %v2954
        %v3071 = vmul.f32 %v419, %v2942
        %v3072 = vmul.f32 %v419, %v2946
        %v3073 = vmul.f32 %v419, %v2950
        %v3074 = vmul.f32 %v419, %v2954
        %v3075 = vmul.f32 %v424, %v2942
        %v3076 = vmul.f32 %v424, %v2946
        %v3077 = vmul.f32 %v424, %v2950
        %v3078 = vmul.f32 %v424, %v2954
        %v3079 = vmul.f32 %v429, %v2942
        %v3080 = vmul.f32 %v429, %v2946
        %v3081 = vmul.f32 %v429, %v2950
        %v3082 = vmul.f32 %v429, %v2954
        %v3083 = vmul.f32 %v434, %v2942
        %v3084 = vmul.f32 %v434, %v2946
        %v3085 = vmul.f32 %v434, %v2950
        %v3086 = vmul.f32 %v434, %v2954
        %v3087 = vld [vmem:[#allocation5 + $0x8] sm:$0xf]
        %v3089 = vlaneseq
        %v3090 = vshrl.u32 %v3089, 7
        %v3091 = vsub.s32 0, %v3090
        %v3092 = vrot.slane %v3087, %v3091
        %v3093 = vlaneseq
        %v3094 = vshrl.u32 %v3093, 7
        %v3095 = vsub.s32 1, %v3094
        %v3096 = vrot.slane %v3087, %v3095
        %v3097 = vlaneseq
        %v3098 = vshrl.u32 %v3097, 7
        %v3099 = vsub.s32 2, %v3098
        %v3100 = vrot.slane %v3087, %v3099
        %v3101 = vlaneseq
        %v3102 = vshrl.u32 %v3101, 7
        %v3103 = vsub.s32 3, %v3102
        %v3104 = vrot.slane %v3087, %v3103
        %v3109 = vadd.f32 %v2959, %v3092
        %v3110 = vadd.f32 %v2960, %v3096
        %v3111 = vadd.f32 %v2961, %v3100
        %v3112 = vadd.f32 %v2962, %v3104
        %v3113 = vadd.f32 %v2963, %v3092
        %v3114 = vadd.f32 %v2964, %v3096
        %v3115 = vadd.f32 %v2965, %v3100
        %v3116 = vadd.f32 %v2966, %v3104
        %v3117 = vadd.f32 %v2967, %v3092
        %v3118 = vadd.f32 %v2968, %v3096
        %v3119 = vadd.f32 %v2969, %v3100
        %v3120 = vadd.f32 %v2970, %v3104
        %v3121 = vadd.f32 %v2971, %v3092
        %v3122 = vadd.f32 %v2972, %v3096
        %v3123 = vadd.f32 %v2973, %v3100
        %v3124 = vadd.f32 %v2974, %v3104
        %v3125 = vadd.f32 %v2975, %v3092
        %v3126 = vadd.f32 %v2976, %v3096
        %v3127 = vadd.f32 %v2977, %v3100
        %v3128 = vadd.f32 %v2978, %v3104
        %v3129 = vadd.f32 %v2979, %v3092
        %v3130 = vadd.f32 %v2980, %v3096
        %v3131 = vadd.f32 %v2981, %v3100
        %v3132 = vadd.f32 %v2982, %v3104
        %v3133 = vadd.f32 %v2983, %v3092
        %v3134 = vadd.f32 %v2984, %v3096
        %v3135 = vadd.f32 %v2985, %v3100
        %v3136 = vadd.f32 %v2986, %v3104
        %v3137 = vadd.f32 %v2987, %v3092
        %v3138 = vadd.f32 %v2988, %v3096
        %v3139 = vadd.f32 %v2989, %v3100
        %v3140 = vadd.f32 %v2990, %v3104
        %v3141 = vadd.f32 %v2991, %v3092
        %v3142 = vadd.f32 %v2992, %v3096
        %v3143 = vadd.f32 %v2993, %v3100
        %v3144 = vadd.f32 %v2994, %v3104
        %v3145 = vadd.f32 %v2995, %v3092
        %v3146 = vadd.f32 %v2996, %v3096
        %v3147 = vadd.f32 %v2997, %v3100
        %v3148 = vadd.f32 %v2998, %v3104
        %v3149 = vadd.f32 %v2999, %v3092
        %v3150 = vadd.f32 %v3000, %v3096
        %v3151 = vadd.f32 %v3001, %v3100
        %v3152 = vadd.f32 %v3002, %v3104
        %v3153 = vadd.f32 %v3003, %v3092
        %v3154 = vadd.f32 %v3004, %v3096
        %v3155 = vadd.f32 %v3005, %v3100
        %v3156 = vadd.f32 %v3006, %v3104
        %v3157 = vadd.f32 %v3007, %v3092
        %v3158 = vadd.f32 %v3008, %v3096
        %v3159 = vadd.f32 %v3009, %v3100
        %v3160 = vadd.f32 %v3010, %v3104
        %v3161 = vadd.f32 %v3011, %v3092
        %v3162 = vadd.f32 %v3012, %v3096
        %v3163 = vadd.f32 %v3013, %v3100
        %v3164 = vadd.f32 %v3014, %v3104
        %v3165 = vadd.f32 %v3015, %v3092
        %v3166 = vadd.f32 %v3016, %v3096
        %v3167 = vadd.f32 %v3017, %v3100
        %v3168 = vadd.f32 %v3018, %v3104
        %v3169 = vadd.f32 %v3019, %v3092
        %v3170 = vadd.f32 %v3020, %v3096
        %v3171 = vadd.f32 %v3021, %v3100
        %v3172 = vadd.f32 %v3022, %v3104
        %v3173 = vadd.f32 %v3023, %v3092
        %v3174 = vadd.f32 %v3024, %v3096
        %v3175 = vadd.f32 %v3025, %v3100
        %v3176 = vadd.f32 %v3026, %v3104
        %v3177 = vadd.f32 %v3027, %v3092
        %v3178 = vadd.f32 %v3028, %v3096
        %v3179 = vadd.f32 %v3029, %v3100
        %v3180 = vadd.f32 %v3030, %v3104
        %v3181 = vadd.f32 %v3031, %v3092
        %v3182 = vadd.f32 %v3032, %v3096
        %v3183 = vadd.f32 %v3033, %v3100
        %v3184 = vadd.f32 %v3034, %v3104
        %v3185 = vadd.f32 %v3035, %v3092
        %v3186 = vadd.f32 %v3036, %v3096
        %v3187 = vadd.f32 %v3037, %v3100
        %v3188 = vadd.f32 %v3038, %v3104
        %v3189 = vadd.f32 %v3039, %v3092
        %v3190 = vadd.f32 %v3040, %v3096
        %v3191 = vadd.f32 %v3041, %v3100
        %v3192 = vadd.f32 %v3042, %v3104
        %v3193 = vadd.f32 %v3043, %v3092
        %v3194 = vadd.f32 %v3044, %v3096
        %v3195 = vadd.f32 %v3045, %v3100
        %v3196 = vadd.f32 %v3046, %v3104
        %v3197 = vadd.f32 %v3047, %v3092
        %v3198 = vadd.f32 %v3048, %v3096
        %v3199 = vadd.f32 %v3049, %v3100
        %v3200 = vadd.f32 %v3050, %v3104
        %v3201 = vadd.f32 %v3051, %v3092
        %v3202 = vadd.f32 %v3052, %v3096
        %v3203 = vadd.f32 %v3053, %v3100
        %v3204 = vadd.f32 %v3054, %v3104
        %v3205 = vadd.f32 %v3055, %v3092
        %v3206 = vadd.f32 %v3056, %v3096
        %v3207 = vadd.f32 %v3057, %v3100
        %v3208 = vadd.f32 %v3058, %v3104
        %v3209 = vadd.f32 %v3059, %v3092
        %v3210 = vadd.f32 %v3060, %v3096
        %v3211 = vadd.f32 %v3061, %v3100
        %v3212 = vadd.f32 %v3062, %v3104
        %v3213 = vadd.f32 %v3063, %v3092
        %v3214 = vadd.f32 %v3064, %v3096
        %v3215 = vadd.f32 %v3065, %v3100
        %v3216 = vadd.f32 %v3066, %v3104
        %v3217 = vadd.f32 %v3067, %v3092
        %v3218 = vadd.f32 %v3068, %v3096
        %v3219 = vadd.f32 %v3069, %v3100
        %v3220 = vadd.f32 %v3070, %v3104
        %v3221 = vadd.f32 %v3071, %v3092
        %v3222 = vadd.f32 %v3072, %v3096
        %v3223 = vadd.f32 %v3073, %v3100
        %v3224 = vadd.f32 %v3074, %v3104
        %v3225 = vadd.f32 %v3075, %v3092
        %v3226 = vadd.f32 %v3076, %v3096
        %v3227 = vadd.f32 %v3077, %v3100
        %v3228 = vadd.f32 %v3078, %v3104
        %v3229 = vadd.f32 %v3079, %v3092
        %v3230 = vadd.f32 %v3080, %v3096
        %v3231 = vadd.f32 %v3081, %v3100
        %v3232 = vadd.f32 %v3082, %v3104
        %v3233 = vadd.f32 %v3083, %v3092
        %v3234 = vadd.f32 %v3084, %v3096
        %v3235 = vadd.f32 %v3085, %v3100
        %v3236 = vadd.f32 %v3086, %v3104
        %s3237 = scalar_lea.vmem [#allocation3], 33
        %v3238 = vld [vmem:[%s3237] ss:$4 sm:$0xf]
        %v3240 = vlaneseq
        %v3241 = vshrl.u32 %v3240, 7
        %v3242 = vsub.s32 0, %v3241
        %v3243 = vrot.slane %v3238, %v3242
        %v3244 = vlaneseq
        %v3245 = vshrl.u32 %v3244, 7
        %v3246 = vsub.s32 1, %v3245
        %v3247 = vrot.slane %v3238, %v3246
        %v3248 = vlaneseq
        %v3249 = vshrl.u32 %v3248, 7
        %v3250 = vsub.s32 2, %v3249
        %v3251 = vrot.slane %v3238, %v3250
        %v3252 = vlaneseq
        %v3253 = vshrl.u32 %v3252, 7
        %v3254 = vsub.s32 3, %v3253
        %v3255 = vrot.slane %v3238, %v3254
        %v3260 = vmul.f32 %v739, %v3243
        %v3261 = vmul.f32 %v739, %v3247
        %v3262 = vmul.f32 %v739, %v3251
        %v3263 = vmul.f32 %v739, %v3255
        %v3264 = vmul.f32 %v743, %v3243
        %v3265 = vmul.f32 %v743, %v3247
        %v3266 = vmul.f32 %v743, %v3251
        %v3267 = vmul.f32 %v743, %v3255
        %v3268 = vmul.f32 %v747, %v3243
        %v3269 = vmul.f32 %v747, %v3247
        %v3270 = vmul.f32 %v747, %v3251
        %v3271 = vmul.f32 %v747, %v3255
        %v3272 = vmul.f32 %v751, %v3243
        %v3273 = vmul.f32 %v751, %v3247
        %v3274 = vmul.f32 %v751, %v3251
        %v3275 = vmul.f32 %v751, %v3255
        %v3276 = vmul.f32 %v755, %v3243
        %v3277 = vmul.f32 %v755, %v3247
        %v3278 = vmul.f32 %v755, %v3251
        %v3279 = vmul.f32 %v755, %v3255
        %v3280 = vmul.f32 %v759, %v3243
        %v3281 = vmul.f32 %v759, %v3247
        %v3282 = vmul.f32 %v759, %v3251
        %v3283 = vmul.f32 %v759, %v3255
        %v3284 = vmul.f32 %v763, %v3243
        %v3285 = vmul.f32 %v763, %v3247
        %v3286 = vmul.f32 %v763, %v3251
        %v3287 = vmul.f32 %v763, %v3255
        %v3288 = vmul.f32 %v767, %v3243
        %v3289 = vmul.f32 %v767, %v3247
        %v3290 = vmul.f32 %v767, %v3251
        %v3291 = vmul.f32 %v767, %v3255
        %v3292 = vmul.f32 %v771, %v3243
        %v3293 = vmul.f32 %v771, %v3247
        %v3294 = vmul.f32 %v771, %v3251
        %v3295 = vmul.f32 %v771, %v3255
        %v3296 = vmul.f32 %v775, %v3243
        %v3297 = vmul.f32 %v775, %v3247
        %v3298 = vmul.f32 %v775, %v3251
        %v3299 = vmul.f32 %v775, %v3255
        %v3300 = vmul.f32 %v779, %v3243
        %v3301 = vmul.f32 %v779, %v3247
        %v3302 = vmul.f32 %v779, %v3251
        %v3303 = vmul.f32 %v779, %v3255
        %v3304 = vmul.f32 %v783, %v3243
        %v3305 = vmul.f32 %v783, %v3247
        %v3306 = vmul.f32 %v783, %v3251
        %v3307 = vmul.f32 %v783, %v3255
        %v3308 = vmul.f32 %v787, %v3243
        %v3309 = vmul.f32 %v787, %v3247
        %v3310 = vmul.f32 %v787, %v3251
        %v3311 = vmul.f32 %v787, %v3255
        %v3312 = vmul.f32 %v791, %v3243
        %v3313 = vmul.f32 %v791, %v3247
        %v3314 = vmul.f32 %v791, %v3251
        %v3315 = vmul.f32 %v791, %v3255
        %v3316 = vmul.f32 %v795, %v3243
        %v3317 = vmul.f32 %v795, %v3247
        %v3318 = vmul.f32 %v795, %v3251
        %v3319 = vmul.f32 %v795, %v3255
        %v3320 = vmul.f32 %v799, %v3243
        %v3321 = vmul.f32 %v799, %v3247
        %v3322 = vmul.f32 %v799, %v3251
        %v3323 = vmul.f32 %v799, %v3255
        %v3324 = vmul.f32 %v803, %v3243
        %v3325 = vmul.f32 %v803, %v3247
        %v3326 = vmul.f32 %v803, %v3251
        %v3327 = vmul.f32 %v803, %v3255
        %v3328 = vmul.f32 %v807, %v3243
        %v3329 = vmul.f32 %v807, %v3247
        %v3330 = vmul.f32 %v807, %v3251
        %v3331 = vmul.f32 %v807, %v3255
        %v3332 = vmul.f32 %v811, %v3243
        %v3333 = vmul.f32 %v811, %v3247
        %v3334 = vmul.f32 %v811, %v3251
        %v3335 = vmul.f32 %v811, %v3255
        %v3336 = vmul.f32 %v815, %v3243
        %v3337 = vmul.f32 %v815, %v3247
        %v3338 = vmul.f32 %v815, %v3251
        %v3339 = vmul.f32 %v815, %v3255
        %v3340 = vmul.f32 %v819, %v3243
        %v3341 = vmul.f32 %v819, %v3247
        %v3342 = vmul.f32 %v819, %v3251
        %v3343 = vmul.f32 %v819, %v3255
        %v3344 = vmul.f32 %v823, %v3243
        %v3345 = vmul.f32 %v823, %v3247
        %v3346 = vmul.f32 %v823, %v3251
        %v3347 = vmul.f32 %v823, %v3255
        %v3348 = vmul.f32 %v827, %v3243
        %v3349 = vmul.f32 %v827, %v3247
        %v3350 = vmul.f32 %v827, %v3251
        %v3351 = vmul.f32 %v827, %v3255
        %v3352 = vmul.f32 %v831, %v3243
        %v3353 = vmul.f32 %v831, %v3247
        %v3354 = vmul.f32 %v831, %v3251
        %v3355 = vmul.f32 %v831, %v3255
        %v3356 = vmul.f32 %v835, %v3243
        %v3357 = vmul.f32 %v835, %v3247
        %v3358 = vmul.f32 %v835, %v3251
        %v3359 = vmul.f32 %v835, %v3255
        %v3360 = vmul.f32 %v839, %v3243
        %v3361 = vmul.f32 %v839, %v3247
        %v3362 = vmul.f32 %v839, %v3251
        %v3363 = vmul.f32 %v839, %v3255
        %v3364 = vmul.f32 %v843, %v3243
        %v3365 = vmul.f32 %v843, %v3247
        %v3366 = vmul.f32 %v843, %v3251
        %v3367 = vmul.f32 %v843, %v3255
        %v3368 = vmul.f32 %v847, %v3243
        %v3369 = vmul.f32 %v847, %v3247
        %v3370 = vmul.f32 %v847, %v3251
        %v3371 = vmul.f32 %v847, %v3255
        %v3372 = vmul.f32 %v851, %v3243
        %v3373 = vmul.f32 %v851, %v3247
        %v3374 = vmul.f32 %v851, %v3251
        %v3375 = vmul.f32 %v851, %v3255
        %v3376 = vmul.f32 %v855, %v3243
        %v3377 = vmul.f32 %v855, %v3247
        %v3378 = vmul.f32 %v855, %v3251
        %v3379 = vmul.f32 %v855, %v3255
        %v3380 = vmul.f32 %v859, %v3243
        %v3381 = vmul.f32 %v859, %v3247
        %v3382 = vmul.f32 %v859, %v3251
        %v3383 = vmul.f32 %v859, %v3255
        %v3384 = vmul.f32 %v863, %v3243
        %v3385 = vmul.f32 %v863, %v3247
        %v3386 = vmul.f32 %v863, %v3251
        %v3387 = vmul.f32 %v863, %v3255
        %v3388 = vadd.f32 %v3109, %v3260
        %v3389 = vadd.f32 %v3110, %v3261
        %v3390 = vadd.f32 %v3111, %v3262
        %v3391 = vadd.f32 %v3112, %v3263
        %v3392 = vadd.f32 %v3113, %v3264
        %v3393 = vadd.f32 %v3114, %v3265
        %v3394 = vadd.f32 %v3115, %v3266
        %v3395 = vadd.f32 %v3116, %v3267
        %v3396 = vadd.f32 %v3117, %v3268
        %v3397 = vadd.f32 %v3118, %v3269
        %v3398 = vadd.f32 %v3119, %v3270
        %v3399 = vadd.f32 %v3120, %v3271
        %v3400 = vadd.f32 %v3121, %v3272
        %v3401 = vadd.f32 %v3122, %v3273
        %v3402 = vadd.f32 %v3123, %v3274
        %v3403 = vadd.f32 %v3124, %v3275
        %v3404 = vadd.f32 %v3125, %v3276
        %v3405 = vadd.f32 %v3126, %v3277
        %v3406 = vadd.f32 %v3127, %v3278
        %v3407 = vadd.f32 %v3128, %v3279
        %v3408 = vadd.f32 %v3129, %v3280
        %v3409 = vadd.f32 %v3130, %v3281
        %v3410 = vadd.f32 %v3131, %v3282
        %v3411 = vadd.f32 %v3132, %v3283
        %v3412 = vadd.f32 %v3133, %v3284
        %v3413 = vadd.f32 %v3134, %v3285
        %v3414 = vadd.f32 %v3135, %v3286
        %v3415 = vadd.f32 %v3136, %v3287
        %v3416 = vadd.f32 %v3137, %v3288
        %v3417 = vadd.f32 %v3138, %v3289
        %v3418 = vadd.f32 %v3139, %v3290
        %v3419 = vadd.f32 %v3140, %v3291
        %v3420 = vadd.f32 %v3141, %v3292
        %v3421 = vadd.f32 %v3142, %v3293
        %v3422 = vadd.f32 %v3143, %v3294
        %v3423 = vadd.f32 %v3144, %v3295
        %v3424 = vadd.f32 %v3145, %v3296
        %v3425 = vadd.f32 %v3146, %v3297
        %v3426 = vadd.f32 %v3147, %v3298
        %v3427 = vadd.f32 %v3148, %v3299
        %v3428 = vadd.f32 %v3149, %v3300
        %v3429 = vadd.f32 %v3150, %v3301
        %v3430 = vadd.f32 %v3151, %v3302
        %v3431 = vadd.f32 %v3152, %v3303
        %v3432 = vadd.f32 %v3153, %v3304
        %v3433 = vadd.f32 %v3154, %v3305
        %v3434 = vadd.f32 %v3155, %v3306
        %v3435 = vadd.f32 %v3156, %v3307
        %v3436 = vadd.f32 %v3157, %v3308
        %v3437 = vadd.f32 %v3158, %v3309
        %v3438 = vadd.f32 %v3159, %v3310
        %v3439 = vadd.f32 %v3160, %v3311
        %v3440 = vadd.f32 %v3161, %v3312
        %v3441 = vadd.f32 %v3162, %v3313
        %v3442 = vadd.f32 %v3163, %v3314
        %v3443 = vadd.f32 %v3164, %v3315
        %v3444 = vadd.f32 %v3165, %v3316
        %v3445 = vadd.f32 %v3166, %v3317
        %v3446 = vadd.f32 %v3167, %v3318
        %v3447 = vadd.f32 %v3168, %v3319
        %v3448 = vadd.f32 %v3169, %v3320
        %v3449 = vadd.f32 %v3170, %v3321
        %v3450 = vadd.f32 %v3171, %v3322
        %v3451 = vadd.f32 %v3172, %v3323
        %v3452 = vadd.f32 %v3173, %v3324
        %v3453 = vadd.f32 %v3174, %v3325
        %v3454 = vadd.f32 %v3175, %v3326
        %v3455 = vadd.f32 %v3176, %v3327
        %v3456 = vadd.f32 %v3177, %v3328
        %v3457 = vadd.f32 %v3178, %v3329
        %v3458 = vadd.f32 %v3179, %v3330
        %v3459 = vadd.f32 %v3180, %v3331
        %v3460 = vadd.f32 %v3181, %v3332
        %v3461 = vadd.f32 %v3182, %v3333
        %v3462 = vadd.f32 %v3183, %v3334
        %v3463 = vadd.f32 %v3184, %v3335
        %v3464 = vadd.f32 %v3185, %v3336
        %v3465 = vadd.f32 %v3186, %v3337
        %v3466 = vadd.f32 %v3187, %v3338
        %v3467 = vadd.f32 %v3188, %v3339
        %v3468 = vadd.f32 %v3189, %v3340
        %v3469 = vadd.f32 %v3190, %v3341
        %v3470 = vadd.f32 %v3191, %v3342
        %v3471 = vadd.f32 %v3192, %v3343
        %v3472 = vadd.f32 %v3193, %v3344
        %v3473 = vadd.f32 %v3194, %v3345
        %v3474 = vadd.f32 %v3195, %v3346
        %v3475 = vadd.f32 %v3196, %v3347
        %v3476 = vadd.f32 %v3197, %v3348
        %v3477 = vadd.f32 %v3198, %v3349
        %v3478 = vadd.f32 %v3199, %v3350
        %v3479 = vadd.f32 %v3200, %v3351
        %v3480 = vadd.f32 %v3201, %v3352
        %v3481 = vadd.f32 %v3202, %v3353
        %v3482 = vadd.f32 %v3203, %v3354
        %v3483 = vadd.f32 %v3204, %v3355
        %v3484 = vadd.f32 %v3205, %v3356
        %v3485 = vadd.f32 %v3206, %v3357
        %v3486 = vadd.f32 %v3207, %v3358
        %v3487 = vadd.f32 %v3208, %v3359
        %v3488 = vadd.f32 %v3209, %v3360
        %v3489 = vadd.f32 %v3210, %v3361
        %v3490 = vadd.f32 %v3211, %v3362
        %v3491 = vadd.f32 %v3212, %v3363
        %v3492 = vadd.f32 %v3213, %v3364
        %v3493 = vadd.f32 %v3214, %v3365
        %v3494 = vadd.f32 %v3215, %v3366
        %v3495 = vadd.f32 %v3216, %v3367
        %v3496 = vadd.f32 %v3217, %v3368
        %v3497 = vadd.f32 %v3218, %v3369
        %v3498 = vadd.f32 %v3219, %v3370
        %v3499 = vadd.f32 %v3220, %v3371
        %v3500 = vadd.f32 %v3221, %v3372
        %v3501 = vadd.f32 %v3222, %v3373
        %v3502 = vadd.f32 %v3223, %v3374
        %v3503 = vadd.f32 %v3224, %v3375
        %v3504 = vadd.f32 %v3225, %v3376
        %v3505 = vadd.f32 %v3226, %v3377
        %v3506 = vadd.f32 %v3227, %v3378
        %v3507 = vadd.f32 %v3228, %v3379
        %v3508 = vadd.f32 %v3229, %v3380
        %v3509 = vadd.f32 %v3230, %v3381
        %v3510 = vadd.f32 %v3231, %v3382
        %v3511 = vadd.f32 %v3232, %v3383
        %v3512 = vadd.f32 %v3233, %v3384
        %v3513 = vadd.f32 %v3234, %v3385
        %v3514 = vadd.f32 %v3235, %v3386
        %v3515 = vadd.f32 %v3236, %v3387
        %s3516 = scalar_lea.vmem [#allocation3], 34
        %v3517 = vld [vmem:[%s3516] ss:$4 sm:$0xf]
        %v3519 = vlaneseq
        %v3520 = vshrl.u32 %v3519, 7
        %v3521 = vsub.s32 0, %v3520
        %v3522 = vrot.slane %v3517, %v3521
        %v3523 = vlaneseq
        %v3524 = vshrl.u32 %v3523, 7
        %v3525 = vsub.s32 1, %v3524
        %v3526 = vrot.slane %v3517, %v3525
        %v3527 = vlaneseq
        %v3528 = vshrl.u32 %v3527, 7
        %v3529 = vsub.s32 2, %v3528
        %v3530 = vrot.slane %v3517, %v3529
        %v3531 = vlaneseq
        %v3532 = vshrl.u32 %v3531, 7
        %v3533 = vsub.s32 3, %v3532
        %v3534 = vrot.slane %v3517, %v3533
        %v3539 = vmul.f32 %v1146, %v3522
        %v3540 = vmul.f32 %v1146, %v3526
        %v3541 = vmul.f32 %v1146, %v3530
        %v3542 = vmul.f32 %v1146, %v3534
        %v3543 = vmul.f32 %v1150, %v3522
        %v3544 = vmul.f32 %v1150, %v3526
        %v3545 = vmul.f32 %v1150, %v3530
        %v3546 = vmul.f32 %v1150, %v3534
        %v3547 = vmul.f32 %v1154, %v3522
        %v3548 = vmul.f32 %v1154, %v3526
        %v3549 = vmul.f32 %v1154, %v3530
        %v3550 = vmul.f32 %v1154, %v3534
        %v3551 = vmul.f32 %v1158, %v3522
        %v3552 = vmul.f32 %v1158, %v3526
        %v3553 = vmul.f32 %v1158, %v3530
        %v3554 = vmul.f32 %v1158, %v3534
        %v3555 = vmul.f32 %v1162, %v3522
        %v3556 = vmul.f32 %v1162, %v3526
        %v3557 = vmul.f32 %v1162, %v3530
        %v3558 = vmul.f32 %v1162, %v3534
        %v3559 = vmul.f32 %v1166, %v3522
        %v3560 = vmul.f32 %v1166, %v3526
        %v3561 = vmul.f32 %v1166, %v3530
        %v3562 = vmul.f32 %v1166, %v3534
        %v3563 = vmul.f32 %v1170, %v3522
        %v3564 = vmul.f32 %v1170, %v3526
        %v3565 = vmul.f32 %v1170, %v3530
        %v3566 = vmul.f32 %v1170, %v3534
        %v3567 = vmul.f32 %v1174, %v3522
        %v3568 = vmul.f32 %v1174, %v3526
        %v3569 = vmul.f32 %v1174, %v3530
        %v3570 = vmul.f32 %v1174, %v3534
        %v3571 = vmul.f32 %v1178, %v3522
        %v3572 = vmul.f32 %v1178, %v3526
        %v3573 = vmul.f32 %v1178, %v3530
        %v3574 = vmul.f32 %v1178, %v3534
        %v3575 = vmul.f32 %v1182, %v3522
        %v3576 = vmul.f32 %v1182, %v3526
        %v3577 = vmul.f32 %v1182, %v3530
        %v3578 = vmul.f32 %v1182, %v3534
        %v3579 = vmul.f32 %v1186, %v3522
        %v3580 = vmul.f32 %v1186, %v3526
        %v3581 = vmul.f32 %v1186, %v3530
        %v3582 = vmul.f32 %v1186, %v3534
        %v3583 = vmul.f32 %v1190, %v3522
        %v3584 = vmul.f32 %v1190, %v3526
        %v3585 = vmul.f32 %v1190, %v3530
        %v3586 = vmul.f32 %v1190, %v3534
        %v3587 = vmul.f32 %v1194, %v3522
        %v3588 = vmul.f32 %v1194, %v3526
        %v3589 = vmul.f32 %v1194, %v3530
        %v3590 = vmul.f32 %v1194, %v3534
        %v3591 = vmul.f32 %v1198, %v3522
        %v3592 = vmul.f32 %v1198, %v3526
        %v3593 = vmul.f32 %v1198, %v3530
        %v3594 = vmul.f32 %v1198, %v3534
        %v3595 = vmul.f32 %v1202, %v3522
        %v3596 = vmul.f32 %v1202, %v3526
        %v3597 = vmul.f32 %v1202, %v3530
        %v3598 = vmul.f32 %v1202, %v3534
        %v3599 = vmul.f32 %v1206, %v3522
        %v3600 = vmul.f32 %v1206, %v3526
        %v3601 = vmul.f32 %v1206, %v3530
        %v3602 = vmul.f32 %v1206, %v3534
        %v3603 = vmul.f32 %v1210, %v3522
        %v3604 = vmul.f32 %v1210, %v3526
        %v3605 = vmul.f32 %v1210, %v3530
        %v3606 = vmul.f32 %v1210, %v3534
        %v3607 = vmul.f32 %v1214, %v3522
        %v3608 = vmul.f32 %v1214, %v3526
        %v3609 = vmul.f32 %v1214, %v3530
        %v3610 = vmul.f32 %v1214, %v3534
        %v3611 = vmul.f32 %v1218, %v3522
        %v3612 = vmul.f32 %v1218, %v3526
        %v3613 = vmul.f32 %v1218, %v3530
        %v3614 = vmul.f32 %v1218, %v3534
        %v3615 = vmul.f32 %v1222, %v3522
        %v3616 = vmul.f32 %v1222, %v3526
        %v3617 = vmul.f32 %v1222, %v3530
        %v3618 = vmul.f32 %v1222, %v3534
        %v3619 = vmul.f32 %v1226, %v3522
        %v3620 = vmul.f32 %v1226, %v3526
        %v3621 = vmul.f32 %v1226, %v3530
        %v3622 = vmul.f32 %v1226, %v3534
        %v3623 = vmul.f32 %v1230, %v3522
        %v3624 = vmul.f32 %v1230, %v3526
        %v3625 = vmul.f32 %v1230, %v3530
        %v3626 = vmul.f32 %v1230, %v3534
        %v3627 = vmul.f32 %v1234, %v3522
        %v3628 = vmul.f32 %v1234, %v3526
        %v3629 = vmul.f32 %v1234, %v3530
        %v3630 = vmul.f32 %v1234, %v3534
        %v3631 = vmul.f32 %v1238, %v3522
        %v3632 = vmul.f32 %v1238, %v3526
        %v3633 = vmul.f32 %v1238, %v3530
        %v3634 = vmul.f32 %v1238, %v3534
        %v3635 = vmul.f32 %v1242, %v3522
        %v3636 = vmul.f32 %v1242, %v3526
        %v3637 = vmul.f32 %v1242, %v3530
        %v3638 = vmul.f32 %v1242, %v3534
        %v3639 = vmul.f32 %v1246, %v3522
        %v3640 = vmul.f32 %v1246, %v3526
        %v3641 = vmul.f32 %v1246, %v3530
        %v3642 = vmul.f32 %v1246, %v3534
        %v3643 = vmul.f32 %v1250, %v3522
        %v3644 = vmul.f32 %v1250, %v3526
        %v3645 = vmul.f32 %v1250, %v3530
        %v3646 = vmul.f32 %v1250, %v3534
        %v3647 = vmul.f32 %v1254, %v3522
        %v3648 = vmul.f32 %v1254, %v3526
        %v3649 = vmul.f32 %v1254, %v3530
        %v3650 = vmul.f32 %v1254, %v3534
        %v3651 = vmul.f32 %v1258, %v3522
        %v3652 = vmul.f32 %v1258, %v3526
        %v3653 = vmul.f32 %v1258, %v3530
        %v3654 = vmul.f32 %v1258, %v3534
        %v3655 = vmul.f32 %v1262, %v3522
        %v3656 = vmul.f32 %v1262, %v3526
        %v3657 = vmul.f32 %v1262, %v3530
        %v3658 = vmul.f32 %v1262, %v3534
        %v3659 = vmul.f32 %v1266, %v3522
        %v3660 = vmul.f32 %v1266, %v3526
        %v3661 = vmul.f32 %v1266, %v3530
        %v3662 = vmul.f32 %v1266, %v3534
        %v3663 = vmul.f32 %v1270, %v3522
        %v3664 = vmul.f32 %v1270, %v3526
        %v3665 = vmul.f32 %v1270, %v3530
        %v3666 = vmul.f32 %v1270, %v3534
        %v3667 = vadd.f32 %v3388, %v3539
        %v3668 = vadd.f32 %v3389, %v3540
        %v3669 = vadd.f32 %v3390, %v3541
        %v3670 = vadd.f32 %v3391, %v3542
        %v3671 = vadd.f32 %v3392, %v3543
        %v3672 = vadd.f32 %v3393, %v3544
        %v3673 = vadd.f32 %v3394, %v3545
        %v3674 = vadd.f32 %v3395, %v3546
        %v3675 = vadd.f32 %v3396, %v3547
        %v3676 = vadd.f32 %v3397, %v3548
        %v3677 = vadd.f32 %v3398, %v3549
        %v3678 = vadd.f32 %v3399, %v3550
        %v3679 = vadd.f32 %v3400, %v3551
        %v3680 = vadd.f32 %v3401, %v3552
        %v3681 = vadd.f32 %v3402, %v3553
        %v3682 = vadd.f32 %v3403, %v3554
        %v3683 = vadd.f32 %v3404, %v3555
        %v3684 = vadd.f32 %v3405, %v3556
        %v3685 = vadd.f32 %v3406, %v3557
        %v3686 = vadd.f32 %v3407, %v3558
        %v3687 = vadd.f32 %v3408, %v3559
        %v3688 = vadd.f32 %v3409, %v3560
        %v3689 = vadd.f32 %v3410, %v3561
        %v3690 = vadd.f32 %v3411, %v3562
        %v3691 = vadd.f32 %v3412, %v3563
        %v3692 = vadd.f32 %v3413, %v3564
        %v3693 = vadd.f32 %v3414, %v3565
        %v3694 = vadd.f32 %v3415, %v3566
        %v3695 = vadd.f32 %v3416, %v3567
        %v3696 = vadd.f32 %v3417, %v3568
        %v3697 = vadd.f32 %v3418, %v3569
        %v3698 = vadd.f32 %v3419, %v3570
        %v3699 = vadd.f32 %v3420, %v3571
        %v3700 = vadd.f32 %v3421, %v3572
        %v3701 = vadd.f32 %v3422, %v3573
        %v3702 = vadd.f32 %v3423, %v3574
        %v3703 = vadd.f32 %v3424, %v3575
        %v3704 = vadd.f32 %v3425, %v3576
        %v3705 = vadd.f32 %v3426, %v3577
        %v3706 = vadd.f32 %v3427, %v3578
        %v3707 = vadd.f32 %v3428, %v3579
        %v3708 = vadd.f32 %v3429, %v3580
        %v3709 = vadd.f32 %v3430, %v3581
        %v3710 = vadd.f32 %v3431, %v3582
        %v3711 = vadd.f32 %v3432, %v3583
        %v3712 = vadd.f32 %v3433, %v3584
        %v3713 = vadd.f32 %v3434, %v3585
        %v3714 = vadd.f32 %v3435, %v3586
        %v3715 = vadd.f32 %v3436, %v3587
        %v3716 = vadd.f32 %v3437, %v3588
        %v3717 = vadd.f32 %v3438, %v3589
        %v3718 = vadd.f32 %v3439, %v3590
        %v3719 = vadd.f32 %v3440, %v3591
        %v3720 = vadd.f32 %v3441, %v3592
        %v3721 = vadd.f32 %v3442, %v3593
        %v3722 = vadd.f32 %v3443, %v3594
        %v3723 = vadd.f32 %v3444, %v3595
        %v3724 = vadd.f32 %v3445, %v3596
        %v3725 = vadd.f32 %v3446, %v3597
        %v3726 = vadd.f32 %v3447, %v3598
        %v3727 = vadd.f32 %v3448, %v3599
        %v3728 = vadd.f32 %v3449, %v3600
        %v3729 = vadd.f32 %v3450, %v3601
        %v3730 = vadd.f32 %v3451, %v3602
        %v3731 = vadd.f32 %v3452, %v3603
        %v3732 = vadd.f32 %v3453, %v3604
        %v3733 = vadd.f32 %v3454, %v3605
        %v3734 = vadd.f32 %v3455, %v3606
        %v3735 = vadd.f32 %v3456, %v3607
        %v3736 = vadd.f32 %v3457, %v3608
        %v3737 = vadd.f32 %v3458, %v3609
        %v3738 = vadd.f32 %v3459, %v3610
        %v3739 = vadd.f32 %v3460, %v3611
        %v3740 = vadd.f32 %v3461, %v3612
        %v3741 = vadd.f32 %v3462, %v3613
        %v3742 = vadd.f32 %v3463, %v3614
        %v3743 = vadd.f32 %v3464, %v3615
        %v3744 = vadd.f32 %v3465, %v3616
        %v3745 = vadd.f32 %v3466, %v3617
        %v3746 = vadd.f32 %v3467, %v3618
        %v3747 = vadd.f32 %v3468, %v3619
        %v3748 = vadd.f32 %v3469, %v3620
        %v3749 = vadd.f32 %v3470, %v3621
        %v3750 = vadd.f32 %v3471, %v3622
        %v3751 = vadd.f32 %v3472, %v3623
        %v3752 = vadd.f32 %v3473, %v3624
        %v3753 = vadd.f32 %v3474, %v3625
        %v3754 = vadd.f32 %v3475, %v3626
        %v3755 = vadd.f32 %v3476, %v3627
        %v3756 = vadd.f32 %v3477, %v3628
        %v3757 = vadd.f32 %v3478, %v3629
        %v3758 = vadd.f32 %v3479, %v3630
        %v3759 = vadd.f32 %v3480, %v3631
        %v3760 = vadd.f32 %v3481, %v3632
        %v3761 = vadd.f32 %v3482, %v3633
        %v3762 = vadd.f32 %v3483, %v3634
        %v3763 = vadd.f32 %v3484, %v3635
        %v3764 = vadd.f32 %v3485, %v3636
        %v3765 = vadd.f32 %v3486, %v3637
        %v3766 = vadd.f32 %v3487, %v3638
        %v3767 = vadd.f32 %v3488, %v3639
        %v3768 = vadd.f32 %v3489, %v3640
        %v3769 = vadd.f32 %v3490, %v3641
        %v3770 = vadd.f32 %v3491, %v3642
        %v3771 = vadd.f32 %v3492, %v3643
        %v3772 = vadd.f32 %v3493, %v3644
        %v3773 = vadd.f32 %v3494, %v3645
        %v3774 = vadd.f32 %v3495, %v3646
        %v3775 = vadd.f32 %v3496, %v3647
        %v3776 = vadd.f32 %v3497, %v3648
        %v3777 = vadd.f32 %v3498, %v3649
        %v3778 = vadd.f32 %v3499, %v3650
        %v3779 = vadd.f32 %v3500, %v3651
        %v3780 = vadd.f32 %v3501, %v3652
        %v3781 = vadd.f32 %v3502, %v3653
        %v3782 = vadd.f32 %v3503, %v3654
        %v3783 = vadd.f32 %v3504, %v3655
        %v3784 = vadd.f32 %v3505, %v3656
        %v3785 = vadd.f32 %v3506, %v3657
        %v3786 = vadd.f32 %v3507, %v3658
        %v3787 = vadd.f32 %v3508, %v3659
        %v3788 = vadd.f32 %v3509, %v3660
        %v3789 = vadd.f32 %v3510, %v3661
        %v3790 = vadd.f32 %v3511, %v3662
        %v3791 = vadd.f32 %v3512, %v3663
        %v3792 = vadd.f32 %v3513, %v3664
        %v3793 = vadd.f32 %v3514, %v3665
        %v3794 = vadd.f32 %v3515, %v3666
        %v3795 = vmax.f32 %v3667, 0.0
        %v3796 = vmax.f32 %v3668, 0.0
        %v3797 = vmax.f32 %v3669, 0.0
        %v3798 = vmax.f32 %v3670, 0.0
        %v3799 = vmax.f32 %v3671, 0.0
        %v3800 = vmax.f32 %v3672, 0.0
        %v3801 = vmax.f32 %v3673, 0.0
        %v3802 = vmax.f32 %v3674, 0.0
        %v3803 = vmax.f32 %v3675, 0.0
        %v3804 = vmax.f32 %v3676, 0.0
        %v3805 = vmax.f32 %v3677, 0.0
        %v3806 = vmax.f32 %v3678, 0.0
        %v3807 = vmax.f32 %v3679, 0.0
        %v3808 = vmax.f32 %v3680, 0.0
        %v3809 = vmax.f32 %v3681, 0.0
        %v3810 = vmax.f32 %v3682, 0.0
        %v3811 = vmax.f32 %v3683, 0.0
        %v3812 = vmax.f32 %v3684, 0.0
        %v3813 = vmax.f32 %v3685, 0.0
        %v3814 = vmax.f32 %v3686, 0.0
        %v3815 = vmax.f32 %v3687, 0.0
        %v3816 = vmax.f32 %v3688, 0.0
        %v3817 = vmax.f32 %v3689, 0.0
        %v3818 = vmax.f32 %v3690, 0.0
        %v3819 = vmax.f32 %v3691, 0.0
        %v3820 = vmax.f32 %v3692, 0.0
        %v3821 = vmax.f32 %v3693, 0.0
        %v3822 = vmax.f32 %v3694, 0.0
        %v3823 = vmax.f32 %v3695, 0.0
        %v3824 = vmax.f32 %v3696, 0.0
        %v3825 = vmax.f32 %v3697, 0.0
        %v3826 = vmax.f32 %v3698, 0.0
        %v3827 = vmax.f32 %v3699, 0.0
        %v3828 = vmax.f32 %v3700, 0.0
        %v3829 = vmax.f32 %v3701, 0.0
        %v3830 = vmax.f32 %v3702, 0.0
        %v3831 = vmax.f32 %v3703, 0.0
        %v3832 = vmax.f32 %v3704, 0.0
        %v3833 = vmax.f32 %v3705, 0.0
        %v3834 = vmax.f32 %v3706, 0.0
        %v3835 = vmax.f32 %v3707, 0.0
        %v3836 = vmax.f32 %v3708, 0.0
        %v3837 = vmax.f32 %v3709, 0.0
        %v3838 = vmax.f32 %v3710, 0.0
        %v3839 = vmax.f32 %v3711, 0.0
        %v3840 = vmax.f32 %v3712, 0.0
        %v3841 = vmax.f32 %v3713, 0.0
        %v3842 = vmax.f32 %v3714, 0.0
        %v3843 = vmax.f32 %v3715, 0.0
        %v3844 = vmax.f32 %v3716, 0.0
        %v3845 = vmax.f32 %v3717, 0.0
        %v3846 = vmax.f32 %v3718, 0.0
        %v3847 = vmax.f32 %v3719, 0.0
        %v3848 = vmax.f32 %v3720, 0.0
        %v3849 = vmax.f32 %v3721, 0.0
        %v3850 = vmax.f32 %v3722, 0.0
        %v3851 = vmax.f32 %v3723, 0.0
        %v3852 = vmax.f32 %v3724, 0.0
        %v3853 = vmax.f32 %v3725, 0.0
        %v3854 = vmax.f32 %v3726, 0.0
        %v3855 = vmax.f32 %v3727, 0.0
        %v3856 = vmax.f32 %v3728, 0.0
        %v3857 = vmax.f32 %v3729, 0.0
        %v3858 = vmax.f32 %v3730, 0.0
        %v3859 = vmax.f32 %v3731, 0.0
        %v3860 = vmax.f32 %v3732, 0.0
        %v3861 = vmax.f32 %v3733, 0.0
        %v3862 = vmax.f32 %v3734, 0.0
        %v3863 = vmax.f32 %v3735, 0.0
        %v3864 = vmax.f32 %v3736, 0.0
        %v3865 = vmax.f32 %v3737, 0.0
        %v3866 = vmax.f32 %v3738, 0.0
        %v3867 = vmax.f32 %v3739, 0.0
        %v3868 = vmax.f32 %v3740, 0.0
        %v3869 = vmax.f32 %v3741, 0.0
        %v3870 = vmax.f32 %v3742, 0.0
        %v3871 = vmax.f32 %v3743, 0.0
        %v3872 = vmax.f32 %v3744, 0.0
        %v3873 = vmax.f32 %v3745, 0.0
        %v3874 = vmax.f32 %v3746, 0.0
        %v3875 = vmax.f32 %v3747, 0.0
        %v3876 = vmax.f32 %v3748, 0.0
        %v3877 = vmax.f32 %v3749, 0.0
        %v3878 = vmax.f32 %v3750, 0.0
        %v3879 = vmax.f32 %v3751, 0.0
        %v3880 = vmax.f32 %v3752, 0.0
        %v3881 = vmax.f32 %v3753, 0.0
        %v3882 = vmax.f32 %v3754, 0.0
        %v3883 = vmax.f32 %v3755, 0.0
        %v3884 = vmax.f32 %v3756, 0.0
        %v3885 = vmax.f32 %v3757, 0.0
        %v3886 = vmax.f32 %v3758, 0.0
        %v3887 = vmax.f32 %v3759, 0.0
        %v3888 = vmax.f32 %v3760, 0.0
        %v3889 = vmax.f32 %v3761, 0.0
        %v3890 = vmax.f32 %v3762, 0.0
        %v3891 = vmax.f32 %v3763, 0.0
        %v3892 = vmax.f32 %v3764, 0.0
        %v3893 = vmax.f32 %v3765, 0.0
        %v3894 = vmax.f32 %v3766, 0.0
        %v3895 = vmax.f32 %v3767, 0.0
        %v3896 = vmax.f32 %v3768, 0.0
        %v3897 = vmax.f32 %v3769, 0.0
        %v3898 = vmax.f32 %v3770, 0.0
        %v3899 = vmax.f32 %v3771, 0.0
        %v3900 = vmax.f32 %v3772, 0.0
        %v3901 = vmax.f32 %v3773, 0.0
        %v3902 = vmax.f32 %v3774, 0.0
        %v3903 = vmax.f32 %v3775, 0.0
        %v3904 = vmax.f32 %v3776, 0.0
        %v3905 = vmax.f32 %v3777, 0.0
        %v3906 = vmax.f32 %v3778, 0.0
        %v3907 = vmax.f32 %v3779, 0.0
        %v3908 = vmax.f32 %v3780, 0.0
        %v3909 = vmax.f32 %v3781, 0.0
        %v3910 = vmax.f32 %v3782, 0.0
        %v3911 = vmax.f32 %v3783, 0.0
        %v3912 = vmax.f32 %v3784, 0.0
        %v3913 = vmax.f32 %v3785, 0.0
        %v3914 = vmax.f32 %v3786, 0.0
        %v3915 = vmax.f32 %v3787, 0.0
        %v3916 = vmax.f32 %v3788, 0.0
        %v3917 = vmax.f32 %v3789, 0.0
        %v3918 = vmax.f32 %v3790, 0.0
        %v3919 = vmax.f32 %v3791, 0.0
        %v3920 = vmax.f32 %v3792, 0.0
        %v3921 = vmax.f32 %v3793, 0.0
        %v3922 = vmax.f32 %v3794, 0.0
        %v3923 = vld [vmem:[#allocation2 + $0x40] sm:$0xff]
        %v3924 = vld [vmem:[#allocation2 + $0x48] sm:$0xff]
        %v3925 = vld [vmem:[#allocation2 + $0x50] sm:$0xff]
        %v3926 = vld [vmem:[#allocation2 + $0x58] sm:$0xff]
        %v3927 = vadd.f32 %v3795, %v3799
        %v3928 = vadd.f32 %v3927, %v3803
        %v3929 = vadd.f32 %v3928, %v3807
        %v3930 = vadd.f32 %v3929, %v3811
        %v3931 = vadd.f32 %v3930, %v3815
        %v3932 = vadd.f32 %v3931, %v3819
        %v3933 = vadd.f32 %v3932, %v3823
        %v3934 = vadd.f32 %v3933, %v3827
        %v3935 = vadd.f32 %v3934, %v3831
        %v3936 = vadd.f32 %v3935, %v3835
        %v3937 = vadd.f32 %v3936, %v3839
        %v3938 = vadd.f32 %v3937, %v3843
        %v3939 = vadd.f32 %v3938, %v3847
        %v3940 = vadd.f32 %v3939, %v3851
        %v3941 = vadd.f32 %v3940, %v3855
        %v3942 = vadd.f32 %v3941, %v3859
        %v3943 = vadd.f32 %v3942, %v3863
        %v3944 = vadd.f32 %v3943, %v3867
        %v3945 = vadd.f32 %v3944, %v3871
        %v3946 = vadd.f32 %v3945, %v3875
        %v3947 = vadd.f32 %v3946, %v3879
        %v3948 = vadd.f32 %v3947, %v3883
        %v3949 = vadd.f32 %v3948, %v3887
        %v3950 = vadd.f32 %v3949, %v3891
        %v3951 = vadd.f32 %v3950, %v3895
        %v3952 = vadd.f32 %v3951, %v3899
        %v3953 = vadd.f32 %v3952, %v3903
        %v3954 = vadd.f32 %v3953, %v3907
        %v3955 = vadd.f32 %v3954, %v3911
        %v3956 = vadd.f32 %v3955, %v3915
        %v3957 = vadd.f32 %v3956, %v3919
        %v3958 = vadd.f32 %v3796, %v3800
        %v3959 = vadd.f32 %v3958, %v3804
        %v3960 = vadd.f32 %v3959, %v3808
        %v3961 = vadd.f32 %v3960, %v3812
        %v3962 = vadd.f32 %v3961, %v3816
        %v3963 = vadd.f32 %v3962, %v3820
        %v3964 = vadd.f32 %v3963, %v3824
        %v3965 = vadd.f32 %v3964, %v3828
        %v3966 = vadd.f32 %v3965, %v3832
        %v3967 = vadd.f32 %v3966, %v3836
        %v3968 = vadd.f32 %v3967, %v3840
        %v3969 = vadd.f32 %v3968, %v3844
        %v3970 = vadd.f32 %v3969, %v3848
        %v3971 = vadd.f32 %v3970, %v3852
        %v3972 = vadd.f32 %v3971, %v3856
        %v3973 = vadd.f32 %v3972, %v3860
        %v3974 = vadd.f32 %v3973, %v3864
        %v3975 = vadd.f32 %v3974, %v3868
        %v3976 = vadd.f32 %v3975, %v3872
        %v3977 = vadd.f32 %v3976, %v3876
        %v3978 = vadd.f32 %v3977, %v3880
        %v3979 = vadd.f32 %v3978, %v3884
        %v3980 = vadd.f32 %v3979, %v3888
        %v3981 = vadd.f32 %v3980, %v3892
        %v3982 = vadd.f32 %v3981, %v3896
        %v3983 = vadd.f32 %v3982, %v3900
        %v3984 = vadd.f32 %v3983, %v3904
        %v3985 = vadd.f32 %v3984, %v3908
        %v3986 = vadd.f32 %v3985, %v3912
        %v3987 = vadd.f32 %v3986, %v3916
        %v3988 = vadd.f32 %v3987, %v3920
        %v3989 = vadd.f32 %v3797, %v3801
        %v3990 = vadd.f32 %v3989, %v3805
        %v3991 = vadd.f32 %v3990, %v3809
        %v3992 = vadd.f32 %v3991, %v3813
        %v3993 = vadd.f32 %v3992, %v3817
        %v3994 = vadd.f32 %v3993, %v3821
        %v3995 = vadd.f32 %v3994, %v3825
        %v3996 = vadd.f32 %v3995, %v3829
        %v3997 = vadd.f32 %v3996, %v3833
        %v3998 = vadd.f32 %v3997, %v3837
        %v3999 = vadd.f32 %v3998, %v3841
        %v4000 = vadd.f32 %v3999, %v3845
        %v4001 = vadd.f32 %v4000, %v3849
        %v4002 = vadd.f32 %v4001, %v3853
        %v4003 = vadd.f32 %v4002, %v3857
        %v4004 = vadd.f32 %v4003, %v3861
        %v4005 = vadd.f32 %v4004, %v3865
        %v4006 = vadd.f32 %v4005, %v3869
        %v4007 = vadd.f32 %v4006, %v3873
        %v4008 = vadd.f32 %v4007, %v3877
        %v4009 = vadd.f32 %v4008, %v3881
        %v4010 = vadd.f32 %v4009, %v3885
        %v4011 = vadd.f32 %v4010, %v3889
        %v4012 = vadd.f32 %v4011, %v3893
        %v4013 = vadd.f32 %v4012, %v3897
        %v4014 = vadd.f32 %v4013, %v3901
        %v4015 = vadd.f32 %v4014, %v3905
        %v4016 = vadd.f32 %v4015, %v3909
        %v4017 = vadd.f32 %v4016, %v3913
        %v4018 = vadd.f32 %v4017, %v3917
        %v4019 = vadd.f32 %v4018, %v3921
        %v4020 = vadd.f32 %v3798, %v3802
        %v4021 = vadd.f32 %v4020, %v3806
        %v4022 = vadd.f32 %v4021, %v3810
        %v4023 = vadd.f32 %v4022, %v3814
        %v4024 = vadd.f32 %v4023, %v3818
        %v4025 = vadd.f32 %v4024, %v3822
        %v4026 = vadd.f32 %v4025, %v3826
        %v4027 = vadd.f32 %v4026, %v3830
        %v4028 = vadd.f32 %v4027, %v3834
        %v4029 = vadd.f32 %v4028, %v3838
        %v4030 = vadd.f32 %v4029, %v3842
        %v4031 = vadd.f32 %v4030, %v3846
        %v4032 = vadd.f32 %v4031, %v3850
        %v4033 = vadd.f32 %v4032, %v3854
        %v4034 = vadd.f32 %v4033, %v3858
        %v4035 = vadd.f32 %v4034, %v3862
        %v4036 = vadd.f32 %v4035, %v3866
        %v4037 = vadd.f32 %v4036, %v3870
        %v4038 = vadd.f32 %v4037, %v3874
        %v4039 = vadd.f32 %v4038, %v3878
        %v4040 = vadd.f32 %v4039, %v3882
        %v4041 = vadd.f32 %v4040, %v3886
        %v4042 = vadd.f32 %v4041, %v3890
        %v4043 = vadd.f32 %v4042, %v3894
        %v4044 = vadd.f32 %v4043, %v3898
        %v4045 = vadd.f32 %v4044, %v3902
        %v4046 = vadd.f32 %v4045, %v3906
        %v4047 = vadd.f32 %v4046, %v3910
        %v4048 = vadd.f32 %v4047, %v3914
        %v4049 = vadd.f32 %v4048, %v3918
        %v4050 = vadd.f32 %v4049, %v3922
        %v4051 = vadd.f32 %v3923, %v3957
        %v4052 = vadd.f32 %v3924, %v3988
        %v4053 = vadd.f32 %v3925, %v4019
        %v4054 = vadd.f32 %v3926, %v4050
        %4055 = vst [vmem:[#allocation2 + $0x40] sm:$0xff] %v4051
        %4056 = vst [vmem:[#allocation2 + $0x48] sm:$0xff] %v4052
        %4057 = vst [vmem:[#allocation2 + $0x50] sm:$0xff] %v4053
        %4058 = vst [vmem:[#allocation2 + $0x58] sm:$0xff] %v4054
        %s4059 = scalar_lea.vmem [#allocation3], 48
        %v4060 = vld [vmem:[%s4059] ss:$4 sm:$0xf]
        %v4062 = vlaneseq
        %v4063 = vshrl.u32 %v4062, 7
        %v4064 = vsub.s32 0, %v4063
        %v4065 = vrot.slane %v4060, %v4064
        %v4066 = vlaneseq
        %v4067 = vshrl.u32 %v4066, 7
        %v4068 = vsub.s32 1, %v4067
        %v4069 = vrot.slane %v4060, %v4068
        %v4070 = vlaneseq
        %v4071 = vshrl.u32 %v4070, 7
        %v4072 = vsub.s32 2, %v4071
        %v4073 = vrot.slane %v4060, %v4072
        %v4074 = vlaneseq
        %v4075 = vshrl.u32 %v4074, 7
        %v4076 = vsub.s32 3, %v4075
        %v4077 = vrot.slane %v4060, %v4076
        %v4082 = vmul.f32 %v279, %v4065
        %v4083 = vmul.f32 %v279, %v4069
        %v4084 = vmul.f32 %v279, %v4073
        %v4085 = vmul.f32 %v279, %v4077
        %v4086 = vmul.f32 %v284, %v4065
        %v4087 = vmul.f32 %v284, %v4069
        %v4088 = vmul.f32 %v284, %v4073
        %v4089 = vmul.f32 %v284, %v4077
        %v4090 = vmul.f32 %v289, %v4065
        %v4091 = vmul.f32 %v289, %v4069
        %v4092 = vmul.f32 %v289, %v4073
        %v4093 = vmul.f32 %v289, %v4077
        %v4094 = vmul.f32 %v294, %v4065
        %v4095 = vmul.f32 %v294, %v4069
        %v4096 = vmul.f32 %v294, %v4073
        %v4097 = vmul.f32 %v294, %v4077
        %v4098 = vmul.f32 %v299, %v4065
        %v4099 = vmul.f32 %v299, %v4069
        %v4100 = vmul.f32 %v299, %v4073
        %v4101 = vmul.f32 %v299, %v4077
        %v4102 = vmul.f32 %v304, %v4065
        %v4103 = vmul.f32 %v304, %v4069
        %v4104 = vmul.f32 %v304, %v4073
        %v4105 = vmul.f32 %v304, %v4077
        %v4106 = vmul.f32 %v309, %v4065
        %v4107 = vmul.f32 %v309, %v4069
        %v4108 = vmul.f32 %v309, %v4073
        %v4109 = vmul.f32 %v309, %v4077
        %v4110 = vmul.f32 %v314, %v4065
        %v4111 = vmul.f32 %v314, %v4069
        %v4112 = vmul.f32 %v314, %v4073
        %v4113 = vmul.f32 %v314, %v4077
        %v4114 = vmul.f32 %v319, %v4065
        %v4115 = vmul.f32 %v319, %v4069
        %v4116 = vmul.f32 %v319, %v4073
        %v4117 = vmul.f32 %v319, %v4077
        %v4118 = vmul.f32 %v324, %v4065
        %v4119 = vmul.f32 %v324, %v4069
        %v4120 = vmul.f32 %v324, %v4073
        %v4121 = vmul.f32 %v324, %v4077
        %v4122 = vmul.f32 %v329, %v4065
        %v4123 = vmul.f32 %v329, %v4069
        %v4124 = vmul.f32 %v329, %v4073
        %v4125 = vmul.f32 %v329, %v4077
        %v4126 = vmul.f32 %v334, %v4065
        %v4127 = vmul.f32 %v334, %v4069
        %v4128 = vmul.f32 %v334, %v4073
        %v4129 = vmul.f32 %v334, %v4077
        %v4130 = vmul.f32 %v339, %v4065
        %v4131 = vmul.f32 %v339, %v4069
        %v4132 = vmul.f32 %v339, %v4073
        %v4133 = vmul.f32 %v339, %v4077
        %v4134 = vmul.f32 %v344, %v4065
        %v4135 = vmul.f32 %v344, %v4069
        %v4136 = vmul.f32 %v344, %v4073
        %v4137 = vmul.f32 %v344, %v4077
        %v4138 = vmul.f32 %v349, %v4065
        %v4139 = vmul.f32 %v349, %v4069
        %v4140 = vmul.f32 %v349, %v4073
        %v4141 = vmul.f32 %v349, %v4077
        %v4142 = vmul.f32 %v354, %v4065
        %v4143 = vmul.f32 %v354, %v4069
        %v4144 = vmul.f32 %v354, %v4073
        %v4145 = vmul.f32 %v354, %v4077
        %v4146 = vmul.f32 %v359, %v4065
        %v4147 = vmul.f32 %v359, %v4069
        %v4148 = vmul.f32 %v359, %v4073
        %v4149 = vmul.f32 %v359, %v4077
        %v4150 = vmul.f32 %v364, %v4065
        %v4151 = vmul.f32 %v364, %v4069
        %v4152 = vmul.f32 %v364, %v4073
        %v4153 = vmul.f32 %v364, %v4077
        %v4154 = vmul.f32 %v369, %v4065
        %v4155 = vmul.f32 %v369, %v4069
        %v4156 = vmul.f32 %v369, %v4073
        %v4157 = vmul.f32 %v369, %v4077
        %v4158 = vmul.f32 %v374, %v4065
        %v4159 = vmul.f32 %v374, %v4069
        %v4160 = vmul.f32 %v374, %v4073
        %v4161 = vmul.f32 %v374, %v4077
        %v4162 = vmul.f32 %v379, %v4065
        %v4163 = vmul.f32 %v379, %v4069
        %v4164 = vmul.f32 %v379, %v4073
        %v4165 = vmul.f32 %v379, %v4077
        %v4166 = vmul.f32 %v384, %v4065
        %v4167 = vmul.f32 %v384, %v4069
        %v4168 = vmul.f32 %v384, %v4073
        %v4169 = vmul.f32 %v384, %v4077
        %v4170 = vmul.f32 %v389, %v4065
        %v4171 = vmul.f32 %v389, %v4069
        %v4172 = vmul.f32 %v389, %v4073
        %v4173 = vmul.f32 %v389, %v4077
        %v4174 = vmul.f32 %v394, %v4065
        %v4175 = vmul.f32 %v394, %v4069
        %v4176 = vmul.f32 %v394, %v4073
        %v4177 = vmul.f32 %v394, %v4077
        %v4178 = vmul.f32 %v399, %v4065
        %v4179 = vmul.f32 %v399, %v4069
        %v4180 = vmul.f32 %v399, %v4073
        %v4181 = vmul.f32 %v399, %v4077
        %v4182 = vmul.f32 %v404, %v4065
        %v4183 = vmul.f32 %v404, %v4069
        %v4184 = vmul.f32 %v404, %v4073
        %v4185 = vmul.f32 %v404, %v4077
        %v4186 = vmul.f32 %v409, %v4065
        %v4187 = vmul.f32 %v409, %v4069
        %v4188 = vmul.f32 %v409, %v4073
        %v4189 = vmul.f32 %v409, %v4077
        %v4190 = vmul.f32 %v414, %v4065
        %v4191 = vmul.f32 %v414, %v4069
        %v4192 = vmul.f32 %v414, %v4073
        %v4193 = vmul.f32 %v414, %v4077
        %v4194 = vmul.f32 %v419, %v4065
        %v4195 = vmul.f32 %v419, %v4069
        %v4196 = vmul.f32 %v419, %v4073
        %v4197 = vmul.f32 %v419, %v4077
        %v4198 = vmul.f32 %v424, %v4065
        %v4199 = vmul.f32 %v424, %v4069
        %v4200 = vmul.f32 %v424, %v4073
        %v4201 = vmul.f32 %v424, %v4077
        %v4202 = vmul.f32 %v429, %v4065
        %v4203 = vmul.f32 %v429, %v4069
        %v4204 = vmul.f32 %v429, %v4073
        %v4205 = vmul.f32 %v429, %v4077
        %v4206 = vmul.f32 %v434, %v4065
        %v4207 = vmul.f32 %v434, %v4069
        %v4208 = vmul.f32 %v434, %v4073
        %v4209 = vmul.f32 %v434, %v4077
        %v4210 = vld [vmem:[#allocation5 + $0xc] sm:$0xf]
        %v4212 = vlaneseq
        %v4213 = vshrl.u32 %v4212, 7
        %v4214 = vsub.s32 0, %v4213
        %v4215 = vrot.slane %v4210, %v4214
        %v4216 = vlaneseq
        %v4217 = vshrl.u32 %v4216, 7
        %v4218 = vsub.s32 1, %v4217
        %v4219 = vrot.slane %v4210, %v4218
        %v4220 = vlaneseq
        %v4221 = vshrl.u32 %v4220, 7
        %v4222 = vsub.s32 2, %v4221
        %v4223 = vrot.slane %v4210, %v4222
        %v4224 = vlaneseq
        %v4225 = vshrl.u32 %v4224, 7
        %v4226 = vsub.s32 3, %v4225
        %v4227 = vrot.slane %v4210, %v4226
        %v4232 = vadd.f32 %v4082, %v4215
        %v4233 = vadd.f32 %v4083, %v4219
        %v4234 = vadd.f32 %v4084, %v4223
        %v4235 = vadd.f32 %v4085, %v4227
        %v4236 = vadd.f32 %v4086, %v4215
        %v4237 = vadd.f32 %v4087, %v4219
        %v4238 = vadd.f32 %v4088, %v4223
        %v4239 = vadd.f32 %v4089, %v4227
        %v4240 = vadd.f32 %v4090, %v4215
        %v4241 = vadd.f32 %v4091, %v4219
        %v4242 = vadd.f32 %v4092, %v4223
        %v4243 = vadd.f32 %v4093, %v4227
        %v4244 = vadd.f32 %v4094, %v4215
        %v4245 = vadd.f32 %v4095, %v4219
        %v4246 = vadd.f32 %v4096, %v4223
        %v4247 = vadd.f32 %v4097, %v4227
        %v4248 = vadd.f32 %v4098, %v4215
        %v4249 = vadd.f32 %v4099, %v4219
        %v4250 = vadd.f32 %v4100, %v4223
        %v4251 = vadd.f32 %v4101, %v4227
        %v4252 = vadd.f32 %v4102, %v4215
        %v4253 = vadd.f32 %v4103, %v4219
        %v4254 = vadd.f32 %v4104, %v4223
        %v4255 = vadd.f32 %v4105, %v4227
        %v4256 = vadd.f32 %v4106, %v4215
        %v4257 = vadd.f32 %v4107, %v4219
        %v4258 = vadd.f32 %v4108, %v4223
        %v4259 = vadd.f32 %v4109, %v4227
        %v4260 = vadd.f32 %v4110, %v4215
        %v4261 = vadd.f32 %v4111, %v4219
        %v4262 = vadd.f32 %v4112, %v4223
        %v4263 = vadd.f32 %v4113, %v4227
        %v4264 = vadd.f32 %v4114, %v4215
        %v4265 = vadd.f32 %v4115, %v4219
        %v4266 = vadd.f32 %v4116, %v4223
        %v4267 = vadd.f32 %v4117, %v4227
        %v4268 = vadd.f32 %v4118, %v4215
        %v4269 = vadd.f32 %v4119, %v4219
        %v4270 = vadd.f32 %v4120, %v4223
        %v4271 = vadd.f32 %v4121, %v4227
        %v4272 = vadd.f32 %v4122, %v4215
        %v4273 = vadd.f32 %v4123, %v4219
        %v4274 = vadd.f32 %v4124, %v4223
        %v4275 = vadd.f32 %v4125, %v4227
        %v4276 = vadd.f32 %v4126, %v4215
        %v4277 = vadd.f32 %v4127, %v4219
        %v4278 = vadd.f32 %v4128, %v4223
        %v4279 = vadd.f32 %v4129, %v4227
        %v4280 = vadd.f32 %v4130, %v4215
        %v4281 = vadd.f32 %v4131, %v4219
        %v4282 = vadd.f32 %v4132, %v4223
        %v4283 = vadd.f32 %v4133, %v4227
        %v4284 = vadd.f32 %v4134, %v4215
        %v4285 = vadd.f32 %v4135, %v4219
        %v4286 = vadd.f32 %v4136, %v4223
        %v4287 = vadd.f32 %v4137, %v4227
        %v4288 = vadd.f32 %v4138, %v4215
        %v4289 = vadd.f32 %v4139, %v4219
        %v4290 = vadd.f32 %v4140, %v4223
        %v4291 = vadd.f32 %v4141, %v4227
        %v4292 = vadd.f32 %v4142, %v4215
        %v4293 = vadd.f32 %v4143, %v4219
        %v4294 = vadd.f32 %v4144, %v4223
        %v4295 = vadd.f32 %v4145, %v4227
        %v4296 = vadd.f32 %v4146, %v4215
        %v4297 = vadd.f32 %v4147, %v4219
        %v4298 = vadd.f32 %v4148, %v4223
        %v4299 = vadd.f32 %v4149, %v4227
        %v4300 = vadd.f32 %v4150, %v4215
        %v4301 = vadd.f32 %v4151, %v4219
        %v4302 = vadd.f32 %v4152, %v4223
        %v4303 = vadd.f32 %v4153, %v4227
        %v4304 = vadd.f32 %v4154, %v4215
        %v4305 = vadd.f32 %v4155, %v4219
        %v4306 = vadd.f32 %v4156, %v4223
        %v4307 = vadd.f32 %v4157, %v4227
        %v4308 = vadd.f32 %v4158, %v4215
        %v4309 = vadd.f32 %v4159, %v4219
        %v4310 = vadd.f32 %v4160, %v4223
        %v4311 = vadd.f32 %v4161, %v4227
        %v4312 = vadd.f32 %v4162, %v4215
        %v4313 = vadd.f32 %v4163, %v4219
        %v4314 = vadd.f32 %v4164, %v4223
        %v4315 = vadd.f32 %v4165, %v4227
        %v4316 = vadd.f32 %v4166, %v4215
        %v4317 = vadd.f32 %v4167, %v4219
        %v4318 = vadd.f32 %v4168, %v4223
        %v4319 = vadd.f32 %v4169, %v4227
        %v4320 = vadd.f32 %v4170, %v4215
        %v4321 = vadd.f32 %v4171, %v4219
        %v4322 = vadd.f32 %v4172, %v4223
        %v4323 = vadd.f32 %v4173, %v4227
        %v4324 = vadd.f32 %v4174, %v4215
        %v4325 = vadd.f32 %v4175, %v4219
        %v4326 = vadd.f32 %v4176, %v4223
        %v4327 = vadd.f32 %v4177, %v4227
        %v4328 = vadd.f32 %v4178, %v4215
        %v4329 = vadd.f32 %v4179, %v4219
        %v4330 = vadd.f32 %v4180, %v4223
        %v4331 = vadd.f32 %v4181, %v4227
        %v4332 = vadd.f32 %v4182, %v4215
        %v4333 = vadd.f32 %v4183, %v4219
        %v4334 = vadd.f32 %v4184, %v4223
        %v4335 = vadd.f32 %v4185, %v4227
        %v4336 = vadd.f32 %v4186, %v4215
        %v4337 = vadd.f32 %v4187, %v4219
        %v4338 = vadd.f32 %v4188, %v4223
        %v4339 = vadd.f32 %v4189, %v4227
        %v4340 = vadd.f32 %v4190, %v4215
        %v4341 = vadd.f32 %v4191, %v4219
        %v4342 = vadd.f32 %v4192, %v4223
        %v4343 = vadd.f32 %v4193, %v4227
        %v4344 = vadd.f32 %v4194, %v4215
        %v4345 = vadd.f32 %v4195, %v4219
        %v4346 = vadd.f32 %v4196, %v4223
        %v4347 = vadd.f32 %v4197, %v4227
        %v4348 = vadd.f32 %v4198, %v4215
        %v4349 = vadd.f32 %v4199, %v4219
        %v4350 = vadd.f32 %v4200, %v4223
        %v4351 = vadd.f32 %v4201, %v4227
        %v4352 = vadd.f32 %v4202, %v4215
        %v4353 = vadd.f32 %v4203, %v4219
        %v4354 = vadd.f32 %v4204, %v4223
        %v4355 = vadd.f32 %v4205, %v4227
        %v4356 = vadd.f32 %v4206, %v4215
        %v4357 = vadd.f32 %v4207, %v4219
        %v4358 = vadd.f32 %v4208, %v4223
        %v4359 = vadd.f32 %v4209, %v4227
        %s4360 = scalar_lea.vmem [#allocation3], 49
        %v4361 = vld [vmem:[%s4360] ss:$4 sm:$0xf]
        %v4363 = vlaneseq
        %v4364 = vshrl.u32 %v4363, 7
        %v4365 = vsub.s32 0, %v4364
        %v4366 = vrot.slane %v4361, %v4365
        %v4367 = vlaneseq
        %v4368 = vshrl.u32 %v4367, 7
        %v4369 = vsub.s32 1, %v4368
        %v4370 = vrot.slane %v4361, %v4369
        %v4371 = vlaneseq
        %v4372 = vshrl.u32 %v4371, 7
        %v4373 = vsub.s32 2, %v4372
        %v4374 = vrot.slane %v4361, %v4373
        %v4375 = vlaneseq
        %v4376 = vshrl.u32 %v4375, 7
        %v4377 = vsub.s32 3, %v4376
        %v4378 = vrot.slane %v4361, %v4377
        %v4383 = vmul.f32 %v739, %v4366
        %v4384 = vmul.f32 %v739, %v4370
        %v4385 = vmul.f32 %v739, %v4374
        %v4386 = vmul.f32 %v739, %v4378
        %v4387 = vmul.f32 %v743, %v4366
        %v4388 = vmul.f32 %v743, %v4370
        %v4389 = vmul.f32 %v743, %v4374
        %v4390 = vmul.f32 %v743, %v4378
        %v4391 = vmul.f32 %v747, %v4366
        %v4392 = vmul.f32 %v747, %v4370
        %v4393 = vmul.f32 %v747, %v4374
        %v4394 = vmul.f32 %v747, %v4378
        %v4395 = vmul.f32 %v751, %v4366
        %v4396 = vmul.f32 %v751, %v4370
        %v4397 = vmul.f32 %v751, %v4374
        %v4398 = vmul.f32 %v751, %v4378
        %v4399 = vmul.f32 %v755, %v4366
        %v4400 = vmul.f32 %v755, %v4370
        %v4401 = vmul.f32 %v755, %v4374
        %v4402 = vmul.f32 %v755, %v4378
        %v4403 = vmul.f32 %v759, %v4366
        %v4404 = vmul.f32 %v759, %v4370
        %v4405 = vmul.f32 %v759, %v4374
        %v4406 = vmul.f32 %v759, %v4378
        %v4407 = vmul.f32 %v763, %v4366
        %v4408 = vmul.f32 %v763, %v4370
        %v4409 = vmul.f32 %v763, %v4374
        %v4410 = vmul.f32 %v763, %v4378
        %v4411 = vmul.f32 %v767, %v4366
        %v4412 = vmul.f32 %v767, %v4370
        %v4413 = vmul.f32 %v767, %v4374
        %v4414 = vmul.f32 %v767, %v4378
        %v4415 = vmul.f32 %v771, %v4366
        %v4416 = vmul.f32 %v771, %v4370
        %v4417 = vmul.f32 %v771, %v4374
        %v4418 = vmul.f32 %v771, %v4378
        %v4419 = vmul.f32 %v775, %v4366
        %v4420 = vmul.f32 %v775, %v4370
        %v4421 = vmul.f32 %v775, %v4374
        %v4422 = vmul.f32 %v775, %v4378
        %v4423 = vmul.f32 %v779, %v4366
        %v4424 = vmul.f32 %v779, %v4370
        %v4425 = vmul.f32 %v779, %v4374
        %v4426 = vmul.f32 %v779, %v4378
        %v4427 = vmul.f32 %v783, %v4366
        %v4428 = vmul.f32 %v783, %v4370
        %v4429 = vmul.f32 %v783, %v4374
        %v4430 = vmul.f32 %v783, %v4378
        %v4431 = vmul.f32 %v787, %v4366
        %v4432 = vmul.f32 %v787, %v4370
        %v4433 = vmul.f32 %v787, %v4374
        %v4434 = vmul.f32 %v787, %v4378
        %v4435 = vmul.f32 %v791, %v4366
        %v4436 = vmul.f32 %v791, %v4370
        %v4437 = vmul.f32 %v791, %v4374
        %v4438 = vmul.f32 %v791, %v4378
        %v4439 = vmul.f32 %v795, %v4366
        %v4440 = vmul.f32 %v795, %v4370
        %v4441 = vmul.f32 %v795, %v4374
        %v4442 = vmul.f32 %v795, %v4378
        %v4443 = vmul.f32 %v799, %v4366
        %v4444 = vmul.f32 %v799, %v4370
        %v4445 = vmul.f32 %v799, %v4374
        %v4446 = vmul.f32 %v799, %v4378
        %v4447 = vmul.f32 %v803, %v4366
        %v4448 = vmul.f32 %v803, %v4370
        %v4449 = vmul.f32 %v803, %v4374
        %v4450 = vmul.f32 %v803, %v4378
        %v4451 = vmul.f32 %v807, %v4366
        %v4452 = vmul.f32 %v807, %v4370
        %v4453 = vmul.f32 %v807, %v4374
        %v4454 = vmul.f32 %v807, %v4378
        %v4455 = vmul.f32 %v811, %v4366
        %v4456 = vmul.f32 %v811, %v4370
        %v4457 = vmul.f32 %v811, %v4374
        %v4458 = vmul.f32 %v811, %v4378
        %v4459 = vmul.f32 %v815, %v4366
        %v4460 = vmul.f32 %v815, %v4370
        %v4461 = vmul.f32 %v815, %v4374
        %v4462 = vmul.f32 %v815, %v4378
        %v4463 = vmul.f32 %v819, %v4366
        %v4464 = vmul.f32 %v819, %v4370
        %v4465 = vmul.f32 %v819, %v4374
        %v4466 = vmul.f32 %v819, %v4378
        %v4467 = vmul.f32 %v823, %v4366
        %v4468 = vmul.f32 %v823, %v4370
        %v4469 = vmul.f32 %v823, %v4374
        %v4470 = vmul.f32 %v823, %v4378
        %v4471 = vmul.f32 %v827, %v4366
        %v4472 = vmul.f32 %v827, %v4370
        %v4473 = vmul.f32 %v827, %v4374
        %v4474 = vmul.f32 %v827, %v4378
        %v4475 = vmul.f32 %v831, %v4366
        %v4476 = vmul.f32 %v831, %v4370
        %v4477 = vmul.f32 %v831, %v4374
        %v4478 = vmul.f32 %v831, %v4378
        %v4479 = vmul.f32 %v835, %v4366
        %v4480 = vmul.f32 %v835, %v4370
        %v4481 = vmul.f32 %v835, %v4374
        %v4482 = vmul.f32 %v835, %v4378
        %v4483 = vmul.f32 %v839, %v4366
        %v4484 = vmul.f32 %v839, %v4370
        %v4485 = vmul.f32 %v839, %v4374
        %v4486 = vmul.f32 %v839, %v4378
        %v4487 = vmul.f32 %v843, %v4366
        %v4488 = vmul.f32 %v843, %v4370
        %v4489 = vmul.f32 %v843, %v4374
        %v4490 = vmul.f32 %v843, %v4378
        %v4491 = vmul.f32 %v847, %v4366
        %v4492 = vmul.f32 %v847, %v4370
        %v4493 = vmul.f32 %v847, %v4374
        %v4494 = vmul.f32 %v847, %v4378
        %v4495 = vmul.f32 %v851, %v4366
        %v4496 = vmul.f32 %v851, %v4370
        %v4497 = vmul.f32 %v851, %v4374
        %v4498 = vmul.f32 %v851, %v4378
        %v4499 = vmul.f32 %v855, %v4366
        %v4500 = vmul.f32 %v855, %v4370
        %v4501 = vmul.f32 %v855, %v4374
        %v4502 = vmul.f32 %v855, %v4378
        %v4503 = vmul.f32 %v859, %v4366
        %v4504 = vmul.f32 %v859, %v4370
        %v4505 = vmul.f32 %v859, %v4374
        %v4506 = vmul.f32 %v859, %v4378
        %v4507 = vmul.f32 %v863, %v4366
        %v4508 = vmul.f32 %v863, %v4370
        %v4509 = vmul.f32 %v863, %v4374
        %v4510 = vmul.f32 %v863, %v4378
        %v4511 = vadd.f32 %v4232, %v4383
        %v4512 = vadd.f32 %v4233, %v4384
        %v4513 = vadd.f32 %v4234, %v4385
        %v4514 = vadd.f32 %v4235, %v4386
        %v4515 = vadd.f32 %v4236, %v4387
        %v4516 = vadd.f32 %v4237, %v4388
        %v4517 = vadd.f32 %v4238, %v4389
        %v4518 = vadd.f32 %v4239, %v4390
        %v4519 = vadd.f32 %v4240, %v4391
        %v4520 = vadd.f32 %v4241, %v4392
        %v4521 = vadd.f32 %v4242, %v4393
        %v4522 = vadd.f32 %v4243, %v4394
        %v4523 = vadd.f32 %v4244, %v4395
        %v4524 = vadd.f32 %v4245, %v4396
        %v4525 = vadd.f32 %v4246, %v4397
        %v4526 = vadd.f32 %v4247, %v4398
        %v4527 = vadd.f32 %v4248, %v4399
        %v4528 = vadd.f32 %v4249, %v4400
        %v4529 = vadd.f32 %v4250, %v4401
        %v4530 = vadd.f32 %v4251, %v4402
        %v4531 = vadd.f32 %v4252, %v4403
        %v4532 = vadd.f32 %v4253, %v4404
        %v4533 = vadd.f32 %v4254, %v4405
        %v4534 = vadd.f32 %v4255, %v4406
        %v4535 = vadd.f32 %v4256, %v4407
        %v4536 = vadd.f32 %v4257, %v4408
        %v4537 = vadd.f32 %v4258, %v4409
        %v4538 = vadd.f32 %v4259, %v4410
        %v4539 = vadd.f32 %v4260, %v4411
        %v4540 = vadd.f32 %v4261, %v4412
        %v4541 = vadd.f32 %v4262, %v4413
        %v4542 = vadd.f32 %v4263, %v4414
        %v4543 = vadd.f32 %v4264, %v4415
        %v4544 = vadd.f32 %v4265, %v4416
        %v4545 = vadd.f32 %v4266, %v4417
        %v4546 = vadd.f32 %v4267, %v4418
        %v4547 = vadd.f32 %v4268, %v4419
        %v4548 = vadd.f32 %v4269, %v4420
        %v4549 = vadd.f32 %v4270, %v4421
        %v4550 = vadd.f32 %v4271, %v4422
        %v4551 = vadd.f32 %v4272, %v4423
        %v4552 = vadd.f32 %v4273, %v4424
        %v4553 = vadd.f32 %v4274, %v4425
        %v4554 = vadd.f32 %v4275, %v4426
        %v4555 = vadd.f32 %v4276, %v4427
        %v4556 = vadd.f32 %v4277, %v4428
        %v4557 = vadd.f32 %v4278, %v4429
        %v4558 = vadd.f32 %v4279, %v4430
        %v4559 = vadd.f32 %v4280, %v4431
        %v4560 = vadd.f32 %v4281, %v4432
        %v4561 = vadd.f32 %v4282, %v4433
        %v4562 = vadd.f32 %v4283, %v4434
        %v4563 = vadd.f32 %v4284, %v4435
        %v4564 = vadd.f32 %v4285, %v4436
        %v4565 = vadd.f32 %v4286, %v4437
        %v4566 = vadd.f32 %v4287, %v4438
        %v4567 = vadd.f32 %v4288, %v4439
        %v4568 = vadd.f32 %v4289, %v4440
        %v4569 = vadd.f32 %v4290, %v4441
        %v4570 = vadd.f32 %v4291, %v4442
        %v4571 = vadd.f32 %v4292, %v4443
        %v4572 = vadd.f32 %v4293, %v4444
        %v4573 = vadd.f32 %v4294, %v4445
        %v4574 = vadd.f32 %v4295, %v4446
        %v4575 = vadd.f32 %v4296, %v4447
        %v4576 = vadd.f32 %v4297, %v4448
        %v4577 = vadd.f32 %v4298, %v4449
        %v4578 = vadd.f32 %v4299, %v4450
        %v4579 = vadd.f32 %v4300, %v4451
        %v4580 = vadd.f32 %v4301, %v4452
        %v4581 = vadd.f32 %v4302, %v4453
        %v4582 = vadd.f32 %v4303, %v4454
        %v4583 = vadd.f32 %v4304, %v4455
        %v4584 = vadd.f32 %v4305, %v4456
        %v4585 = vadd.f32 %v4306, %v4457
        %v4586 = vadd.f32 %v4307, %v4458
        %v4587 = vadd.f32 %v4308, %v4459
        %v4588 = vadd.f32 %v4309, %v4460
        %v4589 = vadd.f32 %v4310, %v4461
        %v4590 = vadd.f32 %v4311, %v4462
        %v4591 = vadd.f32 %v4312, %v4463
        %v4592 = vadd.f32 %v4313, %v4464
        %v4593 = vadd.f32 %v4314, %v4465
        %v4594 = vadd.f32 %v4315, %v4466
        %v4595 = vadd.f32 %v4316, %v4467
        %v4596 = vadd.f32 %v4317, %v4468
        %v4597 = vadd.f32 %v4318, %v4469
        %v4598 = vadd.f32 %v4319, %v4470
        %v4599 = vadd.f32 %v4320, %v4471
        %v4600 = vadd.f32 %v4321, %v4472
        %v4601 = vadd.f32 %v4322, %v4473
        %v4602 = vadd.f32 %v4323, %v4474
        %v4603 = vadd.f32 %v4324, %v4475
        %v4604 = vadd.f32 %v4325, %v4476
        %v4605 = vadd.f32 %v4326, %v4477
        %v4606 = vadd.f32 %v4327, %v4478
        %v4607 = vadd.f32 %v4328, %v4479
        %v4608 = vadd.f32 %v4329, %v4480
        %v4609 = vadd.f32 %v4330, %v4481
        %v4610 = vadd.f32 %v4331, %v4482
        %v4611 = vadd.f32 %v4332, %v4483
        %v4612 = vadd.f32 %v4333, %v4484
        %v4613 = vadd.f32 %v4334, %v4485
        %v4614 = vadd.f32 %v4335, %v4486
        %v4615 = vadd.f32 %v4336, %v4487
        %v4616 = vadd.f32 %v4337, %v4488
        %v4617 = vadd.f32 %v4338, %v4489
        %v4618 = vadd.f32 %v4339, %v4490
        %v4619 = vadd.f32 %v4340, %v4491
        %v4620 = vadd.f32 %v4341, %v4492
        %v4621 = vadd.f32 %v4342, %v4493
        %v4622 = vadd.f32 %v4343, %v4494
        %v4623 = vadd.f32 %v4344, %v4495
        %v4624 = vadd.f32 %v4345, %v4496
        %v4625 = vadd.f32 %v4346, %v4497
        %v4626 = vadd.f32 %v4347, %v4498
        %v4627 = vadd.f32 %v4348, %v4499
        %v4628 = vadd.f32 %v4349, %v4500
        %v4629 = vadd.f32 %v4350, %v4501
        %v4630 = vadd.f32 %v4351, %v4502
        %v4631 = vadd.f32 %v4352, %v4503
        %v4632 = vadd.f32 %v4353, %v4504
        %v4633 = vadd.f32 %v4354, %v4505
        %v4634 = vadd.f32 %v4355, %v4506
        %v4635 = vadd.f32 %v4356, %v4507
        %v4636 = vadd.f32 %v4357, %v4508
        %v4637 = vadd.f32 %v4358, %v4509
        %v4638 = vadd.f32 %v4359, %v4510
        %s4639 = scalar_lea.vmem [#allocation3], 50
        %v4640 = vld [vmem:[%s4639] ss:$4 sm:$0xf]
        %v4642 = vlaneseq
        %v4643 = vshrl.u32 %v4642, 7
        %v4644 = vsub.s32 0, %v4643
        %v4645 = vrot.slane %v4640, %v4644
        %v4646 = vlaneseq
        %v4647 = vshrl.u32 %v4646, 7
        %v4648 = vsub.s32 1, %v4647
        %v4649 = vrot.slane %v4640, %v4648
        %v4650 = vlaneseq
        %v4651 = vshrl.u32 %v4650, 7
        %v4652 = vsub.s32 2, %v4651
        %v4653 = vrot.slane %v4640, %v4652
        %v4654 = vlaneseq
        %v4655 = vshrl.u32 %v4654, 7
        %v4656 = vsub.s32 3, %v4655
        %v4657 = vrot.slane %v4640, %v4656
        %v4662 = vmul.f32 %v1146, %v4645
        %v4663 = vmul.f32 %v1146, %v4649
        %v4664 = vmul.f32 %v1146, %v4653
        %v4665 = vmul.f32 %v1146, %v4657
        %v4666 = vmul.f32 %v1150, %v4645
        %v4667 = vmul.f32 %v1150, %v4649
        %v4668 = vmul.f32 %v1150, %v4653
        %v4669 = vmul.f32 %v1150, %v4657
        %v4670 = vmul.f32 %v1154, %v4645
        %v4671 = vmul.f32 %v1154, %v4649
        %v4672 = vmul.f32 %v1154, %v4653
        %v4673 = vmul.f32 %v1154, %v4657
        %v4674 = vmul.f32 %v1158, %v4645
        %v4675 = vmul.f32 %v1158, %v4649
        %v4676 = vmul.f32 %v1158, %v4653
        %v4677 = vmul.f32 %v1158, %v4657
        %v4678 = vmul.f32 %v1162, %v4645
        %v4679 = vmul.f32 %v1162, %v4649
        %v4680 = vmul.f32 %v1162, %v4653
        %v4681 = vmul.f32 %v1162, %v4657
        %v4682 = vmul.f32 %v1166, %v4645
        %v4683 = vmul.f32 %v1166, %v4649
        %v4684 = vmul.f32 %v1166, %v4653
        %v4685 = vmul.f32 %v1166, %v4657
        %v4686 = vmul.f32 %v1170, %v4645
        %v4687 = vmul.f32 %v1170, %v4649
        %v4688 = vmul.f32 %v1170, %v4653
        %v4689 = vmul.f32 %v1170, %v4657
        %v4690 = vmul.f32 %v1174, %v4645
        %v4691 = vmul.f32 %v1174, %v4649
        %v4692 = vmul.f32 %v1174, %v4653
        %v4693 = vmul.f32 %v1174, %v4657
        %v4694 = vmul.f32 %v1178, %v4645
        %v4695 = vmul.f32 %v1178, %v4649
        %v4696 = vmul.f32 %v1178, %v4653
        %v4697 = vmul.f32 %v1178, %v4657
        %v4698 = vmul.f32 %v1182, %v4645
        %v4699 = vmul.f32 %v1182, %v4649
        %v4700 = vmul.f32 %v1182, %v4653
        %v4701 = vmul.f32 %v1182, %v4657
        %v4702 = vmul.f32 %v1186, %v4645
        %v4703 = vmul.f32 %v1186, %v4649
        %v4704 = vmul.f32 %v1186, %v4653
        %v4705 = vmul.f32 %v1186, %v4657
        %v4706 = vmul.f32 %v1190, %v4645
        %v4707 = vmul.f32 %v1190, %v4649
        %v4708 = vmul.f32 %v1190, %v4653
        %v4709 = vmul.f32 %v1190, %v4657
        %v4710 = vmul.f32 %v1194, %v4645
        %v4711 = vmul.f32 %v1194, %v4649
        %v4712 = vmul.f32 %v1194, %v4653
        %v4713 = vmul.f32 %v1194, %v4657
        %v4714 = vmul.f32 %v1198, %v4645
        %v4715 = vmul.f32 %v1198, %v4649
        %v4716 = vmul.f32 %v1198, %v4653
        %v4717 = vmul.f32 %v1198, %v4657
        %v4718 = vmul.f32 %v1202, %v4645
        %v4719 = vmul.f32 %v1202, %v4649
        %v4720 = vmul.f32 %v1202, %v4653
        %v4721 = vmul.f32 %v1202, %v4657
        %v4722 = vmul.f32 %v1206, %v4645
        %v4723 = vmul.f32 %v1206, %v4649
        %v4724 = vmul.f32 %v1206, %v4653
        %v4725 = vmul.f32 %v1206, %v4657
        %v4726 = vmul.f32 %v1210, %v4645
        %v4727 = vmul.f32 %v1210, %v4649
        %v4728 = vmul.f32 %v1210, %v4653
        %v4729 = vmul.f32 %v1210, %v4657
        %v4730 = vmul.f32 %v1214, %v4645
        %v4731 = vmul.f32 %v1214, %v4649
        %v4732 = vmul.f32 %v1214, %v4653
        %v4733 = vmul.f32 %v1214, %v4657
        %v4734 = vmul.f32 %v1218, %v4645
        %v4735 = vmul.f32 %v1218, %v4649
        %v4736 = vmul.f32 %v1218, %v4653
        %v4737 = vmul.f32 %v1218, %v4657
        %v4738 = vmul.f32 %v1222, %v4645
        %v4739 = vmul.f32 %v1222, %v4649
        %v4740 = vmul.f32 %v1222, %v4653
        %v4741 = vmul.f32 %v1222, %v4657
        %v4742 = vmul.f32 %v1226, %v4645
        %v4743 = vmul.f32 %v1226, %v4649
        %v4744 = vmul.f32 %v1226, %v4653
        %v4745 = vmul.f32 %v1226, %v4657
        %v4746 = vmul.f32 %v1230, %v4645
        %v4747 = vmul.f32 %v1230, %v4649
        %v4748 = vmul.f32 %v1230, %v4653
        %v4749 = vmul.f32 %v1230, %v4657
        %v4750 = vmul.f32 %v1234, %v4645
        %v4751 = vmul.f32 %v1234, %v4649
        %v4752 = vmul.f32 %v1234, %v4653
        %v4753 = vmul.f32 %v1234, %v4657
        %v4754 = vmul.f32 %v1238, %v4645
        %v4755 = vmul.f32 %v1238, %v4649
        %v4756 = vmul.f32 %v1238, %v4653
        %v4757 = vmul.f32 %v1238, %v4657
        %v4758 = vmul.f32 %v1242, %v4645
        %v4759 = vmul.f32 %v1242, %v4649
        %v4760 = vmul.f32 %v1242, %v4653
        %v4761 = vmul.f32 %v1242, %v4657
        %v4762 = vmul.f32 %v1246, %v4645
        %v4763 = vmul.f32 %v1246, %v4649
        %v4764 = vmul.f32 %v1246, %v4653
        %v4765 = vmul.f32 %v1246, %v4657
        %v4766 = vmul.f32 %v1250, %v4645
        %v4767 = vmul.f32 %v1250, %v4649
        %v4768 = vmul.f32 %v1250, %v4653
        %v4769 = vmul.f32 %v1250, %v4657
        %v4770 = vmul.f32 %v1254, %v4645
        %v4771 = vmul.f32 %v1254, %v4649
        %v4772 = vmul.f32 %v1254, %v4653
        %v4773 = vmul.f32 %v1254, %v4657
        %v4774 = vmul.f32 %v1258, %v4645
        %v4775 = vmul.f32 %v1258, %v4649
        %v4776 = vmul.f32 %v1258, %v4653
        %v4777 = vmul.f32 %v1258, %v4657
        %v4778 = vmul.f32 %v1262, %v4645
        %v4779 = vmul.f32 %v1262, %v4649
        %v4780 = vmul.f32 %v1262, %v4653
        %v4781 = vmul.f32 %v1262, %v4657
        %v4782 = vmul.f32 %v1266, %v4645
        %v4783 = vmul.f32 %v1266, %v4649
        %v4784 = vmul.f32 %v1266, %v4653
        %v4785 = vmul.f32 %v1266, %v4657
        %v4786 = vmul.f32 %v1270, %v4645
        %v4787 = vmul.f32 %v1270, %v4649
        %v4788 = vmul.f32 %v1270, %v4653
        %v4789 = vmul.f32 %v1270, %v4657
        %v4790 = vadd.f32 %v4511, %v4662
        %v4791 = vadd.f32 %v4512, %v4663
        %v4792 = vadd.f32 %v4513, %v4664
        %v4793 = vadd.f32 %v4514, %v4665
        %v4794 = vadd.f32 %v4515, %v4666
        %v4795 = vadd.f32 %v4516, %v4667
        %v4796 = vadd.f32 %v4517, %v4668
        %v4797 = vadd.f32 %v4518, %v4669
        %v4798 = vadd.f32 %v4519, %v4670
        %v4799 = vadd.f32 %v4520, %v4671
        %v4800 = vadd.f32 %v4521, %v4672
        %v4801 = vadd.f32 %v4522, %v4673
        %v4802 = vadd.f32 %v4523, %v4674
        %v4803 = vadd.f32 %v4524, %v4675
        %v4804 = vadd.f32 %v4525, %v4676
        %v4805 = vadd.f32 %v4526, %v4677
        %v4806 = vadd.f32 %v4527, %v4678
        %v4807 = vadd.f32 %v4528, %v4679
        %v4808 = vadd.f32 %v4529, %v4680
        %v4809 = vadd.f32 %v4530, %v4681
        %v4810 = vadd.f32 %v4531, %v4682
        %v4811 = vadd.f32 %v4532, %v4683
        %v4812 = vadd.f32 %v4533, %v4684
        %v4813 = vadd.f32 %v4534, %v4685
        %v4814 = vadd.f32 %v4535, %v4686
        %v4815 = vadd.f32 %v4536, %v4687
        %v4816 = vadd.f32 %v4537, %v4688
        %v4817 = vadd.f32 %v4538, %v4689
        %v4818 = vadd.f32 %v4539, %v4690
        %v4819 = vadd.f32 %v4540, %v4691
        %v4820 = vadd.f32 %v4541, %v4692
        %v4821 = vadd.f32 %v4542, %v4693
        %v4822 = vadd.f32 %v4543, %v4694
        %v4823 = vadd.f32 %v4544, %v4695
        %v4824 = vadd.f32 %v4545, %v4696
        %v4825 = vadd.f32 %v4546, %v4697
        %v4826 = vadd.f32 %v4547, %v4698
        %v4827 = vadd.f32 %v4548, %v4699
        %v4828 = vadd.f32 %v4549, %v4700
        %v4829 = vadd.f32 %v4550, %v4701
        %v4830 = vadd.f32 %v4551, %v4702
        %v4831 = vadd.f32 %v4552, %v4703
        %v4832 = vadd.f32 %v4553, %v4704
        %v4833 = vadd.f32 %v4554, %v4705
        %v4834 = vadd.f32 %v4555, %v4706
        %v4835 = vadd.f32 %v4556, %v4707
        %v4836 = vadd.f32 %v4557, %v4708
        %v4837 = vadd.f32 %v4558, %v4709
        %v4838 = vadd.f32 %v4559, %v4710
        %v4839 = vadd.f32 %v4560, %v4711
        %v4840 = vadd.f32 %v4561, %v4712
        %v4841 = vadd.f32 %v4562, %v4713
        %v4842 = vadd.f32 %v4563, %v4714
        %v4843 = vadd.f32 %v4564, %v4715
        %v4844 = vadd.f32 %v4565, %v4716
        %v4845 = vadd.f32 %v4566, %v4717
        %v4846 = vadd.f32 %v4567, %v4718
        %v4847 = vadd.f32 %v4568, %v4719
        %v4848 = vadd.f32 %v4569, %v4720
        %v4849 = vadd.f32 %v4570, %v4721
        %v4850 = vadd.f32 %v4571, %v4722
        %v4851 = vadd.f32 %v4572, %v4723
        %v4852 = vadd.f32 %v4573, %v4724
        %v4853 = vadd.f32 %v4574, %v4725
        %v4854 = vadd.f32 %v4575, %v4726
        %v4855 = vadd.f32 %v4576, %v4727
        %v4856 = vadd.f32 %v4577, %v4728
        %v4857 = vadd.f32 %v4578, %v4729
        %v4858 = vadd.f32 %v4579, %v4730
        %v4859 = vadd.f32 %v4580, %v4731
        %v4860 = vadd.f32 %v4581, %v4732
        %v4861 = vadd.f32 %v4582, %v4733
        %v4862 = vadd.f32 %v4583, %v4734
        %v4863 = vadd.f32 %v4584, %v4735
        %v4864 = vadd.f32 %v4585, %v4736
        %v4865 = vadd.f32 %v4586, %v4737
        %v4866 = vadd.f32 %v4587, %v4738
        %v4867 = vadd.f32 %v4588, %v4739
        %v4868 = vadd.f32 %v4589, %v4740
        %v4869 = vadd.f32 %v4590, %v4741
        %v4870 = vadd.f32 %v4591, %v4742
        %v4871 = vadd.f32 %v4592, %v4743
        %v4872 = vadd.f32 %v4593, %v4744
        %v4873 = vadd.f32 %v4594, %v4745
        %v4874 = vadd.f32 %v4595, %v4746
        %v4875 = vadd.f32 %v4596, %v4747
        %v4876 = vadd.f32 %v4597, %v4748
        %v4877 = vadd.f32 %v4598, %v4749
        %v4878 = vadd.f32 %v4599, %v4750
        %v4879 = vadd.f32 %v4600, %v4751
        %v4880 = vadd.f32 %v4601, %v4752
        %v4881 = vadd.f32 %v4602, %v4753
        %v4882 = vadd.f32 %v4603, %v4754
        %v4883 = vadd.f32 %v4604, %v4755
        %v4884 = vadd.f32 %v4605, %v4756
        %v4885 = vadd.f32 %v4606, %v4757
        %v4886 = vadd.f32 %v4607, %v4758
        %v4887 = vadd.f32 %v4608, %v4759
        %v4888 = vadd.f32 %v4609, %v4760
        %v4889 = vadd.f32 %v4610, %v4761
        %v4890 = vadd.f32 %v4611, %v4762
        %v4891 = vadd.f32 %v4612, %v4763
        %v4892 = vadd.f32 %v4613, %v4764
        %v4893 = vadd.f32 %v4614, %v4765
        %v4894 = vadd.f32 %v4615, %v4766
        %v4895 = vadd.f32 %v4616, %v4767
        %v4896 = vadd.f32 %v4617, %v4768
        %v4897 = vadd.f32 %v4618, %v4769
        %v4898 = vadd.f32 %v4619, %v4770
        %v4899 = vadd.f32 %v4620, %v4771
        %v4900 = vadd.f32 %v4621, %v4772
        %v4901 = vadd.f32 %v4622, %v4773
        %v4902 = vadd.f32 %v4623, %v4774
        %v4903 = vadd.f32 %v4624, %v4775
        %v4904 = vadd.f32 %v4625, %v4776
        %v4905 = vadd.f32 %v4626, %v4777
        %v4906 = vadd.f32 %v4627, %v4778
        %v4907 = vadd.f32 %v4628, %v4779
        %v4908 = vadd.f32 %v4629, %v4780
        %v4909 = vadd.f32 %v4630, %v4781
        %v4910 = vadd.f32 %v4631, %v4782
        %v4911 = vadd.f32 %v4632, %v4783
        %v4912 = vadd.f32 %v4633, %v4784
        %v4913 = vadd.f32 %v4634, %v4785
        %v4914 = vadd.f32 %v4635, %v4786
        %v4915 = vadd.f32 %v4636, %v4787
        %v4916 = vadd.f32 %v4637, %v4788
        %v4917 = vadd.f32 %v4638, %v4789
        %v4918 = vmax.f32 %v4790, 0.0
        %v4919 = vmax.f32 %v4791, 0.0
        %v4920 = vmax.f32 %v4792, 0.0
        %v4921 = vmax.f32 %v4793, 0.0
        %v4922 = vmax.f32 %v4794, 0.0
        %v4923 = vmax.f32 %v4795, 0.0
        %v4924 = vmax.f32 %v4796, 0.0
        %v4925 = vmax.f32 %v4797, 0.0
        %v4926 = vmax.f32 %v4798, 0.0
        %v4927 = vmax.f32 %v4799, 0.0
        %v4928 = vmax.f32 %v4800, 0.0
        %v4929 = vmax.f32 %v4801, 0.0
        %v4930 = vmax.f32 %v4802, 0.0
        %v4931 = vmax.f32 %v4803, 0.0
        %v4932 = vmax.f32 %v4804, 0.0
        %v4933 = vmax.f32 %v4805, 0.0
        %v4934 = vmax.f32 %v4806, 0.0
        %v4935 = vmax.f32 %v4807, 0.0
        %v4936 = vmax.f32 %v4808, 0.0
        %v4937 = vmax.f32 %v4809, 0.0
        %v4938 = vmax.f32 %v4810, 0.0
        %v4939 = vmax.f32 %v4811, 0.0
        %v4940 = vmax.f32 %v4812, 0.0
        %v4941 = vmax.f32 %v4813, 0.0
        %v4942 = vmax.f32 %v4814, 0.0
        %v4943 = vmax.f32 %v4815, 0.0
        %v4944 = vmax.f32 %v4816, 0.0
        %v4945 = vmax.f32 %v4817, 0.0
        %v4946 = vmax.f32 %v4818, 0.0
        %v4947 = vmax.f32 %v4819, 0.0
        %v4948 = vmax.f32 %v4820, 0.0
        %v4949 = vmax.f32 %v4821, 0.0
        %v4950 = vmax.f32 %v4822, 0.0
        %v4951 = vmax.f32 %v4823, 0.0
        %v4952 = vmax.f32 %v4824, 0.0
        %v4953 = vmax.f32 %v4825, 0.0
        %v4954 = vmax.f32 %v4826, 0.0
        %v4955 = vmax.f32 %v4827, 0.0
        %v4956 = vmax.f32 %v4828, 0.0
        %v4957 = vmax.f32 %v4829, 0.0
        %v4958 = vmax.f32 %v4830, 0.0
        %v4959 = vmax.f32 %v4831, 0.0
        %v4960 = vmax.f32 %v4832, 0.0
        %v4961 = vmax.f32 %v4833, 0.0
        %v4962 = vmax.f32 %v4834, 0.0
        %v4963 = vmax.f32 %v4835, 0.0
        %v4964 = vmax.f32 %v4836, 0.0
        %v4965 = vmax.f32 %v4837, 0.0
        %v4966 = vmax.f32 %v4838, 0.0
        %v4967 = vmax.f32 %v4839, 0.0
        %v4968 = vmax.f32 %v4840, 0.0
        %v4969 = vmax.f32 %v4841, 0.0
        %v4970 = vmax.f32 %v4842, 0.0
        %v4971 = vmax.f32 %v4843, 0.0
        %v4972 = vmax.f32 %v4844, 0.0
        %v4973 = vmax.f32 %v4845, 0.0
        %v4974 = vmax.f32 %v4846, 0.0
        %v4975 = vmax.f32 %v4847, 0.0
        %v4976 = vmax.f32 %v4848, 0.0
        %v4977 = vmax.f32 %v4849, 0.0
        %v4978 = vmax.f32 %v4850, 0.0
        %v4979 = vmax.f32 %v4851, 0.0
        %v4980 = vmax.f32 %v4852, 0.0
        %v4981 = vmax.f32 %v4853, 0.0
        %v4982 = vmax.f32 %v4854, 0.0
        %v4983 = vmax.f32 %v4855, 0.0
        %v4984 = vmax.f32 %v4856, 0.0
        %v4985 = vmax.f32 %v4857, 0.0
        %v4986 = vmax.f32 %v4858, 0.0
        %v4987 = vmax.f32 %v4859, 0.0
        %v4988 = vmax.f32 %v4860, 0.0
        %v4989 = vmax.f32 %v4861, 0.0
        %v4990 = vmax.f32 %v4862, 0.0
        %v4991 = vmax.f32 %v4863, 0.0
        %v4992 = vmax.f32 %v4864, 0.0
        %v4993 = vmax.f32 %v4865, 0.0
        %v4994 = vmax.f32 %v4866, 0.0
        %v4995 = vmax.f32 %v4867, 0.0
        %v4996 = vmax.f32 %v4868, 0.0
        %v4997 = vmax.f32 %v4869, 0.0
        %v4998 = vmax.f32 %v4870, 0.0
        %v4999 = vmax.f32 %v4871, 0.0
        %v5000 = vmax.f32 %v4872, 0.0
        %v5001 = vmax.f32 %v4873, 0.0
        %v5002 = vmax.f32 %v4874, 0.0
        %v5003 = vmax.f32 %v4875, 0.0
        %v5004 = vmax.f32 %v4876, 0.0
        %v5005 = vmax.f32 %v4877, 0.0
        %v5006 = vmax.f32 %v4878, 0.0
        %v5007 = vmax.f32 %v4879, 0.0
        %v5008 = vmax.f32 %v4880, 0.0
        %v5009 = vmax.f32 %v4881, 0.0
        %v5010 = vmax.f32 %v4882, 0.0
        %v5011 = vmax.f32 %v4883, 0.0
        %v5012 = vmax.f32 %v4884, 0.0
        %v5013 = vmax.f32 %v4885, 0.0
        %v5014 = vmax.f32 %v4886, 0.0
        %v5015 = vmax.f32 %v4887, 0.0
        %v5016 = vmax.f32 %v4888, 0.0
        %v5017 = vmax.f32 %v4889, 0.0
        %v5018 = vmax.f32 %v4890, 0.0
        %v5019 = vmax.f32 %v4891, 0.0
        %v5020 = vmax.f32 %v4892, 0.0
        %v5021 = vmax.f32 %v4893, 0.0
        %v5022 = vmax.f32 %v4894, 0.0
        %v5023 = vmax.f32 %v4895, 0.0
        %v5024 = vmax.f32 %v4896, 0.0
        %v5025 = vmax.f32 %v4897, 0.0
        %v5026 = vmax.f32 %v4898, 0.0
        %v5027 = vmax.f32 %v4899, 0.0
        %v5028 = vmax.f32 %v4900, 0.0
        %v5029 = vmax.f32 %v4901, 0.0
        %v5030 = vmax.f32 %v4902, 0.0
        %v5031 = vmax.f32 %v4903, 0.0
        %v5032 = vmax.f32 %v4904, 0.0
        %v5033 = vmax.f32 %v4905, 0.0
        %v5034 = vmax.f32 %v4906, 0.0
        %v5035 = vmax.f32 %v4907, 0.0
        %v5036 = vmax.f32 %v4908, 0.0
        %v5037 = vmax.f32 %v4909, 0.0
        %v5038 = vmax.f32 %v4910, 0.0
        %v5039 = vmax.f32 %v4911, 0.0
        %v5040 = vmax.f32 %v4912, 0.0
        %v5041 = vmax.f32 %v4913, 0.0
        %v5042 = vmax.f32 %v4914, 0.0
        %v5043 = vmax.f32 %v4915, 0.0
        %v5044 = vmax.f32 %v4916, 0.0
        %v5045 = vmax.f32 %v4917, 0.0
        %v5046 = vld [vmem:[#allocation2 + $0x60] sm:$0xff]
        %v5047 = vld [vmem:[#allocation2 + $0x68] sm:$0xff]
        %v5048 = vld [vmem:[#allocation2 + $0x70] sm:$0xff]
        %v5049 = vld [vmem:[#allocation2 + $0x78] sm:$0xff]
        %v5050 = vadd.f32 %v4918, %v4922
        %v5051 = vadd.f32 %v5050, %v4926
        %v5052 = vadd.f32 %v5051, %v4930
        %v5053 = vadd.f32 %v5052, %v4934
        %v5054 = vadd.f32 %v5053, %v4938
        %v5055 = vadd.f32 %v5054, %v4942
        %v5056 = vadd.f32 %v5055, %v4946
        %v5057 = vadd.f32 %v5056, %v4950
        %v5058 = vadd.f32 %v5057, %v4954
        %v5059 = vadd.f32 %v5058, %v4958
        %v5060 = vadd.f32 %v5059, %v4962
        %v5061 = vadd.f32 %v5060, %v4966
        %v5062 = vadd.f32 %v5061, %v4970
        %v5063 = vadd.f32 %v5062, %v4974
        %v5064 = vadd.f32 %v5063, %v4978
        %v5065 = vadd.f32 %v5064, %v4982
        %v5066 = vadd.f32 %v5065, %v4986
        %v5067 = vadd.f32 %v5066, %v4990
        %v5068 = vadd.f32 %v5067, %v4994
        %v5069 = vadd.f32 %v5068, %v4998
        %v5070 = vadd.f32 %v5069, %v5002
        %v5071 = vadd.f32 %v5070, %v5006
        %v5072 = vadd.f32 %v5071, %v5010
        %v5073 = vadd.f32 %v5072, %v5014
        %v5074 = vadd.f32 %v5073, %v5018
        %v5075 = vadd.f32 %v5074, %v5022
        %v5076 = vadd.f32 %v5075, %v5026
        %v5077 = vadd.f32 %v5076, %v5030
        %v5078 = vadd.f32 %v5077, %v5034
        %v5079 = vadd.f32 %v5078, %v5038
        %v5080 = vadd.f32 %v5079, %v5042
        %v5081 = vadd.f32 %v4919, %v4923
        %v5082 = vadd.f32 %v5081, %v4927
        %v5083 = vadd.f32 %v5082, %v4931
        %v5084 = vadd.f32 %v5083, %v4935
        %v5085 = vadd.f32 %v5084, %v4939
        %v5086 = vadd.f32 %v5085, %v4943
        %v5087 = vadd.f32 %v5086, %v4947
        %v5088 = vadd.f32 %v5087, %v4951
        %v5089 = vadd.f32 %v5088, %v4955
        %v5090 = vadd.f32 %v5089, %v4959
        %v5091 = vadd.f32 %v5090, %v4963
        %v5092 = vadd.f32 %v5091, %v4967
        %v5093 = vadd.f32 %v5092, %v4971
        %v5094 = vadd.f32 %v5093, %v4975
        %v5095 = vadd.f32 %v5094, %v4979
        %v5096 = vadd.f32 %v5095, %v4983
        %v5097 = vadd.f32 %v5096, %v4987
        %v5098 = vadd.f32 %v5097, %v4991
        %v5099 = vadd.f32 %v5098, %v4995
        %v5100 = vadd.f32 %v5099, %v4999
        %v5101 = vadd.f32 %v5100, %v5003
        %v5102 = vadd.f32 %v5101, %v5007
        %v5103 = vadd.f32 %v5102, %v5011
        %v5104 = vadd.f32 %v5103, %v5015
        %v5105 = vadd.f32 %v5104, %v5019
        %v5106 = vadd.f32 %v5105, %v5023
        %v5107 = vadd.f32 %v5106, %v5027
        %v5108 = vadd.f32 %v5107, %v5031
        %v5109 = vadd.f32 %v5108, %v5035
        %v5110 = vadd.f32 %v5109, %v5039
        %v5111 = vadd.f32 %v5110, %v5043
        %v5112 = vadd.f32 %v4920, %v4924
        %v5113 = vadd.f32 %v5112, %v4928
        %v5114 = vadd.f32 %v5113, %v4932
        %v5115 = vadd.f32 %v5114, %v4936
        %v5116 = vadd.f32 %v5115, %v4940
        %v5117 = vadd.f32 %v5116, %v4944
        %v5118 = vadd.f32 %v5117, %v4948
        %v5119 = vadd.f32 %v5118, %v4952
        %v5120 = vadd.f32 %v5119, %v4956
        %v5121 = vadd.f32 %v5120, %v4960
        %v5122 = vadd.f32 %v5121, %v4964
        %v5123 = vadd.f32 %v5122, %v4968
        %v5124 = vadd.f32 %v5123, %v4972
        %v5125 = vadd.f32 %v5124, %v4976
        %v5126 = vadd.f32 %v5125, %v4980
        %v5127 = vadd.f32 %v5126, %v4984
        %v5128 = vadd.f32 %v5127, %v4988
        %v5129 = vadd.f32 %v5128, %v4992
        %v5130 = vadd.f32 %v5129, %v4996
        %v5131 = vadd.f32 %v5130, %v5000
        %v5132 = vadd.f32 %v5131, %v5004
        %v5133 = vadd.f32 %v5132, %v5008
        %v5134 = vadd.f32 %v5133, %v5012
        %v5135 = vadd.f32 %v5134, %v5016
        %v5136 = vadd.f32 %v5135, %v5020
        %v5137 = vadd.f32 %v5136, %v5024
        %v5138 = vadd.f32 %v5137, %v5028
        %v5139 = vadd.f32 %v5138, %v5032
        %v5140 = vadd.f32 %v5139, %v5036
        %v5141 = vadd.f32 %v5140, %v5040
        %v5142 = vadd.f32 %v5141, %v5044
        %v5143 = vadd.f32 %v4921, %v4925
        %v5144 = vadd.f32 %v5143, %v4929
        %v5145 = vadd.f32 %v5144, %v4933
        %v5146 = vadd.f32 %v5145, %v4937
        %v5147 = vadd.f32 %v5146, %v4941
        %v5148 = vadd.f32 %v5147, %v4945
        %v5149 = vadd.f32 %v5148, %v4949
        %v5150 = vadd.f32 %v5149, %v4953
        %v5151 = vadd.f32 %v5150, %v4957
        %v5152 = vadd.f32 %v5151, %v4961
        %v5153 = vadd.f32 %v5152, %v4965
        %v5154 = vadd.f32 %v5153, %v4969
        %v5155 = vadd.f32 %v5154, %v4973
        %v5156 = vadd.f32 %v5155, %v4977
        %v5157 = vadd.f32 %v5156, %v4981
        %v5158 = vadd.f32 %v5157, %v4985
        %v5159 = vadd.f32 %v5158, %v4989
        %v5160 = vadd.f32 %v5159, %v4993
        %v5161 = vadd.f32 %v5160, %v4997
        %v5162 = vadd.f32 %v5161, %v5001
        %v5163 = vadd.f32 %v5162, %v5005
        %v5164 = vadd.f32 %v5163, %v5009
        %v5165 = vadd.f32 %v5164, %v5013
        %v5166 = vadd.f32 %v5165, %v5017
        %v5167 = vadd.f32 %v5166, %v5021
        %v5168 = vadd.f32 %v5167, %v5025
        %v5169 = vadd.f32 %v5168, %v5029
        %v5170 = vadd.f32 %v5169, %v5033
        %v5171 = vadd.f32 %v5170, %v5037
        %v5172 = vadd.f32 %v5171, %v5041
        %v5173 = vadd.f32 %v5172, %v5045
        %v5174 = vadd.f32 %v5046, %v5080
        %v5175 = vadd.f32 %v5047, %v5111
        %v5176 = vadd.f32 %v5048, %v5142
        %v5177 = vadd.f32 %v5049, %v5173
        %5178 = vst [vmem:[#allocation2 + $0x60] sm:$0xff] %v5174
        %5179 = vst [vmem:[#allocation2 + $0x68] sm:$0xff] %v5175
        %5180 = vst [vmem:[#allocation2 + $0x70] sm:$0xff] %v5176
        %5181 = vst [vmem:[#allocation2 + $0x78] sm:$0xff] %v5177
        // Predicated region
        $region45: #{captioning_forward.4} parent=31 // pred_check
          %p5182 = pneg %p223
        $region46: #{captioning_forward.4} parent=31 // pred_check_branch
          %5184 = sbr.rel (%p5182) target = $region48
        $region47: #{captioning_forward.4} parent=31 // pred_region
          %v5185 = vld [vmem:[#allocation2] sm:$0xff]
          %v5186 = vld [vmem:[#allocation2 + $0x8] sm:$0xff]
          %v5187 = vld [vmem:[#allocation2 + $0x10] sm:$0xff]
          %v5188 = vld [vmem:[#allocation2 + $0x18] sm:$0xff]
          %v5189 = vld [vmem:[#allocation2 + $0x20] sm:$0xff]
          %v5190 = vld [vmem:[#allocation2 + $0x28] sm:$0xff]
          %v5191 = vld [vmem:[#allocation2 + $0x30] sm:$0xff]
          %v5192 = vld [vmem:[#allocation2 + $0x38] sm:$0xff]
          %v5193 = vld [vmem:[#allocation2 + $0x40] sm:$0xff]
          %v5194 = vld [vmem:[#allocation2 + $0x48] sm:$0xff]
          %v5195 = vld [vmem:[#allocation2 + $0x50] sm:$0xff]
          %v5196 = vld [vmem:[#allocation2 + $0x58] sm:$0xff]
          %v5197 = vld [vmem:[#allocation2 + $0x60] sm:$0xff]
          %v5198 = vld [vmem:[#allocation2 + $0x68] sm:$0xff]
          %v5199 = vld [vmem:[#allocation2 + $0x70] sm:$0xff]
          %v5200 = vld [vmem:[#allocation2 + $0x78] sm:$0xff]
          %v5201 = vrot.slane %v5185, 4
          %v5202 = vadd.f32 %v5185, %v5201
          %v5203 = vrot.slane %v5202, 2
          %v5204 = vadd.f32 %v5202, %v5203
          %v5205 = vrot.slane %v5204, 1
          %v5206 = vadd.f32 %v5204, %v5205
          %v5207 = vrot.slane %v5186, 4
          %v5208 = vadd.f32 %v5186, %v5207
          %v5209 = vrot.slane %v5208, 2
          %v5210 = vadd.f32 %v5208, %v5209
          %v5211 = vrot.slane %v5210, 1
          %v5212 = vadd.f32 %v5210, %v5211
          %v5213 = vrot.slane %v5187, 4
          %v5214 = vadd.f32 %v5187, %v5213
          %v5215 = vrot.slane %v5214, 2
          %v5216 = vadd.f32 %v5214, %v5215
          %v5217 = vrot.slane %v5216, 1
          %v5218 = vadd.f32 %v5216, %v5217
          %v5219 = vrot.slane %v5188, 4
          %v5220 = vadd.f32 %v5188, %v5219
          %v5221 = vrot.slane %v5220, 2
          %v5222 = vadd.f32 %v5220, %v5221
          %v5223 = vrot.slane %v5222, 1
          %v5224 = vadd.f32 %v5222, %v5223
          %v5225 = vrot.slane %v5189, 4
          %v5226 = vadd.f32 %v5189, %v5225
          %v5227 = vrot.slane %v5226, 2
          %v5228 = vadd.f32 %v5226, %v5227
          %v5229 = vrot.slane %v5228, 1
          %v5230 = vadd.f32 %v5228, %v5229
          %v5231 = vrot.slane %v5190, 4
          %v5232 = vadd.f32 %v5190, %v5231
          %v5233 = vrot.slane %v5232, 2
          %v5234 = vadd.f32 %v5232, %v5233
          %v5235 = vrot.slane %v5234, 1
          %v5236 = vadd.f32 %v5234, %v5235
          %v5237 = vrot.slane %v5191, 4
          %v5238 = vadd.f32 %v5191, %v5237
          %v5239 = vrot.slane %v5238, 2
          %v5240 = vadd.f32 %v5238, %v5239
          %v5241 = vrot.slane %v5240, 1
          %v5242 = vadd.f32 %v5240, %v5241
          %v5243 = vrot.slane %v5192, 4
          %v5244 = vadd.f32 %v5192, %v5243
          %v5245 = vrot.slane %v5244, 2
          %v5246 = vadd.f32 %v5244, %v5245
          %v5247 = vrot.slane %v5246, 1
          %v5248 = vadd.f32 %v5246, %v5247
          %v5249 = vrot.slane %v5193, 4
          %v5250 = vadd.f32 %v5193, %v5249
          %v5251 = vrot.slane %v5250, 2
          %v5252 = vadd.f32 %v5250, %v5251
          %v5253 = vrot.slane %v5252, 1
          %v5254 = vadd.f32 %v5252, %v5253
          %v5255 = vrot.slane %v5194, 4
          %v5256 = vadd.f32 %v5194, %v5255
          %v5257 = vrot.slane %v5256, 2
          %v5258 = vadd.f32 %v5256, %v5257
          %v5259 = vrot.slane %v5258, 1
          %v5260 = vadd.f32 %v5258, %v5259
          %v5261 = vrot.slane %v5195, 4
          %v5262 = vadd.f32 %v5195, %v5261
          %v5263 = vrot.slane %v5262, 2
          %v5264 = vadd.f32 %v5262, %v5263
          %v5265 = vrot.slane %v5264, 1
          %v5266 = vadd.f32 %v5264, %v5265
          %v5267 = vrot.slane %v5196, 4
          %v5268 = vadd.f32 %v5196, %v5267
          %v5269 = vrot.slane %v5268, 2
          %v5270 = vadd.f32 %v5268, %v5269
          %v5271 = vrot.slane %v5270, 1
          %v5272 = vadd.f32 %v5270, %v5271
          %v5273 = vrot.slane %v5197, 4
          %v5274 = vadd.f32 %v5197, %v5273
          %v5275 = vrot.slane %v5274, 2
          %v5276 = vadd.f32 %v5274, %v5275
          %v5277 = vrot.slane %v5276, 1
          %v5278 = vadd.f32 %v5276, %v5277
          %v5279 = vrot.slane %v5198, 4
          %v5280 = vadd.f32 %v5198, %v5279
          %v5281 = vrot.slane %v5280, 2
          %v5282 = vadd.f32 %v5280, %v5281
          %v5283 = vrot.slane %v5282, 1
          %v5284 = vadd.f32 %v5282, %v5283
          %v5285 = vrot.slane %v5199, 4
          %v5286 = vadd.f32 %v5199, %v5285
          %v5287 = vrot.slane %v5286, 2
          %v5288 = vadd.f32 %v5286, %v5287
          %v5289 = vrot.slane %v5288, 1
          %v5290 = vadd.f32 %v5288, %v5289
          %v5291 = vrot.slane %v5200, 4
          %v5292 = vadd.f32 %v5200, %v5291
          %v5293 = vrot.slane %v5292, 2
          %v5294 = vadd.f32 %v5292, %v5293
          %v5295 = vrot.slane %v5294, 1
          %v5296 = vadd.f32 %v5294, %v5295
          %v5297 = vmul.f32 %v5206, 0.00390625
          %v5298 = vmul.f32 %v5212, 0.00390625
          %v5299 = vmul.f32 %v5218, 0.00390625
          %v5300 = vmul.f32 %v5224, 0.00390625
          %v5301 = vmul.f32 %v5230, 0.00390625
          %v5302 = vmul.f32 %v5236, 0.00390625
          %v5303 = vmul.f32 %v5242, 0.00390625
          %v5304 = vmul.f32 %v5248, 0.00390625
          %v5305 = vmul.f32 %v5254, 0.00390625
          %v5306 = vmul.f32 %v5260, 0.00390625
          %v5307 = vmul.f32 %v5266, 0.00390625
          %v5308 = vmul.f32 %v5272, 0.00390625
          %v5309 = vmul.f32 %v5278, 0.00390625
          %v5310 = vmul.f32 %v5284, 0.00390625
          %v5311 = vmul.f32 %v5290, 0.00390625
          %v5312 = vmul.f32 %v5296, 0.00390625
          %v5329 = vcombine.low %v5297, %v5298
          %v5330 = vcombine.low %v5299, %v5300
          %v5331 = vcombine.low %v5301, %v5302
          %v5332 = vcombine.low %v5303, %v5304
          %v5334 = vunpack.c.l.s4 1966171168
          %v5335 = vunpack.c.0.s8 %v5334
          %v5336 = vlaneseq
          %v5337 = vshrl.u32 %v5336, 7
          %v5338 = vsub.s32 %v5335, %v5337
          %v5339 = vrot.slane %v5329, %v5338
          %v5341 = vunpack.c.l.s4 1966171168
          %v5342 = vunpack.c.0.s8 %v5341
          %v5343 = vlaneseq
          %v5344 = vshrl.u32 %v5343, 7
          %v5345 = vsub.s32 %v5342, %v5344
          %v5346 = vrot.slane %v5330, %v5345
          %v5348 = vunpack.c.l.s4 1966171168
          %v5349 = vunpack.c.0.s8 %v5348
          %v5350 = vlaneseq
          %v5351 = vshrl.u32 %v5350, 7
          %v5352 = vsub.s32 %v5349, %v5351
          %v5353 = vrot.slane %v5331, %v5352
          %v5355 = vunpack.c.l.s4 1966171168
          %v5356 = vunpack.c.0.s8 %v5355
          %v5357 = vlaneseq
          %v5358 = vshrl.u32 %v5357, 7
          %v5359 = vsub.s32 %v5356, %v5358
          %v5360 = vrot.slane %v5332, %v5359
          %v5361 = vcombine.low %v5339, %v5346
          %v5362 = vcombine.low %v5353, %v5360
          %v5364 = vunpack.c.l.s4 1966171168
          %v5365 = vunpack.c.0.s8 %v5364
          %v5366 = vlaneseq
          %v5367 = vshrl.u32 %v5366, 7
          %v5368 = vsub.s32 %v5365, %v5367
          %v5369 = vrot.slane %v5361, %v5368
          %v5371 = vunpack.c.l.s4 1966171168
          %v5372 = vunpack.c.0.s8 %v5371
          %v5373 = vlaneseq
          %v5374 = vshrl.u32 %v5373, 7
          %v5375 = vsub.s32 %v5372, %v5374
          %v5376 = vrot.slane %v5362, %v5375
          %v5377 = vcombine.low %v5369, %v5376
          %v5378 = vcombine.low %v5305, %v5306
          %v5379 = vcombine.low %v5307, %v5308
          %v5380 = vcombine.low %v5309, %v5310
          %v5381 = vcombine.low %v5311, %v5312
          %v5383 = vunpack.c.l.s4 1966171168
          %v5384 = vunpack.c.0.s8 %v5383
          %v5385 = vlaneseq
          %v5386 = vshrl.u32 %v5385, 7
          %v5387 = vsub.s32 %v5384, %v5386
          %v5388 = vrot.slane %v5378, %v5387
          %v5390 = vunpack.c.l.s4 1966171168
          %v5391 = vunpack.c.0.s8 %v5390
          %v5392 = vlaneseq
          %v5393 = vshrl.u32 %v5392, 7
          %v5394 = vsub.s32 %v5391, %v5393
          %v5395 = vrot.slane %v5379, %v5394
          %v5397 = vunpack.c.l.s4 1966171168
          %v5398 = vunpack.c.0.s8 %v5397
          %v5399 = vlaneseq
          %v5400 = vshrl.u32 %v5399, 7
          %v5401 = vsub.s32 %v5398, %v5400
          %v5402 = vrot.slane %v5380, %v5401
          %v5404 = vunpack.c.l.s4 1966171168
          %v5405 = vunpack.c.0.s8 %v5404
          %v5406 = vlaneseq
          %v5407 = vshrl.u32 %v5406, 7
          %v5408 = vsub.s32 %v5405, %v5407
          %v5409 = vrot.slane %v5381, %v5408
          %v5410 = vcombine.low %v5388, %v5395
          %v5411 = vcombine.low %v5402, %v5409
          %v5413 = vunpack.c.l.s4 1966171168
          %v5414 = vunpack.c.0.s8 %v5413
          %v5415 = vlaneseq
          %v5416 = vshrl.u32 %v5415, 7
          %v5417 = vsub.s32 %v5414, %v5416
          %v5418 = vrot.slane %v5410, %v5417
          %v5420 = vunpack.c.l.s4 1966171168
          %v5421 = vunpack.c.0.s8 %v5420
          %v5422 = vlaneseq
          %v5423 = vshrl.u32 %v5422, 7
          %v5424 = vsub.s32 %v5421, %v5423
          %v5425 = vrot.slane %v5411, %v5424
          %v5426 = vcombine.low %v5418, %v5425
          %5429 = vst [vmem:[%s222] sm:$0xff] %v5377
          %5430 = vst [vmem:[%s222 + $0x8] sm:$0xff] %v5426
        $region48: #{captioning_forward.4} parent=31 // pred_fallthru
          _
        %p5431 = scmp.lt.s32.totalorder %s20, 1
        %s5432 = scalar_select %p5431, %s20, 1
        %s5433 = smul.addr %s5432, 16
        %s5434 = scalar_lea.vmem %s3, %s5433
        // Predicated region
        $region49: #{captioning_forward.4} parent=31 // pred_check
          %p5435 = pneg %p116
        $region50: #{captioning_forward.4} parent=31 // pred_check_branch
          %5437 = sbr.rel (%p5435) target = $region52
        $region51: #{captioning_forward.4} parent=31 // pred_region
          _
        $region52: #{captioning_forward.4} parent=31 // pred_fallthru
          _
      $region32: #{captioning_forward.4} parent=5 // pred_fallthru
        _
      %p5438 = scmp.le.s32.totalorder 2, %s11
      // Predicated region
      $region53: #{captioning_forward.4} parent=5 // pred_check
        %p5439 = pneg %p5438
      $region54: #{captioning_forward.4} parent=5 // pred_check_branch
        %5441 = sbr.rel (%p5439) target = $region56
      $region55: #{captioning_forward.4} parent=5 // pred_region
        %s5442 = ssub.s32 %s11, 2
        // Predicated region
        $region57: #{captioning_forward.4} parent=55 // pred_check
          %p5443 = pneg %p122
        $region58: #{captioning_forward.4} parent=55 // pred_check_branch
          %5445 = sbr.rel (%p5443) target = $region60
        $region59: #{captioning_forward.4} parent=55 // pred_region
          %p5446 = scmp.lt.s32.totalorder %s22, 1
          %s5447 = scalar_select %p5446, %s22, 1
          %s5448 = smul.addr %s5447, 16
          %s5449 = scalar_lea.vmem %s3, %s5448
        $region60: #{captioning_forward.4} parent=55 // pred_fallthru
          _
      $region56: #{captioning_forward.4} parent=5 // pred_fallthru
        _
    $region6: #{captioning_forward.4} parent=1 // loop_footer
      %s15 = sadd.s32 1, %s11
    $region7: #{captioning_forward.4} parent=1 // loop_footer_branch
      %10 = sbr.rel target = $region3
    $region8: #{captioning_forward.4} parent=1 // loop_exit
      _
    %5450 = vsyncpa [#allocation4], 1
    %s5451 = scalar_lea.sflag [#allocation4], 1
    %5452 = vsyncpa %s5451, 1
    %5453 = vsyncpa [#allocation6], 1

// kernel: captioning_forward.6
$region0: #{captioning_forward.6}
  #allocation0 [shape = 'u32[]', space=smem, size = 0x4, offset = 0x4, fixed_abs, tag = 'smem constant byte address 0x4 - core index']
  #allocation1 [shape = 'u32[144,128]{1,0:T(1,128)}', space=vmem, size = 0x12000, scoped, tag = 'internal scratch']
  #allocation2 [shape = 'f32[9,8,512]{2,1,0:T(8,128)}', space=vmem, size = 0x24000, scoped, tag = 'scratch operand']
  #allocation3 [shape = 'f32[8,128]{1,0:T(8,128)}', space=vmem, size = 0x1000, scoped, tag = 'scratch operand']
  #allocation4 [shape = 'f32[8,128]{1,0:T(8,128)}', space=vmem, size = 0x1000, scoped, tag = 'scratch operand']
  %s0 = inlined_call_operand.vmem [shape: f32[9,8,128], index: 0, kind: input, shape index: {}]
  %s1 = inlined_call_operand.vmem [shape: bf16[128,512], index: 1, kind: input, shape index: {}]
  %s2 = inlined_call_operand.vmem [shape: bf16[128,512], index: 2, kind: input, shape index: {}]
  %s3 = inlined_call_operand.vmem [shape: f32[1,512], index: 3, kind: input, shape index: {}]
  %s4 = inlined_call_operand.vmem [shape: bf16[9,8,128], index: 4, kind: output, shape index: {}]
  %s5 = sld [smem:[#allocation0]]
  $region26: #{captioning_forward.6} parent=0
    _
  %s7 = ssub.s32 1, %s5
  %s8 = scalar_select 0, %s7, %s5
  // Predicated region
  $region2: #{captioning_forward.6} parent=0 // pred_check
    _
  $region3: #{captioning_forward.6} parent=0 // pred_check_branch
    %10 = sbr.rel (0) target = $region5
  $region4: #{captioning_forward.6} parent=0 // pred_region
    _
  $region5: #{captioning_forward.6} parent=0 // pred_fallthru
    _
  // Predicated region
  $region6: #{captioning_forward.6} parent=0 // pred_check
    _
  $region7: #{captioning_forward.6} parent=0 // pred_check_branch
    %12 = sbr.rel (0) target = $region9
  $region8: #{captioning_forward.6} parent=0 // pred_region
    _
  $region9: #{captioning_forward.6} parent=0 // pred_fallthru
    _
  // Predicated region
  $region10: #{captioning_forward.6} parent=0 // pred_check
    _
  $region11: #{captioning_forward.6} parent=0 // pred_check_branch
    %14 = sbr.rel (0) target = $region13
  $region12: #{captioning_forward.6} parent=0 // pred_region
    _
  $region13: #{captioning_forward.6} parent=0 // pred_fallthru
    _
  // Predicated region
  $region14: #{captioning_forward.6} parent=0 // pred_check
    _
  $region15: #{captioning_forward.6} parent=0 // pred_check_branch
    %16 = sbr.rel (0) target = $region17
  $region16: #{captioning_forward.6} parent=0 // pred_region
    _
  $region17: #{captioning_forward.6} parent=0 // pred_fallthru
    _
  %v18 = vld [vmem:[%s0] sm:$0xff]
  %v19 = vld [vmem:[%s0 + $0x8] sm:$0xff]
  %v20 = vld [vmem:[%s0 + $0x10] sm:$0xff]
  %v21 = vld [vmem:[%s0 + $0x18] sm:$0xff]
  %v22 = vld [vmem:[%s0 + $0x20] sm:$0xff]
  %v23 = vld [vmem:[%s0 + $0x28] sm:$0xff]
  %v24 = vld [vmem:[%s0 + $0x30] sm:$0xff]
  %v25 = vld [vmem:[%s0 + $0x38] sm:$0xff]
  %v26 = vld [vmem:[%s0 + $0x40] sm:$0xff]
  %v27 = vpack.c.bf16 %v19, %v18
  %v28 = vpack.c.bf16 %v21, %v20
  %v29 = vpack.c.bf16 %v23, %v22
  %v30 = vpack.c.bf16 %v25, %v24
  %v31 = vpack.c.bf16 %v26, %v26
  %v32 = vld [vmem:[%s1] sm:$0xff]
  %v33 = vld [vmem:[%s1 + $0x8] sm:$0xff]
  %v34 = vld [vmem:[%s1 + $0x10] sm:$0xff]
  %v35 = vld [vmem:[%s1 + $0x18] sm:$0xff]
  %v36 = vld [vmem:[%s1 + $0x20] sm:$0xff]
  %v37 = vld [vmem:[%s1 + $0x28] sm:$0xff]
  %v38 = vld [vmem:[%s1 + $0x30] sm:$0xff]
  %v39 = vld [vmem:[%s1 + $0x38] sm:$0xff]
  %v40 = vld [vmem:[%s1 + $0x40] sm:$0xff]
  %v41 = vld [vmem:[%s1 + $0x48] sm:$0xff]
  %v42 = vld [vmem:[%s1 + $0x50] sm:$0xff]
  %v43 = vld [vmem:[%s1 + $0x58] sm:$0xff]
  %v44 = vld [vmem:[%s1 + $0x60] sm:$0xff]
  %v45 = vld [vmem:[%s1 + $0x68] sm:$0xff]
  %v46 = vld [vmem:[%s1 + $0x70] sm:$0xff]
  %v47 = vld [vmem:[%s1 + $0x78] sm:$0xff]
  %v48 = vld [vmem:[%s1 + $0x80] sm:$0xff]
  %v49 = vld [vmem:[%s1 + $0x88] sm:$0xff]
  %v50 = vld [vmem:[%s1 + $0x90] sm:$0xff]
  %v51 = vld [vmem:[%s1 + $0x98] sm:$0xff]
  %v52 = vld [vmem:[%s1 + $0xa0] sm:$0xff]
  %v53 = vld [vmem:[%s1 + $0xa8] sm:$0xff]
  %v54 = vld [vmem:[%s1 + $0xb0] sm:$0xff]
  %v55 = vld [vmem:[%s1 + $0xb8] sm:$0xff]
  %v56 = vld [vmem:[%s1 + $0xc0] sm:$0xff]
  %v57 = vld [vmem:[%s1 + $0xc8] sm:$0xff]
  %v58 = vld [vmem:[%s1 + $0xd0] sm:$0xff]
  %v59 = vld [vmem:[%s1 + $0xd8] sm:$0xff]
  %v60 = vld [vmem:[%s1 + $0xe0] sm:$0xff]
  %v61 = vld [vmem:[%s1 + $0xe8] sm:$0xff]
  %v62 = vld [vmem:[%s1 + $0xf0] sm:$0xff]
  %v63 = vld [vmem:[%s1 + $0xf8] sm:$0xff]
  %v64 = vld [vmem:[%s3] sm:$0xf]
  %v66 = vlaneseq
  %v67 = vshrl.u32 %v66, 7
  %v68 = vsub.s32 0, %v67
  %v69 = vrot.slane %v64, %v68
  %v70 = vlaneseq
  %v71 = vshrl.u32 %v70, 7
  %v72 = vsub.s32 1, %v71
  %v73 = vrot.slane %v64, %v72
  %v74 = vlaneseq
  %v75 = vshrl.u32 %v74, 7
  %v76 = vsub.s32 2, %v75
  %v77 = vrot.slane %v64, %v76
  %v78 = vlaneseq
  %v79 = vshrl.u32 %v78, 7
  %v80 = vsub.s32 3, %v79
  %v81 = vrot.slane %v64, %v80
  %v118 = vunpack.c.l.b16 %v32
  %v119 = vunpack.c.h.b16 %v32
  %v120 = vunpack.c.l.b16 %v33
  %v121 = vunpack.c.h.b16 %v33
  %v122 = vunpack.c.l.b16 %v34
  %v123 = vunpack.c.h.b16 %v34
  %v124 = vunpack.c.l.b16 %v35
  %v125 = vunpack.c.h.b16 %v35
  %v126 = vunpack.c.l.b16 %v36
  %v127 = vunpack.c.h.b16 %v36
  %v128 = vunpack.c.l.b16 %v37
  %v129 = vunpack.c.h.b16 %v37
  %v130 = vunpack.c.l.b16 %v38
  %v131 = vunpack.c.h.b16 %v38
  %v132 = vunpack.c.l.b16 %v39
  %v133 = vunpack.c.h.b16 %v39
  %v134 = vunpack.c.l.b16 %v40
  %v135 = vunpack.c.h.b16 %v40
  %v136 = vunpack.c.l.b16 %v41
  %v137 = vunpack.c.h.b16 %v41
  %v138 = vunpack.c.l.b16 %v42
  %v139 = vunpack.c.h.b16 %v42
  %v140 = vunpack.c.l.b16 %v43
  %v141 = vunpack.c.h.b16 %v43
  %v142 = vunpack.c.l.b16 %v44
  %v143 = vunpack.c.h.b16 %v44
  %v144 = vunpack.c.l.b16 %v45
  %v145 = vunpack.c.h.b16 %v45
  %v146 = vunpack.c.l.b16 %v46
  %v147 = vunpack.c.h.b16 %v46
  %v148 = vunpack.c.l.b16 %v47
  %v149 = vunpack.c.h.b16 %v47
  %v150 = vunpack.c.l.b16 %v48
  %v151 = vunpack.c.h.b16 %v48
  %v152 = vunpack.c.l.b16 %v49
  %v153 = vunpack.c.h.b16 %v49
  %v154 = vunpack.c.l.b16 %v50
  %v155 = vunpack.c.h.b16 %v50
  %v156 = vunpack.c.l.b16 %v51
  %v157 = vunpack.c.h.b16 %v51
  %v158 = vunpack.c.l.b16 %v52
  %v159 = vunpack.c.h.b16 %v52
  %v160 = vunpack.c.l.b16 %v53
  %v161 = vunpack.c.h.b16 %v53
  %v162 = vunpack.c.l.b16 %v54
  %v163 = vunpack.c.h.b16 %v54
  %v164 = vunpack.c.l.b16 %v55
  %v165 = vunpack.c.h.b16 %v55
  %v166 = vunpack.c.l.b16 %v56
  %v167 = vunpack.c.h.b16 %v56
  %v168 = vunpack.c.l.b16 %v57
  %v169 = vunpack.c.h.b16 %v57
  %v170 = vunpack.c.l.b16 %v58
  %v171 = vunpack.c.h.b16 %v58
  %v172 = vunpack.c.l.b16 %v59
  %v173 = vunpack.c.h.b16 %v59
  %v174 = vunpack.c.l.b16 %v60
  %v175 = vunpack.c.h.b16 %v60
  %v176 = vunpack.c.l.b16 %v61
  %v177 = vunpack.c.h.b16 %v61
  %v178 = vunpack.c.l.b16 %v62
  %v179 = vunpack.c.h.b16 %v62
  %v180 = vunpack.c.l.b16 %v63
  %v181 = vunpack.c.h.b16 %v63
  %v182 = vpack.c.b16 %v122, %v118
  %v183 = vpack.c.b16 %v123, %v119
  %v184 = vpack.c.b16 %v124, %v120
  %v185 = vpack.c.b16 %v125, %v121
  %v186 = vpack.c.b16 %v130, %v126
  %v187 = vpack.c.b16 %v131, %v127
  %v188 = vpack.c.b16 %v132, %v128
  %v189 = vpack.c.b16 %v133, %v129
  %v190 = vpack.c.b16 %v138, %v134
  %v191 = vpack.c.b16 %v139, %v135
  %v192 = vpack.c.b16 %v140, %v136
  %v193 = vpack.c.b16 %v141, %v137
  %v194 = vpack.c.b16 %v146, %v142
  %v195 = vpack.c.b16 %v147, %v143
  %v196 = vpack.c.b16 %v148, %v144
  %v197 = vpack.c.b16 %v149, %v145
  %v198 = vpack.c.b16 %v154, %v150
  %v199 = vpack.c.b16 %v155, %v151
  %v200 = vpack.c.b16 %v156, %v152
  %v201 = vpack.c.b16 %v157, %v153
  %v202 = vpack.c.b16 %v162, %v158
  %v203 = vpack.c.b16 %v163, %v159
  %v204 = vpack.c.b16 %v164, %v160
  %v205 = vpack.c.b16 %v165, %v161
  %v206 = vpack.c.b16 %v170, %v166
  %v207 = vpack.c.b16 %v171, %v167
  %v208 = vpack.c.b16 %v172, %v168
  %v209 = vpack.c.b16 %v173, %v169
  %v210 = vpack.c.b16 %v178, %v174
  %v211 = vpack.c.b16 %v179, %v175
  %v212 = vpack.c.b16 %v180, %v176
  %v213 = vpack.c.b16 %v181, %v177
  %246 = vmatprep.subr.bf16.mxu0 %v211
  %247 = vmatpush1.bf16.msra.mxu0 %v210
  %248 = vmatprep.subr.bf16.mxu0 %v207
  %249 = vmatpush1.bf16.msra.mxu0 %v206
  %250 = vmatprep.subr.bf16.mxu0 %v203
  %251 = vmatpush1.bf16.msra.mxu0 %v202
  %252 = vmatprep.subr.bf16.mxu0 %v199
  %253 = vmatpush1.bf16.msra.mxu0 %v198
  %254 = vmatprep.subr.bf16.mxu0 %v195
  %255 = vmatpush1.bf16.msra.mxu0 %v194
  %256 = vmatprep.subr.bf16.mxu0 %v191
  %257 = vmatpush1.bf16.msra.mxu0 %v190
  %258 = vmatprep.subr.bf16.mxu0 %v187
  %259 = vmatpush1.bf16.msra.mxu0 %v186
  %260 = vmatprep.subr.bf16.mxu0 %v183
  %261 = vmatpush1.bf16.msra.mxu0 %v182
  %262 = vmatprep.subr.bf16.mxu0 0
  %263 = vmatpush2.bf16.msra.mxu0 0
  %264 = vmatprep.subr.bf16.mxu0 0
  %265 = vmatpush2.bf16.msra.mxu0 0
  %266 = vmatprep.subr.bf16.mxu0 0
  %267 = vmatpush2.bf16.msra.mxu0 0
  %268 = vmatprep.subr.bf16.mxu0 0
  %269 = vmatpush2.bf16.msra.mxu0 0
  %270 = vmatprep.subr.bf16.mxu0 0
  %271 = vmatpush2.bf16.msra.mxu0 0
  %272 = vmatprep.subr.bf16.mxu0 0
  %273 = vmatpush2.bf16.msra.mxu0 0
  %274 = vmatprep.subr.bf16.mxu0 0
  %275 = vmatpush2.bf16.msra.mxu0 0
  %276 = vmatprep.subr.bf16.mxu0 0
  %277 = vmatpush2.bf16.msra.mxu0 0
  %278 = vmatprep.mubr.bf16.mxu0 0
  %279 = vmatmul.mubr.bf16.gmra.mxu0 %v27
  %v280 = vpop.f32.mrf.mxu0
  %v281 = vadd.f32 %v69, %v280
  %v282 = vpop.f32.mrf.mxu0
  %v283 = vadd.f32 %v73, %v282
  %v284 = vpop.f32.mrf.mxu0
  %v285 = vadd.f32 %v69, %v284
  %v286 = vpop.f32.mrf.mxu0
  %v287 = vadd.f32 %v73, %v286
  %288 = vmatprep.mubr.bf16.mxu0 0
  %289 = vmatmul.mubr.bf16.gmra.mxu0 %v28
  %v290 = vpop.f32.mrf.mxu0
  %v291 = vadd.f32 %v69, %v290
  %v292 = vpop.f32.mrf.mxu0
  %v293 = vadd.f32 %v73, %v292
  %v294 = vpop.f32.mrf.mxu0
  %v295 = vadd.f32 %v69, %v294
  %v296 = vpop.f32.mrf.mxu0
  %v297 = vadd.f32 %v73, %v296
  %298 = vmatprep.mubr.bf16.mxu0 0
  %299 = vmatmul.mubr.bf16.gmra.mxu0 %v29
  %v300 = vpop.f32.mrf.mxu0
  %v301 = vadd.f32 %v69, %v300
  %v302 = vpop.f32.mrf.mxu0
  %v303 = vadd.f32 %v73, %v302
  %v304 = vpop.f32.mrf.mxu0
  %v305 = vadd.f32 %v69, %v304
  %v306 = vpop.f32.mrf.mxu0
  %v307 = vadd.f32 %v73, %v306
  %308 = vmatprep.mubr.bf16.mxu0 0
  %309 = vmatmul.mubr.bf16.gmra.mxu0 %v30
  %v310 = vpop.f32.mrf.mxu0
  %v311 = vadd.f32 %v69, %v310
  %v312 = vpop.f32.mrf.mxu0
  %v313 = vadd.f32 %v73, %v312
  %v314 = vpop.f32.mrf.mxu0
  %v315 = vadd.f32 %v69, %v314
  %v316 = vpop.f32.mrf.mxu0
  %v317 = vadd.f32 %v73, %v316
  %318 = vmatprep.mubr.bf16.mxu0 0
  %319 = vmatmul.mubr.bf16.gmra.mxu0 %v31
  %v320 = vpop.f32.mrf.mxu0
  %v321 = vadd.f32 %v69, %v320
  %v322 = vpop.f32.mrf.mxu0
  %v323 = vadd.f32 %v73, %v322
  %v324 = vpop.f32.mrf.mxu0
  %v325 = vpop.f32.mrf.mxu0
  %326 = vdwg.mxu0
  %327 = vmatprep.subr.bf16.mxu0 %v213
  %328 = vmatpush1.bf16.msra.mxu0 %v212
  %329 = vmatprep.subr.bf16.mxu0 %v209
  %330 = vmatpush1.bf16.msra.mxu0 %v208
  %331 = vmatprep.subr.bf16.mxu0 %v205
  %332 = vmatpush1.bf16.msra.mxu0 %v204
  %333 = vmatprep.subr.bf16.mxu0 %v201
  %334 = vmatpush1.bf16.msra.mxu0 %v200
  %335 = vmatprep.subr.bf16.mxu0 %v197
  %336 = vmatpush1.bf16.msra.mxu0 %v196
  %337 = vmatprep.subr.bf16.mxu0 %v193
  %338 = vmatpush1.bf16.msra.mxu0 %v192
  %339 = vmatprep.subr.bf16.mxu0 %v189
  %340 = vmatpush1.bf16.msra.mxu0 %v188
  %341 = vmatprep.subr.bf16.mxu0 %v185
  %342 = vmatpush1.bf16.msra.mxu0 %v184
  %343 = vmatprep.subr.bf16.mxu0 0
  %344 = vmatpush2.bf16.msra.mxu0 0
  %345 = vmatprep.subr.bf16.mxu0 0
  %346 = vmatpush2.bf16.msra.mxu0 0
  %347 = vmatprep.subr.bf16.mxu0 0
  %348 = vmatpush2.bf16.msra.mxu0 0
  %349 = vmatprep.subr.bf16.mxu0 0
  %350 = vmatpush2.bf16.msra.mxu0 0
  %351 = vmatprep.subr.bf16.mxu0 0
  %352 = vmatpush2.bf16.msra.mxu0 0
  %353 = vmatprep.subr.bf16.mxu0 0
  %354 = vmatpush2.bf16.msra.mxu0 0
  %355 = vmatprep.subr.bf16.mxu0 0
  %356 = vmatpush2.bf16.msra.mxu0 0
  %357 = vmatprep.subr.bf16.mxu0 0
  %358 = vmatpush2.bf16.msra.mxu0 0
  %359 = vmatprep.mubr.bf16.mxu0 0
  %360 = vmatmul.mubr.bf16.gmra.mxu0 %v27
  %v361 = vpop.f32.mrf.mxu0
  %v362 = vadd.f32 %v77, %v361
  %v363 = vpop.f32.mrf.mxu0
  %v364 = vadd.f32 %v81, %v363
  %v365 = vpop.f32.mrf.mxu0
  %v366 = vadd.f32 %v77, %v365
  %v367 = vpop.f32.mrf.mxu0
  %v368 = vadd.f32 %v81, %v367
  %369 = vmatprep.mubr.bf16.mxu0 0
  %370 = vmatmul.mubr.bf16.gmra.mxu0 %v28
  %v371 = vpop.f32.mrf.mxu0
  %v372 = vadd.f32 %v77, %v371
  %v373 = vpop.f32.mrf.mxu0
  %v374 = vadd.f32 %v81, %v373
  %v375 = vpop.f32.mrf.mxu0
  %v376 = vadd.f32 %v77, %v375
  %v377 = vpop.f32.mrf.mxu0
  %v378 = vadd.f32 %v81, %v377
  %379 = vmatprep.mubr.bf16.mxu0 0
  %380 = vmatmul.mubr.bf16.gmra.mxu0 %v29
  %v381 = vpop.f32.mrf.mxu0
  %v382 = vadd.f32 %v77, %v381
  %v383 = vpop.f32.mrf.mxu0
  %v384 = vadd.f32 %v81, %v383
  %v385 = vpop.f32.mrf.mxu0
  %v386 = vadd.f32 %v77, %v385
  %v387 = vpop.f32.mrf.mxu0
  %v388 = vadd.f32 %v81, %v387
  %389 = vmatprep.mubr.bf16.mxu0 0
  %390 = vmatmul.mubr.bf16.gmra.mxu0 %v30
  %v391 = vpop.f32.mrf.mxu0
  %v392 = vadd.f32 %v77, %v391
  %v393 = vpop.f32.mrf.mxu0
  %v394 = vadd.f32 %v81, %v393
  %v395 = vpop.f32.mrf.mxu0
  %v396 = vadd.f32 %v77, %v395
  %v397 = vpop.f32.mrf.mxu0
  %v398 = vadd.f32 %v81, %v397
  %399 = vmatprep.mubr.bf16.mxu0 0
  %400 = vmatmul.mubr.bf16.gmra.mxu0 %v31
  %v401 = vpop.f32.mrf.mxu0
  %v402 = vadd.f32 %v77, %v401
  %v403 = vpop.f32.mrf.mxu0
  %v404 = vadd.f32 %v81, %v403
  %v405 = vpop.f32.mrf.mxu0
  %v406 = vpop.f32.mrf.mxu0
  %407 = vdwg.mxu0
  %408 = vst [vmem:[#allocation2] sm:$0xff] %v281
  %409 = vst [vmem:[#allocation2 + $0x8] sm:$0xff] %v283
  %410 = vst [vmem:[#allocation2 + $0x10] sm:$0xff] %v362
  %411 = vst [vmem:[#allocation2 + $0x18] sm:$0xff] %v364
  %412 = vst [vmem:[#allocation2 + $0x20] sm:$0xff] %v285
  %413 = vst [vmem:[#allocation2 + $0x28] sm:$0xff] %v287
  %414 = vst [vmem:[#allocation2 + $0x30] sm:$0xff] %v366
  %415 = vst [vmem:[#allocation2 + $0x38] sm:$0xff] %v368
  %416 = vst [vmem:[#allocation2 + $0x40] sm:$0xff] %v291
  %417 = vst [vmem:[#allocation2 + $0x48] sm:$0xff] %v293
  %418 = vst [vmem:[#allocation2 + $0x50] sm:$0xff] %v372
  %419 = vst [vmem:[#allocation2 + $0x58] sm:$0xff] %v374
  %420 = vst [vmem:[#allocation2 + $0x60] sm:$0xff] %v295
  %421 = vst [vmem:[#allocation2 + $0x68] sm:$0xff] %v297
  %422 = vst [vmem:[#allocation2 + $0x70] sm:$0xff] %v376
  %423 = vst [vmem:[#allocation2 + $0x78] sm:$0xff] %v378
  %424 = vst [vmem:[#allocation2 + $0x80] sm:$0xff] %v301
  %425 = vst [vmem:[#allocation2 + $0x88] sm:$0xff] %v303
  %426 = vst [vmem:[#allocation2 + $0x90] sm:$0xff] %v382
  %427 = vst [vmem:[#allocation2 + $0x98] sm:$0xff] %v384
  %428 = vst [vmem:[#allocation2 + $0xa0] sm:$0xff] %v305
  %429 = vst [vmem:[#allocation2 + $0xa8] sm:$0xff] %v307
  %430 = vst [vmem:[#allocation2 + $0xb0] sm:$0xff] %v386
  %431 = vst [vmem:[#allocation2 + $0xb8] sm:$0xff] %v388
  %432 = vst [vmem:[#allocation2 + $0xc0] sm:$0xff] %v311
  %433 = vst [vmem:[#allocation2 + $0xc8] sm:$0xff] %v313
  %434 = vst [vmem:[#allocation2 + $0xd0] sm:$0xff] %v392
  %435 = vst [vmem:[#allocation2 + $0xd8] sm:$0xff] %v394
  %436 = vst [vmem:[#allocation2 + $0xe0] sm:$0xff] %v315
  %437 = vst [vmem:[#allocation2 + $0xe8] sm:$0xff] %v317
  %438 = vst [vmem:[#allocation2 + $0xf0] sm:$0xff] %v396
  %439 = vst [vmem:[#allocation2 + $0xf8] sm:$0xff] %v398
  %440 = vst [vmem:[#allocation2 + $0x100] sm:$0xff] %v321
  %441 = vst [vmem:[#allocation2 + $0x108] sm:$0xff] %v323
  %442 = vst [vmem:[#allocation2 + $0x110] sm:$0xff] %v402
  %443 = vst [vmem:[#allocation2 + $0x118] sm:$0xff] %v404
  %444 = vst [vmem:[#allocation3] sm:$0xff] 0.0
  %445 = vst [vmem:[#allocation4] sm:$0xff] 0.0
  %v446 = vld [vmem:[#allocation2] sm:$0xff]
  %v447 = vld [vmem:[#allocation2 + $0x8] sm:$0xff]
  %v448 = vld [vmem:[#allocation2 + $0x10] sm:$0xff]
  %v449 = vld [vmem:[#allocation2 + $0x18] sm:$0xff]
  %v450 = vld [vmem:[#allocation3] sm:$0xff]
  %v451 = vpack.c.bf16 %v450, %v450
  %v452 = vld [vmem:[%s2] sm:$0xff]
  %v453 = vld [vmem:[%s2 + $0x8] sm:$0xff]
  %v454 = vld [vmem:[%s2 + $0x10] sm:$0xff]
  %v455 = vld [vmem:[%s2 + $0x18] sm:$0xff]
  %v456 = vld [vmem:[%s2 + $0x20] sm:$0xff]
  %v457 = vld [vmem:[%s2 + $0x28] sm:$0xff]
  %v458 = vld [vmem:[%s2 + $0x30] sm:$0xff]
  %v459 = vld [vmem:[%s2 + $0x38] sm:$0xff]
  %v460 = vld [vmem:[%s2 + $0x40] sm:$0xff]
  %v461 = vld [vmem:[%s2 + $0x48] sm:$0xff]
  %v462 = vld [vmem:[%s2 + $0x50] sm:$0xff]
  %v463 = vld [vmem:[%s2 + $0x58] sm:$0xff]
  %v464 = vld [vmem:[%s2 + $0x60] sm:$0xff]
  %v465 = vld [vmem:[%s2 + $0x68] sm:$0xff]
  %v466 = vld [vmem:[%s2 + $0x70] sm:$0xff]
  %v467 = vld [vmem:[%s2 + $0x78] sm:$0xff]
  %v468 = vld [vmem:[%s2 + $0x80] sm:$0xff]
  %v469 = vld [vmem:[%s2 + $0x88] sm:$0xff]
  %v470 = vld [vmem:[%s2 + $0x90] sm:$0xff]
  %v471 = vld [vmem:[%s2 + $0x98] sm:$0xff]
  %v472 = vld [vmem:[%s2 + $0xa0] sm:$0xff]
  %v473 = vld [vmem:[%s2 + $0xa8] sm:$0xff]
  %v474 = vld [vmem:[%s2 + $0xb0] sm:$0xff]
  %v475 = vld [vmem:[%s2 + $0xb8] sm:$0xff]
  %v476 = vld [vmem:[%s2 + $0xc0] sm:$0xff]
  %v477 = vld [vmem:[%s2 + $0xc8] sm:$0xff]
  %v478 = vld [vmem:[%s2 + $0xd0] sm:$0xff]
  %v479 = vld [vmem:[%s2 + $0xd8] sm:$0xff]
  %v480 = vld [vmem:[%s2 + $0xe0] sm:$0xff]
  %v481 = vld [vmem:[%s2 + $0xe8] sm:$0xff]
  %v482 = vld [vmem:[%s2 + $0xf0] sm:$0xff]
  %v483 = vld [vmem:[%s2 + $0xf8] sm:$0xff]
  %v516 = vunpack.c.l.b16 %v452
  %v517 = vunpack.c.h.b16 %v452
  %v518 = vunpack.c.l.b16 %v453
  %v519 = vunpack.c.h.b16 %v453
  %v520 = vunpack.c.l.b16 %v454
  %v521 = vunpack.c.h.b16 %v454
  %v522 = vunpack.c.l.b16 %v455
  %v523 = vunpack.c.h.b16 %v455
  %v524 = vunpack.c.l.b16 %v456
  %v525 = vunpack.c.h.b16 %v456
  %v526 = vunpack.c.l.b16 %v457
  %v527 = vunpack.c.h.b16 %v457
  %v528 = vunpack.c.l.b16 %v458
  %v529 = vunpack.c.h.b16 %v458
  %v530 = vunpack.c.l.b16 %v459
  %v531 = vunpack.c.h.b16 %v459
  %v532 = vunpack.c.l.b16 %v460
  %v533 = vunpack.c.h.b16 %v460
  %v534 = vunpack.c.l.b16 %v461
  %v535 = vunpack.c.h.b16 %v461
  %v536 = vunpack.c.l.b16 %v462
  %v537 = vunpack.c.h.b16 %v462
  %v538 = vunpack.c.l.b16 %v463
  %v539 = vunpack.c.h.b16 %v463
  %v540 = vunpack.c.l.b16 %v464
  %v541 = vunpack.c.h.b16 %v464
  %v542 = vunpack.c.l.b16 %v465
  %v543 = vunpack.c.h.b16 %v465
  %v544 = vunpack.c.l.b16 %v466
  %v545 = vunpack.c.h.b16 %v466
  %v546 = vunpack.c.l.b16 %v467
  %v547 = vunpack.c.h.b16 %v467
  %v548 = vunpack.c.l.b16 %v468
  %v549 = vunpack.c.h.b16 %v468
  %v550 = vunpack.c.l.b16 %v469
  %v551 = vunpack.c.h.b16 %v469
  %v552 = vunpack.c.l.b16 %v470
  %v553 = vunpack.c.h.b16 %v470
  %v554 = vunpack.c.l.b16 %v471
  %v555 = vunpack.c.h.b16 %v471
  %v556 = vunpack.c.l.b16 %v472
  %v557 = vunpack.c.h.b16 %v472
  %v558 = vunpack.c.l.b16 %v473
  %v559 = vunpack.c.h.b16 %v473
  %v560 = vunpack.c.l.b16 %v474
  %v561 = vunpack.c.h.b16 %v474
  %v562 = vunpack.c.l.b16 %v475
  %v563 = vunpack.c.h.b16 %v475
  %v564 = vunpack.c.l.b16 %v476
  %v565 = vunpack.c.h.b16 %v476
  %v566 = vunpack.c.l.b16 %v477
  %v567 = vunpack.c.h.b16 %v477
  %v568 = vunpack.c.l.b16 %v478
  %v569 = vunpack.c.h.b16 %v478
  %v570 = vunpack.c.l.b16 %v479
  %v571 = vunpack.c.h.b16 %v479
  %v572 = vunpack.c.l.b16 %v480
  %v573 = vunpack.c.h.b16 %v480
  %v574 = vunpack.c.l.b16 %v481
  %v575 = vunpack.c.h.b16 %v481
  %v576 = vunpack.c.l.b16 %v482
  %v577 = vunpack.c.h.b16 %v482
  %v578 = vunpack.c.l.b16 %v483
  %v579 = vunpack.c.h.b16 %v483
  %v580 = vpack.c.b16 %v520, %v516
  %v581 = vpack.c.b16 %v521, %v517
  %v582 = vpack.c.b16 %v522, %v518
  %v583 = vpack.c.b16 %v523, %v519
  %v584 = vpack.c.b16 %v528, %v524
  %v585 = vpack.c.b16 %v529, %v525
  %v586 = vpack.c.b16 %v530, %v526
  %v587 = vpack.c.b16 %v531, %v527
  %v588 = vpack.c.b16 %v536, %v532
  %v589 = vpack.c.b16 %v537, %v533
  %v590 = vpack.c.b16 %v538, %v534
  %v591 = vpack.c.b16 %v539, %v535
  %v592 = vpack.c.b16 %v544, %v540
  %v593 = vpack.c.b16 %v545, %v541
  %v594 = vpack.c.b16 %v546, %v542
  %v595 = vpack.c.b16 %v547, %v543
  %v596 = vpack.c.b16 %v552, %v548
  %v597 = vpack.c.b16 %v553, %v549
  %v598 = vpack.c.b16 %v554, %v550
  %v599 = vpack.c.b16 %v555, %v551
  %v600 = vpack.c.b16 %v560, %v556
  %v601 = vpack.c.b16 %v561, %v557
  %v602 = vpack.c.b16 %v562, %v558
  %v603 = vpack.c.b16 %v563, %v559
  %v604 = vpack.c.b16 %v568, %v564
  %v605 = vpack.c.b16 %v569, %v565
  %v606 = vpack.c.b16 %v570, %v566
  %v607 = vpack.c.b16 %v571, %v567
  %v608 = vpack.c.b16 %v576, %v572
  %v609 = vpack.c.b16 %v577, %v573
  %v610 = vpack.c.b16 %v578, %v574
  %v611 = vpack.c.b16 %v579, %v575
  %644 = vmatprep.subr.bf16.mxu0 %v609
  %645 = vmatpush1.bf16.msra.mxu0 %v608
  %646 = vmatprep.subr.bf16.mxu0 %v605
  %647 = vmatpush1.bf16.msra.mxu0 %v604
  %648 = vmatprep.subr.bf16.mxu0 %v601
  %649 = vmatpush1.bf16.msra.mxu0 %v600
  %650 = vmatprep.subr.bf16.mxu0 %v597
  %651 = vmatpush1.bf16.msra.mxu0 %v596
  %652 = vmatprep.subr.bf16.mxu0 %v593
  %653 = vmatpush1.bf16.msra.mxu0 %v592
  %654 = vmatprep.subr.bf16.mxu0 %v589
  %655 = vmatpush1.bf16.msra.mxu0 %v588
  %656 = vmatprep.subr.bf16.mxu0 %v585
  %657 = vmatpush1.bf16.msra.mxu0 %v584
  %658 = vmatprep.subr.bf16.mxu0 %v581
  %659 = vmatpush1.bf16.msra.mxu0 %v580
  %660 = vmatprep.subr.bf16.mxu0 0
  %661 = vmatpush2.bf16.msra.mxu0 0
  %662 = vmatprep.subr.bf16.mxu0 0
  %663 = vmatpush2.bf16.msra.mxu0 0
  %664 = vmatprep.subr.bf16.mxu0 0
  %665 = vmatpush2.bf16.msra.mxu0 0
  %666 = vmatprep.subr.bf16.mxu0 0
  %667 = vmatpush2.bf16.msra.mxu0 0
  %668 = vmatprep.subr.bf16.mxu0 0
  %669 = vmatpush2.bf16.msra.mxu0 0
  %670 = vmatprep.subr.bf16.mxu0 0
  %671 = vmatpush2.bf16.msra.mxu0 0
  %672 = vmatprep.subr.bf16.mxu0 0
  %673 = vmatpush2.bf16.msra.mxu0 0
  %674 = vmatprep.subr.bf16.mxu0 0
  %675 = vmatpush2.bf16.msra.mxu0 0
  %676 = vmatprep.mubr.bf16.mxu0 0
  %677 = vmatmul.mubr.bf16.gmra.mxu0 %v451
  %v678 = vpop.f32.mrf.mxu0
  %v679 = vadd.f32 0.0, %v678
  %v680 = vpop.f32.mrf.mxu0
  %v681 = vadd.f32 0.0, %v680
  %v682 = vpop.f32.mrf.mxu0
  %v683 = vpop.f32.mrf.mxu0
  %684 = vdwg.mxu0
  %685 = vmatprep.subr.bf16.mxu0 %v611
  %686 = vmatpush1.bf16.msra.mxu0 %v610
  %687 = vmatprep.subr.bf16.mxu0 %v607
  %688 = vmatpush1.bf16.msra.mxu0 %v606
  %689 = vmatprep.subr.bf16.mxu0 %v603
  %690 = vmatpush1.bf16.msra.mxu0 %v602
  %691 = vmatprep.subr.bf16.mxu0 %v599
  %692 = vmatpush1.bf16.msra.mxu0 %v598
  %693 = vmatprep.subr.bf16.mxu0 %v595
  %694 = vmatpush1.bf16.msra.mxu0 %v594
  %695 = vmatprep.subr.bf16.mxu0 %v591
  %696 = vmatpush1.bf16.msra.mxu0 %v590
  %697 = vmatprep.subr.bf16.mxu0 %v587
  %698 = vmatpush1.bf16.msra.mxu0 %v586
  %699 = vmatprep.subr.bf16.mxu0 %v583
  %700 = vmatpush1.bf16.msra.mxu0 %v582
  %701 = vmatprep.subr.bf16.mxu0 0
  %702 = vmatpush2.bf16.msra.mxu0 0
  %703 = vmatprep.subr.bf16.mxu0 0
  %704 = vmatpush2.bf16.msra.mxu0 0
  %705 = vmatprep.subr.bf16.mxu0 0
  %706 = vmatpush2.bf16.msra.mxu0 0
  %707 = vmatprep.subr.bf16.mxu0 0
  %708 = vmatpush2.bf16.msra.mxu0 0
  %709 = vmatprep.subr.bf16.mxu0 0
  %710 = vmatpush2.bf16.msra.mxu0 0
  %711 = vmatprep.subr.bf16.mxu0 0
  %712 = vmatpush2.bf16.msra.mxu0 0
  %713 = vmatprep.subr.bf16.mxu0 0
  %714 = vmatpush2.bf16.msra.mxu0 0
  %715 = vmatprep.subr.bf16.mxu0 0
  %716 = vmatpush2.bf16.msra.mxu0 0
  %717 = vmatprep.mubr.bf16.mxu0 0
  %718 = vmatmul.mubr.bf16.gmra.mxu0 %v451
  %v719 = vpop.f32.mrf.mxu0
  %v720 = vadd.f32 0.0, %v719
  %v721 = vpop.f32.mrf.mxu0
  %v722 = vadd.f32 0.0, %v721
  %v723 = vpop.f32.mrf.mxu0
  %v724 = vpop.f32.mrf.mxu0
  %725 = vdwg.mxu0
  %v726 = vadd.f32 %v446, %v679
  %v727 = vadd.f32 %v447, %v681
  %v728 = vadd.f32 %v448, %v720
  %v729 = vadd.f32 %v449, %v722
  %v730 = vxor.u32 %v726, 2147483648
  %v731 = vmul.f32 %v730, 1.442695
  %v732 = vpow.pop %v731
  %v733 = vadd.f32 %v732, 1.0
  %v734 = vrcp.pop %v733
  %v735 = vmul.f32 1.0, %v734
  %v736 = vxor.u32 %v727, 2147483648
  %v737 = vmul.f32 %v736, 1.442695
  %v738 = vpow.pop %v737
  %v739 = vadd.f32 %v738, 1.0
  %v740 = vrcp.pop %v739
  %v741 = vmul.f32 1.0, %v740
  %v742 = vtanh.pop %v728
  %v743 = vxor.u32 %v729, 2147483648
  %v744 = vmul.f32 %v743, 1.442695
  %v745 = vpow.pop %v744
  %v746 = vadd.f32 %v745, 1.0
  %v747 = vrcp.pop %v746
  %v748 = vmul.f32 1.0, %v747
  %v749 = vld [vmem:[#allocation4] sm:$0xff]
  %v750 = vmul.f32 %v741, %v749
  %v751 = vmul.f32 %v735, %v742
  %v752 = vadd.f32 %v750, %v751
  %v753 = vtanh.pop %v752
  %v754 = vmul.f32 %v748, %v753
  %755 = vst [vmem:[#allocation4] sm:$0xff] %v752
  %756 = vst [vmem:[#allocation3] sm:$0xff] %v754
  %v757 = vpack.c.bf16 %v754, %v754
  %758 = vst [vmem:[%s4] sm:$0xf] %v757
  %s759 = scalar_lea.vmem [#allocation2], 32
  %v760 = vld [vmem:[%s759] sm:$0xff]
  %v761 = vld [vmem:[%s759 + $0x8] sm:$0xff]
  %v762 = vld [vmem:[%s759 + $0x10] sm:$0xff]
  %v763 = vld [vmem:[%s759 + $0x18] sm:$0xff]
  %v764 = vld [vmem:[#allocation3] sm:$0xff]
  %v765 = vpack.c.bf16 %v764, %v764
  %v766 = vld [vmem:[%s2] sm:$0xff]
  %v767 = vld [vmem:[%s2 + $0x8] sm:$0xff]
  %v768 = vld [vmem:[%s2 + $0x10] sm:$0xff]
  %v769 = vld [vmem:[%s2 + $0x18] sm:$0xff]
  %v770 = vld [vmem:[%s2 + $0x20] sm:$0xff]
  %v771 = vld [vmem:[%s2 + $0x28] sm:$0xff]
  %v772 = vld [vmem:[%s2 + $0x30] sm:$0xff]
  %v773 = vld [vmem:[%s2 + $0x38] sm:$0xff]
  %v774 = vld [vmem:[%s2 + $0x40] sm:$0xff]
  %v775 = vld [vmem:[%s2 + $0x48] sm:$0xff]
  %v776 = vld [vmem:[%s2 + $0x50] sm:$0xff]
  %v777 = vld [vmem:[%s2 + $0x58] sm:$0xff]
  %v778 = vld [vmem:[%s2 + $0x60] sm:$0xff]
  %v779 = vld [vmem:[%s2 + $0x68] sm:$0xff]
  %v780 = vld [vmem:[%s2 + $0x70] sm:$0xff]
  %v781 = vld [vmem:[%s2 + $0x78] sm:$0xff]
  %v782 = vld [vmem:[%s2 + $0x80] sm:$0xff]
  %v783 = vld [vmem:[%s2 + $0x88] sm:$0xff]
  %v784 = vld [vmem:[%s2 + $0x90] sm:$0xff]
  %v785 = vld [vmem:[%s2 + $0x98] sm:$0xff]
  %v786 = vld [vmem:[%s2 + $0xa0] sm:$0xff]
  %v787 = vld [vmem:[%s2 + $0xa8] sm:$0xff]
  %v788 = vld [vmem:[%s2 + $0xb0] sm:$0xff]
  %v789 = vld [vmem:[%s2 + $0xb8] sm:$0xff]
  %v790 = vld [vmem:[%s2 + $0xc0] sm:$0xff]
  %v791 = vld [vmem:[%s2 + $0xc8] sm:$0xff]
  %v792 = vld [vmem:[%s2 + $0xd0] sm:$0xff]
  %v793 = vld [vmem:[%s2 + $0xd8] sm:$0xff]
  %v794 = vld [vmem:[%s2 + $0xe0] sm:$0xff]
  %v795 = vld [vmem:[%s2 + $0xe8] sm:$0xff]
  %v796 = vld [vmem:[%s2 + $0xf0] sm:$0xff]
  %v797 = vld [vmem:[%s2 + $0xf8] sm:$0xff]
  %v830 = vunpack.c.l.b16 %v766
  %v831 = vunpack.c.h.b16 %v766
  %v832 = vunpack.c.l.b16 %v767
  %v833 = vunpack.c.h.b16 %v767
  %v834 = vunpack.c.l.b16 %v768
  %v835 = vunpack.c.h.b16 %v768
  %v836 = vunpack.c.l.b16 %v769
  %v837 = vunpack.c.h.b16 %v769
  %v838 = vunpack.c.l.b16 %v770
  %v839 = vunpack.c.h.b16 %v770
  %v840 = vunpack.c.l.b16 %v771
  %v841 = vunpack.c.h.b16 %v771
  %v842 = vunpack.c.l.b16 %v772
  %v843 = vunpack.c.h.b16 %v772
  %v844 = vunpack.c.l.b16 %v773
  %v845 = vunpack.c.h.b16 %v773
  %v846 = vunpack.c.l.b16 %v774
  %v847 = vunpack.c.h.b16 %v774
  %v848 = vunpack.c.l.b16 %v775
  %v849 = vunpack.c.h.b16 %v775
  %v850 = vunpack.c.l.b16 %v776
  %v851 = vunpack.c.h.b16 %v776
  %v852 = vunpack.c.l.b16 %v777
  %v853 = vunpack.c.h.b16 %v777
  %v854 = vunpack.c.l.b16 %v778
  %v855 = vunpack.c.h.b16 %v778
  %v856 = vunpack.c.l.b16 %v779
  %v857 = vunpack.c.h.b16 %v779
  %v858 = vunpack.c.l.b16 %v780
  %v859 = vunpack.c.h.b16 %v780
  %v860 = vunpack.c.l.b16 %v781
  %v861 = vunpack.c.h.b16 %v781
  %v862 = vunpack.c.l.b16 %v782
  %v863 = vunpack.c.h.b16 %v782
  %v864 = vunpack.c.l.b16 %v783
  %v865 = vunpack.c.h.b16 %v783
  %v866 = vunpack.c.l.b16 %v784
  %v867 = vunpack.c.h.b16 %v784
  %v868 = vunpack.c.l.b16 %v785
  %v869 = vunpack.c.h.b16 %v785
  %v870 = vunpack.c.l.b16 %v786
  %v871 = vunpack.c.h.b16 %v786
  %v872 = vunpack.c.l.b16 %v787
  %v873 = vunpack.c.h.b16 %v787
  %v874 = vunpack.c.l.b16 %v788
  %v875 = vunpack.c.h.b16 %v788
  %v876 = vunpack.c.l.b16 %v789
  %v877 = vunpack.c.h.b16 %v789
  %v878 = vunpack.c.l.b16 %v790
  %v879 = vunpack.c.h.b16 %v790
  %v880 = vunpack.c.l.b16 %v791
  %v881 = vunpack.c.h.b16 %v791
  %v882 = vunpack.c.l.b16 %v792
  %v883 = vunpack.c.h.b16 %v792
  %v884 = vunpack.c.l.b16 %v793
  %v885 = vunpack.c.h.b16 %v793
  %v886 = vunpack.c.l.b16 %v794
  %v887 = vunpack.c.h.b16 %v794
  %v888 = vunpack.c.l.b16 %v795
  %v889 = vunpack.c.h.b16 %v795
  %v890 = vunpack.c.l.b16 %v796
  %v891 = vunpack.c.h.b16 %v796
  %v892 = vunpack.c.l.b16 %v797
  %v893 = vunpack.c.h.b16 %v797
  %v894 = vpack.c.b16 %v834, %v830
  %v895 = vpack.c.b16 %v835, %v831
  %v896 = vpack.c.b16 %v836, %v832
  %v897 = vpack.c.b16 %v837, %v833
  %v898 = vpack.c.b16 %v842, %v838
  %v899 = vpack.c.b16 %v843, %v839
  %v900 = vpack.c.b16 %v844, %v840
  %v901 = vpack.c.b16 %v845, %v841
  %v902 = vpack.c.b16 %v850, %v846
  %v903 = vpack.c.b16 %v851, %v847
  %v904 = vpack.c.b16 %v852, %v848
  %v905 = vpack.c.b16 %v853, %v849
  %v906 = vpack.c.b16 %v858, %v854
  %v907 = vpack.c.b16 %v859, %v855
  %v908 = vpack.c.b16 %v860, %v856
  %v909 = vpack.c.b16 %v861, %v857
  %v910 = vpack.c.b16 %v866, %v862
  %v911 = vpack.c.b16 %v867, %v863
  %v912 = vpack.c.b16 %v868, %v864
  %v913 = vpack.c.b16 %v869, %v865
  %v914 = vpack.c.b16 %v874, %v870
  %v915 = vpack.c.b16 %v875, %v871
  %v916 = vpack.c.b16 %v876, %v872
  %v917 = vpack.c.b16 %v877, %v873
  %v918 = vpack.c.b16 %v882, %v878
  %v919 = vpack.c.b16 %v883, %v879
  %v920 = vpack.c.b16 %v884, %v880
  %v921 = vpack.c.b16 %v885, %v881
  %v922 = vpack.c.b16 %v890, %v886
  %v923 = vpack.c.b16 %v891, %v887
  %v924 = vpack.c.b16 %v892, %v888
  %v925 = vpack.c.b16 %v893, %v889
  %958 = vmatprep.subr.bf16.mxu0 %v923
  %959 = vmatpush1.bf16.msra.mxu0 %v922
  %960 = vmatprep.subr.bf16.mxu0 %v919
  %961 = vmatpush1.bf16.msra.mxu0 %v918
  %962 = vmatprep.subr.bf16.mxu0 %v915
  %963 = vmatpush1.bf16.msra.mxu0 %v914
  %964 = vmatprep.subr.bf16.mxu0 %v911
  %965 = vmatpush1.bf16.msra.mxu0 %v910
  %966 = vmatprep.subr.bf16.mxu0 %v907
  %967 = vmatpush1.bf16.msra.mxu0 %v906
  %968 = vmatprep.subr.bf16.mxu0 %v903
  %969 = vmatpush1.bf16.msra.mxu0 %v902
  %970 = vmatprep.subr.bf16.mxu0 %v899
  %971 = vmatpush1.bf16.msra.mxu0 %v898
  %972 = vmatprep.subr.bf16.mxu0 %v895
  %973 = vmatpush1.bf16.msra.mxu0 %v894
  %974 = vmatprep.subr.bf16.mxu0 0
  %975 = vmatpush2.bf16.msra.mxu0 0
  %976 = vmatprep.subr.bf16.mxu0 0
  %977 = vmatpush2.bf16.msra.mxu0 0
  %978 = vmatprep.subr.bf16.mxu0 0
  %979 = vmatpush2.bf16.msra.mxu0 0
  %980 = vmatprep.subr.bf16.mxu0 0
  %981 = vmatpush2.bf16.msra.mxu0 0
  %982 = vmatprep.subr.bf16.mxu0 0
  %983 = vmatpush2.bf16.msra.mxu0 0
  %984 = vmatprep.subr.bf16.mxu0 0
  %985 = vmatpush2.bf16.msra.mxu0 0
  %986 = vmatprep.subr.bf16.mxu0 0
  %987 = vmatpush2.bf16.msra.mxu0 0
  %988 = vmatprep.subr.bf16.mxu0 0
  %989 = vmatpush2.bf16.msra.mxu0 0
  %990 = vmatprep.mubr.bf16.mxu0 0
  %991 = vmatmul.mubr.bf16.gmra.mxu0 %v765
  %v992 = vpop.f32.mrf.mxu0
  %v993 = vadd.f32 0.0, %v992
  %v994 = vpop.f32.mrf.mxu0
  %v995 = vadd.f32 0.0, %v994
  %v996 = vpop.f32.mrf.mxu0
  %v997 = vpop.f32.mrf.mxu0
  %998 = vdwg.mxu0
  %999 = vmatprep.subr.bf16.mxu0 %v925
  %1000 = vmatpush1.bf16.msra.mxu0 %v924
  %1001 = vmatprep.subr.bf16.mxu0 %v921
  %1002 = vmatpush1.bf16.msra.mxu0 %v920
  %1003 = vmatprep.subr.bf16.mxu0 %v917
  %1004 = vmatpush1.bf16.msra.mxu0 %v916
  %1005 = vmatprep.subr.bf16.mxu0 %v913
  %1006 = vmatpush1.bf16.msra.mxu0 %v912
  %1007 = vmatprep.subr.bf16.mxu0 %v909
  %1008 = vmatpush1.bf16.msra.mxu0 %v908
  %1009 = vmatprep.subr.bf16.mxu0 %v905
  %1010 = vmatpush1.bf16.msra.mxu0 %v904
  %1011 = vmatprep.subr.bf16.mxu0 %v901
  %1012 = vmatpush1.bf16.msra.mxu0 %v900
  %1013 = vmatprep.subr.bf16.mxu0 %v897
  %1014 = vmatpush1.bf16.msra.mxu0 %v896
  %1015 = vmatprep.subr.bf16.mxu0 0
  %1016 = vmatpush2.bf16.msra.mxu0 0
  %1017 = vmatprep.subr.bf16.mxu0 0
  %1018 = vmatpush2.bf16.msra.mxu0 0
  %1019 = vmatprep.subr.bf16.mxu0 0
  %1020 = vmatpush2.bf16.msra.mxu0 0
  %1021 = vmatprep.subr.bf16.mxu0 0
  %1022 = vmatpush2.bf16.msra.mxu0 0
  %1023 = vmatprep.subr.bf16.mxu0 0
  %1024 = vmatpush2.bf16.msra.mxu0 0
  %1025 = vmatprep.subr.bf16.mxu0 0
  %1026 = vmatpush2.bf16.msra.mxu0 0
  %1027 = vmatprep.subr.bf16.mxu0 0
  %1028 = vmatpush2.bf16.msra.mxu0 0
  %1029 = vmatprep.subr.bf16.mxu0 0
  %1030 = vmatpush2.bf16.msra.mxu0 0
  %1031 = vmatprep.mubr.bf16.mxu0 0
  %1032 = vmatmul.mubr.bf16.gmra.mxu0 %v765
  %v1033 = vpop.f32.mrf.mxu0
  %v1034 = vadd.f32 0.0, %v1033
  %v1035 = vpop.f32.mrf.mxu0
  %v1036 = vadd.f32 0.0, %v1035
  %v1037 = vpop.f32.mrf.mxu0
  %v1038 = vpop.f32.mrf.mxu0
  %1039 = vdwg.mxu0
  %v1040 = vadd.f32 %v760, %v993
  %v1041 = vadd.f32 %v761, %v995
  %v1042 = vadd.f32 %v762, %v1034
  %v1043 = vadd.f32 %v763, %v1036
  %v1044 = vxor.u32 %v1040, 2147483648
  %v1045 = vmul.f32 %v1044, 1.442695
  %v1046 = vpow.pop %v1045
  %v1047 = vadd.f32 %v1046, 1.0
  %v1048 = vrcp.pop %v1047
  %v1049 = vmul.f32 1.0, %v1048
  %v1050 = vxor.u32 %v1041, 2147483648
  %v1051 = vmul.f32 %v1050, 1.442695
  %v1052 = vpow.pop %v1051
  %v1053 = vadd.f32 %v1052, 1.0
  %v1054 = vrcp.pop %v1053
  %v1055 = vmul.f32 1.0, %v1054
  %v1056 = vtanh.pop %v1042
  %v1057 = vxor.u32 %v1043, 2147483648
  %v1058 = vmul.f32 %v1057, 1.442695
  %v1059 = vpow.pop %v1058
  %v1060 = vadd.f32 %v1059, 1.0
  %v1061 = vrcp.pop %v1060
  %v1062 = vmul.f32 1.0, %v1061
  %v1063 = vld [vmem:[#allocation4] sm:$0xff]
  %v1064 = vmul.f32 %v1055, %v1063
  %v1065 = vmul.f32 %v1049, %v1056
  %v1066 = vadd.f32 %v1064, %v1065
  %v1067 = vtanh.pop %v1066
  %v1068 = vmul.f32 %v1062, %v1067
  %1069 = vst [vmem:[#allocation4] sm:$0xff] %v1066
  %1070 = vst [vmem:[#allocation3] sm:$0xff] %v1068
  %v1071 = vpack.c.bf16 %v1068, %v1068
  %s1072 = scalar_lea.vmem %s4, 4
  %1073 = vst [vmem:[%s1072] sm:$0xf] %v1071
  %s1074 = scalar_lea.vmem [#allocation2], 64
  %v1075 = vld [vmem:[%s1074] sm:$0xff]
  %v1076 = vld [vmem:[%s1074 + $0x8] sm:$0xff]
  %v1077 = vld [vmem:[%s1074 + $0x10] sm:$0xff]
  %v1078 = vld [vmem:[%s1074 + $0x18] sm:$0xff]
  %v1079 = vld [vmem:[#allocation3] sm:$0xff]
  %v1080 = vpack.c.bf16 %v1079, %v1079
  %v1081 = vld [vmem:[%s2] sm:$0xff]
  %v1082 = vld [vmem:[%s2 + $0x8] sm:$0xff]
  %v1083 = vld [vmem:[%s2 + $0x10] sm:$0xff]
  %v1084 = vld [vmem:[%s2 + $0x18] sm:$0xff]
  %v1085 = vld [vmem:[%s2 + $0x20] sm:$0xff]
  %v1086 = vld [vmem:[%s2 + $0x28] sm:$0xff]
  %v1087 = vld [vmem:[%s2 + $0x30] sm:$0xff]
  %v1088 = vld [vmem:[%s2 + $0x38] sm:$0xff]
  %v1089 = vld [vmem:[%s2 + $0x40] sm:$0xff]
  %v1090 = vld [vmem:[%s2 + $0x48] sm:$0xff]
  %v1091 = vld [vmem:[%s2 + $0x50] sm:$0xff]
  %v1092 = vld [vmem:[%s2 + $0x58] sm:$0xff]
  %v1093 = vld [vmem:[%s2 + $0x60] sm:$0xff]
  %v1094 = vld [vmem:[%s2 + $0x68] sm:$0xff]
  %v1095 = vld [vmem:[%s2 + $0x70] sm:$0xff]
  %v1096 = vld [vmem:[%s2 + $0x78] sm:$0xff]
  %v1097 = vld [vmem:[%s2 + $0x80] sm:$0xff]
  %v1098 = vld [vmem:[%s2 + $0x88] sm:$0xff]
  %v1099 = vld [vmem:[%s2 + $0x90] sm:$0xff]
  %v1100 = vld [vmem:[%s2 + $0x98] sm:$0xff]
  %v1101 = vld [vmem:[%s2 + $0xa0] sm:$0xff]
  %v1102 = vld [vmem:[%s2 + $0xa8] sm:$0xff]
  %v1103 = vld [vmem:[%s2 + $0xb0] sm:$0xff]
  %v1104 = vld [vmem:[%s2 + $0xb8] sm:$0xff]
  %v1105 = vld [vmem:[%s2 + $0xc0] sm:$0xff]
  %v1106 = vld [vmem:[%s2 + $0xc8] sm:$0xff]
  %v1107 = vld [vmem:[%s2 + $0xd0] sm:$0xff]
  %v1108 = vld [vmem:[%s2 + $0xd8] sm:$0xff]
  %v1109 = vld [vmem:[%s2 + $0xe0] sm:$0xff]
  %v1110 = vld [vmem:[%s2 + $0xe8] sm:$0xff]
  %v1111 = vld [vmem:[%s2 + $0xf0] sm:$0xff]
  %v1112 = vld [vmem:[%s2 + $0xf8] sm:$0xff]
  %v1145 = vunpack.c.l.b16 %v1081
  %v1146 = vunpack.c.h.b16 %v1081
  %v1147 = vunpack.c.l.b16 %v1082
  %v1148 = vunpack.c.h.b16 %v1082
  %v1149 = vunpack.c.l.b16 %v1083
  %v1150 = vunpack.c.h.b16 %v1083
  %v1151 = vunpack.c.l.b16 %v1084
  %v1152 = vunpack.c.h.b16 %v1084
  %v1153 = vunpack.c.l.b16 %v1085
  %v1154 = vunpack.c.h.b16 %v1085
  %v1155 = vunpack.c.l.b16 %v1086
  %v1156 = vunpack.c.h.b16 %v1086
  %v1157 = vunpack.c.l.b16 %v1087
  %v1158 = vunpack.c.h.b16 %v1087
  %v1159 = vunpack.c.l.b16 %v1088
  %v1160 = vunpack.c.h.b16 %v1088
  %v1161 = vunpack.c.l.b16 %v1089
  %v1162 = vunpack.c.h.b16 %v1089
  %v1163 = vunpack.c.l.b16 %v1090
  %v1164 = vunpack.c.h.b16 %v1090
  %v1165 = vunpack.c.l.b16 %v1091
  %v1166 = vunpack.c.h.b16 %v1091
  %v1167 = vunpack.c.l.b16 %v1092
  %v1168 = vunpack.c.h.b16 %v1092
  %v1169 = vunpack.c.l.b16 %v1093
  %v1170 = vunpack.c.h.b16 %v1093
  %v1171 = vunpack.c.l.b16 %v1094
  %v1172 = vunpack.c.h.b16 %v1094
  %v1173 = vunpack.c.l.b16 %v1095
  %v1174 = vunpack.c.h.b16 %v1095
  %v1175 = vunpack.c.l.b16 %v1096
  %v1176 = vunpack.c.h.b16 %v1096
  %v1177 = vunpack.c.l.b16 %v1097
  %v1178 = vunpack.c.h.b16 %v1097
  %v1179 = vunpack.c.l.b16 %v1098
  %v1180 = vunpack.c.h.b16 %v1098
  %v1181 = vunpack.c.l.b16 %v1099
  %v1182 = vunpack.c.h.b16 %v1099
  %v1183 = vunpack.c.l.b16 %v1100
  %v1184 = vunpack.c.h.b16 %v1100
  %v1185 = vunpack.c.l.b16 %v1101
  %v1186 = vunpack.c.h.b16 %v1101
  %v1187 = vunpack.c.l.b16 %v1102
  %v1188 = vunpack.c.h.b16 %v1102
  %v1189 = vunpack.c.l.b16 %v1103
  %v1190 = vunpack.c.h.b16 %v1103
  %v1191 = vunpack.c.l.b16 %v1104
  %v1192 = vunpack.c.h.b16 %v1104
  %v1193 = vunpack.c.l.b16 %v1105
  %v1194 = vunpack.c.h.b16 %v1105
  %v1195 = vunpack.c.l.b16 %v1106
  %v1196 = vunpack.c.h.b16 %v1106
  %v1197 = vunpack.c.l.b16 %v1107
  %v1198 = vunpack.c.h.b16 %v1107
  %v1199 = vunpack.c.l.b16 %v1108
  %v1200 = vunpack.c.h.b16 %v1108
  %v1201 = vunpack.c.l.b16 %v1109
  %v1202 = vunpack.c.h.b16 %v1109
  %v1203 = vunpack.c.l.b16 %v1110
  %v1204 = vunpack.c.h.b16 %v1110
  %v1205 = vunpack.c.l.b16 %v1111
  %v1206 = vunpack.c.h.b16 %v1111
  %v1207 = vunpack.c.l.b16 %v1112
  %v1208 = vunpack.c.h.b16 %v1112
  %v1209 = vpack.c.b16 %v1149, %v1145
  %v1210 = vpack.c.b16 %v1150, %v1146
  %v1211 = vpack.c.b16 %v1151, %v1147
  %v1212 = vpack.c.b16 %v1152, %v1148
  %v1213 = vpack.c.b16 %v1157, %v1153
  %v1214 = vpack.c.b16 %v1158, %v1154
  %v1215 = vpack.c.b16 %v1159, %v1155
  %v1216 = vpack.c.b16 %v1160, %v1156
  %v1217 = vpack.c.b16 %v1165, %v1161
  %v1218 = vpack.c.b16 %v1166, %v1162
  %v1219 = vpack.c.b16 %v1167, %v1163
  %v1220 = vpack.c.b16 %v1168, %v1164
  %v1221 = vpack.c.b16 %v1173, %v1169
  %v1222 = vpack.c.b16 %v1174, %v1170
  %v1223 = vpack.c.b16 %v1175, %v1171
  %v1224 = vpack.c.b16 %v1176, %v1172
  %v1225 = vpack.c.b16 %v1181, %v1177
  %v1226 = vpack.c.b16 %v1182, %v1178
  %v1227 = vpack.c.b16 %v1183, %v1179
  %v1228 = vpack.c.b16 %v1184, %v1180
  %v1229 = vpack.c.b16 %v1189, %v1185
  %v1230 = vpack.c.b16 %v1190, %v1186
  %v1231 = vpack.c.b16 %v1191, %v1187
  %v1232 = vpack.c.b16 %v1192, %v1188
  %v1233 = vpack.c.b16 %v1197, %v1193
  %v1234 = vpack.c.b16 %v1198, %v1194
  %v1235 = vpack.c.b16 %v1199, %v1195
  %v1236 = vpack.c.b16 %v1200, %v1196
  %v1237 = vpack.c.b16 %v1205, %v1201
  %v1238 = vpack.c.b16 %v1206, %v1202
  %v1239 = vpack.c.b16 %v1207, %v1203
  %v1240 = vpack.c.b16 %v1208, %v1204
  %1273 = vmatprep.subr.bf16.mxu0 %v1238
  %1274 = vmatpush1.bf16.msra.mxu0 %v1237
  %1275 = vmatprep.subr.bf16.mxu0 %v1234
  %1276 = vmatpush1.bf16.msra.mxu0 %v1233
  %1277 = vmatprep.subr.bf16.mxu0 %v1230
  %1278 = vmatpush1.bf16.msra.mxu0 %v1229
  %1279 = vmatprep.subr.bf16.mxu0 %v1226
  %1280 = vmatpush1.bf16.msra.mxu0 %v1225
  %1281 = vmatprep.subr.bf16.mxu0 %v1222
  %1282 = vmatpush1.bf16.msra.mxu0 %v1221
  %1283 = vmatprep.subr.bf16.mxu0 %v1218
  %1284 = vmatpush1.bf16.msra.mxu0 %v1217
  %1285 = vmatprep.subr.bf16.mxu0 %v1214
  %1286 = vmatpush1.bf16.msra.mxu0 %v1213
  %1287 = vmatprep.subr.bf16.mxu0 %v1210
  %1288 = vmatpush1.bf16.msra.mxu0 %v1209
  %1289 = vmatprep.subr.bf16.mxu0 0
  %1290 = vmatpush2.bf16.msra.mxu0 0
  %1291 = vmatprep.subr.bf16.mxu0 0
  %1292 = vmatpush2.bf16.msra.mxu0 0
  %1293 = vmatprep.subr.bf16.mxu0 0
  %1294 = vmatpush2.bf16.msra.mxu0 0
  %1295 = vmatprep.subr.bf16.mxu0 0
  %1296 = vmatpush2.bf16.msra.mxu0 0
  %1297 = vmatprep.subr.bf16.mxu0 0
  %1298 = vmatpush2.bf16.msra.mxu0 0
  %1299 = vmatprep.subr.bf16.mxu0 0
  %1300 = vmatpush2.bf16.msra.mxu0 0
  %1301 = vmatprep.subr.bf16.mxu0 0
  %1302 = vmatpush2.bf16.msra.mxu0 0
  %1303 = vmatprep.subr.bf16.mxu0 0
  %1304 = vmatpush2.bf16.msra.mxu0 0
  %1305 = vmatprep.mubr.bf16.mxu0 0
  %1306 = vmatmul.mubr.bf16.gmra.mxu0 %v1080
  %v1307 = vpop.f32.mrf.mxu0
  %v1308 = vadd.f32 0.0, %v1307
  %v1309 = vpop.f32.mrf.mxu0
  %v1310 = vadd.f32 0.0, %v1309
  %v1311 = vpop.f32.mrf.mxu0
  %v1312 = vpop.f32.mrf.mxu0
  %1313 = vdwg.mxu0
  %1314 = vmatprep.subr.bf16.mxu0 %v1240
  %1315 = vmatpush1.bf16.msra.mxu0 %v1239
  %1316 = vmatprep.subr.bf16.mxu0 %v1236
  %1317 = vmatpush1.bf16.msra.mxu0 %v1235
  %1318 = vmatprep.subr.bf16.mxu0 %v1232
  %1319 = vmatpush1.bf16.msra.mxu0 %v1231
  %1320 = vmatprep.subr.bf16.mxu0 %v1228
  %1321 = vmatpush1.bf16.msra.mxu0 %v1227
  %1322 = vmatprep.subr.bf16.mxu0 %v1224
  %1323 = vmatpush1.bf16.msra.mxu0 %v1223
  %1324 = vmatprep.subr.bf16.mxu0 %v1220
  %1325 = vmatpush1.bf16.msra.mxu0 %v1219
  %1326 = vmatprep.subr.bf16.mxu0 %v1216
  %1327 = vmatpush1.bf16.msra.mxu0 %v1215
  %1328 = vmatprep.subr.bf16.mxu0 %v1212
  %1329 = vmatpush1.bf16.msra.mxu0 %v1211
  %1330 = vmatprep.subr.bf16.mxu0 0
  %1331 = vmatpush2.bf16.msra.mxu0 0
  %1332 = vmatprep.subr.bf16.mxu0 0
  %1333 = vmatpush2.bf16.msra.mxu0 0
  %1334 = vmatprep.subr.bf16.mxu0 0
  %1335 = vmatpush2.bf16.msra.mxu0 0
  %1336 = vmatprep.subr.bf16.mxu0 0
  %1337 = vmatpush2.bf16.msra.mxu0 0
  %1338 = vmatprep.subr.bf16.mxu0 0
  %1339 = vmatpush2.bf16.msra.mxu0 0
  %1340 = vmatprep.subr.bf16.mxu0 0
  %1341 = vmatpush2.bf16.msra.mxu0 0
  %1342 = vmatprep.subr.bf16.mxu0 0
  %1343 = vmatpush2.bf16.msra.mxu0 0
  %1344 = vmatprep.subr.bf16.mxu0 0
  %1345 = vmatpush2.bf16.msra.mxu0 0
  %1346 = vmatprep.mubr.bf16.mxu0 0
  %1347 = vmatmul.mubr.bf16.gmra.mxu0 %v1080
  %v1348 = vpop.f32.mrf.mxu0
  %v1349 = vadd.f32 0.0, %v1348
  %v1350 = vpop.f32.mrf.mxu0
  %v1351 = vadd.f32 0.0, %v1350
  %v1352 = vpop.f32.mrf.mxu0
  %v1353 = vpop.f32.mrf.mxu0
  %1354 = vdwg.mxu0
  %v1355 = vadd.f32 %v1075, %v1308
  %v1356 = vadd.f32 %v1076, %v1310
  %v1357 = vadd.f32 %v1077, %v1349
  %v1358 = vadd.f32 %v1078, %v1351
  %v1359 = vxor.u32 %v1355, 2147483648
  %v1360 = vmul.f32 %v1359, 1.442695
  %v1361 = vpow.pop %v1360
  %v1362 = vadd.f32 %v1361, 1.0
  %v1363 = vrcp.pop %v1362
  %v1364 = vmul.f32 1.0, %v1363
  %v1365 = vxor.u32 %v1356, 2147483648
  %v1366 = vmul.f32 %v1365, 1.442695
  %v1367 = vpow.pop %v1366
  %v1368 = vadd.f32 %v1367, 1.0
  %v1369 = vrcp.pop %v1368
  %v1370 = vmul.f32 1.0, %v1369
  %v1371 = vtanh.pop %v1357
  %v1372 = vxor.u32 %v1358, 2147483648
  %v1373 = vmul.f32 %v1372, 1.442695
  %v1374 = vpow.pop %v1373
  %v1375 = vadd.f32 %v1374, 1.0
  %v1376 = vrcp.pop %v1375
  %v1377 = vmul.f32 1.0, %v1376
  %v1378 = vld [vmem:[#allocation4] sm:$0xff]
  %v1379 = vmul.f32 %v1370, %v1378
  %v1380 = vmul.f32 %v1364, %v1371
  %v1381 = vadd.f32 %v1379, %v1380
  %v1382 = vtanh.pop %v1381
  %v1383 = vmul.f32 %v1377, %v1382
  %1384 = vst [vmem:[#allocation4] sm:$0xff] %v1381
  %1385 = vst [vmem:[#allocation3] sm:$0xff] %v1383
  %v1386 = vpack.c.bf16 %v1383, %v1383
  %s1387 = scalar_lea.vmem %s4, 8
  %1388 = vst [vmem:[%s1387] sm:$0xf] %v1386
  %s1389 = scalar_lea.vmem [#allocation2], 96
  %v1390 = vld [vmem:[%s1389] sm:$0xff]
  %v1391 = vld [vmem:[%s1389 + $0x8] sm:$0xff]
  %v1392 = vld [vmem:[%s1389 + $0x10] sm:$0xff]
  %v1393 = vld [vmem:[%s1389 + $0x18] sm:$0xff]
  %v1394 = vld [vmem:[#allocation3] sm:$0xff]
  %v1395 = vpack.c.bf16 %v1394, %v1394
  %v1396 = vld [vmem:[%s2] sm:$0xff]
  %v1397 = vld [vmem:[%s2 + $0x8] sm:$0xff]
  %v1398 = vld [vmem:[%s2 + $0x10] sm:$0xff]
  %v1399 = vld [vmem:[%s2 + $0x18] sm:$0xff]
  %v1400 = vld [vmem:[%s2 + $0x20] sm:$0xff]
  %v1401 = vld [vmem:[%s2 + $0x28] sm:$0xff]
  %v1402 = vld [vmem:[%s2 + $0x30] sm:$0xff]
  %v1403 = vld [vmem:[%s2 + $0x38] sm:$0xff]
  %v1404 = vld [vmem:[%s2 + $0x40] sm:$0xff]
  %v1405 = vld [vmem:[%s2 + $0x48] sm:$0xff]
  %v1406 = vld [vmem:[%s2 + $0x50] sm:$0xff]
  %v1407 = vld [vmem:[%s2 + $0x58] sm:$0xff]
  %v1408 = vld [vmem:[%s2 + $0x60] sm:$0xff]
  %v1409 = vld [vmem:[%s2 + $0x68] sm:$0xff]
  %v1410 = vld [vmem:[%s2 + $0x70] sm:$0xff]
  %v1411 = vld [vmem:[%s2 + $0x78] sm:$0xff]
  %v1412 = vld [vmem:[%s2 + $0x80] sm:$0xff]
  %v1413 = vld [vmem:[%s2 + $0x88] sm:$0xff]
  %v1414 = vld [vmem:[%s2 + $0x90] sm:$0xff]
  %v1415 = vld [vmem:[%s2 + $0x98] sm:$0xff]
  %v1416 = vld [vmem:[%s2 + $0xa0] sm:$0xff]
  %v1417 = vld [vmem:[%s2 + $0xa8] sm:$0xff]
  %v1418 = vld [vmem:[%s2 + $0xb0] sm:$0xff]
  %v1419 = vld [vmem:[%s2 + $0xb8] sm:$0xff]
  %v1420 = vld [vmem:[%s2 + $0xc0] sm:$0xff]
  %v1421 = vld [vmem:[%s2 + $0xc8] sm:$0xff]
  %v1422 = vld [vmem:[%s2 + $0xd0] sm:$0xff]
  %v1423 = vld [vmem:[%s2 + $0xd8] sm:$0xff]
  %v1424 = vld [vmem:[%s2 + $0xe0] sm:$0xff]
  %v1425 = vld [vmem:[%s2 + $0xe8] sm:$0xff]
  %v1426 = vld [vmem:[%s2 + $0xf0] sm:$0xff]
  %v1427 = vld [vmem:[%s2 + $0xf8] sm:$0xff]
  %v1460 = vunpack.c.l.b16 %v1396
  %v1461 = vunpack.c.h.b16 %v1396
  %v1462 = vunpack.c.l.b16 %v1397
  %v1463 = vunpack.c.h.b16 %v1397
  %v1464 = vunpack.c.l.b16 %v1398
  %v1465 = vunpack.c.h.b16 %v1398
  %v1466 = vunpack.c.l.b16 %v1399
  %v1467 = vunpack.c.h.b16 %v1399
  %v1468 = vunpack.c.l.b16 %v1400
  %v1469 = vunpack.c.h.b16 %v1400
  %v1470 = vunpack.c.l.b16 %v1401
  %v1471 = vunpack.c.h.b16 %v1401
  %v1472 = vunpack.c.l.b16 %v1402
  %v1473 = vunpack.c.h.b16 %v1402
  %v1474 = vunpack.c.l.b16 %v1403
  %v1475 = vunpack.c.h.b16 %v1403
  %v1476 = vunpack.c.l.b16 %v1404
  %v1477 = vunpack.c.h.b16 %v1404
  %v1478 = vunpack.c.l.b16 %v1405
  %v1479 = vunpack.c.h.b16 %v1405
  %v1480 = vunpack.c.l.b16 %v1406
  %v1481 = vunpack.c.h.b16 %v1406
  %v1482 = vunpack.c.l.b16 %v1407
  %v1483 = vunpack.c.h.b16 %v1407
  %v1484 = vunpack.c.l.b16 %v1408
  %v1485 = vunpack.c.h.b16 %v1408
  %v1486 = vunpack.c.l.b16 %v1409
  %v1487 = vunpack.c.h.b16 %v1409
  %v1488 = vunpack.c.l.b16 %v1410
  %v1489 = vunpack.c.h.b16 %v1410
  %v1490 = vunpack.c.l.b16 %v1411
  %v1491 = vunpack.c.h.b16 %v1411
  %v1492 = vunpack.c.l.b16 %v1412
  %v1493 = vunpack.c.h.b16 %v1412
  %v1494 = vunpack.c.l.b16 %v1413
  %v1495 = vunpack.c.h.b16 %v1413
  %v1496 = vunpack.c.l.b16 %v1414
  %v1497 = vunpack.c.h.b16 %v1414
  %v1498 = vunpack.c.l.b16 %v1415
  %v1499 = vunpack.c.h.b16 %v1415
  %v1500 = vunpack.c.l.b16 %v1416
  %v1501 = vunpack.c.h.b16 %v1416
  %v1502 = vunpack.c.l.b16 %v1417
  %v1503 = vunpack.c.h.b16 %v1417
  %v1504 = vunpack.c.l.b16 %v1418
  %v1505 = vunpack.c.h.b16 %v1418
  %v1506 = vunpack.c.l.b16 %v1419
  %v1507 = vunpack.c.h.b16 %v1419
  %v1508 = vunpack.c.l.b16 %v1420
  %v1509 = vunpack.c.h.b16 %v1420
  %v1510 = vunpack.c.l.b16 %v1421
  %v1511 = vunpack.c.h.b16 %v1421
  %v1512 = vunpack.c.l.b16 %v1422
  %v1513 = vunpack.c.h.b16 %v1422
  %v1514 = vunpack.c.l.b16 %v1423
  %v1515 = vunpack.c.h.b16 %v1423
  %v1516 = vunpack.c.l.b16 %v1424
  %v1517 = vunpack.c.h.b16 %v1424
  %v1518 = vunpack.c.l.b16 %v1425
  %v1519 = vunpack.c.h.b16 %v1425
  %v1520 = vunpack.c.l.b16 %v1426
  %v1521 = vunpack.c.h.b16 %v1426
  %v1522 = vunpack.c.l.b16 %v1427
  %v1523 = vunpack.c.h.b16 %v1427
  %v1524 = vpack.c.b16 %v1464, %v1460
  %v1525 = vpack.c.b16 %v1465, %v1461
  %v1526 = vpack.c.b16 %v1466, %v1462
  %v1527 = vpack.c.b16 %v1467, %v1463
  %v1528 = vpack.c.b16 %v1472, %v1468
  %v1529 = vpack.c.b16 %v1473, %v1469
  %v1530 = vpack.c.b16 %v1474, %v1470
  %v1531 = vpack.c.b16 %v1475, %v1471
  %v1532 = vpack.c.b16 %v1480, %v1476
  %v1533 = vpack.c.b16 %v1481, %v1477
  %v1534 = vpack.c.b16 %v1482, %v1478
  %v1535 = vpack.c.b16 %v1483, %v1479
  %v1536 = vpack.c.b16 %v1488, %v1484
  %v1537 = vpack.c.b16 %v1489, %v1485
  %v1538 = vpack.c.b16 %v1490, %v1486
  %v1539 = vpack.c.b16 %v1491, %v1487
  %v1540 = vpack.c.b16 %v1496, %v1492
  %v1541 = vpack.c.b16 %v1497, %v1493
  %v1542 = vpack.c.b16 %v1498, %v1494
  %v1543 = vpack.c.b16 %v1499, %v1495
  %v1544 = vpack.c.b16 %v1504, %v1500
  %v1545 = vpack.c.b16 %v1505, %v1501
  %v1546 = vpack.c.b16 %v1506, %v1502
  %v1547 = vpack.c.b16 %v1507, %v1503
  %v1548 = vpack.c.b16 %v1512, %v1508
  %v1549 = vpack.c.b16 %v1513, %v1509
  %v1550 = vpack.c.b16 %v1514, %v1510
  %v1551 = vpack.c.b16 %v1515, %v1511
  %v1552 = vpack.c.b16 %v1520, %v1516
  %v1553 = vpack.c.b16 %v1521, %v1517
  %v1554 = vpack.c.b16 %v1522, %v1518
  %v1555 = vpack.c.b16 %v1523, %v1519
  %1588 = vmatprep.subr.bf16.mxu0 %v1553
  %1589 = vmatpush1.bf16.msra.mxu0 %v1552
  %1590 = vmatprep.subr.bf16.mxu0 %v1549
  %1591 = vmatpush1.bf16.msra.mxu0 %v1548
  %1592 = vmatprep.subr.bf16.mxu0 %v1545
  %1593 = vmatpush1.bf16.msra.mxu0 %v1544
  %1594 = vmatprep.subr.bf16.mxu0 %v1541
  %1595 = vmatpush1.bf16.msra.mxu0 %v1540
  %1596 = vmatprep.subr.bf16.mxu0 %v1537
  %1597 = vmatpush1.bf16.msra.mxu0 %v1536
  %1598 = vmatprep.subr.bf16.mxu0 %v1533
  %1599 = vmatpush1.bf16.msra.mxu0 %v1532
  %1600 = vmatprep.subr.bf16.mxu0 %v1529
  %1601 = vmatpush1.bf16.msra.mxu0 %v1528
  %1602 = vmatprep.subr.bf16.mxu0 %v1525
  %1603 = vmatpush1.bf16.msra.mxu0 %v1524
  %1604 = vmatprep.subr.bf16.mxu0 0
  %1605 = vmatpush2.bf16.msra.mxu0 0
  %1606 = vmatprep.subr.bf16.mxu0 0
  %1607 = vmatpush2.bf16.msra.mxu0 0
  %1608 = vmatprep.subr.bf16.mxu0 0
  %1609 = vmatpush2.bf16.msra.mxu0 0
  %1610 = vmatprep.subr.bf16.mxu0 0
  %1611 = vmatpush2.bf16.msra.mxu0 0
  %1612 = vmatprep.subr.bf16.mxu0 0
  %1613 = vmatpush2.bf16.msra.mxu0 0
  %1614 = vmatprep.subr.bf16.mxu0 0
  %1615 = vmatpush2.bf16.msra.mxu0 0
  %1616 = vmatprep.subr.bf16.mxu0 0
  %1617 = vmatpush2.bf16.msra.mxu0 0
  %1618 = vmatprep.subr.bf16.mxu0 0
  %1619 = vmatpush2.bf16.msra.mxu0 0
  %1620 = vmatprep.mubr.bf16.mxu0 0
  %1621 = vmatmul.mubr.bf16.gmra.mxu0 %v1395
  %v1622 = vpop.f32.mrf.mxu0
  %v1623 = vadd.f32 0.0, %v1622
  %v1624 = vpop.f32.mrf.mxu0
  %v1625 = vadd.f32 0.0, %v1624
  %v1626 = vpop.f32.mrf.mxu0
  %v1627 = vpop.f32.mrf.mxu0
  %1628 = vdwg.mxu0
  %1629 = vmatprep.subr.bf16.mxu0 %v1555
  %1630 = vmatpush1.bf16.msra.mxu0 %v1554
  %1631 = vmatprep.subr.bf16.mxu0 %v1551
  %1632 = vmatpush1.bf16.msra.mxu0 %v1550
  %1633 = vmatprep.subr.bf16.mxu0 %v1547
  %1634 = vmatpush1.bf16.msra.mxu0 %v1546
  %1635 = vmatprep.subr.bf16.mxu0 %v1543
  %1636 = vmatpush1.bf16.msra.mxu0 %v1542
  %1637 = vmatprep.subr.bf16.mxu0 %v1539
  %1638 = vmatpush1.bf16.msra.mxu0 %v1538
  %1639 = vmatprep.subr.bf16.mxu0 %v1535
  %1640 = vmatpush1.bf16.msra.mxu0 %v1534
  %1641 = vmatprep.subr.bf16.mxu0 %v1531
  %1642 = vmatpush1.bf16.msra.mxu0 %v1530
  %1643 = vmatprep.subr.bf16.mxu0 %v1527
  %1644 = vmatpush1.bf16.msra.mxu0 %v1526
  %1645 = vmatprep.subr.bf16.mxu0 0
  %1646 = vmatpush2.bf16.msra.mxu0 0
  %1647 = vmatprep.subr.bf16.mxu0 0
  %1648 = vmatpush2.bf16.msra.mxu0 0
  %1649 = vmatprep.subr.bf16.mxu0 0
  %1650 = vmatpush2.bf16.msra.mxu0 0
  %1651 = vmatprep.subr.bf16.mxu0 0
  %1652 = vmatpush2.bf16.msra.mxu0 0
  %1653 = vmatprep.subr.bf16.mxu0 0
  %1654 = vmatpush2.bf16.msra.mxu0 0
  %1655 = vmatprep.subr.bf16.mxu0 0
  %1656 = vmatpush2.bf16.msra.mxu0 0
  %1657 = vmatprep.subr.bf16.mxu0 0
  %1658 = vmatpush2.bf16.msra.mxu0 0
  %1659 = vmatprep.subr.bf16.mxu0 0
  %1660 = vmatpush2.bf16.msra.mxu0 0
  %1661 = vmatprep.mubr.bf16.mxu0 0
  %1662 = vmatmul.mubr.bf16.gmra.mxu0 %v1395
  %v1663 = vpop.f32.mrf.mxu0
  %v1664 = vadd.f32 0.0, %v1663
  %v1665 = vpop.f32.mrf.mxu0
  %v1666 = vadd.f32 0.0, %v1665
  %v1667 = vpop.f32.mrf.mxu0
  %v1668 = vpop.f32.mrf.mxu0
  %1669 = vdwg.mxu0
  %v1670 = vadd.f32 %v1390, %v1623
  %v1671 = vadd.f32 %v1391, %v1625
  %v1672 = vadd.f32 %v1392, %v1664
  %v1673 = vadd.f32 %v1393, %v1666
  %v1674 = vxor.u32 %v1670, 2147483648
  %v1675 = vmul.f32 %v1674, 1.442695
  %v1676 = vpow.pop %v1675
  %v1677 = vadd.f32 %v1676, 1.0
  %v1678 = vrcp.pop %v1677
  %v1679 = vmul.f32 1.0, %v1678
  %v1680 = vxor.u32 %v1671, 2147483648
  %v1681 = vmul.f32 %v1680, 1.442695
  %v1682 = vpow.pop %v1681
  %v1683 = vadd.f32 %v1682, 1.0
  %v1684 = vrcp.pop %v1683
  %v1685 = vmul.f32 1.0, %v1684
  %v1686 = vtanh.pop %v1672
  %v1687 = vxor.u32 %v1673, 2147483648
  %v1688 = vmul.f32 %v1687, 1.442695
  %v1689 = vpow.pop %v1688
  %v1690 = vadd.f32 %v1689, 1.0
  %v1691 = vrcp.pop %v1690
  %v1692 = vmul.f32 1.0, %v1691
  %v1693 = vld [vmem:[#allocation4] sm:$0xff]
  %v1694 = vmul.f32 %v1685, %v1693
  %v1695 = vmul.f32 %v1679, %v1686
  %v1696 = vadd.f32 %v1694, %v1695
  %v1697 = vtanh.pop %v1696
  %v1698 = vmul.f32 %v1692, %v1697
  %1699 = vst [vmem:[#allocation4] sm:$0xff] %v1696
  %1700 = vst [vmem:[#allocation3] sm:$0xff] %v1698
  %v1701 = vpack.c.bf16 %v1698, %v1698
  %s1702 = scalar_lea.vmem %s4, 12
  %1703 = vst [vmem:[%s1702] sm:$0xf] %v1701
  %s1704 = scalar_lea.vmem [#allocation2], 128
  %v1705 = vld [vmem:[%s1704] sm:$0xff]
  %v1706 = vld [vmem:[%s1704 + $0x8] sm:$0xff]
  %v1707 = vld [vmem:[%s1704 + $0x10] sm:$0xff]
  %v1708 = vld [vmem:[%s1704 + $0x18] sm:$0xff]
  %v1709 = vld [vmem:[#allocation3] sm:$0xff]
  %v1710 = vpack.c.bf16 %v1709, %v1709
  %v1711 = vld [vmem:[%s2] sm:$0xff]
  %v1712 = vld [vmem:[%s2 + $0x8] sm:$0xff]
  %v1713 = vld [vmem:[%s2 + $0x10] sm:$0xff]
  %v1714 = vld [vmem:[%s2 + $0x18] sm:$0xff]
  %v1715 = vld [vmem:[%s2 + $0x20] sm:$0xff]
  %v1716 = vld [vmem:[%s2 + $0x28] sm:$0xff]
  %v1717 = vld [vmem:[%s2 + $0x30] sm:$0xff]
  %v1718 = vld [vmem:[%s2 + $0x38] sm:$0xff]
  %v1719 = vld [vmem:[%s2 + $0x40] sm:$0xff]
  %v1720 = vld [vmem:[%s2 + $0x48] sm:$0xff]
  %v1721 = vld [vmem:[%s2 + $0x50] sm:$0xff]
  %v1722 = vld [vmem:[%s2 + $0x58] sm:$0xff]
  %v1723 = vld [vmem:[%s2 + $0x60] sm:$0xff]
  %v1724 = vld [vmem:[%s2 + $0x68] sm:$0xff]
  %v1725 = vld [vmem:[%s2 + $0x70] sm:$0xff]
  %v1726 = vld [vmem:[%s2 + $0x78] sm:$0xff]
  %v1727 = vld [vmem:[%s2 + $0x80] sm:$0xff]
  %v1728 = vld [vmem:[%s2 + $0x88] sm:$0xff]
  %v1729 = vld [vmem:[%s2 + $0x90] sm:$0xff]
  %v1730 = vld [vmem:[%s2 + $0x98] sm:$0xff]
  %v1731 = vld [vmem:[%s2 + $0xa0] sm:$0xff]
  %v1732 = vld [vmem:[%s2 + $0xa8] sm:$0xff]
  %v1733 = vld [vmem:[%s2 + $0xb0] sm:$0xff]
  %v1734 = vld [vmem:[%s2 + $0xb8] sm:$0xff]
  %v1735 = vld [vmem:[%s2 + $0xc0] sm:$0xff]
  %v1736 = vld [vmem:[%s2 + $0xc8] sm:$0xff]
  %v1737 = vld [vmem:[%s2 + $0xd0] sm:$0xff]
  %v1738 = vld [vmem:[%s2 + $0xd8] sm:$0xff]
  %v1739 = vld [vmem:[%s2 + $0xe0] sm:$0xff]
  %v1740 = vld [vmem:[%s2 + $0xe8] sm:$0xff]
  %v1741 = vld [vmem:[%s2 + $0xf0] sm:$0xff]
  %v1742 = vld [vmem:[%s2 + $0xf8] sm:$0xff]
  %v1775 = vunpack.c.l.b16 %v1711
  %v1776 = vunpack.c.h.b16 %v1711
  %v1777 = vunpack.c.l.b16 %v1712
  %v1778 = vunpack.c.h.b16 %v1712
  %v1779 = vunpack.c.l.b16 %v1713
  %v1780 = vunpack.c.h.b16 %v1713
  %v1781 = vunpack.c.l.b16 %v1714
  %v1782 = vunpack.c.h.b16 %v1714
  %v1783 = vunpack.c.l.b16 %v1715
  %v1784 = vunpack.c.h.b16 %v1715
  %v1785 = vunpack.c.l.b16 %v1716
  %v1786 = vunpack.c.h.b16 %v1716
  %v1787 = vunpack.c.l.b16 %v1717
  %v1788 = vunpack.c.h.b16 %v1717
  %v1789 = vunpack.c.l.b16 %v1718
  %v1790 = vunpack.c.h.b16 %v1718
  %v1791 = vunpack.c.l.b16 %v1719
  %v1792 = vunpack.c.h.b16 %v1719
  %v1793 = vunpack.c.l.b16 %v1720
  %v1794 = vunpack.c.h.b16 %v1720
  %v1795 = vunpack.c.l.b16 %v1721
  %v1796 = vunpack.c.h.b16 %v1721
  %v1797 = vunpack.c.l.b16 %v1722
  %v1798 = vunpack.c.h.b16 %v1722
  %v1799 = vunpack.c.l.b16 %v1723
  %v1800 = vunpack.c.h.b16 %v1723
  %v1801 = vunpack.c.l.b16 %v1724
  %v1802 = vunpack.c.h.b16 %v1724
  %v1803 = vunpack.c.l.b16 %v1725
  %v1804 = vunpack.c.h.b16 %v1725
  %v1805 = vunpack.c.l.b16 %v1726
  %v1806 = vunpack.c.h.b16 %v1726
  %v1807 = vunpack.c.l.b16 %v1727
  %v1808 = vunpack.c.h.b16 %v1727
  %v1809 = vunpack.c.l.b16 %v1728
  %v1810 = vunpack.c.h.b16 %v1728
  %v1811 = vunpack.c.l.b16 %v1729
  %v1812 = vunpack.c.h.b16 %v1729
  %v1813 = vunpack.c.l.b16 %v1730
  %v1814 = vunpack.c.h.b16 %v1730
  %v1815 = vunpack.c.l.b16 %v1731
  %v1816 = vunpack.c.h.b16 %v1731
  %v1817 = vunpack.c.l.b16 %v1732
  %v1818 = vunpack.c.h.b16 %v1732
  %v1819 = vunpack.c.l.b16 %v1733
  %v1820 = vunpack.c.h.b16 %v1733
  %v1821 = vunpack.c.l.b16 %v1734
  %v1822 = vunpack.c.h.b16 %v1734
  %v1823 = vunpack.c.l.b16 %v1735
  %v1824 = vunpack.c.h.b16 %v1735
  %v1825 = vunpack.c.l.b16 %v1736
  %v1826 = vunpack.c.h.b16 %v1736
  %v1827 = vunpack.c.l.b16 %v1737
  %v1828 = vunpack.c.h.b16 %v1737
  %v1829 = vunpack.c.l.b16 %v1738
  %v1830 = vunpack.c.h.b16 %v1738
  %v1831 = vunpack.c.l.b16 %v1739
  %v1832 = vunpack.c.h.b16 %v1739
  %v1833 = vunpack.c.l.b16 %v1740
  %v1834 = vunpack.c.h.b16 %v1740
  %v1835 = vunpack.c.l.b16 %v1741
  %v1836 = vunpack.c.h.b16 %v1741
  %v1837 = vunpack.c.l.b16 %v1742
  %v1838 = vunpack.c.h.b16 %v1742
  %v1839 = vpack.c.b16 %v1779, %v1775
  %v1840 = vpack.c.b16 %v1780, %v1776
  %v1841 = vpack.c.b16 %v1781, %v1777
  %v1842 = vpack.c.b16 %v1782, %v1778
  %v1843 = vpack.c.b16 %v1787, %v1783
  %v1844 = vpack.c.b16 %v1788, %v1784
  %v1845 = vpack.c.b16 %v1789, %v1785
  %v1846 = vpack.c.b16 %v1790, %v1786
  %v1847 = vpack.c.b16 %v1795, %v1791
  %v1848 = vpack.c.b16 %v1796, %v1792
  %v1849 = vpack.c.b16 %v1797, %v1793
  %v1850 = vpack.c.b16 %v1798, %v1794
  %v1851 = vpack.c.b16 %v1803, %v1799
  %v1852 = vpack.c.b16 %v1804, %v1800
  %v1853 = vpack.c.b16 %v1805, %v1801
  %v1854 = vpack.c.b16 %v1806, %v1802
  %v1855 = vpack.c.b16 %v1811, %v1807
  %v1856 = vpack.c.b16 %v1812, %v1808
  %v1857 = vpack.c.b16 %v1813, %v1809
  %v1858 = vpack.c.b16 %v1814, %v1810
  %v1859 = vpack.c.b16 %v1819, %v1815
  %v1860 = vpack.c.b16 %v1820, %v1816
  %v1861 = vpack.c.b16 %v1821, %v1817
  %v1862 = vpack.c.b16 %v1822, %v1818
  %v1863 = vpack.c.b16 %v1827, %v1823
  %v1864 = vpack.c.b16 %v1828, %v1824
  %v1865 = vpack.c.b16 %v1829, %v1825
  %v1866 = vpack.c.b16 %v1830, %v1826
  %v1867 = vpack.c.b16 %v1835, %v1831
  %v1868 = vpack.c.b16 %v1836, %v1832
  %v1869 = vpack.c.b16 %v1837, %v1833
  %v1870 = vpack.c.b16 %v1838, %v1834
  %1903 = vmatprep.subr.bf16.mxu0 %v1868
  %1904 = vmatpush1.bf16.msra.mxu0 %v1867
  %1905 = vmatprep.subr.bf16.mxu0 %v1864
  %1906 = vmatpush1.bf16.msra.mxu0 %v1863
  %1907 = vmatprep.subr.bf16.mxu0 %v1860
  %1908 = vmatpush1.bf16.msra.mxu0 %v1859
  %1909 = vmatprep.subr.bf16.mxu0 %v1856
  %1910 = vmatpush1.bf16.msra.mxu0 %v1855
  %1911 = vmatprep.subr.bf16.mxu0 %v1852
  %1912 = vmatpush1.bf16.msra.mxu0 %v1851
  %1913 = vmatprep.subr.bf16.mxu0 %v1848
  %1914 = vmatpush1.bf16.msra.mxu0 %v1847
  %1915 = vmatprep.subr.bf16.mxu0 %v1844
  %1916 = vmatpush1.bf16.msra.mxu0 %v1843
  %1917 = vmatprep.subr.bf16.mxu0 %v1840
  %1918 = vmatpush1.bf16.msra.mxu0 %v1839
  %1919 = vmatprep.subr.bf16.mxu0 0
  %1920 = vmatpush2.bf16.msra.mxu0 0
  %1921 = vmatprep.subr.bf16.mxu0 0
  %1922 = vmatpush2.bf16.msra.mxu0 0
  %1923 = vmatprep.subr.bf16.mxu0 0
  %1924 = vmatpush2.bf16.msra.mxu0 0
  %1925 = vmatprep.subr.bf16.mxu0 0
  %1926 = vmatpush2.bf16.msra.mxu0 0
  %1927 = vmatprep.subr.bf16.mxu0 0
  %1928 = vmatpush2.bf16.msra.mxu0 0
  %1929 = vmatprep.subr.bf16.mxu0 0
  %1930 = vmatpush2.bf16.msra.mxu0 0
  %1931 = vmatprep.subr.bf16.mxu0 0
  %1932 = vmatpush2.bf16.msra.mxu0 0
  %1933 = vmatprep.subr.bf16.mxu0 0
  %1934 = vmatpush2.bf16.msra.mxu0 0
  %1935 = vmatprep.mubr.bf16.mxu0 0
  %1936 = vmatmul.mubr.bf16.gmra.mxu0 %v1710
  %v1937 = vpop.f32.mrf.mxu0
  %v1938 = vadd.f32 0.0, %v1937
  %v1939 = vpop.f32.mrf.mxu0
  %v1940 = vadd.f32 0.0, %v1939
  %v1941 = vpop.f32.mrf.mxu0
  %v1942 = vpop.f32.mrf.mxu0
  %1943 = vdwg.mxu0
  %1944 = vmatprep.subr.bf16.mxu0 %v1870
  %1945 = vmatpush1.bf16.msra.mxu0 %v1869
  %1946 = vmatprep.subr.bf16.mxu0 %v1866
  %1947 = vmatpush1.bf16.msra.mxu0 %v1865
  %1948 = vmatprep.subr.bf16.mxu0 %v1862
  %1949 = vmatpush1.bf16.msra.mxu0 %v1861
  %1950 = vmatprep.subr.bf16.mxu0 %v1858
  %1951 = vmatpush1.bf16.msra.mxu0 %v1857
  %1952 = vmatprep.subr.bf16.mxu0 %v1854
  %1953 = vmatpush1.bf16.msra.mxu0 %v1853
  %1954 = vmatprep.subr.bf16.mxu0 %v1850
  %1955 = vmatpush1.bf16.msra.mxu0 %v1849
  %1956 = vmatprep.subr.bf16.mxu0 %v1846
  %1957 = vmatpush1.bf16.msra.mxu0 %v1845
  %1958 = vmatprep.subr.bf16.mxu0 %v1842
  %1959 = vmatpush1.bf16.msra.mxu0 %v1841
  %1960 = vmatprep.subr.bf16.mxu0 0
  %1961 = vmatpush2.bf16.msra.mxu0 0
  %1962 = vmatprep.subr.bf16.mxu0 0
  %1963 = vmatpush2.bf16.msra.mxu0 0
  %1964 = vmatprep.subr.bf16.mxu0 0
  %1965 = vmatpush2.bf16.msra.mxu0 0
  %1966 = vmatprep.subr.bf16.mxu0 0
  %1967 = vmatpush2.bf16.msra.mxu0 0
  %1968 = vmatprep.subr.bf16.mxu0 0
  %1969 = vmatpush2.bf16.msra.mxu0 0
  %1970 = vmatprep.subr.bf16.mxu0 0
  %1971 = vmatpush2.bf16.msra.mxu0 0
  %1972 = vmatprep.subr.bf16.mxu0 0
  %1973 = vmatpush2.bf16.msra.mxu0 0
  %1974 = vmatprep.subr.bf16.mxu0 0
  %1975 = vmatpush2.bf16.msra.mxu0 0
  %1976 = vmatprep.mubr.bf16.mxu0 0
  %1977 = vmatmul.mubr.bf16.gmra.mxu0 %v1710
  %v1978 = vpop.f32.mrf.mxu0
  %v1979 = vadd.f32 0.0, %v1978
  %v1980 = vpop.f32.mrf.mxu0
  %v1981 = vadd.f32 0.0, %v1980
  %v1982 = vpop.f32.mrf.mxu0
  %v1983 = vpop.f32.mrf.mxu0
  %1984 = vdwg.mxu0
  %v1985 = vadd.f32 %v1705, %v1938
  %v1986 = vadd.f32 %v1706, %v1940
  %v1987 = vadd.f32 %v1707, %v1979
  %v1988 = vadd.f32 %v1708, %v1981
  %v1989 = vxor.u32 %v1985, 2147483648
  %v1990 = vmul.f32 %v1989, 1.442695
  %v1991 = vpow.pop %v1990
  %v1992 = vadd.f32 %v1991, 1.0
  %v1993 = vrcp.pop %v1992
  %v1994 = vmul.f32 1.0, %v1993
  %v1995 = vxor.u32 %v1986, 2147483648
  %v1996 = vmul.f32 %v1995, 1.442695
  %v1997 = vpow.pop %v1996
  %v1998 = vadd.f32 %v1997, 1.0
  %v1999 = vrcp.pop %v1998
  %v2000 = vmul.f32 1.0, %v1999
  %v2001 = vtanh.pop %v1987
  %v2002 = vxor.u32 %v1988, 2147483648
  %v2003 = vmul.f32 %v2002, 1.442695
  %v2004 = vpow.pop %v2003
  %v2005 = vadd.f32 %v2004, 1.0
  %v2006 = vrcp.pop %v2005
  %v2007 = vmul.f32 1.0, %v2006
  %v2008 = vld [vmem:[#allocation4] sm:$0xff]
  %v2009 = vmul.f32 %v2000, %v2008
  %v2010 = vmul.f32 %v1994, %v2001
  %v2011 = vadd.f32 %v2009, %v2010
  %v2012 = vtanh.pop %v2011
  %v2013 = vmul.f32 %v2007, %v2012
  %2014 = vst [vmem:[#allocation4] sm:$0xff] %v2011
  %2015 = vst [vmem:[#allocation3] sm:$0xff] %v2013
  %v2016 = vpack.c.bf16 %v2013, %v2013
  %s2017 = scalar_lea.vmem %s4, 16
  %2018 = vst [vmem:[%s2017] sm:$0xf] %v2016
  %s2019 = scalar_lea.vmem [#allocation2], 160
  %v2020 = vld [vmem:[%s2019] sm:$0xff]
  %v2021 = vld [vmem:[%s2019 + $0x8] sm:$0xff]
  %v2022 = vld [vmem:[%s2019 + $0x10] sm:$0xff]
  %v2023 = vld [vmem:[%s2019 + $0x18] sm:$0xff]
  %v2024 = vld [vmem:[#allocation3] sm:$0xff]
  %v2025 = vpack.c.bf16 %v2024, %v2024
  %v2026 = vld [vmem:[%s2] sm:$0xff]
  %v2027 = vld [vmem:[%s2 + $0x8] sm:$0xff]
  %v2028 = vld [vmem:[%s2 + $0x10] sm:$0xff]
  %v2029 = vld [vmem:[%s2 + $0x18] sm:$0xff]
  %v2030 = vld [vmem:[%s2 + $0x20] sm:$0xff]
  %v2031 = vld [vmem:[%s2 + $0x28] sm:$0xff]
  %v2032 = vld [vmem:[%s2 + $0x30] sm:$0xff]
  %v2033 = vld [vmem:[%s2 + $0x38] sm:$0xff]
  %v2034 = vld [vmem:[%s2 + $0x40] sm:$0xff]
  %v2035 = vld [vmem:[%s2 + $0x48] sm:$0xff]
  %v2036 = vld [vmem:[%s2 + $0x50] sm:$0xff]
  %v2037 = vld [vmem:[%s2 + $0x58] sm:$0xff]
  %v2038 = vld [vmem:[%s2 + $0x60] sm:$0xff]
  %v2039 = vld [vmem:[%s2 + $0x68] sm:$0xff]
  %v2040 = vld [vmem:[%s2 + $0x70] sm:$0xff]
  %v2041 = vld [vmem:[%s2 + $0x78] sm:$0xff]
  %v2042 = vld [vmem:[%s2 + $0x80] sm:$0xff]
  %v2043 = vld [vmem:[%s2 + $0x88] sm:$0xff]
  %v2044 = vld [vmem:[%s2 + $0x90] sm:$0xff]
  %v2045 = vld [vmem:[%s2 + $0x98] sm:$0xff]
  %v2046 = vld [vmem:[%s2 + $0xa0] sm:$0xff]
  %v2047 = vld [vmem:[%s2 + $0xa8] sm:$0xff]
  %v2048 = vld [vmem:[%s2 + $0xb0] sm:$0xff]
  %v2049 = vld [vmem:[%s2 + $0xb8] sm:$0xff]
  %v2050 = vld [vmem:[%s2 + $0xc0] sm:$0xff]
  %v2051 = vld [vmem:[%s2 + $0xc8] sm:$0xff]
  %v2052 = vld [vmem:[%s2 + $0xd0] sm:$0xff]
  %v2053 = vld [vmem:[%s2 + $0xd8] sm:$0xff]
  %v2054 = vld [vmem:[%s2 + $0xe0] sm:$0xff]
  %v2055 = vld [vmem:[%s2 + $0xe8] sm:$0xff]
  %v2056 = vld [vmem:[%s2 + $0xf0] sm:$0xff]
  %v2057 = vld [vmem:[%s2 + $0xf8] sm:$0xff]
  %v2090 = vunpack.c.l.b16 %v2026
  %v2091 = vunpack.c.h.b16 %v2026
  %v2092 = vunpack.c.l.b16 %v2027
  %v2093 = vunpack.c.h.b16 %v2027
  %v2094 = vunpack.c.l.b16 %v2028
  %v2095 = vunpack.c.h.b16 %v2028
  %v2096 = vunpack.c.l.b16 %v2029
  %v2097 = vunpack.c.h.b16 %v2029
  %v2098 = vunpack.c.l.b16 %v2030
  %v2099 = vunpack.c.h.b16 %v2030
  %v2100 = vunpack.c.l.b16 %v2031
  %v2101 = vunpack.c.h.b16 %v2031
  %v2102 = vunpack.c.l.b16 %v2032
  %v2103 = vunpack.c.h.b16 %v2032
  %v2104 = vunpack.c.l.b16 %v2033
  %v2105 = vunpack.c.h.b16 %v2033
  %v2106 = vunpack.c.l.b16 %v2034
  %v2107 = vunpack.c.h.b16 %v2034
  %v2108 = vunpack.c.l.b16 %v2035
  %v2109 = vunpack.c.h.b16 %v2035
  %v2110 = vunpack.c.l.b16 %v2036
  %v2111 = vunpack.c.h.b16 %v2036
  %v2112 = vunpack.c.l.b16 %v2037
  %v2113 = vunpack.c.h.b16 %v2037
  %v2114 = vunpack.c.l.b16 %v2038
  %v2115 = vunpack.c.h.b16 %v2038
  %v2116 = vunpack.c.l.b16 %v2039
  %v2117 = vunpack.c.h.b16 %v2039
  %v2118 = vunpack.c.l.b16 %v2040
  %v2119 = vunpack.c.h.b16 %v2040
  %v2120 = vunpack.c.l.b16 %v2041
  %v2121 = vunpack.c.h.b16 %v2041
  %v2122 = vunpack.c.l.b16 %v2042
  %v2123 = vunpack.c.h.b16 %v2042
  %v2124 = vunpack.c.l.b16 %v2043
  %v2125 = vunpack.c.h.b16 %v2043
  %v2126 = vunpack.c.l.b16 %v2044
  %v2127 = vunpack.c.h.b16 %v2044
  %v2128 = vunpack.c.l.b16 %v2045
  %v2129 = vunpack.c.h.b16 %v2045
  %v2130 = vunpack.c.l.b16 %v2046
  %v2131 = vunpack.c.h.b16 %v2046
  %v2132 = vunpack.c.l.b16 %v2047
  %v2133 = vunpack.c.h.b16 %v2047
  %v2134 = vunpack.c.l.b16 %v2048
  %v2135 = vunpack.c.h.b16 %v2048
  %v2136 = vunpack.c.l.b16 %v2049
  %v2137 = vunpack.c.h.b16 %v2049
  %v2138 = vunpack.c.l.b16 %v2050
  %v2139 = vunpack.c.h.b16 %v2050
  %v2140 = vunpack.c.l.b16 %v2051
  %v2141 = vunpack.c.h.b16 %v2051
  %v2142 = vunpack.c.l.b16 %v2052
  %v2143 = vunpack.c.h.b16 %v2052
  %v2144 = vunpack.c.l.b16 %v2053
  %v2145 = vunpack.c.h.b16 %v2053
  %v2146 = vunpack.c.l.b16 %v2054
  %v2147 = vunpack.c.h.b16 %v2054
  %v2148 = vunpack.c.l.b16 %v2055
  %v2149 = vunpack.c.h.b16 %v2055
  %v2150 = vunpack.c.l.b16 %v2056
  %v2151 = vunpack.c.h.b16 %v2056
  %v2152 = vunpack.c.l.b16 %v2057
  %v2153 = vunpack.c.h.b16 %v2057
  %v2154 = vpack.c.b16 %v2094, %v2090
  %v2155 = vpack.c.b16 %v2095, %v2091
  %v2156 = vpack.c.b16 %v2096, %v2092
  %v2157 = vpack.c.b16 %v2097, %v2093
  %v2158 = vpack.c.b16 %v2102, %v2098
  %v2159 = vpack.c.b16 %v2103, %v2099
  %v2160 = vpack.c.b16 %v2104, %v2100
  %v2161 = vpack.c.b16 %v2105, %v2101
  %v2162 = vpack.c.b16 %v2110, %v2106
  %v2163 = vpack.c.b16 %v2111, %v2107
  %v2164 = vpack.c.b16 %v2112, %v2108
  %v2165 = vpack.c.b16 %v2113, %v2109
  %v2166 = vpack.c.b16 %v2118, %v2114
  %v2167 = vpack.c.b16 %v2119, %v2115
  %v2168 = vpack.c.b16 %v2120, %v2116
  %v2169 = vpack.c.b16 %v2121, %v2117
  %v2170 = vpack.c.b16 %v2126, %v2122
  %v2171 = vpack.c.b16 %v2127, %v2123
  %v2172 = vpack.c.b16 %v2128, %v2124
  %v2173 = vpack.c.b16 %v2129, %v2125
  %v2174 = vpack.c.b16 %v2134, %v2130
  %v2175 = vpack.c.b16 %v2135, %v2131
  %v2176 = vpack.c.b16 %v2136, %v2132
  %v2177 = vpack.c.b16 %v2137, %v2133
  %v2178 = vpack.c.b16 %v2142, %v2138
  %v2179 = vpack.c.b16 %v2143, %v2139
  %v2180 = vpack.c.b16 %v2144, %v2140
  %v2181 = vpack.c.b16 %v2145, %v2141
  %v2182 = vpack.c.b16 %v2150, %v2146
  %v2183 = vpack.c.b16 %v2151, %v2147
  %v2184 = vpack.c.b16 %v2152, %v2148
  %v2185 = vpack.c.b16 %v2153, %v2149
  %2218 = vmatprep.subr.bf16.mxu0 %v2183
  %2219 = vmatpush1.bf16.msra.mxu0 %v2182
  %2220 = vmatprep.subr.bf16.mxu0 %v2179
  %2221 = vmatpush1.bf16.msra.mxu0 %v2178
  %2222 = vmatprep.subr.bf16.mxu0 %v2175
  %2223 = vmatpush1.bf16.msra.mxu0 %v2174
  %2224 = vmatprep.subr.bf16.mxu0 %v2171
  %2225 = vmatpush1.bf16.msra.mxu0 %v2170
  %2226 = vmatprep.subr.bf16.mxu0 %v2167
  %2227 = vmatpush1.bf16.msra.mxu0 %v2166
  %2228 = vmatprep.subr.bf16.mxu0 %v2163
  %2229 = vmatpush1.bf16.msra.mxu0 %v2162
  %2230 = vmatprep.subr.bf16.mxu0 %v2159
  %2231 = vmatpush1.bf16.msra.mxu0 %v2158
  %2232 = vmatprep.subr.bf16.mxu0 %v2155
  %2233 = vmatpush1.bf16.msra.mxu0 %v2154
  %2234 = vmatprep.subr.bf16.mxu0 0
  %2235 = vmatpush2.bf16.msra.mxu0 0
  %2236 = vmatprep.subr.bf16.mxu0 0
  %2237 = vmatpush2.bf16.msra.mxu0 0
  %2238 = vmatprep.subr.bf16.mxu0 0
  %2239 = vmatpush2.bf16.msra.mxu0 0
  %2240 = vmatprep.subr.bf16.mxu0 0
  %2241 = vmatpush2.bf16.msra.mxu0 0
  %2242 = vmatprep.subr.bf16.mxu0 0
  %2243 = vmatpush2.bf16.msra.mxu0 0
  %2244 = vmatprep.subr.bf16.mxu0 0
  %2245 = vmatpush2.bf16.msra.mxu0 0
  %2246 = vmatprep.subr.bf16.mxu0 0
  %2247 = vmatpush2.bf16.msra.mxu0 0
  %2248 = vmatprep.subr.bf16.mxu0 0
  %2249 = vmatpush2.bf16.msra.mxu0 0
  %2250 = vmatprep.mubr.bf16.mxu0 0
  %2251 = vmatmul.mubr.bf16.gmra.mxu0 %v2025
  %v2252 = vpop.f32.mrf.mxu0
  %v2253 = vadd.f32 0.0, %v2252
  %v2254 = vpop.f32.mrf.mxu0
  %v2255 = vadd.f32 0.0, %v2254
  %v2256 = vpop.f32.mrf.mxu0
  %v2257 = vpop.f32.mrf.mxu0
  %2258 = vdwg.mxu0
  %2259 = vmatprep.subr.bf16.mxu0 %v2185
  %2260 = vmatpush1.bf16.msra.mxu0 %v2184
  %2261 = vmatprep.subr.bf16.mxu0 %v2181
  %2262 = vmatpush1.bf16.msra.mxu0 %v2180
  %2263 = vmatprep.subr.bf16.mxu0 %v2177
  %2264 = vmatpush1.bf16.msra.mxu0 %v2176
  %2265 = vmatprep.subr.bf16.mxu0 %v2173
  %2266 = vmatpush1.bf16.msra.mxu0 %v2172
  %2267 = vmatprep.subr.bf16.mxu0 %v2169
  %2268 = vmatpush1.bf16.msra.mxu0 %v2168
  %2269 = vmatprep.subr.bf16.mxu0 %v2165
  %2270 = vmatpush1.bf16.msra.mxu0 %v2164
  %2271 = vmatprep.subr.bf16.mxu0 %v2161
  %2272 = vmatpush1.bf16.msra.mxu0 %v2160
  %2273 = vmatprep.subr.bf16.mxu0 %v2157
  %2274 = vmatpush1.bf16.msra.mxu0 %v2156
  %2275 = vmatprep.subr.bf16.mxu0 0
  %2276 = vmatpush2.bf16.msra.mxu0 0
  %2277 = vmatprep.subr.bf16.mxu0 0
  %2278 = vmatpush2.bf16.msra.mxu0 0
  %2279 = vmatprep.subr.bf16.mxu0 0
  %2280 = vmatpush2.bf16.msra.mxu0 0
  %2281 = vmatprep.subr.bf16.mxu0 0
  %2282 = vmatpush2.bf16.msra.mxu0 0
  %2283 = vmatprep.subr.bf16.mxu0 0
  %2284 = vmatpush2.bf16.msra.mxu0 0
  %2285 = vmatprep.subr.bf16.mxu0 0
  %2286 = vmatpush2.bf16.msra.mxu0 0
  %2287 = vmatprep.subr.bf16.mxu0 0
  %2288 = vmatpush2.bf16.msra.mxu0 0
  %2289 = vmatprep.subr.bf16.mxu0 0
  %2290 = vmatpush2.bf16.msra.mxu0 0
  %2291 = vmatprep.mubr.bf16.mxu0 0
  %2292 = vmatmul.mubr.bf16.gmra.mxu0 %v2025
  %v2293 = vpop.f32.mrf.mxu0
  %v2294 = vadd.f32 0.0, %v2293
  %v2295 = vpop.f32.mrf.mxu0
  %v2296 = vadd.f32 0.0, %v2295
  %v2297 = vpop.f32.mrf.mxu0
  %v2298 = vpop.f32.mrf.mxu0
  %2299 = vdwg.mxu0
  %v2300 = vadd.f32 %v2020, %v2253
  %v2301 = vadd.f32 %v2021, %v2255
  %v2302 = vadd.f32 %v2022, %v2294
  %v2303 = vadd.f32 %v2023, %v2296
  %v2304 = vxor.u32 %v2300, 2147483648
  %v2305 = vmul.f32 %v2304, 1.442695
  %v2306 = vpow.pop %v2305
  %v2307 = vadd.f32 %v2306, 1.0
  %v2308 = vrcp.pop %v2307
  %v2309 = vmul.f32 1.0, %v2308
  %v2310 = vxor.u32 %v2301, 2147483648
  %v2311 = vmul.f32 %v2310, 1.442695
  %v2312 = vpow.pop %v2311
  %v2313 = vadd.f32 %v2312, 1.0
  %v2314 = vrcp.pop %v2313
  %v2315 = vmul.f32 1.0, %v2314
  %v2316 = vtanh.pop %v2302
  %v2317 = vxor.u32 %v2303, 2147483648
  %v2318 = vmul.f32 %v2317, 1.442695
  %v2319 = vpow.pop %v2318
  %v2320 = vadd.f32 %v2319, 1.0
  %v2321 = vrcp.pop %v2320
  %v2322 = vmul.f32 1.0, %v2321
  %v2323 = vld [vmem:[#allocation4] sm:$0xff]
  %v2324 = vmul.f32 %v2315, %v2323
  %v2325 = vmul.f32 %v2309, %v2316
  %v2326 = vadd.f32 %v2324, %v2325
  %v2327 = vtanh.pop %v2326
  %v2328 = vmul.f32 %v2322, %v2327
  %2329 = vst [vmem:[#allocation4] sm:$0xff] %v2326
  %2330 = vst [vmem:[#allocation3] sm:$0xff] %v2328
  %v2331 = vpack.c.bf16 %v2328, %v2328
  %s2332 = scalar_lea.vmem %s4, 20
  %2333 = vst [vmem:[%s2332] sm:$0xf] %v2331
  %s2334 = scalar_lea.vmem [#allocation2], 192
  %v2335 = vld [vmem:[%s2334] sm:$0xff]
  %v2336 = vld [vmem:[%s2334 + $0x8] sm:$0xff]
  %v2337 = vld [vmem:[%s2334 + $0x10] sm:$0xff]
  %v2338 = vld [vmem:[%s2334 + $0x18] sm:$0xff]
  %v2339 = vld [vmem:[#allocation3] sm:$0xff]
  %v2340 = vpack.c.bf16 %v2339, %v2339
  %v2341 = vld [vmem:[%s2] sm:$0xff]
  %v2342 = vld [vmem:[%s2 + $0x8] sm:$0xff]
  %v2343 = vld [vmem:[%s2 + $0x10] sm:$0xff]
  %v2344 = vld [vmem:[%s2 + $0x18] sm:$0xff]
  %v2345 = vld [vmem:[%s2 + $0x20] sm:$0xff]
  %v2346 = vld [vmem:[%s2 + $0x28] sm:$0xff]
  %v2347 = vld [vmem:[%s2 + $0x30] sm:$0xff]
  %v2348 = vld [vmem:[%s2 + $0x38] sm:$0xff]
  %v2349 = vld [vmem:[%s2 + $0x40] sm:$0xff]
  %v2350 = vld [vmem:[%s2 + $0x48] sm:$0xff]
  %v2351 = vld [vmem:[%s2 + $0x50] sm:$0xff]
  %v2352 = vld [vmem:[%s2 + $0x58] sm:$0xff]
  %v2353 = vld [vmem:[%s2 + $0x60] sm:$0xff]
  %v2354 = vld [vmem:[%s2 + $0x68] sm:$0xff]
  %v2355 = vld [vmem:[%s2 + $0x70] sm:$0xff]
  %v2356 = vld [vmem:[%s2 + $0x78] sm:$0xff]
  %v2357 = vld [vmem:[%s2 + $0x80] sm:$0xff]
  %v2358 = vld [vmem:[%s2 + $0x88] sm:$0xff]
  %v2359 = vld [vmem:[%s2 + $0x90] sm:$0xff]
  %v2360 = vld [vmem:[%s2 + $0x98] sm:$0xff]
  %v2361 = vld [vmem:[%s2 + $0xa0] sm:$0xff]
  %v2362 = vld [vmem:[%s2 + $0xa8] sm:$0xff]
  %v2363 = vld [vmem:[%s2 + $0xb0] sm:$0xff]
  %v2364 = vld [vmem:[%s2 + $0xb8] sm:$0xff]
  %v2365 = vld [vmem:[%s2 + $0xc0] sm:$0xff]
  %v2366 = vld [vmem:[%s2 + $0xc8] sm:$0xff]
  %v2367 = vld [vmem:[%s2 + $0xd0] sm:$0xff]
  %v2368 = vld [vmem:[%s2 + $0xd8] sm:$0xff]
  %v2369 = vld [vmem:[%s2 + $0xe0] sm:$0xff]
  %v2370 = vld [vmem:[%s2 + $0xe8] sm:$0xff]
  %v2371 = vld [vmem:[%s2 + $0xf0] sm:$0xff]
  %v2372 = vld [vmem:[%s2 + $0xf8] sm:$0xff]
  %v2405 = vunpack.c.l.b16 %v2341
  %v2406 = vunpack.c.h.b16 %v2341
  %v2407 = vunpack.c.l.b16 %v2342
  %v2408 = vunpack.c.h.b16 %v2342
  %v2409 = vunpack.c.l.b16 %v2343
  %v2410 = vunpack.c.h.b16 %v2343
  %v2411 = vunpack.c.l.b16 %v2344
  %v2412 = vunpack.c.h.b16 %v2344
  %v2413 = vunpack.c.l.b16 %v2345
  %v2414 = vunpack.c.h.b16 %v2345
  %v2415 = vunpack.c.l.b16 %v2346
  %v2416 = vunpack.c.h.b16 %v2346
  %v2417 = vunpack.c.l.b16 %v2347
  %v2418 = vunpack.c.h.b16 %v2347
  %v2419 = vunpack.c.l.b16 %v2348
  %v2420 = vunpack.c.h.b16 %v2348
  %v2421 = vunpack.c.l.b16 %v2349
  %v2422 = vunpack.c.h.b16 %v2349
  %v2423 = vunpack.c.l.b16 %v2350
  %v2424 = vunpack.c.h.b16 %v2350
  %v2425 = vunpack.c.l.b16 %v2351
  %v2426 = vunpack.c.h.b16 %v2351
  %v2427 = vunpack.c.l.b16 %v2352
  %v2428 = vunpack.c.h.b16 %v2352
  %v2429 = vunpack.c.l.b16 %v2353
  %v2430 = vunpack.c.h.b16 %v2353
  %v2431 = vunpack.c.l.b16 %v2354
  %v2432 = vunpack.c.h.b16 %v2354
  %v2433 = vunpack.c.l.b16 %v2355
  %v2434 = vunpack.c.h.b16 %v2355
  %v2435 = vunpack.c.l.b16 %v2356
  %v2436 = vunpack.c.h.b16 %v2356
  %v2437 = vunpack.c.l.b16 %v2357
  %v2438 = vunpack.c.h.b16 %v2357
  %v2439 = vunpack.c.l.b16 %v2358
  %v2440 = vunpack.c.h.b16 %v2358
  %v2441 = vunpack.c.l.b16 %v2359
  %v2442 = vunpack.c.h.b16 %v2359
  %v2443 = vunpack.c.l.b16 %v2360
  %v2444 = vunpack.c.h.b16 %v2360
  %v2445 = vunpack.c.l.b16 %v2361
  %v2446 = vunpack.c.h.b16 %v2361
  %v2447 = vunpack.c.l.b16 %v2362
  %v2448 = vunpack.c.h.b16 %v2362
  %v2449 = vunpack.c.l.b16 %v2363
  %v2450 = vunpack.c.h.b16 %v2363
  %v2451 = vunpack.c.l.b16 %v2364
  %v2452 = vunpack.c.h.b16 %v2364
  %v2453 = vunpack.c.l.b16 %v2365
  %v2454 = vunpack.c.h.b16 %v2365
  %v2455 = vunpack.c.l.b16 %v2366
  %v2456 = vunpack.c.h.b16 %v2366
  %v2457 = vunpack.c.l.b16 %v2367
  %v2458 = vunpack.c.h.b16 %v2367
  %v2459 = vunpack.c.l.b16 %v2368
  %v2460 = vunpack.c.h.b16 %v2368
  %v2461 = vunpack.c.l.b16 %v2369
  %v2462 = vunpack.c.h.b16 %v2369
  %v2463 = vunpack.c.l.b16 %v2370
  %v2464 = vunpack.c.h.b16 %v2370
  %v2465 = vunpack.c.l.b16 %v2371
  %v2466 = vunpack.c.h.b16 %v2371
  %v2467 = vunpack.c.l.b16 %v2372
  %v2468 = vunpack.c.h.b16 %v2372
  %v2469 = vpack.c.b16 %v2409, %v2405
  %v2470 = vpack.c.b16 %v2410, %v2406
  %v2471 = vpack.c.b16 %v2411, %v2407
  %v2472 = vpack.c.b16 %v2412, %v2408
  %v2473 = vpack.c.b16 %v2417, %v2413
  %v2474 = vpack.c.b16 %v2418, %v2414
  %v2475 = vpack.c.b16 %v2419, %v2415
  %v2476 = vpack.c.b16 %v2420, %v2416
  %v2477 = vpack.c.b16 %v2425, %v2421
  %v2478 = vpack.c.b16 %v2426, %v2422
  %v2479 = vpack.c.b16 %v2427, %v2423
  %v2480 = vpack.c.b16 %v2428, %v2424
  %v2481 = vpack.c.b16 %v2433, %v2429
  %v2482 = vpack.c.b16 %v2434, %v2430
  %v2483 = vpack.c.b16 %v2435, %v2431
  %v2484 = vpack.c.b16 %v2436, %v2432
  %v2485 = vpack.c.b16 %v2441, %v2437
  %v2486 = vpack.c.b16 %v2442, %v2438
  %v2487 = vpack.c.b16 %v2443, %v2439
  %v2488 = vpack.c.b16 %v2444, %v2440
  %v2489 = vpack.c.b16 %v2449, %v2445
  %v2490 = vpack.c.b16 %v2450, %v2446
  %v2491 = vpack.c.b16 %v2451, %v2447
  %v2492 = vpack.c.b16 %v2452, %v2448
  %v2493 = vpack.c.b16 %v2457, %v2453
  %v2494 = vpack.c.b16 %v2458, %v2454
  %v2495 = vpack.c.b16 %v2459, %v2455
  %v2496 = vpack.c.b16 %v2460, %v2456
  %v2497 = vpack.c.b16 %v2465, %v2461
  %v2498 = vpack.c.b16 %v2466, %v2462
  %v2499 = vpack.c.b16 %v2467, %v2463
  %v2500 = vpack.c.b16 %v2468, %v2464
  %2533 = vmatprep.subr.bf16.mxu0 %v2498
  %2534 = vmatpush1.bf16.msra.mxu0 %v2497
  %2535 = vmatprep.subr.bf16.mxu0 %v2494
  %2536 = vmatpush1.bf16.msra.mxu0 %v2493
  %2537 = vmatprep.subr.bf16.mxu0 %v2490
  %2538 = vmatpush1.bf16.msra.mxu0 %v2489
  %2539 = vmatprep.subr.bf16.mxu0 %v2486
  %2540 = vmatpush1.bf16.msra.mxu0 %v2485
  %2541 = vmatprep.subr.bf16.mxu0 %v2482
  %2542 = vmatpush1.bf16.msra.mxu0 %v2481
  %2543 = vmatprep.subr.bf16.mxu0 %v2478
  %2544 = vmatpush1.bf16.msra.mxu0 %v2477
  %2545 = vmatprep.subr.bf16.mxu0 %v2474
  %2546 = vmatpush1.bf16.msra.mxu0 %v2473
  %2547 = vmatprep.subr.bf16.mxu0 %v2470
  %2548 = vmatpush1.bf16.msra.mxu0 %v2469
  %2549 = vmatprep.subr.bf16.mxu0 0
  %2550 = vmatpush2.bf16.msra.mxu0 0
  %2551 = vmatprep.subr.bf16.mxu0 0
  %2552 = vmatpush2.bf16.msra.mxu0 0
  %2553 = vmatprep.subr.bf16.mxu0 0
  %2554 = vmatpush2.bf16.msra.mxu0 0
  %2555 = vmatprep.subr.bf16.mxu0 0
  %2556 = vmatpush2.bf16.msra.mxu0 0
  %2557 = vmatprep.subr.bf16.mxu0 0
  %2558 = vmatpush2.bf16.msra.mxu0 0
  %2559 = vmatprep.subr.bf16.mxu0 0
  %2560 = vmatpush2.bf16.msra.mxu0 0
  %2561 = vmatprep.subr.bf16.mxu0 0
  %2562 = vmatpush2.bf16.msra.mxu0 0
  %2563 = vmatprep.subr.bf16.mxu0 0
  %2564 = vmatpush2.bf16.msra.mxu0 0
  %2565 = vmatprep.mubr.bf16.mxu0 0
  %2566 = vmatmul.mubr.bf16.gmra.mxu0 %v2340
  %v2567 = vpop.f32.mrf.mxu0
  %v2568 = vadd.f32 0.0, %v2567
  %v2569 = vpop.f32.mrf.mxu0
  %v2570 = vadd.f32 0.0, %v2569
  %v2571 = vpop.f32.mrf.mxu0
  %v2572 = vpop.f32.mrf.mxu0
  %2573 = vdwg.mxu0
  %2574 = vmatprep.subr.bf16.mxu0 %v2500
  %2575 = vmatpush1.bf16.msra.mxu0 %v2499
  %2576 = vmatprep.subr.bf16.mxu0 %v2496
  %2577 = vmatpush1.bf16.msra.mxu0 %v2495
  %2578 = vmatprep.subr.bf16.mxu0 %v2492
  %2579 = vmatpush1.bf16.msra.mxu0 %v2491
  %2580 = vmatprep.subr.bf16.mxu0 %v2488
  %2581 = vmatpush1.bf16.msra.mxu0 %v2487
  %2582 = vmatprep.subr.bf16.mxu0 %v2484
  %2583 = vmatpush1.bf16.msra.mxu0 %v2483
  %2584 = vmatprep.subr.bf16.mxu0 %v2480
  %2585 = vmatpush1.bf16.msra.mxu0 %v2479
  %2586 = vmatprep.subr.bf16.mxu0 %v2476
  %2587 = vmatpush1.bf16.msra.mxu0 %v2475
  %2588 = vmatprep.subr.bf16.mxu0 %v2472
  %2589 = vmatpush1.bf16.msra.mxu0 %v2471
  %2590 = vmatprep.subr.bf16.mxu0 0
  %2591 = vmatpush2.bf16.msra.mxu0 0
  %2592 = vmatprep.subr.bf16.mxu0 0
  %2593 = vmatpush2.bf16.msra.mxu0 0
  %2594 = vmatprep.subr.bf16.mxu0 0
  %2595 = vmatpush2.bf16.msra.mxu0 0
  %2596 = vmatprep.subr.bf16.mxu0 0
  %2597 = vmatpush2.bf16.msra.mxu0 0
  %2598 = vmatprep.subr.bf16.mxu0 0
  %2599 = vmatpush2.bf16.msra.mxu0 0
  %2600 = vmatprep.subr.bf16.mxu0 0
  %2601 = vmatpush2.bf16.msra.mxu0 0
  %2602 = vmatprep.subr.bf16.mxu0 0
  %2603 = vmatpush2.bf16.msra.mxu0 0
  %2604 = vmatprep.subr.bf16.mxu0 0
  %2605 = vmatpush2.bf16.msra.mxu0 0
  %2606 = vmatprep.mubr.bf16.mxu0 0
  %2607 = vmatmul.mubr.bf16.gmra.mxu0 %v2340
  %v2608 = vpop.f32.mrf.mxu0
  %v2609 = vadd.f32 0.0, %v2608
  %v2610 = vpop.f32.mrf.mxu0
  %v2611 = vadd.f32 0.0, %v2610
  %v2612 = vpop.f32.mrf.mxu0
  %v2613 = vpop.f32.mrf.mxu0
  %2614 = vdwg.mxu0
  %v2615 = vadd.f32 %v2335, %v2568
  %v2616 = vadd.f32 %v2336, %v2570
  %v2617 = vadd.f32 %v2337, %v2609
  %v2618 = vadd.f32 %v2338, %v2611
  %v2619 = vxor.u32 %v2615, 2147483648
  %v2620 = vmul.f32 %v2619, 1.442695
  %v2621 = vpow.pop %v2620
  %v2622 = vadd.f32 %v2621, 1.0
  %v2623 = vrcp.pop %v2622
  %v2624 = vmul.f32 1.0, %v2623
  %v2625 = vxor.u32 %v2616, 2147483648
  %v2626 = vmul.f32 %v2625, 1.442695
  %v2627 = vpow.pop %v2626
  %v2628 = vadd.f32 %v2627, 1.0
  %v2629 = vrcp.pop %v2628
  %v2630 = vmul.f32 1.0, %v2629
  %v2631 = vtanh.pop %v2617
  %v2632 = vxor.u32 %v2618, 2147483648
  %v2633 = vmul.f32 %v2632, 1.442695
  %v2634 = vpow.pop %v2633
  %v2635 = vadd.f32 %v2634, 1.0
  %v2636 = vrcp.pop %v2635
  %v2637 = vmul.f32 1.0, %v2636
  %v2638 = vld [vmem:[#allocation4] sm:$0xff]
  %v2639 = vmul.f32 %v2630, %v2638
  %v2640 = vmul.f32 %v2624, %v2631
  %v2641 = vadd.f32 %v2639, %v2640
  %v2642 = vtanh.pop %v2641
  %v2643 = vmul.f32 %v2637, %v2642
  %2644 = vst [vmem:[#allocation4] sm:$0xff] %v2641
  %2645 = vst [vmem:[#allocation3] sm:$0xff] %v2643
  %v2646 = vpack.c.bf16 %v2643, %v2643
  %s2647 = scalar_lea.vmem %s4, 24
  %2648 = vst [vmem:[%s2647] sm:$0xf] %v2646
  %s2649 = scalar_lea.vmem [#allocation2], 224
  %v2650 = vld [vmem:[%s2649] sm:$0xff]
  %v2651 = vld [vmem:[%s2649 + $0x8] sm:$0xff]
  %v2652 = vld [vmem:[%s2649 + $0x10] sm:$0xff]
  %v2653 = vld [vmem:[%s2649 + $0x18] sm:$0xff]
  %v2654 = vld [vmem:[#allocation3] sm:$0xff]
  %v2655 = vpack.c.bf16 %v2654, %v2654
  %v2656 = vld [vmem:[%s2] sm:$0xff]
  %v2657 = vld [vmem:[%s2 + $0x8] sm:$0xff]
  %v2658 = vld [vmem:[%s2 + $0x10] sm:$0xff]
  %v2659 = vld [vmem:[%s2 + $0x18] sm:$0xff]
  %v2660 = vld [vmem:[%s2 + $0x20] sm:$0xff]
  %v2661 = vld [vmem:[%s2 + $0x28] sm:$0xff]
  %v2662 = vld [vmem:[%s2 + $0x30] sm:$0xff]
  %v2663 = vld [vmem:[%s2 + $0x38] sm:$0xff]
  %v2664 = vld [vmem:[%s2 + $0x40] sm:$0xff]
  %v2665 = vld [vmem:[%s2 + $0x48] sm:$0xff]
  %v2666 = vld [vmem:[%s2 + $0x50] sm:$0xff]
  %v2667 = vld [vmem:[%s2 + $0x58] sm:$0xff]
  %v2668 = vld [vmem:[%s2 + $0x60] sm:$0xff]
  %v2669 = vld [vmem:[%s2 + $0x68] sm:$0xff]
  %v2670 = vld [vmem:[%s2 + $0x70] sm:$0xff]
  %v2671 = vld [vmem:[%s2 + $0x78] sm:$0xff]
  %v2672 = vld [vmem:[%s2 + $0x80] sm:$0xff]
  %v2673 = vld [vmem:[%s2 + $0x88] sm:$0xff]
  %v2674 = vld [vmem:[%s2 + $0x90] sm:$0xff]
  %v2675 = vld [vmem:[%s2 + $0x98] sm:$0xff]
  %v2676 = vld [vmem:[%s2 + $0xa0] sm:$0xff]
  %v2677 = vld [vmem:[%s2 + $0xa8] sm:$0xff]
  %v2678 = vld [vmem:[%s2 + $0xb0] sm:$0xff]
  %v2679 = vld [vmem:[%s2 + $0xb8] sm:$0xff]
  %v2680 = vld [vmem:[%s2 + $0xc0] sm:$0xff]
  %v2681 = vld [vmem:[%s2 + $0xc8] sm:$0xff]
  %v2682 = vld [vmem:[%s2 + $0xd0] sm:$0xff]
  %v2683 = vld [vmem:[%s2 + $0xd8] sm:$0xff]
  %v2684 = vld [vmem:[%s2 + $0xe0] sm:$0xff]
  %v2685 = vld [vmem:[%s2 + $0xe8] sm:$0xff]
  %v2686 = vld [vmem:[%s2 + $0xf0] sm:$0xff]
  %v2687 = vld [vmem:[%s2 + $0xf8] sm:$0xff]
  %v2720 = vunpack.c.l.b16 %v2656
  %v2721 = vunpack.c.h.b16 %v2656
  %v2722 = vunpack.c.l.b16 %v2657
  %v2723 = vunpack.c.h.b16 %v2657
  %v2724 = vunpack.c.l.b16 %v2658
  %v2725 = vunpack.c.h.b16 %v2658
  %v2726 = vunpack.c.l.b16 %v2659
  %v2727 = vunpack.c.h.b16 %v2659
  %v2728 = vunpack.c.l.b16 %v2660
  %v2729 = vunpack.c.h.b16 %v2660
  %v2730 = vunpack.c.l.b16 %v2661
  %v2731 = vunpack.c.h.b16 %v2661
  %v2732 = vunpack.c.l.b16 %v2662
  %v2733 = vunpack.c.h.b16 %v2662
  %v2734 = vunpack.c.l.b16 %v2663
  %v2735 = vunpack.c.h.b16 %v2663
  %v2736 = vunpack.c.l.b16 %v2664
  %v2737 = vunpack.c.h.b16 %v2664
  %v2738 = vunpack.c.l.b16 %v2665
  %v2739 = vunpack.c.h.b16 %v2665
  %v2740 = vunpack.c.l.b16 %v2666
  %v2741 = vunpack.c.h.b16 %v2666
  %v2742 = vunpack.c.l.b16 %v2667
  %v2743 = vunpack.c.h.b16 %v2667
  %v2744 = vunpack.c.l.b16 %v2668
  %v2745 = vunpack.c.h.b16 %v2668
  %v2746 = vunpack.c.l.b16 %v2669
  %v2747 = vunpack.c.h.b16 %v2669
  %v2748 = vunpack.c.l.b16 %v2670
  %v2749 = vunpack.c.h.b16 %v2670
  %v2750 = vunpack.c.l.b16 %v2671
  %v2751 = vunpack.c.h.b16 %v2671
  %v2752 = vunpack.c.l.b16 %v2672
  %v2753 = vunpack.c.h.b16 %v2672
  %v2754 = vunpack.c.l.b16 %v2673
  %v2755 = vunpack.c.h.b16 %v2673
  %v2756 = vunpack.c.l.b16 %v2674
  %v2757 = vunpack.c.h.b16 %v2674
  %v2758 = vunpack.c.l.b16 %v2675
  %v2759 = vunpack.c.h.b16 %v2675
  %v2760 = vunpack.c.l.b16 %v2676
  %v2761 = vunpack.c.h.b16 %v2676
  %v2762 = vunpack.c.l.b16 %v2677
  %v2763 = vunpack.c.h.b16 %v2677
  %v2764 = vunpack.c.l.b16 %v2678
  %v2765 = vunpack.c.h.b16 %v2678
  %v2766 = vunpack.c.l.b16 %v2679
  %v2767 = vunpack.c.h.b16 %v2679
  %v2768 = vunpack.c.l.b16 %v2680
  %v2769 = vunpack.c.h.b16 %v2680
  %v2770 = vunpack.c.l.b16 %v2681
  %v2771 = vunpack.c.h.b16 %v2681
  %v2772 = vunpack.c.l.b16 %v2682
  %v2773 = vunpack.c.h.b16 %v2682
  %v2774 = vunpack.c.l.b16 %v2683
  %v2775 = vunpack.c.h.b16 %v2683
  %v2776 = vunpack.c.l.b16 %v2684
  %v2777 = vunpack.c.h.b16 %v2684
  %v2778 = vunpack.c.l.b16 %v2685
  %v2779 = vunpack.c.h.b16 %v2685
  %v2780 = vunpack.c.l.b16 %v2686
  %v2781 = vunpack.c.h.b16 %v2686
  %v2782 = vunpack.c.l.b16 %v2687
  %v2783 = vunpack.c.h.b16 %v2687
  %v2784 = vpack.c.b16 %v2724, %v2720
  %v2785 = vpack.c.b16 %v2725, %v2721
  %v2786 = vpack.c.b16 %v2726, %v2722
  %v2787 = vpack.c.b16 %v2727, %v2723
  %v2788 = vpack.c.b16 %v2732, %v2728
  %v2789 = vpack.c.b16 %v2733, %v2729
  %v2790 = vpack.c.b16 %v2734, %v2730
  %v2791 = vpack.c.b16 %v2735, %v2731
  %v2792 = vpack.c.b16 %v2740, %v2736
  %v2793 = vpack.c.b16 %v2741, %v2737
  %v2794 = vpack.c.b16 %v2742, %v2738
  %v2795 = vpack.c.b16 %v2743, %v2739
  %v2796 = vpack.c.b16 %v2748, %v2744
  %v2797 = vpack.c.b16 %v2749, %v2745
  %v2798 = vpack.c.b16 %v2750, %v2746
  %v2799 = vpack.c.b16 %v2751, %v2747
  %v2800 = vpack.c.b16 %v2756, %v2752
  %v2801 = vpack.c.b16 %v2757, %v2753
  %v2802 = vpack.c.b16 %v2758, %v2754
  %v2803 = vpack.c.b16 %v2759, %v2755
  %v2804 = vpack.c.b16 %v2764, %v2760
  %v2805 = vpack.c.b16 %v2765, %v2761
  %v2806 = vpack.c.b16 %v2766, %v2762
  %v2807 = vpack.c.b16 %v2767, %v2763
  %v2808 = vpack.c.b16 %v2772, %v2768
  %v2809 = vpack.c.b16 %v2773, %v2769
  %v2810 = vpack.c.b16 %v2774, %v2770
  %v2811 = vpack.c.b16 %v2775, %v2771
  %v2812 = vpack.c.b16 %v2780, %v2776
  %v2813 = vpack.c.b16 %v2781, %v2777
  %v2814 = vpack.c.b16 %v2782, %v2778
  %v2815 = vpack.c.b16 %v2783, %v2779
  %2848 = vmatprep.subr.bf16.mxu0 %v2813
  %2849 = vmatpush1.bf16.msra.mxu0 %v2812
  %2850 = vmatprep.subr.bf16.mxu0 %v2809
  %2851 = vmatpush1.bf16.msra.mxu0 %v2808
  %2852 = vmatprep.subr.bf16.mxu0 %v2805
  %2853 = vmatpush1.bf16.msra.mxu0 %v2804
  %2854 = vmatprep.subr.bf16.mxu0 %v2801
  %2855 = vmatpush1.bf16.msra.mxu0 %v2800
  %2856 = vmatprep.subr.bf16.mxu0 %v2797
  %2857 = vmatpush1.bf16.msra.mxu0 %v2796
  %2858 = vmatprep.subr.bf16.mxu0 %v2793
  %2859 = vmatpush1.bf16.msra.mxu0 %v2792
  %2860 = vmatprep.subr.bf16.mxu0 %v2789
  %2861 = vmatpush1.bf16.msra.mxu0 %v2788
  %2862 = vmatprep.subr.bf16.mxu0 %v2785
  %2863 = vmatpush1.bf16.msra.mxu0 %v2784
  %2864 = vmatprep.subr.bf16.mxu0 0
  %2865 = vmatpush2.bf16.msra.mxu0 0
  %2866 = vmatprep.subr.bf16.mxu0 0
  %2867 = vmatpush2.bf16.msra.mxu0 0
  %2868 = vmatprep.subr.bf16.mxu0 0
  %2869 = vmatpush2.bf16.msra.mxu0 0
  %2870 = vmatprep.subr.bf16.mxu0 0
  %2871 = vmatpush2.bf16.msra.mxu0 0
  %2872 = vmatprep.subr.bf16.mxu0 0
  %2873 = vmatpush2.bf16.msra.mxu0 0
  %2874 = vmatprep.subr.bf16.mxu0 0
  %2875 = vmatpush2.bf16.msra.mxu0 0
  %2876 = vmatprep.subr.bf16.mxu0 0
  %2877 = vmatpush2.bf16.msra.mxu0 0
  %2878 = vmatprep.subr.bf16.mxu0 0
  %2879 = vmatpush2.bf16.msra.mxu0 0
  %2880 = vmatprep.mubr.bf16.mxu0 0
  %2881 = vmatmul.mubr.bf16.gmra.mxu0 %v2655
  %v2882 = vpop.f32.mrf.mxu0
  %v2883 = vadd.f32 0.0, %v2882
  %v2884 = vpop.f32.mrf.mxu0
  %v2885 = vadd.f32 0.0, %v2884
  %v2886 = vpop.f32.mrf.mxu0
  %v2887 = vpop.f32.mrf.mxu0
  %2888 = vdwg.mxu0
  %2889 = vmatprep.subr.bf16.mxu0 %v2815
  %2890 = vmatpush1.bf16.msra.mxu0 %v2814
  %2891 = vmatprep.subr.bf16.mxu0 %v2811
  %2892 = vmatpush1.bf16.msra.mxu0 %v2810
  %2893 = vmatprep.subr.bf16.mxu0 %v2807
  %2894 = vmatpush1.bf16.msra.mxu0 %v2806
  %2895 = vmatprep.subr.bf16.mxu0 %v2803
  %2896 = vmatpush1.bf16.msra.mxu0 %v2802
  %2897 = vmatprep.subr.bf16.mxu0 %v2799
  %2898 = vmatpush1.bf16.msra.mxu0 %v2798
  %2899 = vmatprep.subr.bf16.mxu0 %v2795
  %2900 = vmatpush1.bf16.msra.mxu0 %v2794
  %2901 = vmatprep.subr.bf16.mxu0 %v2791
  %2902 = vmatpush1.bf16.msra.mxu0 %v2790
  %2903 = vmatprep.subr.bf16.mxu0 %v2787
  %2904 = vmatpush1.bf16.msra.mxu0 %v2786
  %2905 = vmatprep.subr.bf16.mxu0 0
  %2906 = vmatpush2.bf16.msra.mxu0 0
  %2907 = vmatprep.subr.bf16.mxu0 0
  %2908 = vmatpush2.bf16.msra.mxu0 0
  %2909 = vmatprep.subr.bf16.mxu0 0
  %2910 = vmatpush2.bf16.msra.mxu0 0
  %2911 = vmatprep.subr.bf16.mxu0 0
  %2912 = vmatpush2.bf16.msra.mxu0 0
  %2913 = vmatprep.subr.bf16.mxu0 0
  %2914 = vmatpush2.bf16.msra.mxu0 0
  %2915 = vmatprep.subr.bf16.mxu0 0
  %2916 = vmatpush2.bf16.msra.mxu0 0
  %2917 = vmatprep.subr.bf16.mxu0 0
  %2918 = vmatpush2.bf16.msra.mxu0 0
  %2919 = vmatprep.subr.bf16.mxu0 0
  %2920 = vmatpush2.bf16.msra.mxu0 0
  %2921 = vmatprep.mubr.bf16.mxu0 0
  %2922 = vmatmul.mubr.bf16.gmra.mxu0 %v2655
  %v2923 = vpop.f32.mrf.mxu0
  %v2924 = vadd.f32 0.0, %v2923
  %v2925 = vpop.f32.mrf.mxu0
  %v2926 = vadd.f32 0.0, %v2925
  %v2927 = vpop.f32.mrf.mxu0
  %v2928 = vpop.f32.mrf.mxu0
  %2929 = vdwg.mxu0
  %v2930 = vadd.f32 %v2650, %v2883
  %v2931 = vadd.f32 %v2651, %v2885
  %v2932 = vadd.f32 %v2652, %v2924
  %v2933 = vadd.f32 %v2653, %v2926
  %v2934 = vxor.u32 %v2930, 2147483648
  %v2935 = vmul.f32 %v2934, 1.442695
  %v2936 = vpow.pop %v2935
  %v2937 = vadd.f32 %v2936, 1.0
  %v2938 = vrcp.pop %v2937
  %v2939 = vmul.f32 1.0, %v2938
  %v2940 = vxor.u32 %v2931, 2147483648
  %v2941 = vmul.f32 %v2940, 1.442695
  %v2942 = vpow.pop %v2941
  %v2943 = vadd.f32 %v2942, 1.0
  %v2944 = vrcp.pop %v2943
  %v2945 = vmul.f32 1.0, %v2944
  %v2946 = vtanh.pop %v2932
  %v2947 = vxor.u32 %v2933, 2147483648
  %v2948 = vmul.f32 %v2947, 1.442695
  %v2949 = vpow.pop %v2948
  %v2950 = vadd.f32 %v2949, 1.0
  %v2951 = vrcp.pop %v2950
  %v2952 = vmul.f32 1.0, %v2951
  %v2953 = vld [vmem:[#allocation4] sm:$0xff]
  %v2954 = vmul.f32 %v2945, %v2953
  %v2955 = vmul.f32 %v2939, %v2946
  %v2956 = vadd.f32 %v2954, %v2955
  %v2957 = vtanh.pop %v2956
  %v2958 = vmul.f32 %v2952, %v2957
  %2959 = vst [vmem:[#allocation4] sm:$0xff] %v2956
  %2960 = vst [vmem:[#allocation3] sm:$0xff] %v2958
  %v2961 = vpack.c.bf16 %v2958, %v2958
  %s2962 = scalar_lea.vmem %s4, 28
  %2963 = vst [vmem:[%s2962] sm:$0xf] %v2961
  %s2964 = scalar_lea.vmem [#allocation2], 256
  %v2965 = vld [vmem:[%s2964] sm:$0xff]
  %v2966 = vld [vmem:[%s2964 + $0x8] sm:$0xff]
  %v2967 = vld [vmem:[%s2964 + $0x10] sm:$0xff]
  %v2968 = vld [vmem:[%s2964 + $0x18] sm:$0xff]
  %v2969 = vld [vmem:[#allocation3] sm:$0xff]
  %v2970 = vpack.c.bf16 %v2969, %v2969
  %v2971 = vld [vmem:[%s2] sm:$0xff]
  %v2972 = vld [vmem:[%s2 + $0x8] sm:$0xff]
  %v2973 = vld [vmem:[%s2 + $0x10] sm:$0xff]
  %v2974 = vld [vmem:[%s2 + $0x18] sm:$0xff]
  %v2975 = vld [vmem:[%s2 + $0x20] sm:$0xff]
  %v2976 = vld [vmem:[%s2 + $0x28] sm:$0xff]
  %v2977 = vld [vmem:[%s2 + $0x30] sm:$0xff]
  %v2978 = vld [vmem:[%s2 + $0x38] sm:$0xff]
  %v2979 = vld [vmem:[%s2 + $0x40] sm:$0xff]
  %v2980 = vld [vmem:[%s2 + $0x48] sm:$0xff]
  %v2981 = vld [vmem:[%s2 + $0x50] sm:$0xff]
  %v2982 = vld [vmem:[%s2 + $0x58] sm:$0xff]
  %v2983 = vld [vmem:[%s2 + $0x60] sm:$0xff]
  %v2984 = vld [vmem:[%s2 + $0x68] sm:$0xff]
  %v2985 = vld [vmem:[%s2 + $0x70] sm:$0xff]
  %v2986 = vld [vmem:[%s2 + $0x78] sm:$0xff]
  %v2987 = vld [vmem:[%s2 + $0x80] sm:$0xff]
  %v2988 = vld [vmem:[%s2 + $0x88] sm:$0xff]
  %v2989 = vld [vmem:[%s2 + $0x90] sm:$0xff]
  %v2990 = vld [vmem:[%s2 + $0x98] sm:$0xff]
  %v2991 = vld [vmem:[%s2 + $0xa0] sm:$0xff]
  %v2992 = vld [vmem:[%s2 + $0xa8] sm:$0xff]
  %v2993 = vld [vmem:[%s2 + $0xb0] sm:$0xff]
  %v2994 = vld [vmem:[%s2 + $0xb8] sm:$0xff]
  %v2995 = vld [vmem:[%s2 + $0xc0] sm:$0xff]
  %v2996 = vld [vmem:[%s2 + $0xc8] sm:$0xff]
  %v2997 = vld [vmem:[%s2 + $0xd0] sm:$0xff]
  %v2998 = vld [vmem:[%s2 + $0xd8] sm:$0xff]
  %v2999 = vld [vmem:[%s2 + $0xe0] sm:$0xff]
  %v3000 = vld [vmem:[%s2 + $0xe8] sm:$0xff]
  %v3001 = vld [vmem:[%s2 + $0xf0] sm:$0xff]
  %v3002 = vld [vmem:[%s2 + $0xf8] sm:$0xff]
  %v3035 = vunpack.c.l.b16 %v2971
  %v3036 = vunpack.c.h.b16 %v2971
  %v3037 = vunpack.c.l.b16 %v2972
  %v3038 = vunpack.c.h.b16 %v2972
  %v3039 = vunpack.c.l.b16 %v2973
  %v3040 = vunpack.c.h.b16 %v2973
  %v3041 = vunpack.c.l.b16 %v2974
  %v3042 = vunpack.c.h.b16 %v2974
  %v3043 = vunpack.c.l.b16 %v2975
  %v3044 = vunpack.c.h.b16 %v2975
  %v3045 = vunpack.c.l.b16 %v2976
  %v3046 = vunpack.c.h.b16 %v2976
  %v3047 = vunpack.c.l.b16 %v2977
  %v3048 = vunpack.c.h.b16 %v2977
  %v3049 = vunpack.c.l.b16 %v2978
  %v3050 = vunpack.c.h.b16 %v2978
  %v3051 = vunpack.c.l.b16 %v2979
  %v3052 = vunpack.c.h.b16 %v2979
  %v3053 = vunpack.c.l.b16 %v2980
  %v3054 = vunpack.c.h.b16 %v2980
  %v3055 = vunpack.c.l.b16 %v2981
  %v3056 = vunpack.c.h.b16 %v2981
  %v3057 = vunpack.c.l.b16 %v2982
  %v3058 = vunpack.c.h.b16 %v2982
  %v3059 = vunpack.c.l.b16 %v2983
  %v3060 = vunpack.c.h.b16 %v2983
  %v3061 = vunpack.c.l.b16 %v2984
  %v3062 = vunpack.c.h.b16 %v2984
  %v3063 = vunpack.c.l.b16 %v2985
  %v3064 = vunpack.c.h.b16 %v2985
  %v3065 = vunpack.c.l.b16 %v2986
  %v3066 = vunpack.c.h.b16 %v2986
  %v3067 = vunpack.c.l.b16 %v2987
  %v3068 = vunpack.c.h.b16 %v2987
  %v3069 = vunpack.c.l.b16 %v2988
  %v3070 = vunpack.c.h.b16 %v2988
  %v3071 = vunpack.c.l.b16 %v2989
  %v3072 = vunpack.c.h.b16 %v2989
  %v3073 = vunpack.c.l.b16 %v2990
  %v3074 = vunpack.c.h.b16 %v2990
  %v3075 = vunpack.c.l.b16 %v2991
  %v3076 = vunpack.c.h.b16 %v2991
  %v3077 = vunpack.c.l.b16 %v2992
  %v3078 = vunpack.c.h.b16 %v2992
  %v3079 = vunpack.c.l.b16 %v2993
  %v3080 = vunpack.c.h.b16 %v2993
  %v3081 = vunpack.c.l.b16 %v2994
  %v3082 = vunpack.c.h.b16 %v2994
  %v3083 = vunpack.c.l.b16 %v2995
  %v3084 = vunpack.c.h.b16 %v2995
  %v3085 = vunpack.c.l.b16 %v2996
  %v3086 = vunpack.c.h.b16 %v2996
  %v3087 = vunpack.c.l.b16 %v2997
  %v3088 = vunpack.c.h.b16 %v2997
  %v3089 = vunpack.c.l.b16 %v2998
  %v3090 = vunpack.c.h.b16 %v2998
  %v3091 = vunpack.c.l.b16 %v2999
  %v3092 = vunpack.c.h.b16 %v2999
  %v3093 = vunpack.c.l.b16 %v3000
  %v3094 = vunpack.c.h.b16 %v3000
  %v3095 = vunpack.c.l.b16 %v3001
  %v3096 = vunpack.c.h.b16 %v3001
  %v3097 = vunpack.c.l.b16 %v3002
  %v3098 = vunpack.c.h.b16 %v3002
  %v3099 = vpack.c.b16 %v3039, %v3035
  %v3100 = vpack.c.b16 %v3040, %v3036
  %v3101 = vpack.c.b16 %v3041, %v3037
  %v3102 = vpack.c.b16 %v3042, %v3038
  %v3103 = vpack.c.b16 %v3047, %v3043
  %v3104 = vpack.c.b16 %v3048, %v3044
  %v3105 = vpack.c.b16 %v3049, %v3045
  %v3106 = vpack.c.b16 %v3050, %v3046
  %v3107 = vpack.c.b16 %v3055, %v3051
  %v3108 = vpack.c.b16 %v3056, %v3052
  %v3109 = vpack.c.b16 %v3057, %v3053
  %v3110 = vpack.c.b16 %v3058, %v3054
  %v3111 = vpack.c.b16 %v3063, %v3059
  %v3112 = vpack.c.b16 %v3064, %v3060
  %v3113 = vpack.c.b16 %v3065, %v3061
  %v3114 = vpack.c.b16 %v3066, %v3062
  %v3115 = vpack.c.b16 %v3071, %v3067
  %v3116 = vpack.c.b16 %v3072, %v3068
  %v3117 = vpack.c.b16 %v3073, %v3069
  %v3118 = vpack.c.b16 %v3074, %v3070
  %v3119 = vpack.c.b16 %v3079, %v3075
  %v3120 = vpack.c.b16 %v3080, %v3076
  %v3121 = vpack.c.b16 %v3081, %v3077
  %v3122 = vpack.c.b16 %v3082, %v3078
  %v3123 = vpack.c.b16 %v3087, %v3083
  %v3124 = vpack.c.b16 %v3088, %v3084
  %v3125 = vpack.c.b16 %v3089, %v3085
  %v3126 = vpack.c.b16 %v3090, %v3086
  %v3127 = vpack.c.b16 %v3095, %v3091
  %v3128 = vpack.c.b16 %v3096, %v3092
  %v3129 = vpack.c.b16 %v3097, %v3093
  %v3130 = vpack.c.b16 %v3098, %v3094
  %3163 = vmatprep.subr.bf16.mxu0 %v3128
  %3164 = vmatpush1.bf16.msra.mxu0 %v3127
  %3165 = vmatprep.subr.bf16.mxu0 %v3124
  %3166 = vmatpush1.bf16.msra.mxu0 %v3123
  %3167 = vmatprep.subr.bf16.mxu0 %v3120
  %3168 = vmatpush1.bf16.msra.mxu0 %v3119
  %3169 = vmatprep.subr.bf16.mxu0 %v3116
  %3170 = vmatpush1.bf16.msra.mxu0 %v3115
  %3171 = vmatprep.subr.bf16.mxu0 %v3112
  %3172 = vmatpush1.bf16.msra.mxu0 %v3111
  %3173 = vmatprep.subr.bf16.mxu0 %v3108
  %3174 = vmatpush1.bf16.msra.mxu0 %v3107
  %3175 = vmatprep.subr.bf16.mxu0 %v3104
  %3176 = vmatpush1.bf16.msra.mxu0 %v3103
  %3177 = vmatprep.subr.bf16.mxu0 %v3100
  %3178 = vmatpush1.bf16.msra.mxu0 %v3099
  %3179 = vmatprep.subr.bf16.mxu0 0
  %3180 = vmatpush2.bf16.msra.mxu0 0
  %3181 = vmatprep.subr.bf16.mxu0 0
  %3182 = vmatpush2.bf16.msra.mxu0 0
  %3183 = vmatprep.subr.bf16.mxu0 0
  %3184 = vmatpush2.bf16.msra.mxu0 0
  %3185 = vmatprep.subr.bf16.mxu0 0
  %3186 = vmatpush2.bf16.msra.mxu0 0
  %3187 = vmatprep.subr.bf16.mxu0 0
  %3188 = vmatpush2.bf16.msra.mxu0 0
  %3189 = vmatprep.subr.bf16.mxu0 0
  %3190 = vmatpush2.bf16.msra.mxu0 0
  %3191 = vmatprep.subr.bf16.mxu0 0
  %3192 = vmatpush2.bf16.msra.mxu0 0
  %3193 = vmatprep.subr.bf16.mxu0 0
  %3194 = vmatpush2.bf16.msra.mxu0 0
  %3195 = vmatprep.mubr.bf16.mxu0 0
  %3196 = vmatmul.mubr.bf16.gmra.mxu0 %v2970
  %v3197 = vpop.f32.mrf.mxu0
  %v3198 = vadd.f32 0.0, %v3197
  %v3199 = vpop.f32.mrf.mxu0
  %v3200 = vadd.f32 0.0, %v3199
  %v3201 = vpop.f32.mrf.mxu0
  %v3202 = vpop.f32.mrf.mxu0
  %3203 = vdwg.mxu0
  %3204 = vmatprep.subr.bf16.mxu0 %v3130
  %3205 = vmatpush1.bf16.msra.mxu0 %v3129
  %3206 = vmatprep.subr.bf16.mxu0 %v3126
  %3207 = vmatpush1.bf16.msra.mxu0 %v3125
  %3208 = vmatprep.subr.bf16.mxu0 %v3122
  %3209 = vmatpush1.bf16.msra.mxu0 %v3121
  %3210 = vmatprep.subr.bf16.mxu0 %v3118
  %3211 = vmatpush1.bf16.msra.mxu0 %v3117
  %3212 = vmatprep.subr.bf16.mxu0 %v3114
  %3213 = vmatpush1.bf16.msra.mxu0 %v3113
  %3214 = vmatprep.subr.bf16.mxu0 %v3110
  %3215 = vmatpush1.bf16.msra.mxu0 %v3109
  %3216 = vmatprep.subr.bf16.mxu0 %v3106
  %3217 = vmatpush1.bf16.msra.mxu0 %v3105
  %3218 = vmatprep.subr.bf16.mxu0 %v3102
  %3219 = vmatpush1.bf16.msra.mxu0 %v3101
  %3220 = vmatprep.subr.bf16.mxu0 0
  %3221 = vmatpush2.bf16.msra.mxu0 0
  %3222 = vmatprep.subr.bf16.mxu0 0
  %3223 = vmatpush2.bf16.msra.mxu0 0
  %3224 = vmatprep.subr.bf16.mxu0 0
  %3225 = vmatpush2.bf16.msra.mxu0 0
  %3226 = vmatprep.subr.bf16.mxu0 0
  %3227 = vmatpush2.bf16.msra.mxu0 0
  %3228 = vmatprep.subr.bf16.mxu0 0
  %3229 = vmatpush2.bf16.msra.mxu0 0
  %3230 = vmatprep.subr.bf16.mxu0 0
  %3231 = vmatpush2.bf16.msra.mxu0 0
  %3232 = vmatprep.subr.bf16.mxu0 0
  %3233 = vmatpush2.bf16.msra.mxu0 0
  %3234 = vmatprep.subr.bf16.mxu0 0
  %3235 = vmatpush2.bf16.msra.mxu0 0
  %3236 = vmatprep.mubr.bf16.mxu0 0
  %3237 = vmatmul.mubr.bf16.gmra.mxu0 %v2970
  %v3238 = vpop.f32.mrf.mxu0
  %v3239 = vadd.f32 0.0, %v3238
  %v3240 = vpop.f32.mrf.mxu0
  %v3241 = vadd.f32 0.0, %v3240
  %v3242 = vpop.f32.mrf.mxu0
  %v3243 = vpop.f32.mrf.mxu0
  %3244 = vdwg.mxu0
  %v3245 = vadd.f32 %v2965, %v3198
  %v3246 = vadd.f32 %v2966, %v3200
  %v3247 = vadd.f32 %v2967, %v3239
  %v3248 = vadd.f32 %v2968, %v3241
  %v3249 = vxor.u32 %v3245, 2147483648
  %v3250 = vmul.f32 %v3249, 1.442695
  %v3251 = vpow.pop %v3250
  %v3252 = vadd.f32 %v3251, 1.0
  %v3253 = vrcp.pop %v3252
  %v3254 = vmul.f32 1.0, %v3253
  %v3255 = vxor.u32 %v3246, 2147483648
  %v3256 = vmul.f32 %v3255, 1.442695
  %v3257 = vpow.pop %v3256
  %v3258 = vadd.f32 %v3257, 1.0
  %v3259 = vrcp.pop %v3258
  %v3260 = vmul.f32 1.0, %v3259
  %v3261 = vtanh.pop %v3247
  %v3262 = vxor.u32 %v3248, 2147483648
  %v3263 = vmul.f32 %v3262, 1.442695
  %v3264 = vpow.pop %v3263
  %v3265 = vadd.f32 %v3264, 1.0
  %v3266 = vrcp.pop %v3265
  %v3267 = vmul.f32 1.0, %v3266
  %v3268 = vld [vmem:[#allocation4] sm:$0xff]
  %v3269 = vmul.f32 %v3260, %v3268
  %v3270 = vmul.f32 %v3254, %v3261
  %v3271 = vadd.f32 %v3269, %v3270
  %v3272 = vtanh.pop %v3271
  %v3273 = vmul.f32 %v3267, %v3272
  %3274 = vst [vmem:[#allocation4] sm:$0xff] %v3271
  %3275 = vst [vmem:[#allocation3] sm:$0xff] %v3273
  %v3276 = vpack.c.bf16 %v3273, %v3273
  %s3277 = scalar_lea.vmem %s4, 32
  %3278 = vst [vmem:[%s3277] sm:$0xf] %v3276
  // Predicated region
  $region18: #{captioning_forward.6} parent=0 // pred_check
    _
  $region19: #{captioning_forward.6} parent=0 // pred_check_branch
    %3280 = sbr.rel (0) target = $region21
  $region20: #{captioning_forward.6} parent=0 // pred_region
    _
  $region21: #{captioning_forward.6} parent=0 // pred_fallthru
    _
  // Predicated region
  $region22: #{captioning_forward.6} parent=0 // pred_check
    _
  $region23: #{captioning_forward.6} parent=0 // pred_check_branch
    %3282 = sbr.rel (0) target = $region25
  $region24: #{captioning_forward.6} parent=0 // pred_region
    _
  $region25: #{captioning_forward.6} parent=0 // pred_fallthru
    _

</llo_original>
